<compile_context>
chip_gen: v7x
topology: tpu7x:2x2x1
jax: 0.10.0
libtpu: 0.0.40
codegen_flags: <defaults>
</compile_context>

<pallas_src>
import jax
import jax.numpy as jnp
from jax import lax
from jax.experimental import pallas as pl
from jax.experimental.pallas import tpu as pltpu

B = 8                      # batch (>1 required by BatchNorm1d batch stats)
C, H, W = 4, 16, 16
D_IN = C * H * W           # 1024
D_HID = 2048
D_Z = 512
K_CODES = 128
D_OUT = D_IN
EPS = 1e-5
TN = 256                   # hidden-dim tile streamed per grid step


def codebvae_kernel(x_ref, wenc_ref, benc_ref,
                    w1_ref, b1_ref, w2_ref, b2_ref,
                    gamma_ref, beta_ref,
                    emb_ref, embT_ref, esq_ref,
                    wdec_ref, bdec_ref,
                    out_ref, rloss_ref, closs_ref,
                    acc_ref):
    f32 = jnp.float32
    bf16 = jnp.bfloat16
    j = pl.program_id(0)

    @pl.when(j == 0)
    def _():
        acc_ref[...] = jnp.zeros_like(acc_ref)

    # ---- streamed part: encoder column tile + fc1 row tile -------------------
    # feat_j = relu(x @ wenc[:, jT:(j+1)T] + benc[jT:(j+1)T])          [B, TN]
    # acc   += feat_j @ w1[jT:(j+1)T, :]                               [B, 2048]
    feat = jnp.maximum(
        jnp.dot(x_ref[...], wenc_ref[...], preferred_element_type=f32)
        + benc_ref[...], 0.0)
    acc_ref[...] += jnp.dot(feat.astype(bf16), w1_ref[...],
                            preferred_element_type=f32)

    # ---- finalize on the last tile: fc2 + BatchNorm + VQ + decoder -----------
    @pl.when(j == pl.num_programs(0) - 1)
    def _():
        h = jnp.maximum(acc_ref[...] + b1_ref[...], 0.0)               # [B, 2048]
        z = (jnp.dot(h.astype(bf16), w2_ref[...],
                     preferred_element_type=f32) + b2_ref[...])        # [B, 512]

        # BatchNorm1d, training mode (biased batch stats, eps=1e-5).
        mean = jnp.mean(z, axis=0, keepdims=True)
        var = jnp.mean((z - mean) ** 2, axis=0, keepdims=True)
        zn = (z - mean) * lax.rsqrt(var + EPS) * gamma_ref[...] + beta_ref[...]

        # Nearest-neighbour VQ.  ||zn||^2 is a per-row constant, so argmin of
        # ||zn - e||^2 == argmin of (e_sq - 2 * zn.e); e_sq and emb^T are
        # precomputed in the wrapper (no in-kernel XLU transpose / reduction).
        cross = jnp.dot(zn, embT_ref[...], preferred_element_type=f32)  # [B, K]
        dist = esq_ref[...] - 2.0 * cross                               # [B, K]
        dmin = jnp.min(dist, axis=1, keepdims=True)
        iota = lax.broadcasted_iota(jnp.int32, (B, K_CODES), 1)
        idx = jnp.min(jnp.where(dist == dmin, iota, K_CODES), axis=1,
                      keepdims=True)                                    # [B, 1]
        onehot = (iota == idx).astype(f32)                              # [B, K]
        q = jnp.dot(onehot, emb_ref[...], preferred_element_type=f32)   # [B, D_Z]

        # TODO(synk): the injected codebook's recon vs contrastive losses are
        # unspecified; this stand-in returns the same squared error for both.
        se = jnp.mean((q - zn) ** 2)
        rloss_ref[0, 0] = se
        closs_ref[0, 0] = se

        out_ref[...] = (jnp.dot(q.astype(bf16), wdec_ref[...],
                                preferred_element_type=f32)
                        + bdec_ref[...])                                # [B, D_OUT]


def codebvae_forward(x_nchw, params):
    bf16 = jnp.bfloat16
    x_flat = x_nchw.reshape(B, D_IN).astype(bf16)

    # bf16 weights at the MXU inputs (f32 accumulate); biases/BN params stay f32.
    wenc = params["wenc"].astype(bf16)
    w1 = params["w1"].astype(bf16)
    w2 = params["w2"].astype(bf16)
    wdec = params["wdec"].astype(bf16)
    emb = params["emb"]                               # f32, small (256 KiB)
    embT = emb.T                                      # precomputed transpose
    esq = jnp.sum(emb * emb, axis=1)[None, :]         # [1, K] precomputed

    n_tiles = D_HID // TN
    const = lambda j: (0, 0)
    smem = pltpu.MemorySpace.SMEM

    in_specs = [
        pl.BlockSpec((B, D_IN), const),                # x        (resident)
        pl.BlockSpec((D_IN, TN), lambda j: (0, j)),    # wenc     (column tiles)
        pl.BlockSpec((1, TN), lambda j: (0, j)),       # benc     (column tiles)
        pl.BlockSpec((TN, D_HID), lambda j: (j, 0)),   # w1       (row tiles)
        pl.BlockSpec((1, D_HID), const),               # b1       (resident)
        pl.BlockSpec((D_HID, D_Z), const),             # w2       (resident)
        pl.BlockSpec((1, D_Z), const),                 # b2
        pl.BlockSpec((1, D_Z), const),                 # gamma
        pl.BlockSpec((1, D_Z), const),                 # beta
        pl.BlockSpec((K_CODES, D_Z), const),           # emb
        pl.BlockSpec((D_Z, K_CODES), const),           # emb^T
        pl.BlockSpec((1, K_CODES), const),             # e_sq
        pl.BlockSpec((D_Z, D_OUT), const),             # wdec
        pl.BlockSpec((1, D_OUT), const),               # bdec
    ]
    out_specs = (
        pl.BlockSpec((B, D_OUT), const),
        pl.BlockSpec((1, 1), const, memory_space=smem),
        pl.BlockSpec((1, 1), const, memory_space=smem),
    )

    out, rloss, closs = pl.pallas_call(
        codebvae_kernel,
        out_shape=(
            jax.ShapeDtypeStruct((B, D_OUT), jnp.float32),
            jax.ShapeDtypeStruct((1, 1), jnp.float32),
            jax.ShapeDtypeStruct((1, 1), jnp.float32),
        ),
        grid=(n_tiles,),
        in_specs=in_specs,
        out_specs=out_specs,
        scratch_shapes=[pltpu.VMEM((B, D_HID), jnp.float32)],
        compiler_params=pltpu.CompilerParams(
            dimension_semantics=("arbitrary",),        # reduction into acc
            vmem_limit_bytes=32 << 20),                # safe on v5e/v6e/v7x
    )(x_flat,
      wenc, params["benc"],
      w1, params["b1"], w2, params["b2"],
      params["gamma"], params["beta"],
      emb, embT, esq,
      wdec, params["bdec"])

    return out.reshape(B, C, H, W), rloss[0, 0], closs[0, 0]


def reference_forward(x_nchw, p):
    """Pure-JAX reference mirroring the kernel's bf16-weight matmul precision."""
    f32, bf16 = jnp.float32, jnp.bfloat16
    x = x_nchw.reshape(B, D_IN).astype(bf16)
    wenc = p["wenc"].astype(bf16)
    w1 = p["w1"].astype(bf16)
    w2 = p["w2"].astype(bf16)
    wdec = p["wdec"].astype(bf16)

    feat = jnp.maximum(
        jnp.dot(x, wenc, preferred_element_type=f32) + p["benc"], 0.0)
    h = jnp.maximum(
        jnp.dot(feat.astype(bf16), w1, preferred_element_type=f32) + p["b1"], 0.0)
    z = jnp.dot(h.astype(bf16), w2, preferred_element_type=f32) + p["b2"]

    mean = jnp.mean(z, axis=0, keepdims=True)
    var = jnp.mean((z - mean) ** 2, axis=0, keepdims=True)
    zn = (z - mean) * lax.rsqrt(var + EPS) * p["gamma"] + p["beta"]

    emb = p["emb"]
    dist = (jnp.sum(emb * emb, axis=1)[None, :]
            - 2.0 * jnp.dot(zn, emb.T, precision=lax.Precision.HIGHEST,
                            preferred_element_type=f32))
    idx = jnp.argmin(dist, axis=1)
    q = emb[idx]
    se = jnp.mean((q - zn) ** 2)
    out = jnp.dot(q.astype(bf16), wdec, preferred_element_type=f32) + p["bdec"]
    return out.reshape(B, C, H, W), se, se


def init_params(key):
    ks = jax.random.split(key, 6)

    def lin(k, fan_in, fan_out):
        s = 1.0 / jnp.sqrt(fan_in)
        return (jax.random.uniform(k, (fan_in, fan_out), jnp.float32, -s, s),
                jnp.zeros((1, fan_out), jnp.float32))

    wenc, benc = lin(ks[0], D_IN, D_HID)
    w1, b1 = lin(ks[1], D_HID, D_HID)
    w2, b2 = lin(ks[2], D_HID, D_Z)
    wdec, bdec = lin(ks[3], D_Z, D_OUT)
    emb = jax.random.normal(ks[4], (K_CODES, D_Z), jnp.float32) * 0.1
    return dict(wenc=wenc, benc=benc, w1=w1, b1=b1, w2=w2, b2=b2,
                gamma=jnp.ones((1, D_Z), jnp.float32),
                beta=jnp.zeros((1, D_Z), jnp.float32),
                emb=emb, wdec=wdec, bdec=bdec)


if __name__ == "__main__":
    key = jax.random.PRNGKey(0)
    k_x, k_p = jax.random.split(key)
    x = jax.random.normal(k_x, (B, C, H, W), jnp.float32)   # NCHW input
    params = init_params(k_p)

    out, rloss, closs = codebvae_forward(x, params)
    jax.block_until_ready((out, rloss, closs))

    out_ref, rloss_ref, closs_ref = reference_forward(x, params)
    assert out.shape == (B, C, H, W)
    assert jnp.allclose(out, out_ref, rtol=2e-2, atol=2e-2)
    assert jnp.allclose(rloss, rloss_ref, rtol=2e-2, atol=2e-3)
    assert jnp.allclose(closs, closs_ref, rtol=2e-2, atol=2e-3)
    print("KERNEL_OK")
</pallas_src>

<mosaic_0001>
module attributes {stable_mosaic.version = 11 : i64} {
  func.func @codebvae_kernel(%arg0: i32, %arg1: memref<8x1024xbf16, #tpu.memory_space<vmem>>, %arg2: memref<1024x256xbf16, #tpu.memory_space<vmem>>, %arg3: memref<1x256xf32, #tpu.memory_space<vmem>>, %arg4: memref<256x2048xbf16, #tpu.memory_space<vmem>>, %arg5: memref<1x2048xf32, #tpu.memory_space<vmem>>, %arg6: memref<2048x512xbf16, #tpu.memory_space<vmem>>, %arg7: memref<1x512xf32, #tpu.memory_space<vmem>>, %arg8: memref<1x512xf32, #tpu.memory_space<vmem>>, %arg9: memref<1x512xf32, #tpu.memory_space<vmem>>, %arg10: memref<128x512xf32, #tpu.memory_space<vmem>>, %arg11: memref<512x128xf32, #tpu.memory_space<vmem>>, %arg12: memref<1x128xf32, #tpu.memory_space<vmem>>, %arg13: memref<512x1024xbf16, #tpu.memory_space<vmem>>, %arg14: memref<1x1024xf32, #tpu.memory_space<vmem>>, %arg15: memref<8x1024xf32, #tpu.memory_space<vmem>>, %arg16: memref<1x1xf32, #tpu.memory_space<smem>>, %arg17: memref<1x1xf32, #tpu.memory_space<smem>>, %arg18: memref<8x2048xf32, #tpu.memory_space<vmem>>) attributes {dimension_semantics = [#tpu.dimension_semantics<arbitrary>], iteration_bounds = array<i64: 8>, scalar_prefetch = 0 : i64, scratch_operands = 1 : i64, tpu.core_type = #tpu.core_type<tc>, window_params = [{pipeline_mode = #tpu.pipeline_mode<synchronous>, transform_indices = @transform_0, window_bounds = array<i64: 8, 1024>}, {transform_indices = @transform_1, window_bounds = array<i64: 1024, 256>}, {transform_indices = @transform_2, window_bounds = array<i64: 1, 256>}, {transform_indices = @transform_3, window_bounds = array<i64: 256, 2048>}, {pipeline_mode = #tpu.pipeline_mode<synchronous>, transform_indices = @transform_4, window_bounds = array<i64: 1, 2048>}, {pipeline_mode = #tpu.pipeline_mode<synchronous>, transform_indices = @transform_5, window_bounds = array<i64: 2048, 512>}, {pipeline_mode = #tpu.pipeline_mode<synchronous>, transform_indices = @transform_6, window_bounds = array<i64: 1, 512>}, {pipeline_mode = #tpu.pipeline_mode<synchronous>, transform_indices = @transform_7, window_bounds = array<i64: 1, 512>}, {pipeline_mode = #tpu.pipeline_mode<synchronous>, transform_indices = @transform_8, window_bounds = array<i64: 1, 512>}, {pipeline_mode = #tpu.pipeline_mode<synchronous>, transform_indices = @transform_9, window_bounds = array<i64: 128, 512>}, {pipeline_mode = #tpu.pipeline_mode<synchronous>, transform_indices = @transform_10, window_bounds = array<i64: 512, 128>}, {pipeline_mode = #tpu.pipeline_mode<synchronous>, transform_indices = @transform_11, window_bounds = array<i64: 1, 128>}, {pipeline_mode = #tpu.pipeline_mode<synchronous>, transform_indices = @transform_12, window_bounds = array<i64: 512, 1024>}, {pipeline_mode = #tpu.pipeline_mode<synchronous>, transform_indices = @transform_13, window_bounds = array<i64: 1, 1024>}, {pipeline_mode = #tpu.pipeline_mode<synchronous>, transform_indices = @transform_14, window_bounds = array<i64: 8, 1024>}, {transform_indices = @transform_15, window_bounds = array<i64: 1, 1>}, {transform_indices = @transform_16, window_bounds = array<i64: 1, 1>}]} {
    %c0_i32 = arith.constant 0 : i32
    %0 = arith.cmpi eq, %arg0, %c0_i32 : i32
    %1 = arith.extui %0 : i1 to i32
    %c0_i32_0 = arith.constant 0 : i32
    %2 = arith.cmpi ne, %1, %c0_i32_0 : i32
    scf.if %2 {
      %cst_15 = arith.constant 0.000000e+00 : f32
      %20 = vector.broadcast %cst_15 : f32 to vector<8x2048xf32>
      %c0_16 = arith.constant 0 : index
      %c0_17 = arith.constant 0 : index
      %21 = vector.load %arg18[%c0_16, %c0_17] : memref<8x2048xf32, #tpu.memory_space<vmem>>, vector<8x2048xf32>
      tpu.vector_store %arg18[%c0_16, %c0_17], %20 {strides = array<i32>} : memref<8x2048xf32, #tpu.memory_space<vmem>>, vector<8x2048xf32>,
    } else {
    }
    %c0 = arith.constant 0 : index
    %c0_1 = arith.constant 0 : index
    %3 = vector.load %arg1[%c0, %c0_1] : memref<8x1024xbf16, #tpu.memory_space<vmem>>, vector<8x1024xbf16>
    %c0_2 = arith.constant 0 : index
    %c0_3 = arith.constant 0 : index
    %4 = vector.load %arg2[%c0_2, %c0_3] : memref<1024x256xbf16, #tpu.memory_space<vmem>>, vector<1024x256xbf16>
    %cst = arith.constant dense<0.000000e+00> : vector<8x256xf32>
    %5 = tpu.matmul %3, %4, %cst {dimension_numbers = #tpu.dot_dimension_numbers<[1], [0], [0], [1], [0, 0, 1, 1], [], []>} : vector<8x1024xbf16>, vector<1024x256xbf16>, vector<8x256xf32> -> vector<8x256xf32>
    %c0_4 = arith.constant 0 : index
    %c0_5 = arith.constant 0 : index
    %6 = vector.load %arg3[%c0_4, %c0_5] : memref<1x256xf32, #tpu.memory_space<vmem>>, vector<1x256xf32>
    %7 = vector.broadcast %6 : vector<1x256xf32> to vector<8x256xf32>
    %8 = arith.addf %5, %7 : vector<8x256xf32>
    %cst_6 = arith.constant 0.000000e+00 : f32
    %9 = vector.broadcast %cst_6 : f32 to vector<8x256xf32>
    %10 = arith.maximumf %8, %9 : vector<8x256xf32>
    %c0_7 = arith.constant 0 : index
    %c0_8 = arith.constant 0 : index
    %11 = vector.load %arg18[%c0_7, %c0_8] : memref<8x2048xf32, #tpu.memory_space<vmem>>, vector<8x2048xf32>
    %12 = arith.truncf %10 : vector<8x256xf32> to vector<8x256xbf16>
    %c0_9 = arith.constant 0 : index
    %c0_10 = arith.constant 0 : index
    %13 = vector.load %arg4[%c0_9, %c0_10] : memref<256x2048xbf16, #tpu.memory_space<vmem>>, vector<256x2048xbf16>
    %cst_11 = arith.constant dense<0.000000e+00> : vector<8x2048xf32>
    %14 = tpu.matmul %12, %13, %cst_11 {dimension_numbers = #tpu.dot_dimension_numbers<[1], [0], [0], [1], [0, 0, 1, 1], [], []>} : vector<8x256xbf16>, vector<256x2048xbf16>, vector<8x2048xf32> -> vector<8x2048xf32>
    %15 = arith.addf %11, %14 : vector<8x2048xf32>
    %c0_12 = arith.constant 0 : index
    %c0_13 = arith.constant 0 : index
    %16 = vector.load %arg18[%c0_12, %c0_13] : memref<8x2048xf32, #tpu.memory_space<vmem>>, vector<8x2048xf32>
    tpu.vector_store %arg18[%c0_12, %c0_13], %15 {strides = array<i32>} : memref<8x2048xf32, #tpu.memory_space<vmem>>, vector<8x2048xf32>,
    %c7_i32 = arith.constant 7 : i32
    %17 = arith.cmpi eq, %arg0, %c7_i32 : i32
    %18 = arith.extui %17 : i1 to i32
    %c0_i32_14 = arith.constant 0 : i32
    %19 = arith.cmpi ne, %18, %c0_i32_14 : i32
    scf.if %19 {
      %c0_15 = arith.constant 0 : index
      %c0_16 = arith.constant 0 : index
      %20 = vector.load %arg18[%c0_15, %c0_16] : memref<8x2048xf32, #tpu.memory_space<vmem>>, vector<8x2048xf32>
      %c0_17 = arith.constant 0 : index
      %c0_18 = arith.constant 0 : index
      %21 = vector.load %arg5[%c0_17, %c0_18] : memref<1x2048xf32, #tpu.memory_space<vmem>>, vector<1x2048xf32>
      %22 = vector.broadcast %21 : vector<1x2048xf32> to vector<8x2048xf32>
      %23 = arith.addf %20, %22 : vector<8x2048xf32>
      %cst_19 = arith.constant 0.000000e+00 : f32
      %24 = vector.broadcast %cst_19 : f32 to vector<8x2048xf32>
      %25 = arith.maximumf %23, %24 : vector<8x2048xf32>
      %26 = arith.truncf %25 : vector<8x2048xf32> to vector<8x2048xbf16>
      %c0_20 = arith.constant 0 : index
      %c0_21 = arith.constant 0 : index
      %27 = vector.load %arg6[%c0_20, %c0_21] : memref<2048x512xbf16, #tpu.memory_space<vmem>>, vector<2048x512xbf16>
      %cst_22 = arith.constant dense<0.000000e+00> : vector<8x512xf32>
      %28 = tpu.matmul %26, %27, %cst_22 {dimension_numbers = #tpu.dot_dimension_numbers<[1], [0], [0], [1], [0, 0, 1, 1], [], []>} : vector<8x2048xbf16>, vector<2048x512xbf16>, vector<8x512xf32> -> vector<8x512xf32>
      %c0_23 = arith.constant 0 : index
      %c0_24 = arith.constant 0 : index
      %29 = vector.load %arg7[%c0_23, %c0_24] : memref<1x512xf32, #tpu.memory_space<vmem>>, vector<1x512xf32>
      %30 = vector.broadcast %29 : vector<1x512xf32> to vector<8x512xf32>
      %31 = arith.addf %28, %30 : vector<8x512xf32>
      %cst_25 = arith.constant dense<0.000000e+00> : vector<512xf32>
      %32 = vector.multi_reduction <add>, %31, %cst_25 [0] : vector<8x512xf32> to vector<512xf32>
      %33 = vector.shape_cast %32 : vector<512xf32> to vector<1x512xf32>
      %cst_26 = arith.constant 8.000000e+00 : f32
      %34 = vector.broadcast %cst_26 : f32 to vector<1x512xf32>
      %35 = arith.divf %33, %34 : vector<1x512xf32>
      %36 = vector.broadcast %35 : vector<1x512xf32> to vector<8x512xf32>
      %37 = arith.subf %31, %36 : vector<8x512xf32>
      %38 = arith.mulf %37, %37 : vector<8x512xf32>
      %cst_27 = arith.constant dense<0.000000e+00> : vector<512xf32>
      %39 = vector.multi_reduction <add>, %38, %cst_27 [0] : vector<8x512xf32> to vector<512xf32>
      %40 = vector.shape_cast %39 : vector<512xf32> to vector<1x512xf32>
      %cst_28 = arith.constant 8.000000e+00 : f32
      %41 = vector.broadcast %cst_28 : f32 to vector<1x512xf32>
      %42 = arith.divf %40, %41 : vector<1x512xf32>
      %43 = vector.broadcast %35 : vector<1x512xf32> to vector<8x512xf32>
      %44 = arith.subf %31, %43 : vector<8x512xf32>
      %cst_29 = arith.constant 9.99999974E-6 : f32
      %45 = vector.broadcast %cst_29 : f32 to vector<1x512xf32>
      %46 = arith.addf %42, %45 : vector<1x512xf32>
      %47 = math.rsqrt %46 : vector<1x512xf32>
      %48 = vector.broadcast %47 : vector<1x512xf32> to vector<8x512xf32>
      %49 = arith.mulf %44, %48 : vector<8x512xf32>
      %c0_30 = arith.constant 0 : index
      %c0_31 = arith.constant 0 : index
      %50 = vector.load %arg8[%c0_30, %c0_31] : memref<1x512xf32, #tpu.memory_space<vmem>>, vector<1x512xf32>
      %51 = vector.broadcast %50 : vector<1x512xf32> to vector<8x512xf32>
      %52 = arith.mulf %49, %51 : vector<8x512xf32>
      %c0_32 = arith.constant 0 : index
      %c0_33 = arith.constant 0 : index
      %53 = vector.load %arg9[%c0_32, %c0_33] : memref<1x512xf32, #tpu.memory_space<vmem>>, vector<1x512xf32>
      %54 = vector.broadcast %53 : vector<1x512xf32> to vector<8x512xf32>
      %55 = arith.addf %52, %54 : vector<8x512xf32>
      %c0_34 = arith.constant 0 : index
      %c0_35 = arith.constant 0 : index
      %56 = vector.load %arg11[%c0_34, %c0_35] : memref<512x128xf32, #tpu.memory_space<vmem>>, vector<512x128xf32>
      %cst_36 = arith.constant dense<0.000000e+00> : vector<8x128xf32>
      %57 = tpu.matmul %55, %56, %cst_36 {dimension_numbers = #tpu.dot_dimension_numbers<[1], [0], [0], [1], [0, 0, 1, 1], [], []>} : vector<8x512xf32>, vector<512x128xf32>, vector<8x128xf32> -> vector<8x128xf32>
      %c0_37 = arith.constant 0 : index
      %c0_38 = arith.constant 0 : index
      %58 = vector.load %arg12[%c0_37, %c0_38] : memref<1x128xf32, #tpu.memory_space<vmem>>, vector<1x128xf32>
      %cst_39 = arith.constant 2.000000e+00 : f32
      %59 = vector.broadcast %cst_39 : f32 to vector<8x128xf32>
      %60 = arith.mulf %59, %57 : vector<8x128xf32>
      %61 = vector.broadcast %58 : vector<1x128xf32> to vector<8x128xf32>
      %62 = arith.subf %61, %60 : vector<8x128xf32>
      %cst_40 = arith.constant dense<0x7F800000> : vector<8xf32>
      %63 = vector.multi_reduction <minimumf>, %62, %cst_40 [1] : vector<8x128xf32> to vector<8xf32>
      %64 = vector.shape_cast %63 : vector<8xf32> to vector<8x1xf32>
      %65 = tpu.iota {dimensions = array<i32: 1>} : vector<8x128xi32>
      %66 = vector.broadcast %64 : vector<8x1xf32> to vector<8x128xf32>
      %67 = arith.cmpf oeq, %62, %66 : vector<8x128xf32>
      %c128_i32 = arith.constant 128 : i32
      %68 = vector.broadcast %c128_i32 : i32 to vector<8x128xi32>
      %69 = arith.select %67, %65, %68 : vector<8x128xi1>, vector<8x128xi32>
      %cst_41 = arith.constant dense<2147483647> : vector<8xi32>
      %70 = vector.multi_reduction <minsi>, %69, %cst_41 [1] : vector<8x128xi32> to vector<8xi32>
      %71 = vector.shape_cast %70 : vector<8xi32> to vector<8x1xi32>
      %72 = vector.broadcast %71 : vector<8x1xi32> to vector<8x128xi32>
      %73 = arith.cmpi eq, %65, %72 : vector<8x128xi32>
      %74 = arith.extui %73 : vector<8x128xi1> to vector<8x128xi32>
      %75 = arith.sitofp %74 : vector<8x128xi32> to vector<8x128xf32>
      %c0_42 = arith.constant 0 : index
      %c0_43 = arith.constant 0 : index
      %76 = vector.load %arg10[%c0_42, %c0_43] : memref<128x512xf32, #tpu.memory_space<vmem>>, vector<128x512xf32>
      %cst_44 = arith.constant dense<0.000000e+00> : vector<8x512xf32>
      %77 = tpu.matmul %75, %76, %cst_44 {dimension_numbers = #tpu.dot_dimension_numbers<[1], [0], [0], [1], [0, 0, 1, 1], [], []>} : vector<8x128xf32>, vector<128x512xf32>, vector<8x512xf32> -> vector<8x512xf32>
      %78 = arith.subf %77, %55 : vector<8x512xf32>
      %79 = arith.mulf %78, %78 : vector<8x512xf32>
      %80 = vector.shape_cast %79 : vector<8x512xf32> to vector<1x8x512xf32>
      %cst_45 = arith.constant dense<0.000000e+00> : vector<1xf32>
      %81 = vector.multi_reduction <add>, %80, %cst_45 [1, 2] : vector<1x8x512xf32> to vector<1xf32>
      %82 = vector.shape_cast %81 : vector<1xf32> to vector<1x1x1xf32>
      %83 = vector.extract %82[0, 0, 0] : f32 from vector<1x1x1xf32>
      %cst_46 = arith.constant 4.096000e+03 : f32
      %84 = arith.divf %83, %cst_46 : f32
      %c0_47 = arith.constant 0 : index
      %c0_48 = arith.constant 0 : index
      %85 = memref.load %arg16[%c0_47, %c0_48] : memref<1x1xf32, #tpu.memory_space<smem>>
      memref.store %84, %arg16[%c0_47, %c0_48] : memref<1x1xf32, #tpu.memory_space<smem>>
      %c0_49 = arith.constant 0 : index
      %c0_50 = arith.constant 0 : index
      %86 = memref.load %arg17[%c0_49, %c0_50] : memref<1x1xf32, #tpu.memory_space<smem>>
      memref.store %84, %arg17[%c0_49, %c0_50] : memref<1x1xf32, #tpu.memory_space<smem>>
      %87 = arith.truncf %77 : vector<8x512xf32> to vector<8x512xbf16>
      %c0_51 = arith.constant 0 : index
      %c0_52 = arith.constant 0 : index
      %88 = vector.load %arg13[%c0_51, %c0_52] : memref<512x1024xbf16, #tpu.memory_space<vmem>>, vector<512x1024xbf16>
      %cst_53 = arith.constant dense<0.000000e+00> : vector<8x1024xf32>
      %89 = tpu.matmul %87, %88, %cst_53 {dimension_numbers = #tpu.dot_dimension_numbers<[1], [0], [0], [1], [0, 0, 1, 1], [], []>} : vector<8x512xbf16>, vector<512x1024xbf16>, vector<8x1024xf32> -> vector<8x1024xf32>
      %c0_54 = arith.constant 0 : index
      %c0_55 = arith.constant 0 : index
      %90 = vector.load %arg14[%c0_54, %c0_55] : memref<1x1024xf32, #tpu.memory_space<vmem>>, vector<1x1024xf32>
      %91 = vector.broadcast %90 : vector<1x1024xf32> to vector<8x1024xf32>
      %92 = arith.addf %89, %91 : vector<8x1024xf32>
      %c0_56 = arith.constant 0 : index
      %c0_57 = arith.constant 0 : index
      %93 = vector.load %arg15[%c0_56, %c0_57] : memref<8x1024xf32, #tpu.memory_space<vmem>>, vector<8x1024xf32>
      tpu.vector_store %arg15[%c0_56, %c0_57], %92 {strides = array<i32>} : memref<8x1024xf32, #tpu.memory_space<vmem>>, vector<8x1024xf32>,
    } else {
    }
    return
  }
  func.func @transform_0(%arg0: i32) -> (i32, i32) {
    %c0_i32 = arith.constant 0 : i32
    %c0_i32_0 = arith.constant 0 : i32
    %c0_i32_1 = arith.constant 0 : i32
    return %c0_i32, %c0_i32_0 : i32, i32
  }
  func.func @transform_1(%arg0: i32) -> (i32, i32) {
    %c0_i32 = arith.constant 0 : i32
    %c0_i32_0 = arith.constant 0 : i32
    return %c0_i32, %arg0 : i32, i32
  }
  func.func @transform_2(%arg0: i32) -> (i32, i32) {
    %c0_i32 = arith.constant 0 : i32
    %c0_i32_0 = arith.constant 0 : i32
    return %c0_i32, %arg0 : i32, i32
  }
  func.func @transform_3(%arg0: i32) -> (i32, i32) {
    %c0_i32 = arith.constant 0 : i32
    %c0_i32_0 = arith.constant 0 : i32
    return %arg0, %c0_i32 : i32, i32
  }
  func.func @transform_4(%arg0: i32) -> (i32, i32) {
    %c0_i32 = arith.constant 0 : i32
    %c0_i32_0 = arith.constant 0 : i32
    %c0_i32_1 = arith.constant 0 : i32
    return %c0_i32, %c0_i32_0 : i32, i32
  }
  func.func @transform_5(%arg0: i32) -> (i32, i32) {
    %c0_i32 = arith.constant 0 : i32
    %c0_i32_0 = arith.constant 0 : i32
    %c0_i32_1 = arith.constant 0 : i32
    return %c0_i32, %c0_i32_0 : i32, i32
  }
  func.func @transform_6(%arg0: i32) -> (i32, i32) {
    %c0_i32 = arith.constant 0 : i32
    %c0_i32_0 = arith.constant 0 : i32
    %c0_i32_1 = arith.constant 0 : i32
    return %c0_i32, %c0_i32_0 : i32, i32
  }
  func.func @transform_7(%arg0: i32) -> (i32, i32) {
    %c0_i32 = arith.constant 0 : i32
    %c0_i32_0 = arith.constant 0 : i32
    %c0_i32_1 = arith.constant 0 : i32
    return %c0_i32, %c0_i32_0 : i32, i32
  }
  func.func @transform_8(%arg0: i32) -> (i32, i32) {
    %c0_i32 = arith.constant 0 : i32
    %c0_i32_0 = arith.constant 0 : i32
    %c0_i32_1 = arith.constant 0 : i32
    return %c0_i32, %c0_i32_0 : i32, i32
  }
  func.func @transform_9(%arg0: i32) -> (i32, i32) {
    %c0_i32 = arith.constant 0 : i32
    %c0_i32_0 = arith.constant 0 : i32
    %c0_i32_1 = arith.constant 0 : i32
    return %c0_i32, %c0_i32_0 : i32, i32
  }
  func.func @transform_10(%arg0: i32) -> (i32, i32) {
    %c0_i32 = arith.constant 0 : i32
    %c0_i32_0 = arith.constant 0 : i32
    %c0_i32_1 = arith.constant 0 : i32
    return %c0_i32, %c0_i32_0 : i32, i32
  }
  func.func @transform_11(%arg0: i32) -> (i32, i32) {
    %c0_i32 = arith.constant 0 : i32
    %c0_i32_0 = arith.constant 0 : i32
    %c0_i32_1 = arith.constant 0 : i32
    return %c0_i32, %c0_i32_0 : i32, i32
  }
  func.func @transform_12(%arg0: i32) -> (i32, i32) {
    %c0_i32 = arith.constant 0 : i32
    %c0_i32_0 = arith.constant 0 : i32
    %c0_i32_1 = arith.constant 0 : i32
    return %c0_i32, %c0_i32_0 : i32, i32
  }
  func.func @transform_13(%arg0: i32) -> (i32, i32) {
    %c0_i32 = arith.constant 0 : i32
    %c0_i32_0 = arith.constant 0 : i32
    %c0_i32_1 = arith.constant 0 : i32
    return %c0_i32, %c0_i32_0 : i32, i32
  }
  func.func @transform_14(%arg0: i32) -> (i32, i32) {
    %c0_i32 = arith.constant 0 : i32
    %c0_i32_0 = arith.constant 0 : i32
    %c0_i32_1 = arith.constant 0 : i32
    return %c0_i32, %c0_i32_0 : i32, i32
  }
  func.func @transform_15(%arg0: i32) -> (i32, i32) {
    %c0_i32 = arith.constant 0 : i32
    %c0_i32_0 = arith.constant 0 : i32
    %c0_i32_1 = arith.constant 0 : i32
    return %c0_i32, %c0_i32_0 : i32, i32
  }
  func.func @transform_16(%arg0: i32) -> (i32, i32) {
    %c0_i32 = arith.constant 0 : i32
    %c0_i32_0 = arith.constant 0 : i32
    %c0_i32_1 = arith.constant 0 : i32
    return %c0_i32, %c0_i32_0 : i32, i32
  }
}

</mosaic_0001>

<llo_original>
// kernel: tpu_custom_call.1
$region0: #{tpu_custom_call.1}
  #allocation0 [shape = 'u32[]', space=smem, size = 0x4, offset = 0x4, fixed_abs, tag = 'smem constant byte address 0x4 - core index']
  #allocation1 [shape = 'u32[144,128]{1,0:T(1,128)}', space=vmem, size = 0x12000, scoped, tag = 'internal scratch']
  #allocation2 [shape = 'f32[8,2048]{1,0:T(8,128)}', space=vmem, size = 0x10000, scoped, tag = 'scratch operand']
  %s0 = inlined_call_operand.hbm [shape: bf16[8,1024], index: 0, kind: input, shape index: {}]
  %s1 = inlined_call_operand.hbm [shape: bf16[1024,2048], index: 1, kind: input, shape index: {}]
  %s2 = inlined_call_operand.hbm [shape: f32[1,2048], index: 2, kind: input, shape index: {}]
  %s3 = inlined_call_operand.hbm [shape: bf16[2048,2048], index: 3, kind: input, shape index: {}]
  %s4 = inlined_call_operand.hbm [shape: f32[1,2048], index: 4, kind: input, shape index: {}]
  %s5 = inlined_call_operand.hbm [shape: bf16[2048,512], index: 5, kind: input, shape index: {}]
  %s6 = inlined_call_operand.hbm [shape: f32[1,512], index: 6, kind: input, shape index: {}]
  %s7 = inlined_call_operand.hbm [shape: f32[1,512], index: 7, kind: input, shape index: {}]
  %s8 = inlined_call_operand.hbm [shape: f32[1,512], index: 8, kind: input, shape index: {}]
  %s9 = inlined_call_operand.hbm [shape: f32[128,512], index: 9, kind: input, shape index: {}]
  %s10 = inlined_call_operand.hbm [shape: f32[512,128], index: 10, kind: input, shape index: {}]
  %s11 = inlined_call_operand.hbm [shape: f32[1,128], index: 11, kind: input, shape index: {}]
  %s12 = inlined_call_operand.hbm [shape: bf16[512,1024], index: 12, kind: input, shape index: {}]
  %s13 = inlined_call_operand.hbm [shape: f32[1,1024], index: 13, kind: input, shape index: {}]
  %s14 = inlined_call_operand.hbm [shape: f32[8,1024], index: 14, kind: output, shape index: {0}]
  %s15 = inlined_call_operand.hbm [shape: f32[1,1], index: 15, kind: output, shape index: {1}]
  %s16 = inlined_call_operand.hbm [shape: f32[1,1], index: 16, kind: output, shape index: {2}]
  %17 = xla_tuple %s14, %s15, %s16
  %s18 = sld [smem:[#allocation0]]
  $region169: #{tpu_custom_call.1} parent=0
    _
  %s20 = ssub.s32 1, %s18
  %s21 = scalar_select 0, %s20, %s18
  $region1: #{tpu_custom_call.1} parent=0
    #allocation3 [shape = 'u8[16384]{0}', space=vmem, size = 0x4000, scoped, tag = 'input window, operand 0, single buffered']
    #allocation4 [shape = 's32[2]{0}', space=sflag, size = 0x8, scoped, tag = 'scoped memory for tpu_custom_call.1']
    #allocation5 [shape = 's32[2]{0}', space=sflag, size = 0x8, scoped, tag = 'scoped memory for tpu_custom_call.1']
    #allocation6 [shape = 's32[2]{0}', space=sflag, size = 0x8, scoped, tag = 'scoped memory for tpu_custom_call.1']
    #allocation7 [shape = 'u8[1048576]{0}', space=vmem, size = 0x100000, scoped, tag = 'input window, operand 1']
    #allocation8 [shape = 's32[2]{0}', space=sflag, size = 0x8, scoped, tag = 'scoped memory for tpu_custom_call.1']
    #allocation9 [shape = 'u8[2048]{0}', space=vmem, size = 0x800, scoped, tag = 'input window, operand 2']
    #allocation10 [shape = 'u8[2097152]{0}', space=vmem, size = 0x200000, scoped, tag = 'input window, operand 3']
    #allocation11 [shape = 's32[2]{0}', space=sflag, size = 0x8, scoped, tag = 'scoped memory for tpu_custom_call.1']
    #allocation12 [shape = 'u8[8192]{0}', space=vmem, size = 0x2000, scoped, tag = 'input window, operand 4, single buffered']
    #allocation13 [shape = 'u8[2097152]{0}', space=vmem, size = 0x200000, scoped, tag = 'input window, operand 5, single buffered']
    #allocation14 [shape = 's32[1]{0}', space=sflag, size = 0x4, scoped, tag = 'scoped memory for tpu_custom_call.1']
    #allocation15 [shape = 'u8[2048]{0}', space=vmem, size = 0x800, scoped, tag = 'input window, operand 6, single buffered']
    #allocation16 [shape = 'u8[2048]{0}', space=vmem, size = 0x800, scoped, tag = 'input window, operand 7, single buffered']
    #allocation17 [shape = 's32[1]{0}', space=sflag, size = 0x4, scoped, tag = 'scoped memory for tpu_custom_call.1']
    #allocation18 [shape = 'u8[2048]{0}', space=vmem, size = 0x800, scoped, tag = 'input window, operand 8, single buffered']
    #allocation19 [shape = 'u8[262144]{0}', space=vmem, size = 0x40000, scoped, tag = 'input window, operand 9, single buffered']
    #allocation20 [shape = 's32[1]{0}', space=sflag, size = 0x4, scoped, tag = 'scoped memory for tpu_custom_call.1']
    #allocation21 [shape = 'u8[262144]{0}', space=vmem, size = 0x40000, scoped, tag = 'input window, operand 10, single buffered']
    #allocation22 [shape = 'u8[512]{0}', space=vmem, size = 0x400, scoped, tag = 'input window, operand 11, single buffered']
    #allocation23 [shape = 's32[1]{0}', space=sflag, size = 0x4, scoped, tag = 'scoped memory for tpu_custom_call.1']
    #allocation24 [shape = 'u8[1048576]{0}', space=vmem, size = 0x100000, scoped, tag = 'input window, operand 12, single buffered']
    #allocation25 [shape = 'u8[4096]{0}', space=vmem, size = 0x1000, scoped, tag = 'input window, operand 13, single buffered']
    #allocation26 [shape = 's32[1]{0}', space=sflag, size = 0x4, scoped, tag = 'scoped memory for tpu_custom_call.1']
    #allocation27 [shape = 'u8[32768]{0}', space=vmem, size = 0x8000, scoped, tag = 'output window, operand 0, single buffered']
    #allocation28 [shape = 'u8[512]{0}', space=smem, size = 0x200, scoped, tag = 'output window, operand 1, single buffered']
    #allocation29 [shape = 'u8[512]{0}', space=smem, size = 0x200, scoped, tag = 'output window, operand 2, single buffered']
    #allocation30 [shape = 's32[1]{0}', space=sflag, size = 0x4, scoped, tag = 'scoped memory for tpu_custom_call.1']
    %22 = vsyncpa [#allocation4], 0
    %23 = vsyncpa [#allocation8], 0
    %s24 = scalar_lea.sflag [#allocation8], 1
    %25 = vsyncpa %s24, 0
    %26 = vsyncpa [#allocation11], 0
    %s27 = scalar_lea.sflag [#allocation11], 1
    %28 = vsyncpa %s27, 0
    %29 = vsyncpa [#allocation14], 0
    %30 = vsyncpa [#allocation17], 0
    %31 = vsyncpa [#allocation20], 0
    %32 = vsyncpa [#allocation23], 0
    %33 = vsyncpa [#allocation26], 0
    %34 = vsyncpa [#allocation5], 0
    %35 = vsyncpa [#allocation6], 0
    %36 = vsyncpa [#allocation30], 0
    loop: start=0, step=1, limit=10
    $region2: #{tpu_custom_call.1} parent=1 // loop_pre_header
      _
    $region3: #{tpu_custom_call.1} parent=1 // loop_header
      %s38 = sphi 0, %s42
      %p39 = scmp.ge.s32.totalorder %s38, 10
      %s46 = sphi 0, %s46
      %s48 = sphi 0, %s46
      %s49 = sphi 0, %s48
      %s63 = sphi 0, %s49
      %s69 = sphi 0, %s71
      %s72 = sphi 0, %s69
      %s73 = sphi 0, %s72
      %s89 = sphi 0, %s73
      %s95 = sphi 0, %s97
      %s98 = sphi 0, %s95
      %s99 = sphi 0, %s98
      %s115 = sphi 0, %s99
      %s121 = sphi 0, %s123
      %s124 = sphi 0, %s121
      %s125 = sphi 0, %s124
      %s141 = sphi 0, %s125
      %s145 = sphi 0, %s145
      %s147 = sphi 0, %s145
      %s148 = sphi 0, %s147
      %s162 = sphi 0, %s148
      %s166 = sphi 0, %s166
      %s168 = sphi 0, %s166
      %s169 = sphi 0, %s168
      %s183 = sphi 0, %s169
      %s187 = sphi 0, %s187
      %s189 = sphi 0, %s187
      %s190 = sphi 0, %s189
      %s204 = sphi 0, %s190
      %s208 = sphi 0, %s208
      %s210 = sphi 0, %s208
      %s211 = sphi 0, %s210
      %s225 = sphi 0, %s211
      %s229 = sphi 0, %s229
      %s231 = sphi 0, %s229
      %s232 = sphi 0, %s231
      %s246 = sphi 0, %s232
      %s250 = sphi 0, %s250
      %s252 = sphi 0, %s250
      %s253 = sphi 0, %s252
      %s267 = sphi 0, %s253
      %s271 = sphi 0, %s271
      %s273 = sphi 0, %s271
      %s274 = sphi 0, %s273
      %s288 = sphi 0, %s274
      %s292 = sphi 0, %s292
      %s294 = sphi 0, %s292
      %s295 = sphi 0, %s294
      %s309 = sphi 0, %s295
      %s313 = sphi 0, %s313
      %s315 = sphi 0, %s313
      %s316 = sphi 0, %s315
      %s330 = sphi 0, %s316
      %s334 = sphi 0, %s334
      %s336 = sphi 0, %s334
      %s337 = sphi 0, %s336
      %s351 = sphi 0, %s337
      %s355 = sphi 0, %s355
      %s357 = sphi 0, %s355
      %s358 = sphi 0, %s357
      %s372 = sphi 0, %s358
      %s376 = sphi 0, %s376
      %s378 = sphi 0, %s376
      %s379 = sphi 0, %s378
      %s393 = sphi 0, %s379
      %s397 = sphi 0, %s397
      %s399 = sphi 0, %s397
      %s400 = sphi 0, %s399
      %s414 = sphi 0, %s400
    $region4: #{tpu_custom_call.1} parent=1 // loop_header_branch
      %41 = sbr.rel (%p39) target = $region8
    $region5: #{tpu_custom_call.1} parent=1 // loop_body
      %s43 = ssub.s32 %s38, 1
      %s44 = ssub.s32 %s38, 2
      %s45 = sadd.s32 %s38, 1
      %s47 = sadd.s32 %s46, 1
      %p50 = scmp.eq.s32.totalorder %s38, 7
      %p51 = scmp.ne.s32.totalorder %s46, %s48
      %p52 = scmp.eq.s32.totalorder %s38, 0
      %p53 = por %p51, %p52
      %p54 = scmp.ne.s32.totalorder %s46, %s48
      %p55 = scmp.eq.s32.totalorder %s43, 7
      %p56 = por %p54, %p55
      %p57 = scmp.ne.s32.totalorder %s48, %s49
      %p58 = scmp.eq.s32.totalorder %s43, 0
      %p59 = por %p57, %p58
      %p60 = scmp.ne.s32.totalorder %s48, %s49
      %p61 = scmp.eq.s32.totalorder %s44, 7
      %p62 = por %p60, %p61
      %p64 = scmp.ne.s32.totalorder %s49, %s63
      %p65 = scmp.eq.s32.totalorder %s44, 0
      %p66 = por %p64, %p65
      %s67 = ssub.s32 %s38, %s45
      %p68 = scmp.eq.s32.totalorder %s67, 0
      %s70 = sadd.s32 %s69, 1
      %s71 = scalar_select %p68, %s69, %s70
      %p74 = pneg %p68
      %p75 = scmp.eq.s32.totalorder %s38, 7
      %p76 = por %p74, %p75
      %p77 = scmp.ne.s32.totalorder %s69, %s72
      %p78 = scmp.eq.s32.totalorder %s38, 0
      %p79 = por %p77, %p78
      %p80 = scmp.ne.s32.totalorder %s69, %s72
      %p81 = scmp.eq.s32.totalorder %s43, 7
      %p82 = por %p80, %p81
      %p83 = scmp.ne.s32.totalorder %s72, %s73
      %p84 = scmp.eq.s32.totalorder %s43, 0
      %p85 = por %p83, %p84
      %p86 = scmp.ne.s32.totalorder %s72, %s73
      %p87 = scmp.eq.s32.totalorder %s44, 7
      %p88 = por %p86, %p87
      %p90 = scmp.ne.s32.totalorder %s73, %s89
      %p91 = scmp.eq.s32.totalorder %s44, 0
      %p92 = por %p90, %p91
      %s93 = ssub.s32 %s38, %s45
      %p94 = scmp.eq.s32.totalorder %s93, 0
      %s96 = sadd.s32 %s95, 1
      %s97 = scalar_select %p94, %s95, %s96
      %p100 = pneg %p94
      %p101 = scmp.eq.s32.totalorder %s38, 7
      %p102 = por %p100, %p101
      %p103 = scmp.ne.s32.totalorder %s95, %s98
      %p104 = scmp.eq.s32.totalorder %s38, 0
      %p105 = por %p103, %p104
      %p106 = scmp.ne.s32.totalorder %s95, %s98
      %p107 = scmp.eq.s32.totalorder %s43, 7
      %p108 = por %p106, %p107
      %p109 = scmp.ne.s32.totalorder %s98, %s99
      %p110 = scmp.eq.s32.totalorder %s43, 0
      %p111 = por %p109, %p110
      %p112 = scmp.ne.s32.totalorder %s98, %s99
      %p113 = scmp.eq.s32.totalorder %s44, 7
      %p114 = por %p112, %p113
      %p116 = scmp.ne.s32.totalorder %s99, %s115
      %p117 = scmp.eq.s32.totalorder %s44, 0
      %p118 = por %p116, %p117
      %s119 = ssub.s32 %s38, %s45
      %p120 = scmp.eq.s32.totalorder %s119, 0
      %s122 = sadd.s32 %s121, 1
      %s123 = scalar_select %p120, %s121, %s122
      %p126 = pneg %p120
      %p127 = scmp.eq.s32.totalorder %s38, 7
      %p128 = por %p126, %p127
      %p129 = scmp.ne.s32.totalorder %s121, %s124
      %p130 = scmp.eq.s32.totalorder %s38, 0
      %p131 = por %p129, %p130
      %p132 = scmp.ne.s32.totalorder %s121, %s124
      %p133 = scmp.eq.s32.totalorder %s43, 7
      %p134 = por %p132, %p133
      %p135 = scmp.ne.s32.totalorder %s124, %s125
      %p136 = scmp.eq.s32.totalorder %s43, 0
      %p137 = por %p135, %p136
      %p138 = scmp.ne.s32.totalorder %s124, %s125
      %p139 = scmp.eq.s32.totalorder %s44, 7
      %p140 = por %p138, %p139
      %p142 = scmp.ne.s32.totalorder %s125, %s141
      %p143 = scmp.eq.s32.totalorder %s44, 0
      %p144 = por %p142, %p143
      %s146 = sadd.s32 %s145, 1
      %p149 = scmp.eq.s32.totalorder %s38, 7
      %p150 = scmp.ne.s32.totalorder %s145, %s147
      %p151 = scmp.eq.s32.totalorder %s38, 0
      %p152 = por %p150, %p151
      %p153 = scmp.ne.s32.totalorder %s145, %s147
      %p154 = scmp.eq.s32.totalorder %s43, 7
      %p155 = por %p153, %p154
      %p156 = scmp.ne.s32.totalorder %s147, %s148
      %p157 = scmp.eq.s32.totalorder %s43, 0
      %p158 = por %p156, %p157
      %p159 = scmp.ne.s32.totalorder %s147, %s148
      %p160 = scmp.eq.s32.totalorder %s44, 7
      %p161 = por %p159, %p160
      %p163 = scmp.ne.s32.totalorder %s148, %s162
      %p164 = scmp.eq.s32.totalorder %s44, 0
      %p165 = por %p163, %p164
      %s167 = sadd.s32 %s166, 1
      %p170 = scmp.eq.s32.totalorder %s38, 7
      %p171 = scmp.ne.s32.totalorder %s166, %s168
      %p172 = scmp.eq.s32.totalorder %s38, 0
      %p173 = por %p171, %p172
      %p174 = scmp.ne.s32.totalorder %s166, %s168
      %p175 = scmp.eq.s32.totalorder %s43, 7
      %p176 = por %p174, %p175
      %p177 = scmp.ne.s32.totalorder %s168, %s169
      %p178 = scmp.eq.s32.totalorder %s43, 0
      %p179 = por %p177, %p178
      %p180 = scmp.ne.s32.totalorder %s168, %s169
      %p181 = scmp.eq.s32.totalorder %s44, 7
      %p182 = por %p180, %p181
      %p184 = scmp.ne.s32.totalorder %s169, %s183
      %p185 = scmp.eq.s32.totalorder %s44, 0
      %p186 = por %p184, %p185
      %s188 = sadd.s32 %s187, 1
      %p191 = scmp.eq.s32.totalorder %s38, 7
      %p192 = scmp.ne.s32.totalorder %s187, %s189
      %p193 = scmp.eq.s32.totalorder %s38, 0
      %p194 = por %p192, %p193
      %p195 = scmp.ne.s32.totalorder %s187, %s189
      %p196 = scmp.eq.s32.totalorder %s43, 7
      %p197 = por %p195, %p196
      %p198 = scmp.ne.s32.totalorder %s189, %s190
      %p199 = scmp.eq.s32.totalorder %s43, 0
      %p200 = por %p198, %p199
      %p201 = scmp.ne.s32.totalorder %s189, %s190
      %p202 = scmp.eq.s32.totalorder %s44, 7
      %p203 = por %p201, %p202
      %p205 = scmp.ne.s32.totalorder %s190, %s204
      %p206 = scmp.eq.s32.totalorder %s44, 0
      %p207 = por %p205, %p206
      %s209 = sadd.s32 %s208, 1
      %p212 = scmp.eq.s32.totalorder %s38, 7
      %p213 = scmp.ne.s32.totalorder %s208, %s210
      %p214 = scmp.eq.s32.totalorder %s38, 0
      %p215 = por %p213, %p214
      %p216 = scmp.ne.s32.totalorder %s208, %s210
      %p217 = scmp.eq.s32.totalorder %s43, 7
      %p218 = por %p216, %p217
      %p219 = scmp.ne.s32.totalorder %s210, %s211
      %p220 = scmp.eq.s32.totalorder %s43, 0
      %p221 = por %p219, %p220
      %p222 = scmp.ne.s32.totalorder %s210, %s211
      %p223 = scmp.eq.s32.totalorder %s44, 7
      %p224 = por %p222, %p223
      %p226 = scmp.ne.s32.totalorder %s211, %s225
      %p227 = scmp.eq.s32.totalorder %s44, 0
      %p228 = por %p226, %p227
      %s230 = sadd.s32 %s229, 1
      %p233 = scmp.eq.s32.totalorder %s38, 7
      %p234 = scmp.ne.s32.totalorder %s229, %s231
      %p235 = scmp.eq.s32.totalorder %s38, 0
      %p236 = por %p234, %p235
      %p237 = scmp.ne.s32.totalorder %s229, %s231
      %p238 = scmp.eq.s32.totalorder %s43, 7
      %p239 = por %p237, %p238
      %p240 = scmp.ne.s32.totalorder %s231, %s232
      %p241 = scmp.eq.s32.totalorder %s43, 0
      %p242 = por %p240, %p241
      %p243 = scmp.ne.s32.totalorder %s231, %s232
      %p244 = scmp.eq.s32.totalorder %s44, 7
      %p245 = por %p243, %p244
      %p247 = scmp.ne.s32.totalorder %s232, %s246
      %p248 = scmp.eq.s32.totalorder %s44, 0
      %p249 = por %p247, %p248
      %s251 = sadd.s32 %s250, 1
      %p254 = scmp.eq.s32.totalorder %s38, 7
      %p255 = scmp.ne.s32.totalorder %s250, %s252
      %p256 = scmp.eq.s32.totalorder %s38, 0
      %p257 = por %p255, %p256
      %p258 = scmp.ne.s32.totalorder %s250, %s252
      %p259 = scmp.eq.s32.totalorder %s43, 7
      %p260 = por %p258, %p259
      %p261 = scmp.ne.s32.totalorder %s252, %s253
      %p262 = scmp.eq.s32.totalorder %s43, 0
      %p263 = por %p261, %p262
      %p264 = scmp.ne.s32.totalorder %s252, %s253
      %p265 = scmp.eq.s32.totalorder %s44, 7
      %p266 = por %p264, %p265
      %p268 = scmp.ne.s32.totalorder %s253, %s267
      %p269 = scmp.eq.s32.totalorder %s44, 0
      %p270 = por %p268, %p269
      %s272 = sadd.s32 %s271, 1
      %p275 = scmp.eq.s32.totalorder %s38, 7
      %p276 = scmp.ne.s32.totalorder %s271, %s273
      %p277 = scmp.eq.s32.totalorder %s38, 0
      %p278 = por %p276, %p277
      %p279 = scmp.ne.s32.totalorder %s271, %s273
      %p280 = scmp.eq.s32.totalorder %s43, 7
      %p281 = por %p279, %p280
      %p282 = scmp.ne.s32.totalorder %s273, %s274
      %p283 = scmp.eq.s32.totalorder %s43, 0
      %p284 = por %p282, %p283
      %p285 = scmp.ne.s32.totalorder %s273, %s274
      %p286 = scmp.eq.s32.totalorder %s44, 7
      %p287 = por %p285, %p286
      %p289 = scmp.ne.s32.totalorder %s274, %s288
      %p290 = scmp.eq.s32.totalorder %s44, 0
      %p291 = por %p289, %p290
      %s293 = sadd.s32 %s292, 1
      %p296 = scmp.eq.s32.totalorder %s38, 7
      %p297 = scmp.ne.s32.totalorder %s292, %s294
      %p298 = scmp.eq.s32.totalorder %s38, 0
      %p299 = por %p297, %p298
      %p300 = scmp.ne.s32.totalorder %s292, %s294
      %p301 = scmp.eq.s32.totalorder %s43, 7
      %p302 = por %p300, %p301
      %p303 = scmp.ne.s32.totalorder %s294, %s295
      %p304 = scmp.eq.s32.totalorder %s43, 0
      %p305 = por %p303, %p304
      %p306 = scmp.ne.s32.totalorder %s294, %s295
      %p307 = scmp.eq.s32.totalorder %s44, 7
      %p308 = por %p306, %p307
      %p310 = scmp.ne.s32.totalorder %s295, %s309
      %p311 = scmp.eq.s32.totalorder %s44, 0
      %p312 = por %p310, %p311
      %s314 = sadd.s32 %s313, 1
      %p317 = scmp.eq.s32.totalorder %s38, 7
      %p318 = scmp.ne.s32.totalorder %s313, %s315
      %p319 = scmp.eq.s32.totalorder %s38, 0
      %p320 = por %p318, %p319
      %p321 = scmp.ne.s32.totalorder %s313, %s315
      %p322 = scmp.eq.s32.totalorder %s43, 7
      %p323 = por %p321, %p322
      %p324 = scmp.ne.s32.totalorder %s315, %s316
      %p325 = scmp.eq.s32.totalorder %s43, 0
      %p326 = por %p324, %p325
      %p327 = scmp.ne.s32.totalorder %s315, %s316
      %p328 = scmp.eq.s32.totalorder %s44, 7
      %p329 = por %p327, %p328
      %p331 = scmp.ne.s32.totalorder %s316, %s330
      %p332 = scmp.eq.s32.totalorder %s44, 0
      %p333 = por %p331, %p332
      %s335 = sadd.s32 %s334, 1
      %p338 = scmp.eq.s32.totalorder %s38, 7
      %p339 = scmp.ne.s32.totalorder %s334, %s336
      %p340 = scmp.eq.s32.totalorder %s38, 0
      %p341 = por %p339, %p340
      %p342 = scmp.ne.s32.totalorder %s334, %s336
      %p343 = scmp.eq.s32.totalorder %s43, 7
      %p344 = por %p342, %p343
      %p345 = scmp.ne.s32.totalorder %s336, %s337
      %p346 = scmp.eq.s32.totalorder %s43, 0
      %p347 = por %p345, %p346
      %p348 = scmp.ne.s32.totalorder %s336, %s337
      %p349 = scmp.eq.s32.totalorder %s44, 7
      %p350 = por %p348, %p349
      %p352 = scmp.ne.s32.totalorder %s337, %s351
      %p353 = scmp.eq.s32.totalorder %s44, 0
      %p354 = por %p352, %p353
      %s356 = sadd.s32 %s355, 1
      %p359 = scmp.eq.s32.totalorder %s38, 7
      %p360 = scmp.ne.s32.totalorder %s355, %s357
      %p361 = scmp.eq.s32.totalorder %s38, 0
      %p362 = por %p360, %p361
      %p363 = scmp.ne.s32.totalorder %s355, %s357
      %p364 = scmp.eq.s32.totalorder %s43, 7
      %p365 = por %p363, %p364
      %p366 = scmp.ne.s32.totalorder %s357, %s358
      %p367 = scmp.eq.s32.totalorder %s43, 0
      %p368 = por %p366, %p367
      %p369 = scmp.ne.s32.totalorder %s357, %s358
      %p370 = scmp.eq.s32.totalorder %s44, 7
      %p371 = por %p369, %p370
      %p373 = scmp.ne.s32.totalorder %s358, %s372
      %p374 = scmp.eq.s32.totalorder %s44, 0
      %p375 = por %p373, %p374
      %s377 = sadd.s32 %s376, 1
      %p380 = scmp.eq.s32.totalorder %s38, 7
      %p381 = scmp.ne.s32.totalorder %s376, %s378
      %p382 = scmp.eq.s32.totalorder %s38, 0
      %p383 = por %p381, %p382
      %p384 = scmp.ne.s32.totalorder %s376, %s378
      %p385 = scmp.eq.s32.totalorder %s43, 7
      %p386 = por %p384, %p385
      %p387 = scmp.ne.s32.totalorder %s378, %s379
      %p388 = scmp.eq.s32.totalorder %s43, 0
      %p389 = por %p387, %p388
      %p390 = scmp.ne.s32.totalorder %s378, %s379
      %p391 = scmp.eq.s32.totalorder %s44, 7
      %p392 = por %p390, %p391
      %p394 = scmp.ne.s32.totalorder %s379, %s393
      %p395 = scmp.eq.s32.totalorder %s44, 0
      %p396 = por %p394, %p395
      %s398 = sadd.s32 %s397, 1
      %p401 = scmp.eq.s32.totalorder %s38, 7
      %p402 = scmp.ne.s32.totalorder %s397, %s399
      %p403 = scmp.eq.s32.totalorder %s38, 0
      %p404 = por %p402, %p403
      %p405 = scmp.ne.s32.totalorder %s397, %s399
      %p406 = scmp.eq.s32.totalorder %s43, 7
      %p407 = por %p405, %p406
      %p408 = scmp.ne.s32.totalorder %s399, %s400
      %p409 = scmp.eq.s32.totalorder %s43, 0
      %p410 = por %p408, %p409
      %p411 = scmp.ne.s32.totalorder %s399, %s400
      %p412 = scmp.eq.s32.totalorder %s44, 7
      %p413 = por %p411, %p412
      %p415 = scmp.ne.s32.totalorder %s400, %s414
      %p416 = scmp.eq.s32.totalorder %s44, 0
      %p417 = por %p415, %p416
      %p418 = scmp.le.s32.totalorder 1, %s38
      %p419 = scmp.lt.s32.totalorder %s38, 9
      %p420 = pnand %p418, %p419
      %p421 = pneg %p420
      // Predicated region
      $region9: #{tpu_custom_call.1} parent=5 // pred_check
        _
      $region10: #{tpu_custom_call.1} parent=5 // pred_check_branch
        %423 = sbr.rel (%p420) target = $region12
      $region11: #{tpu_custom_call.1} parent=5 // pred_region
        %s424 = ssub.s32 %s38, 1
        // Predicated region
        $region13: #{tpu_custom_call.1} parent=11 // pred_check
          %p425 = pneg %p59
        $region14: #{tpu_custom_call.1} parent=11 // pred_check_branch
          %427 = sbr.rel (%p425) target = $region16
        $region15: #{tpu_custom_call.1} parent=11 // pred_region
          %s429 = ssub.s32 512, 512
          %430 = vsyncadd [#allocation4], %s429
          %s432 = sshll.u32 [#allocation3], 4
          %s433 = int_to_ptr.vmem [resolvable:$true] %s432
          %435 = dma.hbm_to_vmem [thread:$0]  %s0, 512, %s433, [#allocation4]
        $region16: #{tpu_custom_call.1} parent=11 // pred_fallthru
          _
        // Predicated region
        $region17: #{tpu_custom_call.1} parent=11 // pred_check
          %p436 = pneg %p158
        $region18: #{tpu_custom_call.1} parent=11 // pred_check_branch
          %438 = sbr.rel (%p436) target = $region20
        $region19: #{tpu_custom_call.1} parent=11 // pred_region
          %s440 = ssub.s32 256, 256
          %441 = vsyncadd [#allocation11], %s440
          %s443 = sshll.u32 [#allocation12], 4
          %s444 = int_to_ptr.vmem [resolvable:$true] %s443
          %446 = dma.hbm_to_vmem [thread:$0]  %s4, 256, %s444, [#allocation11]
        $region20: #{tpu_custom_call.1} parent=11 // pred_fallthru
          _
        // Predicated region
        $region21: #{tpu_custom_call.1} parent=11 // pred_check
          %p447 = pneg %p179
        $region22: #{tpu_custom_call.1} parent=11 // pred_check_branch
          %449 = sbr.rel (%p447) target = $region24
        $region23: #{tpu_custom_call.1} parent=11 // pred_region
          %s451 = ssub.s32 65536, 65536
          %452 = vsyncadd [#allocation14], %s451
          %s453 = sshll.u32 [#allocation13], 4
          %s454 = int_to_ptr.vmem [resolvable:$true] %s453
          %459 = dma.hbm_to_vmem [thread:$0]  %s5, 65536, %s454, [#allocation14], 256, 256, 16
        $region24: #{tpu_custom_call.1} parent=11 // pred_fallthru
          _
        // Predicated region
        $region25: #{tpu_custom_call.1} parent=11 // pred_check
          %p460 = pneg %p200
        $region26: #{tpu_custom_call.1} parent=11 // pred_check_branch
          %462 = sbr.rel (%p460) target = $region28
        $region27: #{tpu_custom_call.1} parent=11 // pred_region
          %s464 = ssub.s32 64, 64
          %465 = vsyncadd [#allocation14], %s464
          %s467 = sshll.u32 [#allocation15], 4
          %s468 = int_to_ptr.vmem [resolvable:$true] %s467
          %470 = dma.hbm_to_vmem [thread:$0]  %s6, 64, %s468, [#allocation14]
        $region28: #{tpu_custom_call.1} parent=11 // pred_fallthru
          _
        // Predicated region
        $region29: #{tpu_custom_call.1} parent=11 // pred_check
          %p471 = pneg %p221
        $region30: #{tpu_custom_call.1} parent=11 // pred_check_branch
          %473 = sbr.rel (%p471) target = $region32
        $region31: #{tpu_custom_call.1} parent=11 // pred_region
          %s475 = ssub.s32 64, 64
          %476 = vsyncadd [#allocation17], %s475
          %s478 = sshll.u32 [#allocation16], 4
          %s479 = int_to_ptr.vmem [resolvable:$true] %s478
          %481 = dma.hbm_to_vmem [thread:$0]  %s7, 64, %s479, [#allocation17]
        $region32: #{tpu_custom_call.1} parent=11 // pred_fallthru
          _
        // Predicated region
        $region33: #{tpu_custom_call.1} parent=11 // pred_check
          %p482 = pneg %p242
        $region34: #{tpu_custom_call.1} parent=11 // pred_check_branch
          %484 = sbr.rel (%p482) target = $region36
        $region35: #{tpu_custom_call.1} parent=11 // pred_region
          %s486 = ssub.s32 64, 64
          %487 = vsyncadd [#allocation17], %s486
          %s489 = sshll.u32 [#allocation18], 4
          %s490 = int_to_ptr.vmem [resolvable:$true] %s489
          %492 = dma.hbm_to_vmem [thread:$0]  %s8, 64, %s490, [#allocation17]
        $region36: #{tpu_custom_call.1} parent=11 // pred_fallthru
          _
        // Predicated region
        $region37: #{tpu_custom_call.1} parent=11 // pred_check
          %p493 = pneg %p263
        $region38: #{tpu_custom_call.1} parent=11 // pred_check_branch
          %495 = sbr.rel (%p493) target = $region40
        $region39: #{tpu_custom_call.1} parent=11 // pred_region
          %s497 = ssub.s32 8192, 8192
          %498 = vsyncadd [#allocation20], %s497
          %s499 = sshll.u32 [#allocation19], 4
          %s500 = int_to_ptr.vmem [resolvable:$true] %s499
          %505 = dma.hbm_to_vmem [thread:$0]  %s9, 8192, %s500, [#allocation20], 512, 512, 32
        $region40: #{tpu_custom_call.1} parent=11 // pred_fallthru
          _
        // Predicated region
        $region41: #{tpu_custom_call.1} parent=11 // pred_check
          %p506 = pneg %p284
        $region42: #{tpu_custom_call.1} parent=11 // pred_check_branch
          %508 = sbr.rel (%p506) target = $region44
        $region43: #{tpu_custom_call.1} parent=11 // pred_region
          %s510 = ssub.s32 8192, 8192
          %511 = vsyncadd [#allocation20], %s510
          %s512 = sshll.u32 [#allocation21], 4
          %s513 = int_to_ptr.vmem [resolvable:$true] %s512
          %518 = dma.hbm_to_vmem [thread:$0]  %s10, 8192, %s513, [#allocation20], 128, 128, 8
        $region44: #{tpu_custom_call.1} parent=11 // pred_fallthru
          _
        // Predicated region
        $region45: #{tpu_custom_call.1} parent=11 // pred_check
          %p519 = pneg %p305
        $region46: #{tpu_custom_call.1} parent=11 // pred_check_branch
          %521 = sbr.rel (%p519) target = $region48
        $region47: #{tpu_custom_call.1} parent=11 // pred_region
          %s523 = ssub.s32 16, 16
          %524 = vsyncadd [#allocation23], %s523
          %s526 = sshll.u32 [#allocation22], 4
          %s527 = int_to_ptr.vmem [resolvable:$true] %s526
          %529 = dma.hbm_to_vmem [thread:$0]  %s11, 16, %s527, [#allocation23]
        $region48: #{tpu_custom_call.1} parent=11 // pred_fallthru
          _
        // Predicated region
        $region49: #{tpu_custom_call.1} parent=11 // pred_check
          %p530 = pneg %p326
        $region50: #{tpu_custom_call.1} parent=11 // pred_check_branch
          %532 = sbr.rel (%p530) target = $region52
        $region51: #{tpu_custom_call.1} parent=11 // pred_region
          %s534 = ssub.s32 32768, 32768
          %535 = vsyncadd [#allocation23], %s534
          %s536 = sshll.u32 [#allocation24], 4
          %s537 = int_to_ptr.vmem [resolvable:$true] %s536
          %542 = dma.hbm_to_vmem [thread:$0]  %s12, 32768, %s537, [#allocation23], 512, 512, 32
        $region52: #{tpu_custom_call.1} parent=11 // pred_fallthru
          _
        // Predicated region
        $region53: #{tpu_custom_call.1} parent=11 // pred_check
          %p543 = pneg %p347
        $region54: #{tpu_custom_call.1} parent=11 // pred_check_branch
          %545 = sbr.rel (%p543) target = $region56
        $region55: #{tpu_custom_call.1} parent=11 // pred_region
          %s547 = ssub.s32 128, 128
          %548 = vsyncadd [#allocation26], %s547
          %s550 = sshll.u32 [#allocation25], 4
          %s551 = int_to_ptr.vmem [resolvable:$true] %s550
          %553 = dma.hbm_to_vmem [thread:$0]  %s13, 128, %s551, [#allocation26]
        $region56: #{tpu_custom_call.1} parent=11 // pred_fallthru
          _
      $region12: #{tpu_custom_call.1} parent=5 // pred_fallthru
        _
      %p554 = scmp.lt.s32.totalorder %s38, 8
      // Predicated region
      $region57: #{tpu_custom_call.1} parent=5 // pred_check
        %p555 = pneg %p554
      $region58: #{tpu_custom_call.1} parent=5 // pred_check_branch
        %557 = sbr.rel (%p555) target = $region60
      $region59: #{tpu_custom_call.1} parent=5 // pred_region
        // Predicated region
        $region61: #{tpu_custom_call.1} parent=59 // pred_check
          %p558 = pneg %p79
        $region62: #{tpu_custom_call.1} parent=59 // pred_check_branch
          %560 = sbr.rel (%p558) target = $region64
        $region63: #{tpu_custom_call.1} parent=59 // pred_region
          %s561 = sand.u32 %s38, 1
          %s562 = scalar_lea.sflag [#allocation8], %s561
          %s563 = sand.u32 %s69, 1
          %s564 = smul.addr %s563, 1024
          %s565 = scalar_lea.vmem [#allocation7], %s564
          %s566 = smul.u32 2, %s38
          %s568 = ssub.s32 16384, 16384
          %569 = vsyncadd %s562, %s568
          %s570 = smul.addr %s566, 64
          %s571 = scalar_lea.hbm %s1, %s570
          %s572 = sshll.u32 %s565, 4
          %s573 = int_to_ptr.vmem [resolvable:$true] %s572
          %578 = dma.hbm_to_vmem [thread:$0]  %s571, 16384, %s573, %s562, 1024, 128, 8
        $region64: #{tpu_custom_call.1} parent=59 // pred_fallthru
          _
        // Predicated region
        $region65: #{tpu_custom_call.1} parent=59 // pred_check
          %p579 = pneg %p105
        $region66: #{tpu_custom_call.1} parent=59 // pred_check_branch
          %581 = sbr.rel (%p579) target = $region68
        $region67: #{tpu_custom_call.1} parent=59 // pred_region
          %s582 = sand.u32 %s38, 1
          %s583 = scalar_lea.sflag [#allocation8], %s582
          %s584 = sand.u32 %s95, 1
          %s585 = smul.addr %s584, 2
          %s586 = scalar_lea.vmem [#allocation9], %s585
          %s587 = smul.u32 2, %s38
          %s589 = ssub.s32 32, 32
          %590 = vsyncadd %s583, %s589
          %s591 = smul.addr %s587, 16
          %s592 = scalar_lea.hbm %s2, %s591
          %s594 = sshll.u32 %s586, 4
          %s595 = int_to_ptr.vmem [resolvable:$true] %s594
          %597 = dma.hbm_to_vmem [thread:$0]  %s592, 32, %s595, %s583
        $region68: #{tpu_custom_call.1} parent=59 // pred_fallthru
          _
        // Predicated region
        $region69: #{tpu_custom_call.1} parent=59 // pred_check
          %p598 = pneg %p131
        $region70: #{tpu_custom_call.1} parent=59 // pred_check_branch
          %600 = sbr.rel (%p598) target = $region72
        $region71: #{tpu_custom_call.1} parent=59 // pred_region
          %s601 = sand.u32 %s38, 1
          %s602 = scalar_lea.sflag [#allocation11], %s601
          %s603 = sand.u32 %s121, 1
          %s604 = smul.addr %s603, 2048
          %s605 = scalar_lea.vmem [#allocation10], %s604
          %s606 = smul.u32 32, %s38
          %s608 = ssub.s32 32768, 32768
          %609 = vsyncadd %s602, %s608
          %s610 = smul.addr %s606, 16
          %s611 = smul.addr %s610, 64
          %s612 = scalar_lea.hbm %s3, %s611
          %s613 = sshll.u32 %s605, 4
          %s614 = int_to_ptr.vmem [resolvable:$true] %s613
          %619 = dma.hbm_to_vmem [thread:$0]  %s612, 32768, %s614, %s602, 1024, 1024, 64
        $region72: #{tpu_custom_call.1} parent=59 // pred_fallthru
          _
      $region60: #{tpu_custom_call.1} parent=5 // pred_fallthru
        _
      %p620 = scmp.le.s32.totalorder 1, %s38
      %p621 = scmp.lt.s32.totalorder %s38, 9
      %p622 = pnand %p620, %p621
      %p623 = pneg %p622
      // Predicated region
      $region73: #{tpu_custom_call.1} parent=5 // pred_check
        _
      $region74: #{tpu_custom_call.1} parent=5 // pred_check_branch
        %625 = sbr.rel (%p622) target = $region76
      $region75: #{tpu_custom_call.1} parent=5 // pred_region
        %s626 = ssub.s32 %s38, 1
        // Predicated region
        $region77: #{tpu_custom_call.1} parent=75 // pred_check
          %p627 = pneg %p59
        $region78: #{tpu_custom_call.1} parent=75 // pred_check_branch
          %629 = sbr.rel (%p627) target = $region80
        $region79: #{tpu_custom_call.1} parent=75 // pred_region
          %630 = dma.done [#allocation4], 512
        $region80: #{tpu_custom_call.1} parent=75 // pred_fallthru
          _
        %s631 = sand.u32 %s43, 1
        %s632 = scalar_lea.sflag [#allocation8], %s631
        %s633 = sand.u32 %s72, 1
        %s634 = smul.addr %s633, 1024
        %s635 = scalar_lea.vmem [#allocation7], %s634
        // Predicated region
        $region81: #{tpu_custom_call.1} parent=75 // pred_check
          %p636 = pneg %p85
        $region82: #{tpu_custom_call.1} parent=75 // pred_check_branch
          %638 = sbr.rel (%p636) target = $region84
        $region83: #{tpu_custom_call.1} parent=75 // pred_region
          %639 = dma.done %s632, 16384
        $region84: #{tpu_custom_call.1} parent=75 // pred_fallthru
          _
        %s640 = sand.u32 %s43, 1
        %s641 = scalar_lea.sflag [#allocation8], %s640
        %s642 = sand.u32 %s98, 1
        %s643 = smul.addr %s642, 2
        %s644 = scalar_lea.vmem [#allocation9], %s643
        // Predicated region
        $region85: #{tpu_custom_call.1} parent=75 // pred_check
          %p645 = pneg %p111
        $region86: #{tpu_custom_call.1} parent=75 // pred_check_branch
          %647 = sbr.rel (%p645) target = $region88
        $region87: #{tpu_custom_call.1} parent=75 // pred_region
          %648 = dma.done %s641, 32
        $region88: #{tpu_custom_call.1} parent=75 // pred_fallthru
          _
        %s649 = sand.u32 %s43, 1
        %s650 = scalar_lea.sflag [#allocation11], %s649
        %s651 = sand.u32 %s124, 1
        %s652 = smul.addr %s651, 2048
        %s653 = scalar_lea.vmem [#allocation10], %s652
        // Predicated region
        $region89: #{tpu_custom_call.1} parent=75 // pred_check
          %p654 = pneg %p137
        $region90: #{tpu_custom_call.1} parent=75 // pred_check_branch
          %656 = sbr.rel (%p654) target = $region92
        $region91: #{tpu_custom_call.1} parent=75 // pred_region
          %657 = dma.done %s650, 32768
        $region92: #{tpu_custom_call.1} parent=75 // pred_fallthru
          _
        // Predicated region
        $region93: #{tpu_custom_call.1} parent=75 // pred_check
          %p658 = pneg %p158
        $region94: #{tpu_custom_call.1} parent=75 // pred_check_branch
          %660 = sbr.rel (%p658) target = $region96
        $region95: #{tpu_custom_call.1} parent=75 // pred_region
          %661 = dma.done [#allocation11], 256
        $region96: #{tpu_custom_call.1} parent=75 // pred_fallthru
          _
        // Predicated region
        $region97: #{tpu_custom_call.1} parent=75 // pred_check
          %p662 = pneg %p179
        $region98: #{tpu_custom_call.1} parent=75 // pred_check_branch
          %664 = sbr.rel (%p662) target = $region100
        $region99: #{tpu_custom_call.1} parent=75 // pred_region
          %665 = dma.done [#allocation14], 65536
        $region100: #{tpu_custom_call.1} parent=75 // pred_fallthru
          _
        // Predicated region
        $region101: #{tpu_custom_call.1} parent=75 // pred_check
          %p666 = pneg %p200
        $region102: #{tpu_custom_call.1} parent=75 // pred_check_branch
          %668 = sbr.rel (%p666) target = $region104
        $region103: #{tpu_custom_call.1} parent=75 // pred_region
          %669 = dma.done [#allocation14], 64
        $region104: #{tpu_custom_call.1} parent=75 // pred_fallthru
          _
        // Predicated region
        $region105: #{tpu_custom_call.1} parent=75 // pred_check
          %p670 = pneg %p221
        $region106: #{tpu_custom_call.1} parent=75 // pred_check_branch
          %672 = sbr.rel (%p670) target = $region108
        $region107: #{tpu_custom_call.1} parent=75 // pred_region
          %673 = dma.done [#allocation17], 64
        $region108: #{tpu_custom_call.1} parent=75 // pred_fallthru
          _
        // Predicated region
        $region109: #{tpu_custom_call.1} parent=75 // pred_check
          %p674 = pneg %p242
        $region110: #{tpu_custom_call.1} parent=75 // pred_check_branch
          %676 = sbr.rel (%p674) target = $region112
        $region111: #{tpu_custom_call.1} parent=75 // pred_region
          %677 = dma.done [#allocation17], 64
        $region112: #{tpu_custom_call.1} parent=75 // pred_fallthru
          _
        // Predicated region
        $region113: #{tpu_custom_call.1} parent=75 // pred_check
          %p678 = pneg %p263
        $region114: #{tpu_custom_call.1} parent=75 // pred_check_branch
          %680 = sbr.rel (%p678) target = $region116
        $region115: #{tpu_custom_call.1} parent=75 // pred_region
          %681 = dma.done [#allocation20], 8192
        $region116: #{tpu_custom_call.1} parent=75 // pred_fallthru
          _
        // Predicated region
        $region117: #{tpu_custom_call.1} parent=75 // pred_check
          %p682 = pneg %p284
        $region118: #{tpu_custom_call.1} parent=75 // pred_check_branch
          %684 = sbr.rel (%p682) target = $region120
        $region119: #{tpu_custom_call.1} parent=75 // pred_region
          %685 = dma.done [#allocation20], 8192
        $region120: #{tpu_custom_call.1} parent=75 // pred_fallthru
          _
        // Predicated region
        $region121: #{tpu_custom_call.1} parent=75 // pred_check
          %p686 = pneg %p305
        $region122: #{tpu_custom_call.1} parent=75 // pred_check_branch
          %688 = sbr.rel (%p686) target = $region124
        $region123: #{tpu_custom_call.1} parent=75 // pred_region
          %689 = dma.done [#allocation23], 16
        $region124: #{tpu_custom_call.1} parent=75 // pred_fallthru
          _
        // Predicated region
        $region125: #{tpu_custom_call.1} parent=75 // pred_check
          %p690 = pneg %p326
        $region126: #{tpu_custom_call.1} parent=75 // pred_check_branch
          %692 = sbr.rel (%p690) target = $region128
        $region127: #{tpu_custom_call.1} parent=75 // pred_region
          %693 = dma.done [#allocation23], 32768
        $region128: #{tpu_custom_call.1} parent=75 // pred_fallthru
          _
        // Predicated region
        $region129: #{tpu_custom_call.1} parent=75 // pred_check
          %p694 = pneg %p347
        $region130: #{tpu_custom_call.1} parent=75 // pred_check_branch
          %696 = sbr.rel (%p694) target = $region132
        $region131: #{tpu_custom_call.1} parent=75 // pred_region
          %697 = dma.done [#allocation26], 128
        $region132: #{tpu_custom_call.1} parent=75 // pred_fallthru
          _
        %p698 = pneg %p59
        %p699 = pneg %p56
        %s700 = sand.u32 %s43, 1
        %s701 = scalar_lea.sflag [#allocation8], %s700
        %s702 = sand.u32 %s72, 1
        %s703 = smul.addr %s702, 1024
        %s704 = scalar_lea.vmem [#allocation7], %s703
        %p705 = pneg %p85
        %p706 = pneg %p82
        %s707 = sand.u32 %s43, 1
        %s708 = scalar_lea.sflag [#allocation8], %s707
        %s709 = sand.u32 %s98, 1
        %s710 = smul.addr %s709, 2
        %s711 = scalar_lea.vmem [#allocation9], %s710
        %p712 = pneg %p111
        %p713 = pneg %p108
        %s714 = sand.u32 %s43, 1
        %s715 = scalar_lea.sflag [#allocation11], %s714
        %s716 = sand.u32 %s124, 1
        %s717 = smul.addr %s716, 2048
        %s718 = scalar_lea.vmem [#allocation10], %s717
        %p719 = pneg %p137
        %p720 = pneg %p134
        %p721 = pneg %p158
        %p722 = pneg %p155
        %p723 = pneg %p179
        %p724 = pneg %p176
        %p725 = pneg %p200
        %p726 = pneg %p197
        %p727 = pneg %p221
        %p728 = pneg %p218
        %p729 = pneg %p242
        %p730 = pneg %p239
        %p731 = pneg %p263
        %p732 = pneg %p260
        %p733 = pneg %p284
        %p734 = pneg %p281
        %p735 = pneg %p305
        %p736 = pneg %p302
        %p737 = pneg %p326
        %p738 = pneg %p323
        %p739 = pneg %p347
        %p740 = pneg %p344
        %p741 = pneg %p368
        %p742 = pneg %p365
        %p743 = pneg %p389
        %p744 = pneg %p386
        %p745 = pneg %p410
        %p746 = pneg %p407
        %s747 = smul.u32 2, %s43
        %s748 = smul.u32 2, %s43
        %s749 = smul.u32 32, %s43
        %p750 = scmp.eq.s32.totalorder %s43, 0
        // Predicated region
        $region133: #{tpu_custom_call.1} parent=75 // pred_check
          %p751 = pneg %p750
        $region134: #{tpu_custom_call.1} parent=75 // pred_check_branch
          %753 = sbr.rel (%p751) target = $region136
        $region135: #{tpu_custom_call.1} parent=75 // pred_region
          %754 = vst [vmem:[#allocation2] sm:$0xff] 0.0
          %755 = vst [vmem:[#allocation2 + $0x8] sm:$0xff] 0.0
          %756 = vst [vmem:[#allocation2 + $0x10] sm:$0xff] 0.0
          %757 = vst [vmem:[#allocation2 + $0x18] sm:$0xff] 0.0
          %758 = vst [vmem:[#allocation2 + $0x20] sm:$0xff] 0.0
          %759 = vst [vmem:[#allocation2 + $0x28] sm:$0xff] 0.0
          %760 = vst [vmem:[#allocation2 + $0x30] sm:$0xff] 0.0
          %761 = vst [vmem:[#allocation2 + $0x38] sm:$0xff] 0.0
          %762 = vst [vmem:[#allocation2 + $0x40] sm:$0xff] 0.0
          %763 = vst [vmem:[#allocation2 + $0x48] sm:$0xff] 0.0
          %764 = vst [vmem:[#allocation2 + $0x50] sm:$0xff] 0.0
          %765 = vst [vmem:[#allocation2 + $0x58] sm:$0xff] 0.0
          %766 = vst [vmem:[#allocation2 + $0x60] sm:$0xff] 0.0
          %767 = vst [vmem:[#allocation2 + $0x68] sm:$0xff] 0.0
          %768 = vst [vmem:[#allocation2 + $0x70] sm:$0xff] 0.0
          %769 = vst [vmem:[#allocation2 + $0x78] sm:$0xff] 0.0
        $region136: #{tpu_custom_call.1} parent=75 // pred_fallthru
          _
        %v770 = vld [vmem:[#allocation3] sm:$0xff]
        %v771 = vld [vmem:[#allocation3 + $0x8] sm:$0xff]
        %v772 = vld [vmem:[#allocation3 + $0x10] sm:$0xff]
        %v773 = vld [vmem:[#allocation3 + $0x18] sm:$0xff]
        %v774 = vld [vmem:[%s635] sm:$0xff]
        %v775 = vld [vmem:[%s635 + $0x8] sm:$0xff]
        %v776 = vld [vmem:[%s635 + $0x10] sm:$0xff]
        %v777 = vld [vmem:[%s635 + $0x18] sm:$0xff]
        %v778 = vld [vmem:[%s635 + $0x20] sm:$0xff]
        %v779 = vld [vmem:[%s635 + $0x28] sm:$0xff]
        %v780 = vld [vmem:[%s635 + $0x30] sm:$0xff]
        %v781 = vld [vmem:[%s635 + $0x38] sm:$0xff]
        %v782 = vld [vmem:[%s635 + $0x40] sm:$0xff]
        %v783 = vld [vmem:[%s635 + $0x48] sm:$0xff]
        %v784 = vld [vmem:[%s635 + $0x50] sm:$0xff]
        %v785 = vld [vmem:[%s635 + $0x58] sm:$0xff]
        %v786 = vld [vmem:[%s635 + $0x60] sm:$0xff]
        %v787 = vld [vmem:[%s635 + $0x68] sm:$0xff]
        %v788 = vld [vmem:[%s635 + $0x70] sm:$0xff]
        %v789 = vld [vmem:[%s635 + $0x78] sm:$0xff]
        %v790 = vld [vmem:[%s635 + $0x80] sm:$0xff]
        %v791 = vld [vmem:[%s635 + $0x88] sm:$0xff]
        %v792 = vld [vmem:[%s635 + $0x90] sm:$0xff]
        %v793 = vld [vmem:[%s635 + $0x98] sm:$0xff]
        %v794 = vld [vmem:[%s635 + $0xa0] sm:$0xff]
        %v795 = vld [vmem:[%s635 + $0xa8] sm:$0xff]
        %v796 = vld [vmem:[%s635 + $0xb0] sm:$0xff]
        %v797 = vld [vmem:[%s635 + $0xb8] sm:$0xff]
        %v798 = vld [vmem:[%s635 + $0xc0] sm:$0xff]
        %v799 = vld [vmem:[%s635 + $0xc8] sm:$0xff]
        %v800 = vld [vmem:[%s635 + $0xd0] sm:$0xff]
        %v801 = vld [vmem:[%s635 + $0xd8] sm:$0xff]
        %v802 = vld [vmem:[%s635 + $0xe0] sm:$0xff]
        %v803 = vld [vmem:[%s635 + $0xe8] sm:$0xff]
        %v804 = vld [vmem:[%s635 + $0xf0] sm:$0xff]
        %v805 = vld [vmem:[%s635 + $0xf8] sm:$0xff]
        %v806 = vld [vmem:[%s635 + $0x100] sm:$0xff]
        %v807 = vld [vmem:[%s635 + $0x108] sm:$0xff]
        %v808 = vld [vmem:[%s635 + $0x110] sm:$0xff]
        %v809 = vld [vmem:[%s635 + $0x118] sm:$0xff]
        %v810 = vld [vmem:[%s635 + $0x120] sm:$0xff]
        %v811 = vld [vmem:[%s635 + $0x128] sm:$0xff]
        %v812 = vld [vmem:[%s635 + $0x130] sm:$0xff]
        %v813 = vld [vmem:[%s635 + $0x138] sm:$0xff]
        %v814 = vld [vmem:[%s635 + $0x140] sm:$0xff]
        %v815 = vld [vmem:[%s635 + $0x148] sm:$0xff]
        %v816 = vld [vmem:[%s635 + $0x150] sm:$0xff]
        %v817 = vld [vmem:[%s635 + $0x158] sm:$0xff]
        %v818 = vld [vmem:[%s635 + $0x160] sm:$0xff]
        %v819 = vld [vmem:[%s635 + $0x168] sm:$0xff]
        %v820 = vld [vmem:[%s635 + $0x170] sm:$0xff]
        %v821 = vld [vmem:[%s635 + $0x178] sm:$0xff]
        %v822 = vld [vmem:[%s635 + $0x180] sm:$0xff]
        %v823 = vld [vmem:[%s635 + $0x188] sm:$0xff]
        %v824 = vld [vmem:[%s635 + $0x190] sm:$0xff]
        %v825 = vld [vmem:[%s635 + $0x198] sm:$0xff]
        %v826 = vld [vmem:[%s635 + $0x1a0] sm:$0xff]
        %v827 = vld [vmem:[%s635 + $0x1a8] sm:$0xff]
        %v828 = vld [vmem:[%s635 + $0x1b0] sm:$0xff]
        %v829 = vld [vmem:[%s635 + $0x1b8] sm:$0xff]
        %v830 = vld [vmem:[%s635 + $0x1c0] sm:$0xff]
        %v831 = vld [vmem:[%s635 + $0x1c8] sm:$0xff]
        %v832 = vld [vmem:[%s635 + $0x1d0] sm:$0xff]
        %v833 = vld [vmem:[%s635 + $0x1d8] sm:$0xff]
        %v834 = vld [vmem:[%s635 + $0x1e0] sm:$0xff]
        %v835 = vld [vmem:[%s635 + $0x1e8] sm:$0xff]
        %v836 = vld [vmem:[%s635 + $0x1f0] sm:$0xff]
        %v837 = vld [vmem:[%s635 + $0x1f8] sm:$0xff]
        %v838 = vld [vmem:[%s635 + $0x200] sm:$0xff]
        %v839 = vld [vmem:[%s635 + $0x208] sm:$0xff]
        %v840 = vld [vmem:[%s635 + $0x210] sm:$0xff]
        %v841 = vld [vmem:[%s635 + $0x218] sm:$0xff]
        %v842 = vld [vmem:[%s635 + $0x220] sm:$0xff]
        %v843 = vld [vmem:[%s635 + $0x228] sm:$0xff]
        %v844 = vld [vmem:[%s635 + $0x230] sm:$0xff]
        %v845 = vld [vmem:[%s635 + $0x238] sm:$0xff]
        %v846 = vld [vmem:[%s635 + $0x240] sm:$0xff]
        %v847 = vld [vmem:[%s635 + $0x248] sm:$0xff]
        %v848 = vld [vmem:[%s635 + $0x250] sm:$0xff]
        %v849 = vld [vmem:[%s635 + $0x258] sm:$0xff]
        %v850 = vld [vmem:[%s635 + $0x260] sm:$0xff]
        %v851 = vld [vmem:[%s635 + $0x268] sm:$0xff]
        %v852 = vld [vmem:[%s635 + $0x270] sm:$0xff]
        %v853 = vld [vmem:[%s635 + $0x278] sm:$0xff]
        %v854 = vld [vmem:[%s635 + $0x280] sm:$0xff]
        %v855 = vld [vmem:[%s635 + $0x288] sm:$0xff]
        %v856 = vld [vmem:[%s635 + $0x290] sm:$0xff]
        %v857 = vld [vmem:[%s635 + $0x298] sm:$0xff]
        %v858 = vld [vmem:[%s635 + $0x2a0] sm:$0xff]
        %v859 = vld [vmem:[%s635 + $0x2a8] sm:$0xff]
        %v860 = vld [vmem:[%s635 + $0x2b0] sm:$0xff]
        %v861 = vld [vmem:[%s635 + $0x2b8] sm:$0xff]
        %v862 = vld [vmem:[%s635 + $0x2c0] sm:$0xff]
        %v863 = vld [vmem:[%s635 + $0x2c8] sm:$0xff]
        %v864 = vld [vmem:[%s635 + $0x2d0] sm:$0xff]
        %v865 = vld [vmem:[%s635 + $0x2d8] sm:$0xff]
        %v866 = vld [vmem:[%s635 + $0x2e0] sm:$0xff]
        %v867 = vld [vmem:[%s635 + $0x2e8] sm:$0xff]
        %v868 = vld [vmem:[%s635 + $0x2f0] sm:$0xff]
        %v869 = vld [vmem:[%s635 + $0x2f8] sm:$0xff]
        %v870 = vld [vmem:[%s635 + $0x300] sm:$0xff]
        %v871 = vld [vmem:[%s635 + $0x308] sm:$0xff]
        %v872 = vld [vmem:[%s635 + $0x310] sm:$0xff]
        %v873 = vld [vmem:[%s635 + $0x318] sm:$0xff]
        %v874 = vld [vmem:[%s635 + $0x320] sm:$0xff]
        %v875 = vld [vmem:[%s635 + $0x328] sm:$0xff]
        %v876 = vld [vmem:[%s635 + $0x330] sm:$0xff]
        %v877 = vld [vmem:[%s635 + $0x338] sm:$0xff]
        %v878 = vld [vmem:[%s635 + $0x340] sm:$0xff]
        %v879 = vld [vmem:[%s635 + $0x348] sm:$0xff]
        %v880 = vld [vmem:[%s635 + $0x350] sm:$0xff]
        %v881 = vld [vmem:[%s635 + $0x358] sm:$0xff]
        %v882 = vld [vmem:[%s635 + $0x360] sm:$0xff]
        %v883 = vld [vmem:[%s635 + $0x368] sm:$0xff]
        %v884 = vld [vmem:[%s635 + $0x370] sm:$0xff]
        %v885 = vld [vmem:[%s635 + $0x378] sm:$0xff]
        %v886 = vld [vmem:[%s635 + $0x380] sm:$0xff]
        %v887 = vld [vmem:[%s635 + $0x388] sm:$0xff]
        %v888 = vld [vmem:[%s635 + $0x390] sm:$0xff]
        %v889 = vld [vmem:[%s635 + $0x398] sm:$0xff]
        %v890 = vld [vmem:[%s635 + $0x3a0] sm:$0xff]
        %v891 = vld [vmem:[%s635 + $0x3a8] sm:$0xff]
        %v892 = vld [vmem:[%s635 + $0x3b0] sm:$0xff]
        %v893 = vld [vmem:[%s635 + $0x3b8] sm:$0xff]
        %v894 = vld [vmem:[%s635 + $0x3c0] sm:$0xff]
        %v895 = vld [vmem:[%s635 + $0x3c8] sm:$0xff]
        %v896 = vld [vmem:[%s635 + $0x3d0] sm:$0xff]
        %v897 = vld [vmem:[%s635 + $0x3d8] sm:$0xff]
        %v898 = vld [vmem:[%s635 + $0x3e0] sm:$0xff]
        %v899 = vld [vmem:[%s635 + $0x3e8] sm:$0xff]
        %v900 = vld [vmem:[%s635 + $0x3f0] sm:$0xff]
        %v901 = vld [vmem:[%s635 + $0x3f8] sm:$0xff]
        %v902 = vld [vmem:[%s644] sm:$0x3]
        %v904 = vlaneseq
        %v905 = vshrl.u32 %v904, 7
        %v906 = vsub.s32 0, %v905
        %v907 = vrot.slane %v902, %v906
        %v908 = vlaneseq
        %v909 = vshrl.u32 %v908, 7
        %v910 = vsub.s32 1, %v909
        %v911 = vrot.slane %v902, %v910
        %v918 = vunpack.c.l.b16 %v770
        %v919 = vunpack.c.h.b16 %v770
        %v920 = vunpack.c.l.b16 %v771
        %v921 = vunpack.c.h.b16 %v771
        %v922 = vunpack.c.l.b16 %v772
        %v923 = vunpack.c.h.b16 %v772
        %v924 = vunpack.c.l.b16 %v773
        %v925 = vunpack.c.h.b16 %v773
        %v926 = vpack.c.b16 %v918, %v918
        %v927 = vpack.c.b16 %v919, %v919
        %v928 = vpack.c.b16 %v920, %v920
        %v929 = vpack.c.b16 %v921, %v921
        %v930 = vpack.c.b16 %v922, %v922
        %v931 = vpack.c.b16 %v923, %v923
        %v932 = vpack.c.b16 %v924, %v924
        %v933 = vpack.c.b16 %v925, %v925
        %v1070 = vunpack.c.l.b16 %v774
        %v1071 = vunpack.c.h.b16 %v774
        %v1072 = vunpack.c.l.b16 %v775
        %v1073 = vunpack.c.h.b16 %v775
        %v1074 = vunpack.c.l.b16 %v776
        %v1075 = vunpack.c.h.b16 %v776
        %v1076 = vunpack.c.l.b16 %v777
        %v1077 = vunpack.c.h.b16 %v777
        %v1078 = vunpack.c.l.b16 %v778
        %v1079 = vunpack.c.h.b16 %v778
        %v1080 = vunpack.c.l.b16 %v779
        %v1081 = vunpack.c.h.b16 %v779
        %v1082 = vunpack.c.l.b16 %v780
        %v1083 = vunpack.c.h.b16 %v780
        %v1084 = vunpack.c.l.b16 %v781
        %v1085 = vunpack.c.h.b16 %v781
        %v1086 = vunpack.c.l.b16 %v782
        %v1087 = vunpack.c.h.b16 %v782
        %v1088 = vunpack.c.l.b16 %v783
        %v1089 = vunpack.c.h.b16 %v783
        %v1090 = vunpack.c.l.b16 %v784
        %v1091 = vunpack.c.h.b16 %v784
        %v1092 = vunpack.c.l.b16 %v785
        %v1093 = vunpack.c.h.b16 %v785
        %v1094 = vunpack.c.l.b16 %v786
        %v1095 = vunpack.c.h.b16 %v786
        %v1096 = vunpack.c.l.b16 %v787
        %v1097 = vunpack.c.h.b16 %v787
        %v1098 = vunpack.c.l.b16 %v788
        %v1099 = vunpack.c.h.b16 %v788
        %v1100 = vunpack.c.l.b16 %v789
        %v1101 = vunpack.c.h.b16 %v789
        %v1102 = vunpack.c.l.b16 %v790
        %v1103 = vunpack.c.h.b16 %v790
        %v1104 = vunpack.c.l.b16 %v791
        %v1105 = vunpack.c.h.b16 %v791
        %v1106 = vunpack.c.l.b16 %v792
        %v1107 = vunpack.c.h.b16 %v792
        %v1108 = vunpack.c.l.b16 %v793
        %v1109 = vunpack.c.h.b16 %v793
        %v1110 = vunpack.c.l.b16 %v794
        %v1111 = vunpack.c.h.b16 %v794
        %v1112 = vunpack.c.l.b16 %v795
        %v1113 = vunpack.c.h.b16 %v795
        %v1114 = vunpack.c.l.b16 %v796
        %v1115 = vunpack.c.h.b16 %v796
        %v1116 = vunpack.c.l.b16 %v797
        %v1117 = vunpack.c.h.b16 %v797
        %v1118 = vunpack.c.l.b16 %v798
        %v1119 = vunpack.c.h.b16 %v798
        %v1120 = vunpack.c.l.b16 %v799
        %v1121 = vunpack.c.h.b16 %v799
        %v1122 = vunpack.c.l.b16 %v800
        %v1123 = vunpack.c.h.b16 %v800
        %v1124 = vunpack.c.l.b16 %v801
        %v1125 = vunpack.c.h.b16 %v801
        %v1126 = vunpack.c.l.b16 %v802
        %v1127 = vunpack.c.h.b16 %v802
        %v1128 = vunpack.c.l.b16 %v803
        %v1129 = vunpack.c.h.b16 %v803
        %v1130 = vunpack.c.l.b16 %v804
        %v1131 = vunpack.c.h.b16 %v804
        %v1132 = vunpack.c.l.b16 %v805
        %v1133 = vunpack.c.h.b16 %v805
        %v1134 = vunpack.c.l.b16 %v806
        %v1135 = vunpack.c.h.b16 %v806
        %v1136 = vunpack.c.l.b16 %v807
        %v1137 = vunpack.c.h.b16 %v807
        %v1138 = vunpack.c.l.b16 %v808
        %v1139 = vunpack.c.h.b16 %v808
        %v1140 = vunpack.c.l.b16 %v809
        %v1141 = vunpack.c.h.b16 %v809
        %v1142 = vunpack.c.l.b16 %v810
        %v1143 = vunpack.c.h.b16 %v810
        %v1144 = vunpack.c.l.b16 %v811
        %v1145 = vunpack.c.h.b16 %v811
        %v1146 = vunpack.c.l.b16 %v812
        %v1147 = vunpack.c.h.b16 %v812
        %v1148 = vunpack.c.l.b16 %v813
        %v1149 = vunpack.c.h.b16 %v813
        %v1150 = vunpack.c.l.b16 %v814
        %v1151 = vunpack.c.h.b16 %v814
        %v1152 = vunpack.c.l.b16 %v815
        %v1153 = vunpack.c.h.b16 %v815
        %v1154 = vunpack.c.l.b16 %v816
        %v1155 = vunpack.c.h.b16 %v816
        %v1156 = vunpack.c.l.b16 %v817
        %v1157 = vunpack.c.h.b16 %v817
        %v1158 = vunpack.c.l.b16 %v818
        %v1159 = vunpack.c.h.b16 %v818
        %v1160 = vunpack.c.l.b16 %v819
        %v1161 = vunpack.c.h.b16 %v819
        %v1162 = vunpack.c.l.b16 %v820
        %v1163 = vunpack.c.h.b16 %v820
        %v1164 = vunpack.c.l.b16 %v821
        %v1165 = vunpack.c.h.b16 %v821
        %v1166 = vunpack.c.l.b16 %v822
        %v1167 = vunpack.c.h.b16 %v822
        %v1168 = vunpack.c.l.b16 %v823
        %v1169 = vunpack.c.h.b16 %v823
        %v1170 = vunpack.c.l.b16 %v824
        %v1171 = vunpack.c.h.b16 %v824
        %v1172 = vunpack.c.l.b16 %v825
        %v1173 = vunpack.c.h.b16 %v825
        %v1174 = vunpack.c.l.b16 %v826
        %v1175 = vunpack.c.h.b16 %v826
        %v1176 = vunpack.c.l.b16 %v827
        %v1177 = vunpack.c.h.b16 %v827
        %v1178 = vunpack.c.l.b16 %v828
        %v1179 = vunpack.c.h.b16 %v828
        %v1180 = vunpack.c.l.b16 %v829
        %v1181 = vunpack.c.h.b16 %v829
        %v1182 = vunpack.c.l.b16 %v830
        %v1183 = vunpack.c.h.b16 %v830
        %v1184 = vunpack.c.l.b16 %v831
        %v1185 = vunpack.c.h.b16 %v831
        %v1186 = vunpack.c.l.b16 %v832
        %v1187 = vunpack.c.h.b16 %v832
        %v1188 = vunpack.c.l.b16 %v833
        %v1189 = vunpack.c.h.b16 %v833
        %v1190 = vunpack.c.l.b16 %v834
        %v1191 = vunpack.c.h.b16 %v834
        %v1192 = vunpack.c.l.b16 %v835
        %v1193 = vunpack.c.h.b16 %v835
        %v1194 = vunpack.c.l.b16 %v836
        %v1195 = vunpack.c.h.b16 %v836
        %v1196 = vunpack.c.l.b16 %v837
        %v1197 = vunpack.c.h.b16 %v837
        %v1198 = vunpack.c.l.b16 %v838
        %v1199 = vunpack.c.h.b16 %v838
        %v1200 = vunpack.c.l.b16 %v839
        %v1201 = vunpack.c.h.b16 %v839
        %v1202 = vunpack.c.l.b16 %v840
        %v1203 = vunpack.c.h.b16 %v840
        %v1204 = vunpack.c.l.b16 %v841
        %v1205 = vunpack.c.h.b16 %v841
        %v1206 = vunpack.c.l.b16 %v842
        %v1207 = vunpack.c.h.b16 %v842
        %v1208 = vunpack.c.l.b16 %v843
        %v1209 = vunpack.c.h.b16 %v843
        %v1210 = vunpack.c.l.b16 %v844
        %v1211 = vunpack.c.h.b16 %v844
        %v1212 = vunpack.c.l.b16 %v845
        %v1213 = vunpack.c.h.b16 %v845
        %v1214 = vunpack.c.l.b16 %v846
        %v1215 = vunpack.c.h.b16 %v846
        %v1216 = vunpack.c.l.b16 %v847
        %v1217 = vunpack.c.h.b16 %v847
        %v1218 = vunpack.c.l.b16 %v848
        %v1219 = vunpack.c.h.b16 %v848
        %v1220 = vunpack.c.l.b16 %v849
        %v1221 = vunpack.c.h.b16 %v849
        %v1222 = vunpack.c.l.b16 %v850
        %v1223 = vunpack.c.h.b16 %v850
        %v1224 = vunpack.c.l.b16 %v851
        %v1225 = vunpack.c.h.b16 %v851
        %v1226 = vunpack.c.l.b16 %v852
        %v1227 = vunpack.c.h.b16 %v852
        %v1228 = vunpack.c.l.b16 %v853
        %v1229 = vunpack.c.h.b16 %v853
        %v1230 = vunpack.c.l.b16 %v854
        %v1231 = vunpack.c.h.b16 %v854
        %v1232 = vunpack.c.l.b16 %v855
        %v1233 = vunpack.c.h.b16 %v855
        %v1234 = vunpack.c.l.b16 %v856
        %v1235 = vunpack.c.h.b16 %v856
        %v1236 = vunpack.c.l.b16 %v857
        %v1237 = vunpack.c.h.b16 %v857
        %v1238 = vunpack.c.l.b16 %v858
        %v1239 = vunpack.c.h.b16 %v858
        %v1240 = vunpack.c.l.b16 %v859
        %v1241 = vunpack.c.h.b16 %v859
        %v1242 = vunpack.c.l.b16 %v860
        %v1243 = vunpack.c.h.b16 %v860
        %v1244 = vunpack.c.l.b16 %v861
        %v1245 = vunpack.c.h.b16 %v861
        %v1246 = vunpack.c.l.b16 %v862
        %v1247 = vunpack.c.h.b16 %v862
        %v1248 = vunpack.c.l.b16 %v863
        %v1249 = vunpack.c.h.b16 %v863
        %v1250 = vunpack.c.l.b16 %v864
        %v1251 = vunpack.c.h.b16 %v864
        %v1252 = vunpack.c.l.b16 %v865
        %v1253 = vunpack.c.h.b16 %v865
        %v1254 = vunpack.c.l.b16 %v866
        %v1255 = vunpack.c.h.b16 %v866
        %v1256 = vunpack.c.l.b16 %v867
        %v1257 = vunpack.c.h.b16 %v867
        %v1258 = vunpack.c.l.b16 %v868
        %v1259 = vunpack.c.h.b16 %v868
        %v1260 = vunpack.c.l.b16 %v869
        %v1261 = vunpack.c.h.b16 %v869
        %v1262 = vunpack.c.l.b16 %v870
        %v1263 = vunpack.c.h.b16 %v870
        %v1264 = vunpack.c.l.b16 %v871
        %v1265 = vunpack.c.h.b16 %v871
        %v1266 = vunpack.c.l.b16 %v872
        %v1267 = vunpack.c.h.b16 %v872
        %v1268 = vunpack.c.l.b16 %v873
        %v1269 = vunpack.c.h.b16 %v873
        %v1270 = vunpack.c.l.b16 %v874
        %v1271 = vunpack.c.h.b16 %v874
        %v1272 = vunpack.c.l.b16 %v875
        %v1273 = vunpack.c.h.b16 %v875
        %v1274 = vunpack.c.l.b16 %v876
        %v1275 = vunpack.c.h.b16 %v876
        %v1276 = vunpack.c.l.b16 %v877
        %v1277 = vunpack.c.h.b16 %v877
        %v1278 = vunpack.c.l.b16 %v878
        %v1279 = vunpack.c.h.b16 %v878
        %v1280 = vunpack.c.l.b16 %v879
        %v1281 = vunpack.c.h.b16 %v879
        %v1282 = vunpack.c.l.b16 %v880
        %v1283 = vunpack.c.h.b16 %v880
        %v1284 = vunpack.c.l.b16 %v881
        %v1285 = vunpack.c.h.b16 %v881
        %v1286 = vunpack.c.l.b16 %v882
        %v1287 = vunpack.c.h.b16 %v882
        %v1288 = vunpack.c.l.b16 %v883
        %v1289 = vunpack.c.h.b16 %v883
        %v1290 = vunpack.c.l.b16 %v884
        %v1291 = vunpack.c.h.b16 %v884
        %v1292 = vunpack.c.l.b16 %v885
        %v1293 = vunpack.c.h.b16 %v885
        %v1294 = vunpack.c.l.b16 %v886
        %v1295 = vunpack.c.h.b16 %v886
        %v1296 = vunpack.c.l.b16 %v887
        %v1297 = vunpack.c.h.b16 %v887
        %v1298 = vunpack.c.l.b16 %v888
        %v1299 = vunpack.c.h.b16 %v888
        %v1300 = vunpack.c.l.b16 %v889
        %v1301 = vunpack.c.h.b16 %v889
        %v1302 = vunpack.c.l.b16 %v890
        %v1303 = vunpack.c.h.b16 %v890
        %v1304 = vunpack.c.l.b16 %v891
        %v1305 = vunpack.c.h.b16 %v891
        %v1306 = vunpack.c.l.b16 %v892
        %v1307 = vunpack.c.h.b16 %v892
        %v1308 = vunpack.c.l.b16 %v893
        %v1309 = vunpack.c.h.b16 %v893
        %v1310 = vunpack.c.l.b16 %v894
        %v1311 = vunpack.c.h.b16 %v894
        %v1312 = vunpack.c.l.b16 %v895
        %v1313 = vunpack.c.h.b16 %v895
        %v1314 = vunpack.c.l.b16 %v896
        %v1315 = vunpack.c.h.b16 %v896
        %v1316 = vunpack.c.l.b16 %v897
        %v1317 = vunpack.c.h.b16 %v897
        %v1318 = vunpack.c.l.b16 %v898
        %v1319 = vunpack.c.h.b16 %v898
        %v1320 = vunpack.c.l.b16 %v899
        %v1321 = vunpack.c.h.b16 %v899
        %v1322 = vunpack.c.l.b16 %v900
        %v1323 = vunpack.c.h.b16 %v900
        %v1324 = vunpack.c.l.b16 %v901
        %v1325 = vunpack.c.h.b16 %v901
        %v1326 = vpack.c.b16 %v1072, %v1070
        %v1327 = vpack.c.b16 %v1073, %v1071
        %v1328 = vpack.c.b16 %v1076, %v1074
        %v1329 = vpack.c.b16 %v1077, %v1075
        %v1330 = vpack.c.b16 %v1080, %v1078
        %v1331 = vpack.c.b16 %v1081, %v1079
        %v1332 = vpack.c.b16 %v1084, %v1082
        %v1333 = vpack.c.b16 %v1085, %v1083
        %v1334 = vpack.c.b16 %v1088, %v1086
        %v1335 = vpack.c.b16 %v1089, %v1087
        %v1336 = vpack.c.b16 %v1092, %v1090
        %v1337 = vpack.c.b16 %v1093, %v1091
        %v1338 = vpack.c.b16 %v1096, %v1094
        %v1339 = vpack.c.b16 %v1097, %v1095
        %v1340 = vpack.c.b16 %v1100, %v1098
        %v1341 = vpack.c.b16 %v1101, %v1099
        %v1342 = vpack.c.b16 %v1104, %v1102
        %v1343 = vpack.c.b16 %v1105, %v1103
        %v1344 = vpack.c.b16 %v1108, %v1106
        %v1345 = vpack.c.b16 %v1109, %v1107
        %v1346 = vpack.c.b16 %v1112, %v1110
        %v1347 = vpack.c.b16 %v1113, %v1111
        %v1348 = vpack.c.b16 %v1116, %v1114
        %v1349 = vpack.c.b16 %v1117, %v1115
        %v1350 = vpack.c.b16 %v1120, %v1118
        %v1351 = vpack.c.b16 %v1121, %v1119
        %v1352 = vpack.c.b16 %v1124, %v1122
        %v1353 = vpack.c.b16 %v1125, %v1123
        %v1354 = vpack.c.b16 %v1128, %v1126
        %v1355 = vpack.c.b16 %v1129, %v1127
        %v1356 = vpack.c.b16 %v1132, %v1130
        %v1357 = vpack.c.b16 %v1133, %v1131
        %v1358 = vpack.c.b16 %v1136, %v1134
        %v1359 = vpack.c.b16 %v1137, %v1135
        %v1360 = vpack.c.b16 %v1140, %v1138
        %v1361 = vpack.c.b16 %v1141, %v1139
        %v1362 = vpack.c.b16 %v1144, %v1142
        %v1363 = vpack.c.b16 %v1145, %v1143
        %v1364 = vpack.c.b16 %v1148, %v1146
        %v1365 = vpack.c.b16 %v1149, %v1147
        %v1366 = vpack.c.b16 %v1152, %v1150
        %v1367 = vpack.c.b16 %v1153, %v1151
        %v1368 = vpack.c.b16 %v1156, %v1154
        %v1369 = vpack.c.b16 %v1157, %v1155
        %v1370 = vpack.c.b16 %v1160, %v1158
        %v1371 = vpack.c.b16 %v1161, %v1159
        %v1372 = vpack.c.b16 %v1164, %v1162
        %v1373 = vpack.c.b16 %v1165, %v1163
        %v1374 = vpack.c.b16 %v1168, %v1166
        %v1375 = vpack.c.b16 %v1169, %v1167
        %v1376 = vpack.c.b16 %v1172, %v1170
        %v1377 = vpack.c.b16 %v1173, %v1171
        %v1378 = vpack.c.b16 %v1176, %v1174
        %v1379 = vpack.c.b16 %v1177, %v1175
        %v1380 = vpack.c.b16 %v1180, %v1178
        %v1381 = vpack.c.b16 %v1181, %v1179
        %v1382 = vpack.c.b16 %v1184, %v1182
        %v1383 = vpack.c.b16 %v1185, %v1183
        %v1384 = vpack.c.b16 %v1188, %v1186
        %v1385 = vpack.c.b16 %v1189, %v1187
        %v1386 = vpack.c.b16 %v1192, %v1190
        %v1387 = vpack.c.b16 %v1193, %v1191
        %v1388 = vpack.c.b16 %v1196, %v1194
        %v1389 = vpack.c.b16 %v1197, %v1195
        %v1390 = vpack.c.b16 %v1200, %v1198
        %v1391 = vpack.c.b16 %v1201, %v1199
        %v1392 = vpack.c.b16 %v1204, %v1202
        %v1393 = vpack.c.b16 %v1205, %v1203
        %v1394 = vpack.c.b16 %v1208, %v1206
        %v1395 = vpack.c.b16 %v1209, %v1207
        %v1396 = vpack.c.b16 %v1212, %v1210
        %v1397 = vpack.c.b16 %v1213, %v1211
        %v1398 = vpack.c.b16 %v1216, %v1214
        %v1399 = vpack.c.b16 %v1217, %v1215
        %v1400 = vpack.c.b16 %v1220, %v1218
        %v1401 = vpack.c.b16 %v1221, %v1219
        %v1402 = vpack.c.b16 %v1224, %v1222
        %v1403 = vpack.c.b16 %v1225, %v1223
        %v1404 = vpack.c.b16 %v1228, %v1226
        %v1405 = vpack.c.b16 %v1229, %v1227
        %v1406 = vpack.c.b16 %v1232, %v1230
        %v1407 = vpack.c.b16 %v1233, %v1231
        %v1408 = vpack.c.b16 %v1236, %v1234
        %v1409 = vpack.c.b16 %v1237, %v1235
        %v1410 = vpack.c.b16 %v1240, %v1238
        %v1411 = vpack.c.b16 %v1241, %v1239
        %v1412 = vpack.c.b16 %v1244, %v1242
        %v1413 = vpack.c.b16 %v1245, %v1243
        %v1414 = vpack.c.b16 %v1248, %v1246
        %v1415 = vpack.c.b16 %v1249, %v1247
        %v1416 = vpack.c.b16 %v1252, %v1250
        %v1417 = vpack.c.b16 %v1253, %v1251
        %v1418 = vpack.c.b16 %v1256, %v1254
        %v1419 = vpack.c.b16 %v1257, %v1255
        %v1420 = vpack.c.b16 %v1260, %v1258
        %v1421 = vpack.c.b16 %v1261, %v1259
        %v1422 = vpack.c.b16 %v1264, %v1262
        %v1423 = vpack.c.b16 %v1265, %v1263
        %v1424 = vpack.c.b16 %v1268, %v1266
        %v1425 = vpack.c.b16 %v1269, %v1267
        %v1426 = vpack.c.b16 %v1272, %v1270
        %v1427 = vpack.c.b16 %v1273, %v1271
        %v1428 = vpack.c.b16 %v1276, %v1274
        %v1429 = vpack.c.b16 %v1277, %v1275
        %v1430 = vpack.c.b16 %v1280, %v1278
        %v1431 = vpack.c.b16 %v1281, %v1279
        %v1432 = vpack.c.b16 %v1284, %v1282
        %v1433 = vpack.c.b16 %v1285, %v1283
        %v1434 = vpack.c.b16 %v1288, %v1286
        %v1435 = vpack.c.b16 %v1289, %v1287
        %v1436 = vpack.c.b16 %v1292, %v1290
        %v1437 = vpack.c.b16 %v1293, %v1291
        %v1438 = vpack.c.b16 %v1296, %v1294
        %v1439 = vpack.c.b16 %v1297, %v1295
        %v1440 = vpack.c.b16 %v1300, %v1298
        %v1441 = vpack.c.b16 %v1301, %v1299
        %v1442 = vpack.c.b16 %v1304, %v1302
        %v1443 = vpack.c.b16 %v1305, %v1303
        %v1444 = vpack.c.b16 %v1308, %v1306
        %v1445 = vpack.c.b16 %v1309, %v1307
        %v1446 = vpack.c.b16 %v1312, %v1310
        %v1447 = vpack.c.b16 %v1313, %v1311
        %v1448 = vpack.c.b16 %v1316, %v1314
        %v1449 = vpack.c.b16 %v1317, %v1315
        %v1450 = vpack.c.b16 %v1320, %v1318
        %v1451 = vpack.c.b16 %v1321, %v1319
        %v1452 = vpack.c.b16 %v1324, %v1322
        %v1453 = vpack.c.b16 %v1325, %v1323
        %1582 = vmatprep.subr.bf16.mxu0 %v1327
        %1583 = vmatpush1.bf16.msra.mxu0 %v1326
        %1584 = vmatprep.subr.bf16.mxu0 %v1329
        %1585 = vmatpush1.bf16.msra.mxu0 %v1328
        %1586 = vmatprep.subr.bf16.mxu0 %v1331
        %1587 = vmatpush1.bf16.msra.mxu0 %v1330
        %1588 = vmatprep.subr.bf16.mxu0 %v1333
        %1589 = vmatpush1.bf16.msra.mxu0 %v1332
        %1590 = vmatprep.subr.bf16.mxu0 %v1335
        %1591 = vmatpush1.bf16.msra.mxu0 %v1334
        %1592 = vmatprep.subr.bf16.mxu0 %v1337
        %1593 = vmatpush1.bf16.msra.mxu0 %v1336
        %1594 = vmatprep.subr.bf16.mxu0 %v1339
        %1595 = vmatpush1.bf16.msra.mxu0 %v1338
        %1596 = vmatprep.subr.bf16.mxu0 %v1341
        %1597 = vmatpush1.bf16.msra.mxu0 %v1340
        %1598 = vmatprep.subr.bf16.mxu0 %v1343
        %1599 = vmatpush1.bf16.msra.mxu0 %v1342
        %1600 = vmatprep.subr.bf16.mxu0 %v1345
        %1601 = vmatpush1.bf16.msra.mxu0 %v1344
        %1602 = vmatprep.subr.bf16.mxu0 %v1347
        %1603 = vmatpush1.bf16.msra.mxu0 %v1346
        %1604 = vmatprep.subr.bf16.mxu0 %v1349
        %1605 = vmatpush1.bf16.msra.mxu0 %v1348
        %1606 = vmatprep.subr.bf16.mxu0 %v1351
        %1607 = vmatpush1.bf16.msra.mxu0 %v1350
        %1608 = vmatprep.subr.bf16.mxu0 %v1353
        %1609 = vmatpush1.bf16.msra.mxu0 %v1352
        %1610 = vmatprep.subr.bf16.mxu0 %v1355
        %1611 = vmatpush1.bf16.msra.mxu0 %v1354
        %1612 = vmatprep.subr.bf16.mxu0 %v1357
        %1613 = vmatpush1.bf16.msra.mxu0 %v1356
        %1614 = vmatprep.mubr.bf16.mxu0 %v927
        %1615 = vmatmul.mubr.bf16.gmra.mrb[0].mxu0 %v926
        %v1616 = vpop.f32.mrb[0].mxu0
        %v1617 = vadd.f32 %v907, %v1616
        %v1618 = vpop.f32.mrb[0].mxu0
        %v1619 = vadd.f32 %v911, %v1618
        %v1620 = vpop.f32.mrb[0].mxu0
        %v1621 = vpop.f32.mrb[0].mxu0
        %1622 = vdwg.mxu0
        %1623 = vmatprep.subr.bf16.mxu0 %v1359
        %1624 = vmatpush1.bf16.msra.mxu0 %v1358
        %1625 = vmatprep.subr.bf16.mxu0 %v1361
        %1626 = vmatpush1.bf16.msra.mxu0 %v1360
        %1627 = vmatprep.subr.bf16.mxu0 %v1363
        %1628 = vmatpush1.bf16.msra.mxu0 %v1362
        %1629 = vmatprep.subr.bf16.mxu0 %v1365
        %1630 = vmatpush1.bf16.msra.mxu0 %v1364
        %1631 = vmatprep.subr.bf16.mxu0 %v1367
        %1632 = vmatpush1.bf16.msra.mxu0 %v1366
        %1633 = vmatprep.subr.bf16.mxu0 %v1369
        %1634 = vmatpush1.bf16.msra.mxu0 %v1368
        %1635 = vmatprep.subr.bf16.mxu0 %v1371
        %1636 = vmatpush1.bf16.msra.mxu0 %v1370
        %1637 = vmatprep.subr.bf16.mxu0 %v1373
        %1638 = vmatpush1.bf16.msra.mxu0 %v1372
        %1639 = vmatprep.subr.bf16.mxu0 %v1375
        %1640 = vmatpush1.bf16.msra.mxu0 %v1374
        %1641 = vmatprep.subr.bf16.mxu0 %v1377
        %1642 = vmatpush1.bf16.msra.mxu0 %v1376
        %1643 = vmatprep.subr.bf16.mxu0 %v1379
        %1644 = vmatpush1.bf16.msra.mxu0 %v1378
        %1645 = vmatprep.subr.bf16.mxu0 %v1381
        %1646 = vmatpush1.bf16.msra.mxu0 %v1380
        %1647 = vmatprep.subr.bf16.mxu0 %v1383
        %1648 = vmatpush1.bf16.msra.mxu0 %v1382
        %1649 = vmatprep.subr.bf16.mxu0 %v1385
        %1650 = vmatpush1.bf16.msra.mxu0 %v1384
        %1651 = vmatprep.subr.bf16.mxu0 %v1387
        %1652 = vmatpush1.bf16.msra.mxu0 %v1386
        %1653 = vmatprep.subr.bf16.mxu0 %v1389
        %1654 = vmatpush1.bf16.msra.mxu0 %v1388
        %1655 = vmatprep.mubr.bf16.mxu0 %v929
        %1656 = vmatmul.mubr.bf16.gmra.mrb[0].mxu0 %v928
        %v1657 = vpop.f32.mrb[0].mxu0
        %v1658 = vadd.f32 %v1617, %v1657
        %v1659 = vpop.f32.mrb[0].mxu0
        %v1660 = vadd.f32 %v1619, %v1659
        %v1661 = vpop.f32.mrb[0].mxu0
        %v1662 = vpop.f32.mrb[0].mxu0
        %1663 = vdwg.mxu0
        %1664 = vmatprep.subr.bf16.mxu0 %v1391
        %1665 = vmatpush1.bf16.msra.mxu0 %v1390
        %1666 = vmatprep.subr.bf16.mxu0 %v1393
        %1667 = vmatpush1.bf16.msra.mxu0 %v1392
        %1668 = vmatprep.subr.bf16.mxu0 %v1395
        %1669 = vmatpush1.bf16.msra.mxu0 %v1394
        %1670 = vmatprep.subr.bf16.mxu0 %v1397
        %1671 = vmatpush1.bf16.msra.mxu0 %v1396
        %1672 = vmatprep.subr.bf16.mxu0 %v1399
        %1673 = vmatpush1.bf16.msra.mxu0 %v1398
        %1674 = vmatprep.subr.bf16.mxu0 %v1401
        %1675 = vmatpush1.bf16.msra.mxu0 %v1400
        %1676 = vmatprep.subr.bf16.mxu0 %v1403
        %1677 = vmatpush1.bf16.msra.mxu0 %v1402
        %1678 = vmatprep.subr.bf16.mxu0 %v1405
        %1679 = vmatpush1.bf16.msra.mxu0 %v1404
        %1680 = vmatprep.subr.bf16.mxu0 %v1407
        %1681 = vmatpush1.bf16.msra.mxu0 %v1406
        %1682 = vmatprep.subr.bf16.mxu0 %v1409
        %1683 = vmatpush1.bf16.msra.mxu0 %v1408
        %1684 = vmatprep.subr.bf16.mxu0 %v1411
        %1685 = vmatpush1.bf16.msra.mxu0 %v1410
        %1686 = vmatprep.subr.bf16.mxu0 %v1413
        %1687 = vmatpush1.bf16.msra.mxu0 %v1412
        %1688 = vmatprep.subr.bf16.mxu0 %v1415
        %1689 = vmatpush1.bf16.msra.mxu0 %v1414
        %1690 = vmatprep.subr.bf16.mxu0 %v1417
        %1691 = vmatpush1.bf16.msra.mxu0 %v1416
        %1692 = vmatprep.subr.bf16.mxu0 %v1419
        %1693 = vmatpush1.bf16.msra.mxu0 %v1418
        %1694 = vmatprep.subr.bf16.mxu0 %v1421
        %1695 = vmatpush1.bf16.msra.mxu0 %v1420
        %1696 = vmatprep.mubr.bf16.mxu0 %v931
        %1697 = vmatmul.mubr.bf16.gmra.mrb[0].mxu0 %v930
        %v1698 = vpop.f32.mrb[0].mxu0
        %v1699 = vadd.f32 %v1658, %v1698
        %v1700 = vpop.f32.mrb[0].mxu0
        %v1701 = vadd.f32 %v1660, %v1700
        %v1702 = vpop.f32.mrb[0].mxu0
        %v1703 = vpop.f32.mrb[0].mxu0
        %1704 = vdwg.mxu0
        %1705 = vmatprep.subr.bf16.mxu0 %v1423
        %1706 = vmatpush1.bf16.msra.mxu0 %v1422
        %1707 = vmatprep.subr.bf16.mxu0 %v1425
        %1708 = vmatpush1.bf16.msra.mxu0 %v1424
        %1709 = vmatprep.subr.bf16.mxu0 %v1427
        %1710 = vmatpush1.bf16.msra.mxu0 %v1426
        %1711 = vmatprep.subr.bf16.mxu0 %v1429
        %1712 = vmatpush1.bf16.msra.mxu0 %v1428
        %1713 = vmatprep.subr.bf16.mxu0 %v1431
        %1714 = vmatpush1.bf16.msra.mxu0 %v1430
        %1715 = vmatprep.subr.bf16.mxu0 %v1433
        %1716 = vmatpush1.bf16.msra.mxu0 %v1432
        %1717 = vmatprep.subr.bf16.mxu0 %v1435
        %1718 = vmatpush1.bf16.msra.mxu0 %v1434
        %1719 = vmatprep.subr.bf16.mxu0 %v1437
        %1720 = vmatpush1.bf16.msra.mxu0 %v1436
        %1721 = vmatprep.subr.bf16.mxu0 %v1439
        %1722 = vmatpush1.bf16.msra.mxu0 %v1438
        %1723 = vmatprep.subr.bf16.mxu0 %v1441
        %1724 = vmatpush1.bf16.msra.mxu0 %v1440
        %1725 = vmatprep.subr.bf16.mxu0 %v1443
        %1726 = vmatpush1.bf16.msra.mxu0 %v1442
        %1727 = vmatprep.subr.bf16.mxu0 %v1445
        %1728 = vmatpush1.bf16.msra.mxu0 %v1444
        %1729 = vmatprep.subr.bf16.mxu0 %v1447
        %1730 = vmatpush1.bf16.msra.mxu0 %v1446
        %1731 = vmatprep.subr.bf16.mxu0 %v1449
        %1732 = vmatpush1.bf16.msra.mxu0 %v1448
        %1733 = vmatprep.subr.bf16.mxu0 %v1451
        %1734 = vmatpush1.bf16.msra.mxu0 %v1450
        %1735 = vmatprep.subr.bf16.mxu0 %v1453
        %1736 = vmatpush1.bf16.msra.mxu0 %v1452
        %1737 = vmatprep.mubr.bf16.mxu0 %v933
        %1738 = vmatmul.mubr.bf16.gmra.mrb[0].mxu0 %v932
        %v1739 = vpop.f32.mrb[0].mxu0
        %v1740 = vadd.f32 %v1699, %v1739
        %v1741 = vpop.f32.mrb[0].mxu0
        %v1742 = vadd.f32 %v1701, %v1741
        %v1743 = vpop.f32.mrb[0].mxu0
        %v1744 = vpop.f32.mrb[0].mxu0
        %1745 = vdwg.mxu0
        %v1746 = vmax.f32 %v1740, 0.0
        %v1747 = vmax.f32 %v1742, 0.0
        %v1748 = vld [vmem:[#allocation2] sm:$0xff]
        %v1749 = vld [vmem:[#allocation2 + $0x8] sm:$0xff]
        %v1750 = vld [vmem:[#allocation2 + $0x10] sm:$0xff]
        %v1751 = vld [vmem:[#allocation2 + $0x18] sm:$0xff]
        %v1752 = vld [vmem:[#allocation2 + $0x20] sm:$0xff]
        %v1753 = vld [vmem:[#allocation2 + $0x28] sm:$0xff]
        %v1754 = vld [vmem:[#allocation2 + $0x30] sm:$0xff]
        %v1755 = vld [vmem:[#allocation2 + $0x38] sm:$0xff]
        %v1756 = vld [vmem:[#allocation2 + $0x40] sm:$0xff]
        %v1757 = vld [vmem:[#allocation2 + $0x48] sm:$0xff]
        %v1758 = vld [vmem:[#allocation2 + $0x50] sm:$0xff]
        %v1759 = vld [vmem:[#allocation2 + $0x58] sm:$0xff]
        %v1760 = vld [vmem:[#allocation2 + $0x60] sm:$0xff]
        %v1761 = vld [vmem:[#allocation2 + $0x68] sm:$0xff]
        %v1762 = vld [vmem:[#allocation2 + $0x70] sm:$0xff]
        %v1763 = vld [vmem:[#allocation2 + $0x78] sm:$0xff]
        %v1764 = vpack.c.bf16 %v1746, %v1746
        %v1765 = vpack.c.bf16 %v1747, %v1747
        %v1766 = vld [vmem:[%s653] sm:$0xff]
        %v1767 = vld [vmem:[%s653 + $0x8] sm:$0xff]
        %v1768 = vld [vmem:[%s653 + $0x10] sm:$0xff]
        %v1769 = vld [vmem:[%s653 + $0x18] sm:$0xff]
        %v1770 = vld [vmem:[%s653 + $0x20] sm:$0xff]
        %v1771 = vld [vmem:[%s653 + $0x28] sm:$0xff]
        %v1772 = vld [vmem:[%s653 + $0x30] sm:$0xff]
        %v1773 = vld [vmem:[%s653 + $0x38] sm:$0xff]
        %v1774 = vld [vmem:[%s653 + $0x40] sm:$0xff]
        %v1775 = vld [vmem:[%s653 + $0x48] sm:$0xff]
        %v1776 = vld [vmem:[%s653 + $0x50] sm:$0xff]
        %v1777 = vld [vmem:[%s653 + $0x58] sm:$0xff]
        %v1778 = vld [vmem:[%s653 + $0x60] sm:$0xff]
        %v1779 = vld [vmem:[%s653 + $0x68] sm:$0xff]
        %v1780 = vld [vmem:[%s653 + $0x70] sm:$0xff]
        %v1781 = vld [vmem:[%s653 + $0x78] sm:$0xff]
        %v1782 = vld [vmem:[%s653 + $0x80] sm:$0xff]
        %v1783 = vld [vmem:[%s653 + $0x88] sm:$0xff]
        %v1784 = vld [vmem:[%s653 + $0x90] sm:$0xff]
        %v1785 = vld [vmem:[%s653 + $0x98] sm:$0xff]
        %v1786 = vld [vmem:[%s653 + $0xa0] sm:$0xff]
        %v1787 = vld [vmem:[%s653 + $0xa8] sm:$0xff]
        %v1788 = vld [vmem:[%s653 + $0xb0] sm:$0xff]
        %v1789 = vld [vmem:[%s653 + $0xb8] sm:$0xff]
        %v1790 = vld [vmem:[%s653 + $0xc0] sm:$0xff]
        %v1791 = vld [vmem:[%s653 + $0xc8] sm:$0xff]
        %v1792 = vld [vmem:[%s653 + $0xd0] sm:$0xff]
        %v1793 = vld [vmem:[%s653 + $0xd8] sm:$0xff]
        %v1794 = vld [vmem:[%s653 + $0xe0] sm:$0xff]
        %v1795 = vld [vmem:[%s653 + $0xe8] sm:$0xff]
        %v1796 = vld [vmem:[%s653 + $0xf0] sm:$0xff]
        %v1797 = vld [vmem:[%s653 + $0xf8] sm:$0xff]
        %v1798 = vld [vmem:[%s653 + $0x100] sm:$0xff]
        %v1799 = vld [vmem:[%s653 + $0x108] sm:$0xff]
        %v1800 = vld [vmem:[%s653 + $0x110] sm:$0xff]
        %v1801 = vld [vmem:[%s653 + $0x118] sm:$0xff]
        %v1802 = vld [vmem:[%s653 + $0x120] sm:$0xff]
        %v1803 = vld [vmem:[%s653 + $0x128] sm:$0xff]
        %v1804 = vld [vmem:[%s653 + $0x130] sm:$0xff]
        %v1805 = vld [vmem:[%s653 + $0x138] sm:$0xff]
        %v1806 = vld [vmem:[%s653 + $0x140] sm:$0xff]
        %v1807 = vld [vmem:[%s653 + $0x148] sm:$0xff]
        %v1808 = vld [vmem:[%s653 + $0x150] sm:$0xff]
        %v1809 = vld [vmem:[%s653 + $0x158] sm:$0xff]
        %v1810 = vld [vmem:[%s653 + $0x160] sm:$0xff]
        %v1811 = vld [vmem:[%s653 + $0x168] sm:$0xff]
        %v1812 = vld [vmem:[%s653 + $0x170] sm:$0xff]
        %v1813 = vld [vmem:[%s653 + $0x178] sm:$0xff]
        %v1814 = vld [vmem:[%s653 + $0x180] sm:$0xff]
        %v1815 = vld [vmem:[%s653 + $0x188] sm:$0xff]
        %v1816 = vld [vmem:[%s653 + $0x190] sm:$0xff]
        %v1817 = vld [vmem:[%s653 + $0x198] sm:$0xff]
        %v1818 = vld [vmem:[%s653 + $0x1a0] sm:$0xff]
        %v1819 = vld [vmem:[%s653 + $0x1a8] sm:$0xff]
        %v1820 = vld [vmem:[%s653 + $0x1b0] sm:$0xff]
        %v1821 = vld [vmem:[%s653 + $0x1b8] sm:$0xff]
        %v1822 = vld [vmem:[%s653 + $0x1c0] sm:$0xff]
        %v1823 = vld [vmem:[%s653 + $0x1c8] sm:$0xff]
        %v1824 = vld [vmem:[%s653 + $0x1d0] sm:$0xff]
        %v1825 = vld [vmem:[%s653 + $0x1d8] sm:$0xff]
        %v1826 = vld [vmem:[%s653 + $0x1e0] sm:$0xff]
        %v1827 = vld [vmem:[%s653 + $0x1e8] sm:$0xff]
        %v1828 = vld [vmem:[%s653 + $0x1f0] sm:$0xff]
        %v1829 = vld [vmem:[%s653 + $0x1f8] sm:$0xff]
        %v1830 = vld [vmem:[%s653 + $0x200] sm:$0xff]
        %v1831 = vld [vmem:[%s653 + $0x208] sm:$0xff]
        %v1832 = vld [vmem:[%s653 + $0x210] sm:$0xff]
        %v1833 = vld [vmem:[%s653 + $0x218] sm:$0xff]
        %v1834 = vld [vmem:[%s653 + $0x220] sm:$0xff]
        %v1835 = vld [vmem:[%s653 + $0x228] sm:$0xff]
        %v1836 = vld [vmem:[%s653 + $0x230] sm:$0xff]
        %v1837 = vld [vmem:[%s653 + $0x238] sm:$0xff]
        %v1838 = vld [vmem:[%s653 + $0x240] sm:$0xff]
        %v1839 = vld [vmem:[%s653 + $0x248] sm:$0xff]
        %v1840 = vld [vmem:[%s653 + $0x250] sm:$0xff]
        %v1841 = vld [vmem:[%s653 + $0x258] sm:$0xff]
        %v1842 = vld [vmem:[%s653 + $0x260] sm:$0xff]
        %v1843 = vld [vmem:[%s653 + $0x268] sm:$0xff]
        %v1844 = vld [vmem:[%s653 + $0x270] sm:$0xff]
        %v1845 = vld [vmem:[%s653 + $0x278] sm:$0xff]
        %v1846 = vld [vmem:[%s653 + $0x280] sm:$0xff]
        %v1847 = vld [vmem:[%s653 + $0x288] sm:$0xff]
        %v1848 = vld [vmem:[%s653 + $0x290] sm:$0xff]
        %v1849 = vld [vmem:[%s653 + $0x298] sm:$0xff]
        %v1850 = vld [vmem:[%s653 + $0x2a0] sm:$0xff]
        %v1851 = vld [vmem:[%s653 + $0x2a8] sm:$0xff]
        %v1852 = vld [vmem:[%s653 + $0x2b0] sm:$0xff]
        %v1853 = vld [vmem:[%s653 + $0x2b8] sm:$0xff]
        %v1854 = vld [vmem:[%s653 + $0x2c0] sm:$0xff]
        %v1855 = vld [vmem:[%s653 + $0x2c8] sm:$0xff]
        %v1856 = vld [vmem:[%s653 + $0x2d0] sm:$0xff]
        %v1857 = vld [vmem:[%s653 + $0x2d8] sm:$0xff]
        %v1858 = vld [vmem:[%s653 + $0x2e0] sm:$0xff]
        %v1859 = vld [vmem:[%s653 + $0x2e8] sm:$0xff]
        %v1860 = vld [vmem:[%s653 + $0x2f0] sm:$0xff]
        %v1861 = vld [vmem:[%s653 + $0x2f8] sm:$0xff]
        %v1862 = vld [vmem:[%s653 + $0x300] sm:$0xff]
        %v1863 = vld [vmem:[%s653 + $0x308] sm:$0xff]
        %v1864 = vld [vmem:[%s653 + $0x310] sm:$0xff]
        %v1865 = vld [vmem:[%s653 + $0x318] sm:$0xff]
        %v1866 = vld [vmem:[%s653 + $0x320] sm:$0xff]
        %v1867 = vld [vmem:[%s653 + $0x328] sm:$0xff]
        %v1868 = vld [vmem:[%s653 + $0x330] sm:$0xff]
        %v1869 = vld [vmem:[%s653 + $0x338] sm:$0xff]
        %v1870 = vld [vmem:[%s653 + $0x340] sm:$0xff]
        %v1871 = vld [vmem:[%s653 + $0x348] sm:$0xff]
        %v1872 = vld [vmem:[%s653 + $0x350] sm:$0xff]
        %v1873 = vld [vmem:[%s653 + $0x358] sm:$0xff]
        %v1874 = vld [vmem:[%s653 + $0x360] sm:$0xff]
        %v1875 = vld [vmem:[%s653 + $0x368] sm:$0xff]
        %v1876 = vld [vmem:[%s653 + $0x370] sm:$0xff]
        %v1877 = vld [vmem:[%s653 + $0x378] sm:$0xff]
        %v1878 = vld [vmem:[%s653 + $0x380] sm:$0xff]
        %v1879 = vld [vmem:[%s653 + $0x388] sm:$0xff]
        %v1880 = vld [vmem:[%s653 + $0x390] sm:$0xff]
        %v1881 = vld [vmem:[%s653 + $0x398] sm:$0xff]
        %v1882 = vld [vmem:[%s653 + $0x3a0] sm:$0xff]
        %v1883 = vld [vmem:[%s653 + $0x3a8] sm:$0xff]
        %v1884 = vld [vmem:[%s653 + $0x3b0] sm:$0xff]
        %v1885 = vld [vmem:[%s653 + $0x3b8] sm:$0xff]
        %v1886 = vld [vmem:[%s653 + $0x3c0] sm:$0xff]
        %v1887 = vld [vmem:[%s653 + $0x3c8] sm:$0xff]
        %v1888 = vld [vmem:[%s653 + $0x3d0] sm:$0xff]
        %v1889 = vld [vmem:[%s653 + $0x3d8] sm:$0xff]
        %v1890 = vld [vmem:[%s653 + $0x3e0] sm:$0xff]
        %v1891 = vld [vmem:[%s653 + $0x3e8] sm:$0xff]
        %v1892 = vld [vmem:[%s653 + $0x3f0] sm:$0xff]
        %v1893 = vld [vmem:[%s653 + $0x3f8] sm:$0xff]
        %v1894 = vld [vmem:[%s653 + $0x400] sm:$0xff]
        %v1895 = vld [vmem:[%s653 + $0x408] sm:$0xff]
        %v1896 = vld [vmem:[%s653 + $0x410] sm:$0xff]
        %v1897 = vld [vmem:[%s653 + $0x418] sm:$0xff]
        %v1898 = vld [vmem:[%s653 + $0x420] sm:$0xff]
        %v1899 = vld [vmem:[%s653 + $0x428] sm:$0xff]
        %v1900 = vld [vmem:[%s653 + $0x430] sm:$0xff]
        %v1901 = vld [vmem:[%s653 + $0x438] sm:$0xff]
        %v1902 = vld [vmem:[%s653 + $0x440] sm:$0xff]
        %v1903 = vld [vmem:[%s653 + $0x448] sm:$0xff]
        %v1904 = vld [vmem:[%s653 + $0x450] sm:$0xff]
        %v1905 = vld [vmem:[%s653 + $0x458] sm:$0xff]
        %v1906 = vld [vmem:[%s653 + $0x460] sm:$0xff]
        %v1907 = vld [vmem:[%s653 + $0x468] sm:$0xff]
        %v1908 = vld [vmem:[%s653 + $0x470] sm:$0xff]
        %v1909 = vld [vmem:[%s653 + $0x478] sm:$0xff]
        %v1910 = vld [vmem:[%s653 + $0x480] sm:$0xff]
        %v1911 = vld [vmem:[%s653 + $0x488] sm:$0xff]
        %v1912 = vld [vmem:[%s653 + $0x490] sm:$0xff]
        %v1913 = vld [vmem:[%s653 + $0x498] sm:$0xff]
        %v1914 = vld [vmem:[%s653 + $0x4a0] sm:$0xff]
        %v1915 = vld [vmem:[%s653 + $0x4a8] sm:$0xff]
        %v1916 = vld [vmem:[%s653 + $0x4b0] sm:$0xff]
        %v1917 = vld [vmem:[%s653 + $0x4b8] sm:$0xff]
        %v1918 = vld [vmem:[%s653 + $0x4c0] sm:$0xff]
        %v1919 = vld [vmem:[%s653 + $0x4c8] sm:$0xff]
        %v1920 = vld [vmem:[%s653 + $0x4d0] sm:$0xff]
        %v1921 = vld [vmem:[%s653 + $0x4d8] sm:$0xff]
        %v1922 = vld [vmem:[%s653 + $0x4e0] sm:$0xff]
        %v1923 = vld [vmem:[%s653 + $0x4e8] sm:$0xff]
        %v1924 = vld [vmem:[%s653 + $0x4f0] sm:$0xff]
        %v1925 = vld [vmem:[%s653 + $0x4f8] sm:$0xff]
        %v1926 = vld [vmem:[%s653 + $0x500] sm:$0xff]
        %v1927 = vld [vmem:[%s653 + $0x508] sm:$0xff]
        %v1928 = vld [vmem:[%s653 + $0x510] sm:$0xff]
        %v1929 = vld [vmem:[%s653 + $0x518] sm:$0xff]
        %v1930 = vld [vmem:[%s653 + $0x520] sm:$0xff]
        %v1931 = vld [vmem:[%s653 + $0x528] sm:$0xff]
        %v1932 = vld [vmem:[%s653 + $0x530] sm:$0xff]
        %v1933 = vld [vmem:[%s653 + $0x538] sm:$0xff]
        %v1934 = vld [vmem:[%s653 + $0x540] sm:$0xff]
        %v1935 = vld [vmem:[%s653 + $0x548] sm:$0xff]
        %v1936 = vld [vmem:[%s653 + $0x550] sm:$0xff]
        %v1937 = vld [vmem:[%s653 + $0x558] sm:$0xff]
        %v1938 = vld [vmem:[%s653 + $0x560] sm:$0xff]
        %v1939 = vld [vmem:[%s653 + $0x568] sm:$0xff]
        %v1940 = vld [vmem:[%s653 + $0x570] sm:$0xff]
        %v1941 = vld [vmem:[%s653 + $0x578] sm:$0xff]
        %v1942 = vld [vmem:[%s653 + $0x580] sm:$0xff]
        %v1943 = vld [vmem:[%s653 + $0x588] sm:$0xff]
        %v1944 = vld [vmem:[%s653 + $0x590] sm:$0xff]
        %v1945 = vld [vmem:[%s653 + $0x598] sm:$0xff]
        %v1946 = vld [vmem:[%s653 + $0x5a0] sm:$0xff]
        %v1947 = vld [vmem:[%s653 + $0x5a8] sm:$0xff]
        %v1948 = vld [vmem:[%s653 + $0x5b0] sm:$0xff]
        %v1949 = vld [vmem:[%s653 + $0x5b8] sm:$0xff]
        %v1950 = vld [vmem:[%s653 + $0x5c0] sm:$0xff]
        %v1951 = vld [vmem:[%s653 + $0x5c8] sm:$0xff]
        %v1952 = vld [vmem:[%s653 + $0x5d0] sm:$0xff]
        %v1953 = vld [vmem:[%s653 + $0x5d8] sm:$0xff]
        %v1954 = vld [vmem:[%s653 + $0x5e0] sm:$0xff]
        %v1955 = vld [vmem:[%s653 + $0x5e8] sm:$0xff]
        %v1956 = vld [vmem:[%s653 + $0x5f0] sm:$0xff]
        %v1957 = vld [vmem:[%s653 + $0x5f8] sm:$0xff]
        %v1958 = vld [vmem:[%s653 + $0x600] sm:$0xff]
        %v1959 = vld [vmem:[%s653 + $0x608] sm:$0xff]
        %v1960 = vld [vmem:[%s653 + $0x610] sm:$0xff]
        %v1961 = vld [vmem:[%s653 + $0x618] sm:$0xff]
        %v1962 = vld [vmem:[%s653 + $0x620] sm:$0xff]
        %v1963 = vld [vmem:[%s653 + $0x628] sm:$0xff]
        %v1964 = vld [vmem:[%s653 + $0x630] sm:$0xff]
        %v1965 = vld [vmem:[%s653 + $0x638] sm:$0xff]
        %v1966 = vld [vmem:[%s653 + $0x640] sm:$0xff]
        %v1967 = vld [vmem:[%s653 + $0x648] sm:$0xff]
        %v1968 = vld [vmem:[%s653 + $0x650] sm:$0xff]
        %v1969 = vld [vmem:[%s653 + $0x658] sm:$0xff]
        %v1970 = vld [vmem:[%s653 + $0x660] sm:$0xff]
        %v1971 = vld [vmem:[%s653 + $0x668] sm:$0xff]
        %v1972 = vld [vmem:[%s653 + $0x670] sm:$0xff]
        %v1973 = vld [vmem:[%s653 + $0x678] sm:$0xff]
        %v1974 = vld [vmem:[%s653 + $0x680] sm:$0xff]
        %v1975 = vld [vmem:[%s653 + $0x688] sm:$0xff]
        %v1976 = vld [vmem:[%s653 + $0x690] sm:$0xff]
        %v1977 = vld [vmem:[%s653 + $0x698] sm:$0xff]
        %v1978 = vld [vmem:[%s653 + $0x6a0] sm:$0xff]
        %v1979 = vld [vmem:[%s653 + $0x6a8] sm:$0xff]
        %v1980 = vld [vmem:[%s653 + $0x6b0] sm:$0xff]
        %v1981 = vld [vmem:[%s653 + $0x6b8] sm:$0xff]
        %v1982 = vld [vmem:[%s653 + $0x6c0] sm:$0xff]
        %v1983 = vld [vmem:[%s653 + $0x6c8] sm:$0xff]
        %v1984 = vld [vmem:[%s653 + $0x6d0] sm:$0xff]
        %v1985 = vld [vmem:[%s653 + $0x6d8] sm:$0xff]
        %v1986 = vld [vmem:[%s653 + $0x6e0] sm:$0xff]
        %v1987 = vld [vmem:[%s653 + $0x6e8] sm:$0xff]
        %v1988 = vld [vmem:[%s653 + $0x6f0] sm:$0xff]
        %v1989 = vld [vmem:[%s653 + $0x6f8] sm:$0xff]
        %v1990 = vld [vmem:[%s653 + $0x700] sm:$0xff]
        %v1991 = vld [vmem:[%s653 + $0x708] sm:$0xff]
        %v1992 = vld [vmem:[%s653 + $0x710] sm:$0xff]
        %v1993 = vld [vmem:[%s653 + $0x718] sm:$0xff]
        %v1994 = vld [vmem:[%s653 + $0x720] sm:$0xff]
        %v1995 = vld [vmem:[%s653 + $0x728] sm:$0xff]
        %v1996 = vld [vmem:[%s653 + $0x730] sm:$0xff]
        %v1997 = vld [vmem:[%s653 + $0x738] sm:$0xff]
        %v1998 = vld [vmem:[%s653 + $0x740] sm:$0xff]
        %v1999 = vld [vmem:[%s653 + $0x748] sm:$0xff]
        %v2000 = vld [vmem:[%s653 + $0x750] sm:$0xff]
        %v2001 = vld [vmem:[%s653 + $0x758] sm:$0xff]
        %v2002 = vld [vmem:[%s653 + $0x760] sm:$0xff]
        %v2003 = vld [vmem:[%s653 + $0x768] sm:$0xff]
        %v2004 = vld [vmem:[%s653 + $0x770] sm:$0xff]
        %v2005 = vld [vmem:[%s653 + $0x778] sm:$0xff]
        %v2006 = vld [vmem:[%s653 + $0x780] sm:$0xff]
        %v2007 = vld [vmem:[%s653 + $0x788] sm:$0xff]
        %v2008 = vld [vmem:[%s653 + $0x790] sm:$0xff]
        %v2009 = vld [vmem:[%s653 + $0x798] sm:$0xff]
        %v2010 = vld [vmem:[%s653 + $0x7a0] sm:$0xff]
        %v2011 = vld [vmem:[%s653 + $0x7a8] sm:$0xff]
        %v2012 = vld [vmem:[%s653 + $0x7b0] sm:$0xff]
        %v2013 = vld [vmem:[%s653 + $0x7b8] sm:$0xff]
        %v2014 = vld [vmem:[%s653 + $0x7c0] sm:$0xff]
        %v2015 = vld [vmem:[%s653 + $0x7c8] sm:$0xff]
        %v2016 = vld [vmem:[%s653 + $0x7d0] sm:$0xff]
        %v2017 = vld [vmem:[%s653 + $0x7d8] sm:$0xff]
        %v2018 = vld [vmem:[%s653 + $0x7e0] sm:$0xff]
        %v2019 = vld [vmem:[%s653 + $0x7e8] sm:$0xff]
        %v2020 = vld [vmem:[%s653 + $0x7f0] sm:$0xff]
        %v2021 = vld [vmem:[%s653 + $0x7f8] sm:$0xff]
        %v2278 = vunpack.c.l.b16 %v1766
        %v2279 = vunpack.c.h.b16 %v1766
        %v2280 = vunpack.c.l.b16 %v1767
        %v2281 = vunpack.c.h.b16 %v1767
        %v2282 = vunpack.c.l.b16 %v1768
        %v2283 = vunpack.c.h.b16 %v1768
        %v2284 = vunpack.c.l.b16 %v1769
        %v2285 = vunpack.c.h.b16 %v1769
        %v2286 = vunpack.c.l.b16 %v1770
        %v2287 = vunpack.c.h.b16 %v1770
        %v2288 = vunpack.c.l.b16 %v1771
        %v2289 = vunpack.c.h.b16 %v1771
        %v2290 = vunpack.c.l.b16 %v1772
        %v2291 = vunpack.c.h.b16 %v1772
        %v2292 = vunpack.c.l.b16 %v1773
        %v2293 = vunpack.c.h.b16 %v1773
        %v2294 = vunpack.c.l.b16 %v1774
        %v2295 = vunpack.c.h.b16 %v1774
        %v2296 = vunpack.c.l.b16 %v1775
        %v2297 = vunpack.c.h.b16 %v1775
        %v2298 = vunpack.c.l.b16 %v1776
        %v2299 = vunpack.c.h.b16 %v1776
        %v2300 = vunpack.c.l.b16 %v1777
        %v2301 = vunpack.c.h.b16 %v1777
        %v2302 = vunpack.c.l.b16 %v1778
        %v2303 = vunpack.c.h.b16 %v1778
        %v2304 = vunpack.c.l.b16 %v1779
        %v2305 = vunpack.c.h.b16 %v1779
        %v2306 = vunpack.c.l.b16 %v1780
        %v2307 = vunpack.c.h.b16 %v1780
        %v2308 = vunpack.c.l.b16 %v1781
        %v2309 = vunpack.c.h.b16 %v1781
        %v2310 = vunpack.c.l.b16 %v1782
        %v2311 = vunpack.c.h.b16 %v1782
        %v2312 = vunpack.c.l.b16 %v1783
        %v2313 = vunpack.c.h.b16 %v1783
        %v2314 = vunpack.c.l.b16 %v1784
        %v2315 = vunpack.c.h.b16 %v1784
        %v2316 = vunpack.c.l.b16 %v1785
        %v2317 = vunpack.c.h.b16 %v1785
        %v2318 = vunpack.c.l.b16 %v1786
        %v2319 = vunpack.c.h.b16 %v1786
        %v2320 = vunpack.c.l.b16 %v1787
        %v2321 = vunpack.c.h.b16 %v1787
        %v2322 = vunpack.c.l.b16 %v1788
        %v2323 = vunpack.c.h.b16 %v1788
        %v2324 = vunpack.c.l.b16 %v1789
        %v2325 = vunpack.c.h.b16 %v1789
        %v2326 = vunpack.c.l.b16 %v1790
        %v2327 = vunpack.c.h.b16 %v1790
        %v2328 = vunpack.c.l.b16 %v1791
        %v2329 = vunpack.c.h.b16 %v1791
        %v2330 = vunpack.c.l.b16 %v1792
        %v2331 = vunpack.c.h.b16 %v1792
        %v2332 = vunpack.c.l.b16 %v1793
        %v2333 = vunpack.c.h.b16 %v1793
        %v2334 = vunpack.c.l.b16 %v1794
        %v2335 = vunpack.c.h.b16 %v1794
        %v2336 = vunpack.c.l.b16 %v1795
        %v2337 = vunpack.c.h.b16 %v1795
        %v2338 = vunpack.c.l.b16 %v1796
        %v2339 = vunpack.c.h.b16 %v1796
        %v2340 = vunpack.c.l.b16 %v1797
        %v2341 = vunpack.c.h.b16 %v1797
        %v2342 = vunpack.c.l.b16 %v1798
        %v2343 = vunpack.c.h.b16 %v1798
        %v2344 = vunpack.c.l.b16 %v1799
        %v2345 = vunpack.c.h.b16 %v1799
        %v2346 = vunpack.c.l.b16 %v1800
        %v2347 = vunpack.c.h.b16 %v1800
        %v2348 = vunpack.c.l.b16 %v1801
        %v2349 = vunpack.c.h.b16 %v1801
        %v2350 = vunpack.c.l.b16 %v1802
        %v2351 = vunpack.c.h.b16 %v1802
        %v2352 = vunpack.c.l.b16 %v1803
        %v2353 = vunpack.c.h.b16 %v1803
        %v2354 = vunpack.c.l.b16 %v1804
        %v2355 = vunpack.c.h.b16 %v1804
        %v2356 = vunpack.c.l.b16 %v1805
        %v2357 = vunpack.c.h.b16 %v1805
        %v2358 = vunpack.c.l.b16 %v1806
        %v2359 = vunpack.c.h.b16 %v1806
        %v2360 = vunpack.c.l.b16 %v1807
        %v2361 = vunpack.c.h.b16 %v1807
        %v2362 = vunpack.c.l.b16 %v1808
        %v2363 = vunpack.c.h.b16 %v1808
        %v2364 = vunpack.c.l.b16 %v1809
        %v2365 = vunpack.c.h.b16 %v1809
        %v2366 = vunpack.c.l.b16 %v1810
        %v2367 = vunpack.c.h.b16 %v1810
        %v2368 = vunpack.c.l.b16 %v1811
        %v2369 = vunpack.c.h.b16 %v1811
        %v2370 = vunpack.c.l.b16 %v1812
        %v2371 = vunpack.c.h.b16 %v1812
        %v2372 = vunpack.c.l.b16 %v1813
        %v2373 = vunpack.c.h.b16 %v1813
        %v2374 = vunpack.c.l.b16 %v1814
        %v2375 = vunpack.c.h.b16 %v1814
        %v2376 = vunpack.c.l.b16 %v1815
        %v2377 = vunpack.c.h.b16 %v1815
        %v2378 = vunpack.c.l.b16 %v1816
        %v2379 = vunpack.c.h.b16 %v1816
        %v2380 = vunpack.c.l.b16 %v1817
        %v2381 = vunpack.c.h.b16 %v1817
        %v2382 = vunpack.c.l.b16 %v1818
        %v2383 = vunpack.c.h.b16 %v1818
        %v2384 = vunpack.c.l.b16 %v1819
        %v2385 = vunpack.c.h.b16 %v1819
        %v2386 = vunpack.c.l.b16 %v1820
        %v2387 = vunpack.c.h.b16 %v1820
        %v2388 = vunpack.c.l.b16 %v1821
        %v2389 = vunpack.c.h.b16 %v1821
        %v2390 = vunpack.c.l.b16 %v1822
        %v2391 = vunpack.c.h.b16 %v1822
        %v2392 = vunpack.c.l.b16 %v1823
        %v2393 = vunpack.c.h.b16 %v1823
        %v2394 = vunpack.c.l.b16 %v1824
        %v2395 = vunpack.c.h.b16 %v1824
        %v2396 = vunpack.c.l.b16 %v1825
        %v2397 = vunpack.c.h.b16 %v1825
        %v2398 = vunpack.c.l.b16 %v1826
        %v2399 = vunpack.c.h.b16 %v1826
        %v2400 = vunpack.c.l.b16 %v1827
        %v2401 = vunpack.c.h.b16 %v1827
        %v2402 = vunpack.c.l.b16 %v1828
        %v2403 = vunpack.c.h.b16 %v1828
        %v2404 = vunpack.c.l.b16 %v1829
        %v2405 = vunpack.c.h.b16 %v1829
        %v2406 = vunpack.c.l.b16 %v1830
        %v2407 = vunpack.c.h.b16 %v1830
        %v2408 = vunpack.c.l.b16 %v1831
        %v2409 = vunpack.c.h.b16 %v1831
        %v2410 = vunpack.c.l.b16 %v1832
        %v2411 = vunpack.c.h.b16 %v1832
        %v2412 = vunpack.c.l.b16 %v1833
        %v2413 = vunpack.c.h.b16 %v1833
        %v2414 = vunpack.c.l.b16 %v1834
        %v2415 = vunpack.c.h.b16 %v1834
        %v2416 = vunpack.c.l.b16 %v1835
        %v2417 = vunpack.c.h.b16 %v1835
        %v2418 = vunpack.c.l.b16 %v1836
        %v2419 = vunpack.c.h.b16 %v1836
        %v2420 = vunpack.c.l.b16 %v1837
        %v2421 = vunpack.c.h.b16 %v1837
        %v2422 = vunpack.c.l.b16 %v1838
        %v2423 = vunpack.c.h.b16 %v1838
        %v2424 = vunpack.c.l.b16 %v1839
        %v2425 = vunpack.c.h.b16 %v1839
        %v2426 = vunpack.c.l.b16 %v1840
        %v2427 = vunpack.c.h.b16 %v1840
        %v2428 = vunpack.c.l.b16 %v1841
        %v2429 = vunpack.c.h.b16 %v1841
        %v2430 = vunpack.c.l.b16 %v1842
        %v2431 = vunpack.c.h.b16 %v1842
        %v2432 = vunpack.c.l.b16 %v1843
        %v2433 = vunpack.c.h.b16 %v1843
        %v2434 = vunpack.c.l.b16 %v1844
        %v2435 = vunpack.c.h.b16 %v1844
        %v2436 = vunpack.c.l.b16 %v1845
        %v2437 = vunpack.c.h.b16 %v1845
        %v2438 = vunpack.c.l.b16 %v1846
        %v2439 = vunpack.c.h.b16 %v1846
        %v2440 = vunpack.c.l.b16 %v1847
        %v2441 = vunpack.c.h.b16 %v1847
        %v2442 = vunpack.c.l.b16 %v1848
        %v2443 = vunpack.c.h.b16 %v1848
        %v2444 = vunpack.c.l.b16 %v1849
        %v2445 = vunpack.c.h.b16 %v1849
        %v2446 = vunpack.c.l.b16 %v1850
        %v2447 = vunpack.c.h.b16 %v1850
        %v2448 = vunpack.c.l.b16 %v1851
        %v2449 = vunpack.c.h.b16 %v1851
        %v2450 = vunpack.c.l.b16 %v1852
        %v2451 = vunpack.c.h.b16 %v1852
        %v2452 = vunpack.c.l.b16 %v1853
        %v2453 = vunpack.c.h.b16 %v1853
        %v2454 = vunpack.c.l.b16 %v1854
        %v2455 = vunpack.c.h.b16 %v1854
        %v2456 = vunpack.c.l.b16 %v1855
        %v2457 = vunpack.c.h.b16 %v1855
        %v2458 = vunpack.c.l.b16 %v1856
        %v2459 = vunpack.c.h.b16 %v1856
        %v2460 = vunpack.c.l.b16 %v1857
        %v2461 = vunpack.c.h.b16 %v1857
        %v2462 = vunpack.c.l.b16 %v1858
        %v2463 = vunpack.c.h.b16 %v1858
        %v2464 = vunpack.c.l.b16 %v1859
        %v2465 = vunpack.c.h.b16 %v1859
        %v2466 = vunpack.c.l.b16 %v1860
        %v2467 = vunpack.c.h.b16 %v1860
        %v2468 = vunpack.c.l.b16 %v1861
        %v2469 = vunpack.c.h.b16 %v1861
        %v2470 = vunpack.c.l.b16 %v1862
        %v2471 = vunpack.c.h.b16 %v1862
        %v2472 = vunpack.c.l.b16 %v1863
        %v2473 = vunpack.c.h.b16 %v1863
        %v2474 = vunpack.c.l.b16 %v1864
        %v2475 = vunpack.c.h.b16 %v1864
        %v2476 = vunpack.c.l.b16 %v1865
        %v2477 = vunpack.c.h.b16 %v1865
        %v2478 = vunpack.c.l.b16 %v1866
        %v2479 = vunpack.c.h.b16 %v1866
        %v2480 = vunpack.c.l.b16 %v1867
        %v2481 = vunpack.c.h.b16 %v1867
        %v2482 = vunpack.c.l.b16 %v1868
        %v2483 = vunpack.c.h.b16 %v1868
        %v2484 = vunpack.c.l.b16 %v1869
        %v2485 = vunpack.c.h.b16 %v1869
        %v2486 = vunpack.c.l.b16 %v1870
        %v2487 = vunpack.c.h.b16 %v1870
        %v2488 = vunpack.c.l.b16 %v1871
        %v2489 = vunpack.c.h.b16 %v1871
        %v2490 = vunpack.c.l.b16 %v1872
        %v2491 = vunpack.c.h.b16 %v1872
        %v2492 = vunpack.c.l.b16 %v1873
        %v2493 = vunpack.c.h.b16 %v1873
        %v2494 = vunpack.c.l.b16 %v1874
        %v2495 = vunpack.c.h.b16 %v1874
        %v2496 = vunpack.c.l.b16 %v1875
        %v2497 = vunpack.c.h.b16 %v1875
        %v2498 = vunpack.c.l.b16 %v1876
        %v2499 = vunpack.c.h.b16 %v1876
        %v2500 = vunpack.c.l.b16 %v1877
        %v2501 = vunpack.c.h.b16 %v1877
        %v2502 = vunpack.c.l.b16 %v1878
        %v2503 = vunpack.c.h.b16 %v1878
        %v2504 = vunpack.c.l.b16 %v1879
        %v2505 = vunpack.c.h.b16 %v1879
        %v2506 = vunpack.c.l.b16 %v1880
        %v2507 = vunpack.c.h.b16 %v1880
        %v2508 = vunpack.c.l.b16 %v1881
        %v2509 = vunpack.c.h.b16 %v1881
        %v2510 = vunpack.c.l.b16 %v1882
        %v2511 = vunpack.c.h.b16 %v1882
        %v2512 = vunpack.c.l.b16 %v1883
        %v2513 = vunpack.c.h.b16 %v1883
        %v2514 = vunpack.c.l.b16 %v1884
        %v2515 = vunpack.c.h.b16 %v1884
        %v2516 = vunpack.c.l.b16 %v1885
        %v2517 = vunpack.c.h.b16 %v1885
        %v2518 = vunpack.c.l.b16 %v1886
        %v2519 = vunpack.c.h.b16 %v1886
        %v2520 = vunpack.c.l.b16 %v1887
        %v2521 = vunpack.c.h.b16 %v1887
        %v2522 = vunpack.c.l.b16 %v1888
        %v2523 = vunpack.c.h.b16 %v1888
        %v2524 = vunpack.c.l.b16 %v1889
        %v2525 = vunpack.c.h.b16 %v1889
        %v2526 = vunpack.c.l.b16 %v1890
        %v2527 = vunpack.c.h.b16 %v1890
        %v2528 = vunpack.c.l.b16 %v1891
        %v2529 = vunpack.c.h.b16 %v1891
        %v2530 = vunpack.c.l.b16 %v1892
        %v2531 = vunpack.c.h.b16 %v1892
        %v2532 = vunpack.c.l.b16 %v1893
        %v2533 = vunpack.c.h.b16 %v1893
        %v2534 = vunpack.c.l.b16 %v1894
        %v2535 = vunpack.c.h.b16 %v1894
        %v2536 = vunpack.c.l.b16 %v1895
        %v2537 = vunpack.c.h.b16 %v1895
        %v2538 = vunpack.c.l.b16 %v1896
        %v2539 = vunpack.c.h.b16 %v1896
        %v2540 = vunpack.c.l.b16 %v1897
        %v2541 = vunpack.c.h.b16 %v1897
        %v2542 = vunpack.c.l.b16 %v1898
        %v2543 = vunpack.c.h.b16 %v1898
        %v2544 = vunpack.c.l.b16 %v1899
        %v2545 = vunpack.c.h.b16 %v1899
        %v2546 = vunpack.c.l.b16 %v1900
        %v2547 = vunpack.c.h.b16 %v1900
        %v2548 = vunpack.c.l.b16 %v1901
        %v2549 = vunpack.c.h.b16 %v1901
        %v2550 = vunpack.c.l.b16 %v1902
        %v2551 = vunpack.c.h.b16 %v1902
        %v2552 = vunpack.c.l.b16 %v1903
        %v2553 = vunpack.c.h.b16 %v1903
        %v2554 = vunpack.c.l.b16 %v1904
        %v2555 = vunpack.c.h.b16 %v1904
        %v2556 = vunpack.c.l.b16 %v1905
        %v2557 = vunpack.c.h.b16 %v1905
        %v2558 = vunpack.c.l.b16 %v1906
        %v2559 = vunpack.c.h.b16 %v1906
        %v2560 = vunpack.c.l.b16 %v1907
        %v2561 = vunpack.c.h.b16 %v1907
        %v2562 = vunpack.c.l.b16 %v1908
        %v2563 = vunpack.c.h.b16 %v1908
        %v2564 = vunpack.c.l.b16 %v1909
        %v2565 = vunpack.c.h.b16 %v1909
        %v2566 = vunpack.c.l.b16 %v1910
        %v2567 = vunpack.c.h.b16 %v1910
        %v2568 = vunpack.c.l.b16 %v1911
        %v2569 = vunpack.c.h.b16 %v1911
        %v2570 = vunpack.c.l.b16 %v1912
        %v2571 = vunpack.c.h.b16 %v1912
        %v2572 = vunpack.c.l.b16 %v1913
        %v2573 = vunpack.c.h.b16 %v1913
        %v2574 = vunpack.c.l.b16 %v1914
        %v2575 = vunpack.c.h.b16 %v1914
        %v2576 = vunpack.c.l.b16 %v1915
        %v2577 = vunpack.c.h.b16 %v1915
        %v2578 = vunpack.c.l.b16 %v1916
        %v2579 = vunpack.c.h.b16 %v1916
        %v2580 = vunpack.c.l.b16 %v1917
        %v2581 = vunpack.c.h.b16 %v1917
        %v2582 = vunpack.c.l.b16 %v1918
        %v2583 = vunpack.c.h.b16 %v1918
        %v2584 = vunpack.c.l.b16 %v1919
        %v2585 = vunpack.c.h.b16 %v1919
        %v2586 = vunpack.c.l.b16 %v1920
        %v2587 = vunpack.c.h.b16 %v1920
        %v2588 = vunpack.c.l.b16 %v1921
        %v2589 = vunpack.c.h.b16 %v1921
        %v2590 = vunpack.c.l.b16 %v1922
        %v2591 = vunpack.c.h.b16 %v1922
        %v2592 = vunpack.c.l.b16 %v1923
        %v2593 = vunpack.c.h.b16 %v1923
        %v2594 = vunpack.c.l.b16 %v1924
        %v2595 = vunpack.c.h.b16 %v1924
        %v2596 = vunpack.c.l.b16 %v1925
        %v2597 = vunpack.c.h.b16 %v1925
        %v2598 = vunpack.c.l.b16 %v1926
        %v2599 = vunpack.c.h.b16 %v1926
        %v2600 = vunpack.c.l.b16 %v1927
        %v2601 = vunpack.c.h.b16 %v1927
        %v2602 = vunpack.c.l.b16 %v1928
        %v2603 = vunpack.c.h.b16 %v1928
        %v2604 = vunpack.c.l.b16 %v1929
        %v2605 = vunpack.c.h.b16 %v1929
        %v2606 = vunpack.c.l.b16 %v1930
        %v2607 = vunpack.c.h.b16 %v1930
        %v2608 = vunpack.c.l.b16 %v1931
        %v2609 = vunpack.c.h.b16 %v1931
        %v2610 = vunpack.c.l.b16 %v1932
        %v2611 = vunpack.c.h.b16 %v1932
        %v2612 = vunpack.c.l.b16 %v1933
        %v2613 = vunpack.c.h.b16 %v1933
        %v2614 = vunpack.c.l.b16 %v1934
        %v2615 = vunpack.c.h.b16 %v1934
        %v2616 = vunpack.c.l.b16 %v1935
        %v2617 = vunpack.c.h.b16 %v1935
        %v2618 = vunpack.c.l.b16 %v1936
        %v2619 = vunpack.c.h.b16 %v1936
        %v2620 = vunpack.c.l.b16 %v1937
        %v2621 = vunpack.c.h.b16 %v1937
        %v2622 = vunpack.c.l.b16 %v1938
        %v2623 = vunpack.c.h.b16 %v1938
        %v2624 = vunpack.c.l.b16 %v1939
        %v2625 = vunpack.c.h.b16 %v1939
        %v2626 = vunpack.c.l.b16 %v1940
        %v2627 = vunpack.c.h.b16 %v1940
        %v2628 = vunpack.c.l.b16 %v1941
        %v2629 = vunpack.c.h.b16 %v1941
        %v2630 = vunpack.c.l.b16 %v1942
        %v2631 = vunpack.c.h.b16 %v1942
        %v2632 = vunpack.c.l.b16 %v1943
        %v2633 = vunpack.c.h.b16 %v1943
        %v2634 = vunpack.c.l.b16 %v1944
        %v2635 = vunpack.c.h.b16 %v1944
        %v2636 = vunpack.c.l.b16 %v1945
        %v2637 = vunpack.c.h.b16 %v1945
        %v2638 = vunpack.c.l.b16 %v1946
        %v2639 = vunpack.c.h.b16 %v1946
        %v2640 = vunpack.c.l.b16 %v1947
        %v2641 = vunpack.c.h.b16 %v1947
        %v2642 = vunpack.c.l.b16 %v1948
        %v2643 = vunpack.c.h.b16 %v1948
        %v2644 = vunpack.c.l.b16 %v1949
        %v2645 = vunpack.c.h.b16 %v1949
        %v2646 = vunpack.c.l.b16 %v1950
        %v2647 = vunpack.c.h.b16 %v1950
        %v2648 = vunpack.c.l.b16 %v1951
        %v2649 = vunpack.c.h.b16 %v1951
        %v2650 = vunpack.c.l.b16 %v1952
        %v2651 = vunpack.c.h.b16 %v1952
        %v2652 = vunpack.c.l.b16 %v1953
        %v2653 = vunpack.c.h.b16 %v1953
        %v2654 = vunpack.c.l.b16 %v1954
        %v2655 = vunpack.c.h.b16 %v1954
        %v2656 = vunpack.c.l.b16 %v1955
        %v2657 = vunpack.c.h.b16 %v1955
        %v2658 = vunpack.c.l.b16 %v1956
        %v2659 = vunpack.c.h.b16 %v1956
        %v2660 = vunpack.c.l.b16 %v1957
        %v2661 = vunpack.c.h.b16 %v1957
        %v2662 = vunpack.c.l.b16 %v1958
        %v2663 = vunpack.c.h.b16 %v1958
        %v2664 = vunpack.c.l.b16 %v1959
        %v2665 = vunpack.c.h.b16 %v1959
        %v2666 = vunpack.c.l.b16 %v1960
        %v2667 = vunpack.c.h.b16 %v1960
        %v2668 = vunpack.c.l.b16 %v1961
        %v2669 = vunpack.c.h.b16 %v1961
        %v2670 = vunpack.c.l.b16 %v1962
        %v2671 = vunpack.c.h.b16 %v1962
        %v2672 = vunpack.c.l.b16 %v1963
        %v2673 = vunpack.c.h.b16 %v1963
        %v2674 = vunpack.c.l.b16 %v1964
        %v2675 = vunpack.c.h.b16 %v1964
        %v2676 = vunpack.c.l.b16 %v1965
        %v2677 = vunpack.c.h.b16 %v1965
        %v2678 = vunpack.c.l.b16 %v1966
        %v2679 = vunpack.c.h.b16 %v1966
        %v2680 = vunpack.c.l.b16 %v1967
        %v2681 = vunpack.c.h.b16 %v1967
        %v2682 = vunpack.c.l.b16 %v1968
        %v2683 = vunpack.c.h.b16 %v1968
        %v2684 = vunpack.c.l.b16 %v1969
        %v2685 = vunpack.c.h.b16 %v1969
        %v2686 = vunpack.c.l.b16 %v1970
        %v2687 = vunpack.c.h.b16 %v1970
        %v2688 = vunpack.c.l.b16 %v1971
        %v2689 = vunpack.c.h.b16 %v1971
        %v2690 = vunpack.c.l.b16 %v1972
        %v2691 = vunpack.c.h.b16 %v1972
        %v2692 = vunpack.c.l.b16 %v1973
        %v2693 = vunpack.c.h.b16 %v1973
        %v2694 = vunpack.c.l.b16 %v1974
        %v2695 = vunpack.c.h.b16 %v1974
        %v2696 = vunpack.c.l.b16 %v1975
        %v2697 = vunpack.c.h.b16 %v1975
        %v2698 = vunpack.c.l.b16 %v1976
        %v2699 = vunpack.c.h.b16 %v1976
        %v2700 = vunpack.c.l.b16 %v1977
        %v2701 = vunpack.c.h.b16 %v1977
        %v2702 = vunpack.c.l.b16 %v1978
        %v2703 = vunpack.c.h.b16 %v1978
        %v2704 = vunpack.c.l.b16 %v1979
        %v2705 = vunpack.c.h.b16 %v1979
        %v2706 = vunpack.c.l.b16 %v1980
        %v2707 = vunpack.c.h.b16 %v1980
        %v2708 = vunpack.c.l.b16 %v1981
        %v2709 = vunpack.c.h.b16 %v1981
        %v2710 = vunpack.c.l.b16 %v1982
        %v2711 = vunpack.c.h.b16 %v1982
        %v2712 = vunpack.c.l.b16 %v1983
        %v2713 = vunpack.c.h.b16 %v1983
        %v2714 = vunpack.c.l.b16 %v1984
        %v2715 = vunpack.c.h.b16 %v1984
        %v2716 = vunpack.c.l.b16 %v1985
        %v2717 = vunpack.c.h.b16 %v1985
        %v2718 = vunpack.c.l.b16 %v1986
        %v2719 = vunpack.c.h.b16 %v1986
        %v2720 = vunpack.c.l.b16 %v1987
        %v2721 = vunpack.c.h.b16 %v1987
        %v2722 = vunpack.c.l.b16 %v1988
        %v2723 = vunpack.c.h.b16 %v1988
        %v2724 = vunpack.c.l.b16 %v1989
        %v2725 = vunpack.c.h.b16 %v1989
        %v2726 = vunpack.c.l.b16 %v1990
        %v2727 = vunpack.c.h.b16 %v1990
        %v2728 = vunpack.c.l.b16 %v1991
        %v2729 = vunpack.c.h.b16 %v1991
        %v2730 = vunpack.c.l.b16 %v1992
        %v2731 = vunpack.c.h.b16 %v1992
        %v2732 = vunpack.c.l.b16 %v1993
        %v2733 = vunpack.c.h.b16 %v1993
        %v2734 = vunpack.c.l.b16 %v1994
        %v2735 = vunpack.c.h.b16 %v1994
        %v2736 = vunpack.c.l.b16 %v1995
        %v2737 = vunpack.c.h.b16 %v1995
        %v2738 = vunpack.c.l.b16 %v1996
        %v2739 = vunpack.c.h.b16 %v1996
        %v2740 = vunpack.c.l.b16 %v1997
        %v2741 = vunpack.c.h.b16 %v1997
        %v2742 = vunpack.c.l.b16 %v1998
        %v2743 = vunpack.c.h.b16 %v1998
        %v2744 = vunpack.c.l.b16 %v1999
        %v2745 = vunpack.c.h.b16 %v1999
        %v2746 = vunpack.c.l.b16 %v2000
        %v2747 = vunpack.c.h.b16 %v2000
        %v2748 = vunpack.c.l.b16 %v2001
        %v2749 = vunpack.c.h.b16 %v2001
        %v2750 = vunpack.c.l.b16 %v2002
        %v2751 = vunpack.c.h.b16 %v2002
        %v2752 = vunpack.c.l.b16 %v2003
        %v2753 = vunpack.c.h.b16 %v2003
        %v2754 = vunpack.c.l.b16 %v2004
        %v2755 = vunpack.c.h.b16 %v2004
        %v2756 = vunpack.c.l.b16 %v2005
        %v2757 = vunpack.c.h.b16 %v2005
        %v2758 = vunpack.c.l.b16 %v2006
        %v2759 = vunpack.c.h.b16 %v2006
        %v2760 = vunpack.c.l.b16 %v2007
        %v2761 = vunpack.c.h.b16 %v2007
        %v2762 = vunpack.c.l.b16 %v2008
        %v2763 = vunpack.c.h.b16 %v2008
        %v2764 = vunpack.c.l.b16 %v2009
        %v2765 = vunpack.c.h.b16 %v2009
        %v2766 = vunpack.c.l.b16 %v2010
        %v2767 = vunpack.c.h.b16 %v2010
        %v2768 = vunpack.c.l.b16 %v2011
        %v2769 = vunpack.c.h.b16 %v2011
        %v2770 = vunpack.c.l.b16 %v2012
        %v2771 = vunpack.c.h.b16 %v2012
        %v2772 = vunpack.c.l.b16 %v2013
        %v2773 = vunpack.c.h.b16 %v2013
        %v2774 = vunpack.c.l.b16 %v2014
        %v2775 = vunpack.c.h.b16 %v2014
        %v2776 = vunpack.c.l.b16 %v2015
        %v2777 = vunpack.c.h.b16 %v2015
        %v2778 = vunpack.c.l.b16 %v2016
        %v2779 = vunpack.c.h.b16 %v2016
        %v2780 = vunpack.c.l.b16 %v2017
        %v2781 = vunpack.c.h.b16 %v2017
        %v2782 = vunpack.c.l.b16 %v2018
        %v2783 = vunpack.c.h.b16 %v2018
        %v2784 = vunpack.c.l.b16 %v2019
        %v2785 = vunpack.c.h.b16 %v2019
        %v2786 = vunpack.c.l.b16 %v2020
        %v2787 = vunpack.c.h.b16 %v2020
        %v2788 = vunpack.c.l.b16 %v2021
        %v2789 = vunpack.c.h.b16 %v2021
        %v2790 = vpack.c.b16 %v2294, %v2278
        %v2791 = vpack.c.b16 %v2295, %v2279
        %v2792 = vpack.c.b16 %v2296, %v2280
        %v2793 = vpack.c.b16 %v2297, %v2281
        %v2794 = vpack.c.b16 %v2298, %v2282
        %v2795 = vpack.c.b16 %v2299, %v2283
        %v2796 = vpack.c.b16 %v2300, %v2284
        %v2797 = vpack.c.b16 %v2301, %v2285
        %v2798 = vpack.c.b16 %v2302, %v2286
        %v2799 = vpack.c.b16 %v2303, %v2287
        %v2800 = vpack.c.b16 %v2304, %v2288
        %v2801 = vpack.c.b16 %v2305, %v2289
        %v2802 = vpack.c.b16 %v2306, %v2290
        %v2803 = vpack.c.b16 %v2307, %v2291
        %v2804 = vpack.c.b16 %v2308, %v2292
        %v2805 = vpack.c.b16 %v2309, %v2293
        %v2806 = vpack.c.b16 %v2326, %v2310
        %v2807 = vpack.c.b16 %v2327, %v2311
        %v2808 = vpack.c.b16 %v2328, %v2312
        %v2809 = vpack.c.b16 %v2329, %v2313
        %v2810 = vpack.c.b16 %v2330, %v2314
        %v2811 = vpack.c.b16 %v2331, %v2315
        %v2812 = vpack.c.b16 %v2332, %v2316
        %v2813 = vpack.c.b16 %v2333, %v2317
        %v2814 = vpack.c.b16 %v2334, %v2318
        %v2815 = vpack.c.b16 %v2335, %v2319
        %v2816 = vpack.c.b16 %v2336, %v2320
        %v2817 = vpack.c.b16 %v2337, %v2321
        %v2818 = vpack.c.b16 %v2338, %v2322
        %v2819 = vpack.c.b16 %v2339, %v2323
        %v2820 = vpack.c.b16 %v2340, %v2324
        %v2821 = vpack.c.b16 %v2341, %v2325
        %v2822 = vpack.c.b16 %v2358, %v2342
        %v2823 = vpack.c.b16 %v2359, %v2343
        %v2824 = vpack.c.b16 %v2360, %v2344
        %v2825 = vpack.c.b16 %v2361, %v2345
        %v2826 = vpack.c.b16 %v2362, %v2346
        %v2827 = vpack.c.b16 %v2363, %v2347
        %v2828 = vpack.c.b16 %v2364, %v2348
        %v2829 = vpack.c.b16 %v2365, %v2349
        %v2830 = vpack.c.b16 %v2366, %v2350
        %v2831 = vpack.c.b16 %v2367, %v2351
        %v2832 = vpack.c.b16 %v2368, %v2352
        %v2833 = vpack.c.b16 %v2369, %v2353
        %v2834 = vpack.c.b16 %v2370, %v2354
        %v2835 = vpack.c.b16 %v2371, %v2355
        %v2836 = vpack.c.b16 %v2372, %v2356
        %v2837 = vpack.c.b16 %v2373, %v2357
        %v2838 = vpack.c.b16 %v2390, %v2374
        %v2839 = vpack.c.b16 %v2391, %v2375
        %v2840 = vpack.c.b16 %v2392, %v2376
        %v2841 = vpack.c.b16 %v2393, %v2377
        %v2842 = vpack.c.b16 %v2394, %v2378
        %v2843 = vpack.c.b16 %v2395, %v2379
        %v2844 = vpack.c.b16 %v2396, %v2380
        %v2845 = vpack.c.b16 %v2397, %v2381
        %v2846 = vpack.c.b16 %v2398, %v2382
        %v2847 = vpack.c.b16 %v2399, %v2383
        %v2848 = vpack.c.b16 %v2400, %v2384
        %v2849 = vpack.c.b16 %v2401, %v2385
        %v2850 = vpack.c.b16 %v2402, %v2386
        %v2851 = vpack.c.b16 %v2403, %v2387
        %v2852 = vpack.c.b16 %v2404, %v2388
        %v2853 = vpack.c.b16 %v2405, %v2389
        %v2854 = vpack.c.b16 %v2422, %v2406
        %v2855 = vpack.c.b16 %v2423, %v2407
        %v2856 = vpack.c.b16 %v2424, %v2408
        %v2857 = vpack.c.b16 %v2425, %v2409
        %v2858 = vpack.c.b16 %v2426, %v2410
        %v2859 = vpack.c.b16 %v2427, %v2411
        %v2860 = vpack.c.b16 %v2428, %v2412
        %v2861 = vpack.c.b16 %v2429, %v2413
        %v2862 = vpack.c.b16 %v2430, %v2414
        %v2863 = vpack.c.b16 %v2431, %v2415
        %v2864 = vpack.c.b16 %v2432, %v2416
        %v2865 = vpack.c.b16 %v2433, %v2417
        %v2866 = vpack.c.b16 %v2434, %v2418
        %v2867 = vpack.c.b16 %v2435, %v2419
        %v2868 = vpack.c.b16 %v2436, %v2420
        %v2869 = vpack.c.b16 %v2437, %v2421
        %v2870 = vpack.c.b16 %v2454, %v2438
        %v2871 = vpack.c.b16 %v2455, %v2439
        %v2872 = vpack.c.b16 %v2456, %v2440
        %v2873 = vpack.c.b16 %v2457, %v2441
        %v2874 = vpack.c.b16 %v2458, %v2442
        %v2875 = vpack.c.b16 %v2459, %v2443
        %v2876 = vpack.c.b16 %v2460, %v2444
        %v2877 = vpack.c.b16 %v2461, %v2445
        %v2878 = vpack.c.b16 %v2462, %v2446
        %v2879 = vpack.c.b16 %v2463, %v2447
        %v2880 = vpack.c.b16 %v2464, %v2448
        %v2881 = vpack.c.b16 %v2465, %v2449
        %v2882 = vpack.c.b16 %v2466, %v2450
        %v2883 = vpack.c.b16 %v2467, %v2451
        %v2884 = vpack.c.b16 %v2468, %v2452
        %v2885 = vpack.c.b16 %v2469, %v2453
        %v2886 = vpack.c.b16 %v2486, %v2470
        %v2887 = vpack.c.b16 %v2487, %v2471
        %v2888 = vpack.c.b16 %v2488, %v2472
        %v2889 = vpack.c.b16 %v2489, %v2473
        %v2890 = vpack.c.b16 %v2490, %v2474
        %v2891 = vpack.c.b16 %v2491, %v2475
        %v2892 = vpack.c.b16 %v2492, %v2476
        %v2893 = vpack.c.b16 %v2493, %v2477
        %v2894 = vpack.c.b16 %v2494, %v2478
        %v2895 = vpack.c.b16 %v2495, %v2479
        %v2896 = vpack.c.b16 %v2496, %v2480
        %v2897 = vpack.c.b16 %v2497, %v2481
        %v2898 = vpack.c.b16 %v2498, %v2482
        %v2899 = vpack.c.b16 %v2499, %v2483
        %v2900 = vpack.c.b16 %v2500, %v2484
        %v2901 = vpack.c.b16 %v2501, %v2485
        %v2902 = vpack.c.b16 %v2518, %v2502
        %v2903 = vpack.c.b16 %v2519, %v2503
        %v2904 = vpack.c.b16 %v2520, %v2504
        %v2905 = vpack.c.b16 %v2521, %v2505
        %v2906 = vpack.c.b16 %v2522, %v2506
        %v2907 = vpack.c.b16 %v2523, %v2507
        %v2908 = vpack.c.b16 %v2524, %v2508
        %v2909 = vpack.c.b16 %v2525, %v2509
        %v2910 = vpack.c.b16 %v2526, %v2510
        %v2911 = vpack.c.b16 %v2527, %v2511
        %v2912 = vpack.c.b16 %v2528, %v2512
        %v2913 = vpack.c.b16 %v2529, %v2513
        %v2914 = vpack.c.b16 %v2530, %v2514
        %v2915 = vpack.c.b16 %v2531, %v2515
        %v2916 = vpack.c.b16 %v2532, %v2516
        %v2917 = vpack.c.b16 %v2533, %v2517
        %v2918 = vpack.c.b16 %v2550, %v2534
        %v2919 = vpack.c.b16 %v2551, %v2535
        %v2920 = vpack.c.b16 %v2552, %v2536
        %v2921 = vpack.c.b16 %v2553, %v2537
        %v2922 = vpack.c.b16 %v2554, %v2538
        %v2923 = vpack.c.b16 %v2555, %v2539
        %v2924 = vpack.c.b16 %v2556, %v2540
        %v2925 = vpack.c.b16 %v2557, %v2541
        %v2926 = vpack.c.b16 %v2558, %v2542
        %v2927 = vpack.c.b16 %v2559, %v2543
        %v2928 = vpack.c.b16 %v2560, %v2544
        %v2929 = vpack.c.b16 %v2561, %v2545
        %v2930 = vpack.c.b16 %v2562, %v2546
        %v2931 = vpack.c.b16 %v2563, %v2547
        %v2932 = vpack.c.b16 %v2564, %v2548
        %v2933 = vpack.c.b16 %v2565, %v2549
        %v2934 = vpack.c.b16 %v2582, %v2566
        %v2935 = vpack.c.b16 %v2583, %v2567
        %v2936 = vpack.c.b16 %v2584, %v2568
        %v2937 = vpack.c.b16 %v2585, %v2569
        %v2938 = vpack.c.b16 %v2586, %v2570
        %v2939 = vpack.c.b16 %v2587, %v2571
        %v2940 = vpack.c.b16 %v2588, %v2572
        %v2941 = vpack.c.b16 %v2589, %v2573
        %v2942 = vpack.c.b16 %v2590, %v2574
        %v2943 = vpack.c.b16 %v2591, %v2575
        %v2944 = vpack.c.b16 %v2592, %v2576
        %v2945 = vpack.c.b16 %v2593, %v2577
        %v2946 = vpack.c.b16 %v2594, %v2578
        %v2947 = vpack.c.b16 %v2595, %v2579
        %v2948 = vpack.c.b16 %v2596, %v2580
        %v2949 = vpack.c.b16 %v2597, %v2581
        %v2950 = vpack.c.b16 %v2614, %v2598
        %v2951 = vpack.c.b16 %v2615, %v2599
        %v2952 = vpack.c.b16 %v2616, %v2600
        %v2953 = vpack.c.b16 %v2617, %v2601
        %v2954 = vpack.c.b16 %v2618, %v2602
        %v2955 = vpack.c.b16 %v2619, %v2603
        %v2956 = vpack.c.b16 %v2620, %v2604
        %v2957 = vpack.c.b16 %v2621, %v2605
        %v2958 = vpack.c.b16 %v2622, %v2606
        %v2959 = vpack.c.b16 %v2623, %v2607
        %v2960 = vpack.c.b16 %v2624, %v2608
        %v2961 = vpack.c.b16 %v2625, %v2609
        %v2962 = vpack.c.b16 %v2626, %v2610
        %v2963 = vpack.c.b16 %v2627, %v2611
        %v2964 = vpack.c.b16 %v2628, %v2612
        %v2965 = vpack.c.b16 %v2629, %v2613
        %v2966 = vpack.c.b16 %v2646, %v2630
        %v2967 = vpack.c.b16 %v2647, %v2631
        %v2968 = vpack.c.b16 %v2648, %v2632
        %v2969 = vpack.c.b16 %v2649, %v2633
        %v2970 = vpack.c.b16 %v2650, %v2634
        %v2971 = vpack.c.b16 %v2651, %v2635
        %v2972 = vpack.c.b16 %v2652, %v2636
        %v2973 = vpack.c.b16 %v2653, %v2637
        %v2974 = vpack.c.b16 %v2654, %v2638
        %v2975 = vpack.c.b16 %v2655, %v2639
        %v2976 = vpack.c.b16 %v2656, %v2640
        %v2977 = vpack.c.b16 %v2657, %v2641
        %v2978 = vpack.c.b16 %v2658, %v2642
        %v2979 = vpack.c.b16 %v2659, %v2643
        %v2980 = vpack.c.b16 %v2660, %v2644
        %v2981 = vpack.c.b16 %v2661, %v2645
        %v2982 = vpack.c.b16 %v2678, %v2662
        %v2983 = vpack.c.b16 %v2679, %v2663
        %v2984 = vpack.c.b16 %v2680, %v2664
        %v2985 = vpack.c.b16 %v2681, %v2665
        %v2986 = vpack.c.b16 %v2682, %v2666
        %v2987 = vpack.c.b16 %v2683, %v2667
        %v2988 = vpack.c.b16 %v2684, %v2668
        %v2989 = vpack.c.b16 %v2685, %v2669
        %v2990 = vpack.c.b16 %v2686, %v2670
        %v2991 = vpack.c.b16 %v2687, %v2671
        %v2992 = vpack.c.b16 %v2688, %v2672
        %v2993 = vpack.c.b16 %v2689, %v2673
        %v2994 = vpack.c.b16 %v2690, %v2674
        %v2995 = vpack.c.b16 %v2691, %v2675
        %v2996 = vpack.c.b16 %v2692, %v2676
        %v2997 = vpack.c.b16 %v2693, %v2677
        %v2998 = vpack.c.b16 %v2710, %v2694
        %v2999 = vpack.c.b16 %v2711, %v2695
        %v3000 = vpack.c.b16 %v2712, %v2696
        %v3001 = vpack.c.b16 %v2713, %v2697
        %v3002 = vpack.c.b16 %v2714, %v2698
        %v3003 = vpack.c.b16 %v2715, %v2699
        %v3004 = vpack.c.b16 %v2716, %v2700
        %v3005 = vpack.c.b16 %v2717, %v2701
        %v3006 = vpack.c.b16 %v2718, %v2702
        %v3007 = vpack.c.b16 %v2719, %v2703
        %v3008 = vpack.c.b16 %v2720, %v2704
        %v3009 = vpack.c.b16 %v2721, %v2705
        %v3010 = vpack.c.b16 %v2722, %v2706
        %v3011 = vpack.c.b16 %v2723, %v2707
        %v3012 = vpack.c.b16 %v2724, %v2708
        %v3013 = vpack.c.b16 %v2725, %v2709
        %v3014 = vpack.c.b16 %v2742, %v2726
        %v3015 = vpack.c.b16 %v2743, %v2727
        %v3016 = vpack.c.b16 %v2744, %v2728
        %v3017 = vpack.c.b16 %v2745, %v2729
        %v3018 = vpack.c.b16 %v2746, %v2730
        %v3019 = vpack.c.b16 %v2747, %v2731
        %v3020 = vpack.c.b16 %v2748, %v2732
        %v3021 = vpack.c.b16 %v2749, %v2733
        %v3022 = vpack.c.b16 %v2750, %v2734
        %v3023 = vpack.c.b16 %v2751, %v2735
        %v3024 = vpack.c.b16 %v2752, %v2736
        %v3025 = vpack.c.b16 %v2753, %v2737
        %v3026 = vpack.c.b16 %v2754, %v2738
        %v3027 = vpack.c.b16 %v2755, %v2739
        %v3028 = vpack.c.b16 %v2756, %v2740
        %v3029 = vpack.c.b16 %v2757, %v2741
        %v3030 = vpack.c.b16 %v2774, %v2758
        %v3031 = vpack.c.b16 %v2775, %v2759
        %v3032 = vpack.c.b16 %v2776, %v2760
        %v3033 = vpack.c.b16 %v2777, %v2761
        %v3034 = vpack.c.b16 %v2778, %v2762
        %v3035 = vpack.c.b16 %v2779, %v2763
        %v3036 = vpack.c.b16 %v2780, %v2764
        %v3037 = vpack.c.b16 %v2781, %v2765
        %v3038 = vpack.c.b16 %v2782, %v2766
        %v3039 = vpack.c.b16 %v2783, %v2767
        %v3040 = vpack.c.b16 %v2784, %v2768
        %v3041 = vpack.c.b16 %v2785, %v2769
        %v3042 = vpack.c.b16 %v2786, %v2770
        %v3043 = vpack.c.b16 %v2787, %v2771
        %v3044 = vpack.c.b16 %v2788, %v2772
        %v3045 = vpack.c.b16 %v2789, %v2773
        %3302 = vmatprep.subr.bf16.mxu0 %v2791
        %3303 = vmatpush1.bf16.msra.mxu0 %v2790
        %3304 = vmatprep.subr.bf16.mxu0 %v2807
        %3305 = vmatpush1.bf16.msra.mxu0 %v2806
        %3306 = vmatprep.subr.bf16.mxu0 %v2823
        %3307 = vmatpush1.bf16.msra.mxu0 %v2822
        %3308 = vmatprep.subr.bf16.mxu0 %v2839
        %3309 = vmatpush1.bf16.msra.mxu0 %v2838
        %3310 = vmatprep.subr.bf16.mxu0 %v2855
        %3311 = vmatpush1.bf16.msra.mxu0 %v2854
        %3312 = vmatprep.subr.bf16.mxu0 %v2871
        %3313 = vmatpush1.bf16.msra.mxu0 %v2870
        %3314 = vmatprep.subr.bf16.mxu0 %v2887
        %3315 = vmatpush1.bf16.msra.mxu0 %v2886
        %3316 = vmatprep.subr.bf16.mxu0 %v2903
        %3317 = vmatpush1.bf16.msra.mxu0 %v2902
        %3318 = vmatprep.subr.bf16.mxu0 %v2919
        %3319 = vmatpush1.bf16.msra.mxu0 %v2918
        %3320 = vmatprep.subr.bf16.mxu0 %v2935
        %3321 = vmatpush1.bf16.msra.mxu0 %v2934
        %3322 = vmatprep.subr.bf16.mxu0 %v2951
        %3323 = vmatpush1.bf16.msra.mxu0 %v2950
        %3324 = vmatprep.subr.bf16.mxu0 %v2967
        %3325 = vmatpush1.bf16.msra.mxu0 %v2966
        %3326 = vmatprep.subr.bf16.mxu0 %v2983
        %3327 = vmatpush1.bf16.msra.mxu0 %v2982
        %3328 = vmatprep.subr.bf16.mxu0 %v2999
        %3329 = vmatpush1.bf16.msra.mxu0 %v2998
        %3330 = vmatprep.subr.bf16.mxu0 %v3015
        %3331 = vmatpush1.bf16.msra.mxu0 %v3014
        %3332 = vmatprep.subr.bf16.mxu0 %v3031
        %3333 = vmatpush1.bf16.msra.mxu0 %v3030
        %3334 = vmatprep.mubr.bf16.mxu0 %v1765
        %3335 = vmatmul.mubr.bf16.gmra.mrb[0].mxu0 %v1764
        %v3336 = vpop.f32.mrb[0].mxu0
        %v3337 = vadd.f32 0.0, %v3336
        %v3338 = vpop.f32.mrb[0].mxu0
        %v3339 = vadd.f32 0.0, %v3338
        %v3340 = vpop.f32.mrb[0].mxu0
        %v3341 = vpop.f32.mrb[0].mxu0
        %3342 = vdwg.mxu0
        %3343 = vmatprep.subr.bf16.mxu0 %v2793
        %3344 = vmatpush1.bf16.msra.mxu0 %v2792
        %3345 = vmatprep.subr.bf16.mxu0 %v2809
        %3346 = vmatpush1.bf16.msra.mxu0 %v2808
        %3347 = vmatprep.subr.bf16.mxu0 %v2825
        %3348 = vmatpush1.bf16.msra.mxu0 %v2824
        %3349 = vmatprep.subr.bf16.mxu0 %v2841
        %3350 = vmatpush1.bf16.msra.mxu0 %v2840
        %3351 = vmatprep.subr.bf16.mxu0 %v2857
        %3352 = vmatpush1.bf16.msra.mxu0 %v2856
        %3353 = vmatprep.subr.bf16.mxu0 %v2873
        %3354 = vmatpush1.bf16.msra.mxu0 %v2872
        %3355 = vmatprep.subr.bf16.mxu0 %v2889
        %3356 = vmatpush1.bf16.msra.mxu0 %v2888
        %3357 = vmatprep.subr.bf16.mxu0 %v2905
        %3358 = vmatpush1.bf16.msra.mxu0 %v2904
        %3359 = vmatprep.subr.bf16.mxu0 %v2921
        %3360 = vmatpush1.bf16.msra.mxu0 %v2920
        %3361 = vmatprep.subr.bf16.mxu0 %v2937
        %3362 = vmatpush1.bf16.msra.mxu0 %v2936
        %3363 = vmatprep.subr.bf16.mxu0 %v2953
        %3364 = vmatpush1.bf16.msra.mxu0 %v2952
        %3365 = vmatprep.subr.bf16.mxu0 %v2969
        %3366 = vmatpush1.bf16.msra.mxu0 %v2968
        %3367 = vmatprep.subr.bf16.mxu0 %v2985
        %3368 = vmatpush1.bf16.msra.mxu0 %v2984
        %3369 = vmatprep.subr.bf16.mxu0 %v3001
        %3370 = vmatpush1.bf16.msra.mxu0 %v3000
        %3371 = vmatprep.subr.bf16.mxu0 %v3017
        %3372 = vmatpush1.bf16.msra.mxu0 %v3016
        %3373 = vmatprep.subr.bf16.mxu0 %v3033
        %3374 = vmatpush1.bf16.msra.mxu0 %v3032
        %3375 = vmatprep.mubr.bf16.mxu0 %v1765
        %3376 = vmatmul.mubr.bf16.gmra.mrb[0].mxu0 %v1764
        %v3377 = vpop.f32.mrb[0].mxu0
        %v3378 = vadd.f32 0.0, %v3377
        %v3379 = vpop.f32.mrb[0].mxu0
        %v3380 = vadd.f32 0.0, %v3379
        %v3381 = vpop.f32.mrb[0].mxu0
        %v3382 = vpop.f32.mrb[0].mxu0
        %3383 = vdwg.mxu0
        %3384 = vmatprep.subr.bf16.mxu0 %v2795
        %3385 = vmatpush1.bf16.msra.mxu0 %v2794
        %3386 = vmatprep.subr.bf16.mxu0 %v2811
        %3387 = vmatpush1.bf16.msra.mxu0 %v2810
        %3388 = vmatprep.subr.bf16.mxu0 %v2827
        %3389 = vmatpush1.bf16.msra.mxu0 %v2826
        %3390 = vmatprep.subr.bf16.mxu0 %v2843
        %3391 = vmatpush1.bf16.msra.mxu0 %v2842
        %3392 = vmatprep.subr.bf16.mxu0 %v2859
        %3393 = vmatpush1.bf16.msra.mxu0 %v2858
        %3394 = vmatprep.subr.bf16.mxu0 %v2875
        %3395 = vmatpush1.bf16.msra.mxu0 %v2874
        %3396 = vmatprep.subr.bf16.mxu0 %v2891
        %3397 = vmatpush1.bf16.msra.mxu0 %v2890
        %3398 = vmatprep.subr.bf16.mxu0 %v2907
        %3399 = vmatpush1.bf16.msra.mxu0 %v2906
        %3400 = vmatprep.subr.bf16.mxu0 %v2923
        %3401 = vmatpush1.bf16.msra.mxu0 %v2922
        %3402 = vmatprep.subr.bf16.mxu0 %v2939
        %3403 = vmatpush1.bf16.msra.mxu0 %v2938
        %3404 = vmatprep.subr.bf16.mxu0 %v2955
        %3405 = vmatpush1.bf16.msra.mxu0 %v2954
        %3406 = vmatprep.subr.bf16.mxu0 %v2971
        %3407 = vmatpush1.bf16.msra.mxu0 %v2970
        %3408 = vmatprep.subr.bf16.mxu0 %v2987
        %3409 = vmatpush1.bf16.msra.mxu0 %v2986
        %3410 = vmatprep.subr.bf16.mxu0 %v3003
        %3411 = vmatpush1.bf16.msra.mxu0 %v3002
        %3412 = vmatprep.subr.bf16.mxu0 %v3019
        %3413 = vmatpush1.bf16.msra.mxu0 %v3018
        %3414 = vmatprep.subr.bf16.mxu0 %v3035
        %3415 = vmatpush1.bf16.msra.mxu0 %v3034
        %3416 = vmatprep.mubr.bf16.mxu0 %v1765
        %3417 = vmatmul.mubr.bf16.gmra.mrb[0].mxu0 %v1764
        %v3418 = vpop.f32.mrb[0].mxu0
        %v3419 = vadd.f32 0.0, %v3418
        %v3420 = vpop.f32.mrb[0].mxu0
        %v3421 = vadd.f32 0.0, %v3420
        %v3422 = vpop.f32.mrb[0].mxu0
        %v3423 = vpop.f32.mrb[0].mxu0
        %3424 = vdwg.mxu0
        %3425 = vmatprep.subr.bf16.mxu0 %v2797
        %3426 = vmatpush1.bf16.msra.mxu0 %v2796
        %3427 = vmatprep.subr.bf16.mxu0 %v2813
        %3428 = vmatpush1.bf16.msra.mxu0 %v2812
        %3429 = vmatprep.subr.bf16.mxu0 %v2829
        %3430 = vmatpush1.bf16.msra.mxu0 %v2828
        %3431 = vmatprep.subr.bf16.mxu0 %v2845
        %3432 = vmatpush1.bf16.msra.mxu0 %v2844
        %3433 = vmatprep.subr.bf16.mxu0 %v2861
        %3434 = vmatpush1.bf16.msra.mxu0 %v2860
        %3435 = vmatprep.subr.bf16.mxu0 %v2877
        %3436 = vmatpush1.bf16.msra.mxu0 %v2876
        %3437 = vmatprep.subr.bf16.mxu0 %v2893
        %3438 = vmatpush1.bf16.msra.mxu0 %v2892
        %3439 = vmatprep.subr.bf16.mxu0 %v2909
        %3440 = vmatpush1.bf16.msra.mxu0 %v2908
        %3441 = vmatprep.subr.bf16.mxu0 %v2925
        %3442 = vmatpush1.bf16.msra.mxu0 %v2924
        %3443 = vmatprep.subr.bf16.mxu0 %v2941
        %3444 = vmatpush1.bf16.msra.mxu0 %v2940
        %3445 = vmatprep.subr.bf16.mxu0 %v2957
        %3446 = vmatpush1.bf16.msra.mxu0 %v2956
        %3447 = vmatprep.subr.bf16.mxu0 %v2973
        %3448 = vmatpush1.bf16.msra.mxu0 %v2972
        %3449 = vmatprep.subr.bf16.mxu0 %v2989
        %3450 = vmatpush1.bf16.msra.mxu0 %v2988
        %3451 = vmatprep.subr.bf16.mxu0 %v3005
        %3452 = vmatpush1.bf16.msra.mxu0 %v3004
        %3453 = vmatprep.subr.bf16.mxu0 %v3021
        %3454 = vmatpush1.bf16.msra.mxu0 %v3020
        %3455 = vmatprep.subr.bf16.mxu0 %v3037
        %3456 = vmatpush1.bf16.msra.mxu0 %v3036
        %3457 = vmatprep.mubr.bf16.mxu0 %v1765
        %3458 = vmatmul.mubr.bf16.gmra.mrb[0].mxu0 %v1764
        %v3459 = vpop.f32.mrb[0].mxu0
        %v3460 = vadd.f32 0.0, %v3459
        %v3461 = vpop.f32.mrb[0].mxu0
        %v3462 = vadd.f32 0.0, %v3461
        %v3463 = vpop.f32.mrb[0].mxu0
        %v3464 = vpop.f32.mrb[0].mxu0
        %3465 = vdwg.mxu0
        %3466 = vmatprep.subr.bf16.mxu0 %v2799
        %3467 = vmatpush1.bf16.msra.mxu0 %v2798
        %3468 = vmatprep.subr.bf16.mxu0 %v2815
        %3469 = vmatpush1.bf16.msra.mxu0 %v2814
        %3470 = vmatprep.subr.bf16.mxu0 %v2831
        %3471 = vmatpush1.bf16.msra.mxu0 %v2830
        %3472 = vmatprep.subr.bf16.mxu0 %v2847
        %3473 = vmatpush1.bf16.msra.mxu0 %v2846
        %3474 = vmatprep.subr.bf16.mxu0 %v2863
        %3475 = vmatpush1.bf16.msra.mxu0 %v2862
        %3476 = vmatprep.subr.bf16.mxu0 %v2879
        %3477 = vmatpush1.bf16.msra.mxu0 %v2878
        %3478 = vmatprep.subr.bf16.mxu0 %v2895
        %3479 = vmatpush1.bf16.msra.mxu0 %v2894
        %3480 = vmatprep.subr.bf16.mxu0 %v2911
        %3481 = vmatpush1.bf16.msra.mxu0 %v2910
        %3482 = vmatprep.subr.bf16.mxu0 %v2927
        %3483 = vmatpush1.bf16.msra.mxu0 %v2926
        %3484 = vmatprep.subr.bf16.mxu0 %v2943
        %3485 = vmatpush1.bf16.msra.mxu0 %v2942
        %3486 = vmatprep.subr.bf16.mxu0 %v2959
        %3487 = vmatpush1.bf16.msra.mxu0 %v2958
        %3488 = vmatprep.subr.bf16.mxu0 %v2975
        %3489 = vmatpush1.bf16.msra.mxu0 %v2974
        %3490 = vmatprep.subr.bf16.mxu0 %v2991
        %3491 = vmatpush1.bf16.msra.mxu0 %v2990
        %3492 = vmatprep.subr.bf16.mxu0 %v3007
        %3493 = vmatpush1.bf16.msra.mxu0 %v3006
        %3494 = vmatprep.subr.bf16.mxu0 %v3023
        %3495 = vmatpush1.bf16.msra.mxu0 %v3022
        %3496 = vmatprep.subr.bf16.mxu0 %v3039
        %3497 = vmatpush1.bf16.msra.mxu0 %v3038
        %3498 = vmatprep.mubr.bf16.mxu0 %v1765
        %3499 = vmatmul.mubr.bf16.gmra.mrb[0].mxu0 %v1764
        %v3500 = vpop.f32.mrb[0].mxu0
        %v3501 = vadd.f32 0.0, %v3500
        %v3502 = vpop.f32.mrb[0].mxu0
        %v3503 = vadd.f32 0.0, %v3502
        %v3504 = vpop.f32.mrb[0].mxu0
        %v3505 = vpop.f32.mrb[0].mxu0
        %3506 = vdwg.mxu0
        %3507 = vmatprep.subr.bf16.mxu0 %v2801
        %3508 = vmatpush1.bf16.msra.mxu0 %v2800
        %3509 = vmatprep.subr.bf16.mxu0 %v2817
        %3510 = vmatpush1.bf16.msra.mxu0 %v2816
        %3511 = vmatprep.subr.bf16.mxu0 %v2833
        %3512 = vmatpush1.bf16.msra.mxu0 %v2832
        %3513 = vmatprep.subr.bf16.mxu0 %v2849
        %3514 = vmatpush1.bf16.msra.mxu0 %v2848
        %3515 = vmatprep.subr.bf16.mxu0 %v2865
        %3516 = vmatpush1.bf16.msra.mxu0 %v2864
        %3517 = vmatprep.subr.bf16.mxu0 %v2881
        %3518 = vmatpush1.bf16.msra.mxu0 %v2880
        %3519 = vmatprep.subr.bf16.mxu0 %v2897
        %3520 = vmatpush1.bf16.msra.mxu0 %v2896
        %3521 = vmatprep.subr.bf16.mxu0 %v2913
        %3522 = vmatpush1.bf16.msra.mxu0 %v2912
        %3523 = vmatprep.subr.bf16.mxu0 %v2929
        %3524 = vmatpush1.bf16.msra.mxu0 %v2928
        %3525 = vmatprep.subr.bf16.mxu0 %v2945
        %3526 = vmatpush1.bf16.msra.mxu0 %v2944
        %3527 = vmatprep.subr.bf16.mxu0 %v2961
        %3528 = vmatpush1.bf16.msra.mxu0 %v2960
        %3529 = vmatprep.subr.bf16.mxu0 %v2977
        %3530 = vmatpush1.bf16.msra.mxu0 %v2976
        %3531 = vmatprep.subr.bf16.mxu0 %v2993
        %3532 = vmatpush1.bf16.msra.mxu0 %v2992
        %3533 = vmatprep.subr.bf16.mxu0 %v3009
        %3534 = vmatpush1.bf16.msra.mxu0 %v3008
        %3535 = vmatprep.subr.bf16.mxu0 %v3025
        %3536 = vmatpush1.bf16.msra.mxu0 %v3024
        %3537 = vmatprep.subr.bf16.mxu0 %v3041
        %3538 = vmatpush1.bf16.msra.mxu0 %v3040
        %3539 = vmatprep.mubr.bf16.mxu0 %v1765
        %3540 = vmatmul.mubr.bf16.gmra.mrb[0].mxu0 %v1764
        %v3541 = vpop.f32.mrb[0].mxu0
        %v3542 = vadd.f32 0.0, %v3541
        %v3543 = vpop.f32.mrb[0].mxu0
        %v3544 = vadd.f32 0.0, %v3543
        %v3545 = vpop.f32.mrb[0].mxu0
        %v3546 = vpop.f32.mrb[0].mxu0
        %3547 = vdwg.mxu0
        %3548 = vmatprep.subr.bf16.mxu0 %v2803
        %3549 = vmatpush1.bf16.msra.mxu0 %v2802
        %3550 = vmatprep.subr.bf16.mxu0 %v2819
        %3551 = vmatpush1.bf16.msra.mxu0 %v2818
        %3552 = vmatprep.subr.bf16.mxu0 %v2835
        %3553 = vmatpush1.bf16.msra.mxu0 %v2834
        %3554 = vmatprep.subr.bf16.mxu0 %v2851
        %3555 = vmatpush1.bf16.msra.mxu0 %v2850
        %3556 = vmatprep.subr.bf16.mxu0 %v2867
        %3557 = vmatpush1.bf16.msra.mxu0 %v2866
        %3558 = vmatprep.subr.bf16.mxu0 %v2883
        %3559 = vmatpush1.bf16.msra.mxu0 %v2882
        %3560 = vmatprep.subr.bf16.mxu0 %v2899
        %3561 = vmatpush1.bf16.msra.mxu0 %v2898
        %3562 = vmatprep.subr.bf16.mxu0 %v2915
        %3563 = vmatpush1.bf16.msra.mxu0 %v2914
        %3564 = vmatprep.subr.bf16.mxu0 %v2931
        %3565 = vmatpush1.bf16.msra.mxu0 %v2930
        %3566 = vmatprep.subr.bf16.mxu0 %v2947
        %3567 = vmatpush1.bf16.msra.mxu0 %v2946
        %3568 = vmatprep.subr.bf16.mxu0 %v2963
        %3569 = vmatpush1.bf16.msra.mxu0 %v2962
        %3570 = vmatprep.subr.bf16.mxu0 %v2979
        %3571 = vmatpush1.bf16.msra.mxu0 %v2978
        %3572 = vmatprep.subr.bf16.mxu0 %v2995
        %3573 = vmatpush1.bf16.msra.mxu0 %v2994
        %3574 = vmatprep.subr.bf16.mxu0 %v3011
        %3575 = vmatpush1.bf16.msra.mxu0 %v3010
        %3576 = vmatprep.subr.bf16.mxu0 %v3027
        %3577 = vmatpush1.bf16.msra.mxu0 %v3026
        %3578 = vmatprep.subr.bf16.mxu0 %v3043
        %3579 = vmatpush1.bf16.msra.mxu0 %v3042
        %3580 = vmatprep.mubr.bf16.mxu0 %v1765
        %3581 = vmatmul.mubr.bf16.gmra.mrb[0].mxu0 %v1764
        %v3582 = vpop.f32.mrb[0].mxu0
        %v3583 = vadd.f32 0.0, %v3582
        %v3584 = vpop.f32.mrb[0].mxu0
        %v3585 = vadd.f32 0.0, %v3584
        %v3586 = vpop.f32.mrb[0].mxu0
        %v3587 = vpop.f32.mrb[0].mxu0
        %3588 = vdwg.mxu0
        %3589 = vmatprep.subr.bf16.mxu0 %v2805
        %3590 = vmatpush1.bf16.msra.mxu0 %v2804
        %3591 = vmatprep.subr.bf16.mxu0 %v2821
        %3592 = vmatpush1.bf16.msra.mxu0 %v2820
        %3593 = vmatprep.subr.bf16.mxu0 %v2837
        %3594 = vmatpush1.bf16.msra.mxu0 %v2836
        %3595 = vmatprep.subr.bf16.mxu0 %v2853
        %3596 = vmatpush1.bf16.msra.mxu0 %v2852
        %3597 = vmatprep.subr.bf16.mxu0 %v2869
        %3598 = vmatpush1.bf16.msra.mxu0 %v2868
        %3599 = vmatprep.subr.bf16.mxu0 %v2885
        %3600 = vmatpush1.bf16.msra.mxu0 %v2884
        %3601 = vmatprep.subr.bf16.mxu0 %v2901
        %3602 = vmatpush1.bf16.msra.mxu0 %v2900
        %3603 = vmatprep.subr.bf16.mxu0 %v2917
        %3604 = vmatpush1.bf16.msra.mxu0 %v2916
        %3605 = vmatprep.subr.bf16.mxu0 %v2933
        %3606 = vmatpush1.bf16.msra.mxu0 %v2932
        %3607 = vmatprep.subr.bf16.mxu0 %v2949
        %3608 = vmatpush1.bf16.msra.mxu0 %v2948
        %3609 = vmatprep.subr.bf16.mxu0 %v2965
        %3610 = vmatpush1.bf16.msra.mxu0 %v2964
        %3611 = vmatprep.subr.bf16.mxu0 %v2981
        %3612 = vmatpush1.bf16.msra.mxu0 %v2980
        %3613 = vmatprep.subr.bf16.mxu0 %v2997
        %3614 = vmatpush1.bf16.msra.mxu0 %v2996
        %3615 = vmatprep.subr.bf16.mxu0 %v3013
        %3616 = vmatpush1.bf16.msra.mxu0 %v3012
        %3617 = vmatprep.subr.bf16.mxu0 %v3029
        %3618 = vmatpush1.bf16.msra.mxu0 %v3028
        %3619 = vmatprep.subr.bf16.mxu0 %v3045
        %3620 = vmatpush1.bf16.msra.mxu0 %v3044
        %3621 = vmatprep.mubr.bf16.mxu0 %v1765
        %3622 = vmatmul.mubr.bf16.gmra.mrb[0].mxu0 %v1764
        %v3623 = vpop.f32.mrb[0].mxu0
        %v3624 = vadd.f32 0.0, %v3623
        %v3625 = vpop.f32.mrb[0].mxu0
        %v3626 = vadd.f32 0.0, %v3625
        %v3627 = vpop.f32.mrb[0].mxu0
        %v3628 = vpop.f32.mrb[0].mxu0
        %3629 = vdwg.mxu0
        %v3630 = vadd.f32 %v1748, %v3337
        %v3631 = vadd.f32 %v1749, %v3339
        %v3632 = vadd.f32 %v1750, %v3378
        %v3633 = vadd.f32 %v1751, %v3380
        %v3634 = vadd.f32 %v1752, %v3419
        %v3635 = vadd.f32 %v1753, %v3421
        %v3636 = vadd.f32 %v1754, %v3460
        %v3637 = vadd.f32 %v1755, %v3462
        %v3638 = vadd.f32 %v1756, %v3501
        %v3639 = vadd.f32 %v1757, %v3503
        %v3640 = vadd.f32 %v1758, %v3542
        %v3641 = vadd.f32 %v1759, %v3544
        %v3642 = vadd.f32 %v1760, %v3583
        %v3643 = vadd.f32 %v1761, %v3585
        %v3644 = vadd.f32 %v1762, %v3624
        %v3645 = vadd.f32 %v1763, %v3626
        %3646 = vst [vmem:[#allocation2] sm:$0xff] %v3630
        %3647 = vst [vmem:[#allocation2 + $0x8] sm:$0xff] %v3631
        %3648 = vst [vmem:[#allocation2 + $0x10] sm:$0xff] %v3632
        %3649 = vst [vmem:[#allocation2 + $0x18] sm:$0xff] %v3633
        %3650 = vst [vmem:[#allocation2 + $0x20] sm:$0xff] %v3634
        %3651 = vst [vmem:[#allocation2 + $0x28] sm:$0xff] %v3635
        %3652 = vst [vmem:[#allocation2 + $0x30] sm:$0xff] %v3636
        %3653 = vst [vmem:[#allocation2 + $0x38] sm:$0xff] %v3637
        %3654 = vst [vmem:[#allocation2 + $0x40] sm:$0xff] %v3638
        %3655 = vst [vmem:[#allocation2 + $0x48] sm:$0xff] %v3639
        %3656 = vst [vmem:[#allocation2 + $0x50] sm:$0xff] %v3640
        %3657 = vst [vmem:[#allocation2 + $0x58] sm:$0xff] %v3641
        %3658 = vst [vmem:[#allocation2 + $0x60] sm:$0xff] %v3642
        %3659 = vst [vmem:[#allocation2 + $0x68] sm:$0xff] %v3643
        %3660 = vst [vmem:[#allocation2 + $0x70] sm:$0xff] %v3644
        %3661 = vst [vmem:[#allocation2 + $0x78] sm:$0xff] %v3645
        %p3662 = scmp.eq.s32.totalorder %s43, 7
        // Predicated region
        $region137: #{tpu_custom_call.1} parent=75 // pred_check
          %p3663 = pneg %p3662
        $region138: #{tpu_custom_call.1} parent=75 // pred_check_branch
          %3665 = sbr.rel (%p3663) target = $region140
        $region139: #{tpu_custom_call.1} parent=75 // pred_region
          %v3666 = vld [vmem:[#allocation2] sm:$0xff]
          %v3667 = vld [vmem:[#allocation2 + $0x8] sm:$0xff]
          %v3668 = vld [vmem:[#allocation2 + $0x10] sm:$0xff]
          %v3669 = vld [vmem:[#allocation2 + $0x18] sm:$0xff]
          %v3670 = vld [vmem:[#allocation2 + $0x20] sm:$0xff]
          %v3671 = vld [vmem:[#allocation2 + $0x28] sm:$0xff]
          %v3672 = vld [vmem:[#allocation2 + $0x30] sm:$0xff]
          %v3673 = vld [vmem:[#allocation2 + $0x38] sm:$0xff]
          %v3674 = vld [vmem:[#allocation2 + $0x40] sm:$0xff]
          %v3675 = vld [vmem:[#allocation2 + $0x48] sm:$0xff]
          %v3676 = vld [vmem:[#allocation2 + $0x50] sm:$0xff]
          %v3677 = vld [vmem:[#allocation2 + $0x58] sm:$0xff]
          %v3678 = vld [vmem:[#allocation2 + $0x60] sm:$0xff]
          %v3679 = vld [vmem:[#allocation2 + $0x68] sm:$0xff]
          %v3680 = vld [vmem:[#allocation2 + $0x70] sm:$0xff]
          %v3681 = vld [vmem:[#allocation2 + $0x78] sm:$0xff]
          %v3682 = vld [vmem:[#allocation12] sm:$0xff]
          %v3683 = vld [vmem:[#allocation12 + $0x8] sm:$0xff]
          %v3686 = vlaneseq
          %v3687 = vshrl.u32 %v3686, 7
          %v3688 = vsub.s32 0, %v3687
          %v3689 = vrot.slane %v3682, %v3688
          %v3690 = vlaneseq
          %v3691 = vshrl.u32 %v3690, 7
          %v3692 = vsub.s32 1, %v3691
          %v3693 = vrot.slane %v3682, %v3692
          %v3694 = vlaneseq
          %v3695 = vshrl.u32 %v3694, 7
          %v3696 = vsub.s32 2, %v3695
          %v3697 = vrot.slane %v3682, %v3696
          %v3698 = vlaneseq
          %v3699 = vshrl.u32 %v3698, 7
          %v3700 = vsub.s32 3, %v3699
          %v3701 = vrot.slane %v3682, %v3700
          %v3702 = vlaneseq
          %v3703 = vshrl.u32 %v3702, 7
          %v3704 = vsub.s32 4, %v3703
          %v3705 = vrot.slane %v3682, %v3704
          %v3706 = vlaneseq
          %v3707 = vshrl.u32 %v3706, 7
          %v3708 = vsub.s32 5, %v3707
          %v3709 = vrot.slane %v3682, %v3708
          %v3710 = vlaneseq
          %v3711 = vshrl.u32 %v3710, 7
          %v3712 = vsub.s32 6, %v3711
          %v3713 = vrot.slane %v3682, %v3712
          %v3714 = vlaneseq
          %v3715 = vshrl.u32 %v3714, 7
          %v3716 = vsub.s32 7, %v3715
          %v3717 = vrot.slane %v3682, %v3716
          %v3718 = vlaneseq
          %v3719 = vshrl.u32 %v3718, 7
          %v3720 = vsub.s32 0, %v3719
          %v3721 = vrot.slane %v3683, %v3720
          %v3722 = vlaneseq
          %v3723 = vshrl.u32 %v3722, 7
          %v3724 = vsub.s32 1, %v3723
          %v3725 = vrot.slane %v3683, %v3724
          %v3726 = vlaneseq
          %v3727 = vshrl.u32 %v3726, 7
          %v3728 = vsub.s32 2, %v3727
          %v3729 = vrot.slane %v3683, %v3728
          %v3730 = vlaneseq
          %v3731 = vshrl.u32 %v3730, 7
          %v3732 = vsub.s32 3, %v3731
          %v3733 = vrot.slane %v3683, %v3732
          %v3734 = vlaneseq
          %v3735 = vshrl.u32 %v3734, 7
          %v3736 = vsub.s32 4, %v3735
          %v3737 = vrot.slane %v3683, %v3736
          %v3738 = vlaneseq
          %v3739 = vshrl.u32 %v3738, 7
          %v3740 = vsub.s32 5, %v3739
          %v3741 = vrot.slane %v3683, %v3740
          %v3742 = vlaneseq
          %v3743 = vshrl.u32 %v3742, 7
          %v3744 = vsub.s32 6, %v3743
          %v3745 = vrot.slane %v3683, %v3744
          %v3746 = vlaneseq
          %v3747 = vshrl.u32 %v3746, 7
          %v3748 = vsub.s32 7, %v3747
          %v3749 = vrot.slane %v3683, %v3748
          %v3766 = vadd.f32 %v3666, %v3689
          %v3767 = vadd.f32 %v3667, %v3693
          %v3768 = vadd.f32 %v3668, %v3697
          %v3769 = vadd.f32 %v3669, %v3701
          %v3770 = vadd.f32 %v3670, %v3705
          %v3771 = vadd.f32 %v3671, %v3709
          %v3772 = vadd.f32 %v3672, %v3713
          %v3773 = vadd.f32 %v3673, %v3717
          %v3774 = vadd.f32 %v3674, %v3721
          %v3775 = vadd.f32 %v3675, %v3725
          %v3776 = vadd.f32 %v3676, %v3729
          %v3777 = vadd.f32 %v3677, %v3733
          %v3778 = vadd.f32 %v3678, %v3737
          %v3779 = vadd.f32 %v3679, %v3741
          %v3780 = vadd.f32 %v3680, %v3745
          %v3781 = vadd.f32 %v3681, %v3749
          %v3782 = vmax.f32 %v3766, 0.0
          %v3783 = vmax.f32 %v3767, 0.0
          %v3784 = vmax.f32 %v3768, 0.0
          %v3785 = vmax.f32 %v3769, 0.0
          %v3786 = vmax.f32 %v3770, 0.0
          %v3787 = vmax.f32 %v3771, 0.0
          %v3788 = vmax.f32 %v3772, 0.0
          %v3789 = vmax.f32 %v3773, 0.0
          %v3790 = vmax.f32 %v3774, 0.0
          %v3791 = vmax.f32 %v3775, 0.0
          %v3792 = vmax.f32 %v3776, 0.0
          %v3793 = vmax.f32 %v3777, 0.0
          %v3794 = vmax.f32 %v3778, 0.0
          %v3795 = vmax.f32 %v3779, 0.0
          %v3796 = vmax.f32 %v3780, 0.0
          %v3797 = vmax.f32 %v3781, 0.0
          %v3798 = vpack.c.bf16 %v3782, %v3782
          %v3799 = vpack.c.bf16 %v3783, %v3783
          %v3800 = vpack.c.bf16 %v3784, %v3784
          %v3801 = vpack.c.bf16 %v3785, %v3785
          %v3802 = vpack.c.bf16 %v3786, %v3786
          %v3803 = vpack.c.bf16 %v3787, %v3787
          %v3804 = vpack.c.bf16 %v3788, %v3788
          %v3805 = vpack.c.bf16 %v3789, %v3789
          %v3806 = vpack.c.bf16 %v3790, %v3790
          %v3807 = vpack.c.bf16 %v3791, %v3791
          %v3808 = vpack.c.bf16 %v3792, %v3792
          %v3809 = vpack.c.bf16 %v3793, %v3793
          %v3810 = vpack.c.bf16 %v3794, %v3794
          %v3811 = vpack.c.bf16 %v3795, %v3795
          %v3812 = vpack.c.bf16 %v3796, %v3796
          %v3813 = vpack.c.bf16 %v3797, %v3797
          %v3814 = vld [vmem:[#allocation13] sm:$0xff]
          %v3815 = vld [vmem:[#allocation13 + $0x8] sm:$0xff]
          %v3816 = vld [vmem:[#allocation13 + $0x10] sm:$0xff]
          %v3817 = vld [vmem:[#allocation13 + $0x18] sm:$0xff]
          %v3818 = vld [vmem:[#allocation13 + $0x20] sm:$0xff]
          %v3819 = vld [vmem:[#allocation13 + $0x28] sm:$0xff]
          %v3820 = vld [vmem:[#allocation13 + $0x30] sm:$0xff]
          %v3821 = vld [vmem:[#allocation13 + $0x38] sm:$0xff]
          %v3822 = vld [vmem:[#allocation13 + $0x40] sm:$0xff]
          %v3823 = vld [vmem:[#allocation13 + $0x48] sm:$0xff]
          %v3824 = vld [vmem:[#allocation13 + $0x50] sm:$0xff]
          %v3825 = vld [vmem:[#allocation13 + $0x58] sm:$0xff]
          %v3826 = vld [vmem:[#allocation13 + $0x60] sm:$0xff]
          %v3827 = vld [vmem:[#allocation13 + $0x68] sm:$0xff]
          %v3828 = vld [vmem:[#allocation13 + $0x70] sm:$0xff]
          %v3829 = vld [vmem:[#allocation13 + $0x78] sm:$0xff]
          %v3830 = vld [vmem:[#allocation13 + $0x80] sm:$0xff]
          %v3831 = vld [vmem:[#allocation13 + $0x88] sm:$0xff]
          %v3832 = vld [vmem:[#allocation13 + $0x90] sm:$0xff]
          %v3833 = vld [vmem:[#allocation13 + $0x98] sm:$0xff]
          %v3834 = vld [vmem:[#allocation13 + $0xa0] sm:$0xff]
          %v3835 = vld [vmem:[#allocation13 + $0xa8] sm:$0xff]
          %v3836 = vld [vmem:[#allocation13 + $0xb0] sm:$0xff]
          %v3837 = vld [vmem:[#allocation13 + $0xb8] sm:$0xff]
          %v3838 = vld [vmem:[#allocation13 + $0xc0] sm:$0xff]
          %v3839 = vld [vmem:[#allocation13 + $0xc8] sm:$0xff]
          %v3840 = vld [vmem:[#allocation13 + $0xd0] sm:$0xff]
          %v3841 = vld [vmem:[#allocation13 + $0xd8] sm:$0xff]
          %v3842 = vld [vmem:[#allocation13 + $0xe0] sm:$0xff]
          %v3843 = vld [vmem:[#allocation13 + $0xe8] sm:$0xff]
          %v3844 = vld [vmem:[#allocation13 + $0xf0] sm:$0xff]
          %v3845 = vld [vmem:[#allocation13 + $0xf8] sm:$0xff]
          %v3846 = vld [vmem:[#allocation13 + $0x100] sm:$0xff]
          %v3847 = vld [vmem:[#allocation13 + $0x108] sm:$0xff]
          %v3848 = vld [vmem:[#allocation13 + $0x110] sm:$0xff]
          %v3849 = vld [vmem:[#allocation13 + $0x118] sm:$0xff]
          %v3850 = vld [vmem:[#allocation13 + $0x120] sm:$0xff]
          %v3851 = vld [vmem:[#allocation13 + $0x128] sm:$0xff]
          %v3852 = vld [vmem:[#allocation13 + $0x130] sm:$0xff]
          %v3853 = vld [vmem:[#allocation13 + $0x138] sm:$0xff]
          %v3854 = vld [vmem:[#allocation13 + $0x140] sm:$0xff]
          %v3855 = vld [vmem:[#allocation13 + $0x148] sm:$0xff]
          %v3856 = vld [vmem:[#allocation13 + $0x150] sm:$0xff]
          %v3857 = vld [vmem:[#allocation13 + $0x158] sm:$0xff]
          %v3858 = vld [vmem:[#allocation13 + $0x160] sm:$0xff]
          %v3859 = vld [vmem:[#allocation13 + $0x168] sm:$0xff]
          %v3860 = vld [vmem:[#allocation13 + $0x170] sm:$0xff]
          %v3861 = vld [vmem:[#allocation13 + $0x178] sm:$0xff]
          %v3862 = vld [vmem:[#allocation13 + $0x180] sm:$0xff]
          %v3863 = vld [vmem:[#allocation13 + $0x188] sm:$0xff]
          %v3864 = vld [vmem:[#allocation13 + $0x190] sm:$0xff]
          %v3865 = vld [vmem:[#allocation13 + $0x198] sm:$0xff]
          %v3866 = vld [vmem:[#allocation13 + $0x1a0] sm:$0xff]
          %v3867 = vld [vmem:[#allocation13 + $0x1a8] sm:$0xff]
          %v3868 = vld [vmem:[#allocation13 + $0x1b0] sm:$0xff]
          %v3869 = vld [vmem:[#allocation13 + $0x1b8] sm:$0xff]
          %v3870 = vld [vmem:[#allocation13 + $0x1c0] sm:$0xff]
          %v3871 = vld [vmem:[#allocation13 + $0x1c8] sm:$0xff]
          %v3872 = vld [vmem:[#allocation13 + $0x1d0] sm:$0xff]
          %v3873 = vld [vmem:[#allocation13 + $0x1d8] sm:$0xff]
          %v3874 = vld [vmem:[#allocation13 + $0x1e0] sm:$0xff]
          %v3875 = vld [vmem:[#allocation13 + $0x1e8] sm:$0xff]
          %v3876 = vld [vmem:[#allocation13 + $0x1f0] sm:$0xff]
          %v3877 = vld [vmem:[#allocation13 + $0x1f8] sm:$0xff]
          %v3878 = vld [vmem:[#allocation13 + $0x200] sm:$0xff]
          %v3879 = vld [vmem:[#allocation13 + $0x208] sm:$0xff]
          %v3880 = vld [vmem:[#allocation13 + $0x210] sm:$0xff]
          %v3881 = vld [vmem:[#allocation13 + $0x218] sm:$0xff]
          %v3882 = vld [vmem:[#allocation13 + $0x220] sm:$0xff]
          %v3883 = vld [vmem:[#allocation13 + $0x228] sm:$0xff]
          %v3884 = vld [vmem:[#allocation13 + $0x230] sm:$0xff]
          %v3885 = vld [vmem:[#allocation13 + $0x238] sm:$0xff]
          %v3886 = vld [vmem:[#allocation13 + $0x240] sm:$0xff]
          %v3887 = vld [vmem:[#allocation13 + $0x248] sm:$0xff]
          %v3888 = vld [vmem:[#allocation13 + $0x250] sm:$0xff]
          %v3889 = vld [vmem:[#allocation13 + $0x258] sm:$0xff]
          %v3890 = vld [vmem:[#allocation13 + $0x260] sm:$0xff]
          %v3891 = vld [vmem:[#allocation13 + $0x268] sm:$0xff]
          %v3892 = vld [vmem:[#allocation13 + $0x270] sm:$0xff]
          %v3893 = vld [vmem:[#allocation13 + $0x278] sm:$0xff]
          %v3894 = vld [vmem:[#allocation13 + $0x280] sm:$0xff]
          %v3895 = vld [vmem:[#allocation13 + $0x288] sm:$0xff]
          %v3896 = vld [vmem:[#allocation13 + $0x290] sm:$0xff]
          %v3897 = vld [vmem:[#allocation13 + $0x298] sm:$0xff]
          %v3898 = vld [vmem:[#allocation13 + $0x2a0] sm:$0xff]
          %v3899 = vld [vmem:[#allocation13 + $0x2a8] sm:$0xff]
          %v3900 = vld [vmem:[#allocation13 + $0x2b0] sm:$0xff]
          %v3901 = vld [vmem:[#allocation13 + $0x2b8] sm:$0xff]
          %v3902 = vld [vmem:[#allocation13 + $0x2c0] sm:$0xff]
          %v3903 = vld [vmem:[#allocation13 + $0x2c8] sm:$0xff]
          %v3904 = vld [vmem:[#allocation13 + $0x2d0] sm:$0xff]
          %v3905 = vld [vmem:[#allocation13 + $0x2d8] sm:$0xff]
          %v3906 = vld [vmem:[#allocation13 + $0x2e0] sm:$0xff]
          %v3907 = vld [vmem:[#allocation13 + $0x2e8] sm:$0xff]
          %v3908 = vld [vmem:[#allocation13 + $0x2f0] sm:$0xff]
          %v3909 = vld [vmem:[#allocation13 + $0x2f8] sm:$0xff]
          %v3910 = vld [vmem:[#allocation13 + $0x300] sm:$0xff]
          %v3911 = vld [vmem:[#allocation13 + $0x308] sm:$0xff]
          %v3912 = vld [vmem:[#allocation13 + $0x310] sm:$0xff]
          %v3913 = vld [vmem:[#allocation13 + $0x318] sm:$0xff]
          %v3914 = vld [vmem:[#allocation13 + $0x320] sm:$0xff]
          %v3915 = vld [vmem:[#allocation13 + $0x328] sm:$0xff]
          %v3916 = vld [vmem:[#allocation13 + $0x330] sm:$0xff]
          %v3917 = vld [vmem:[#allocation13 + $0x338] sm:$0xff]
          %v3918 = vld [vmem:[#allocation13 + $0x340] sm:$0xff]
          %v3919 = vld [vmem:[#allocation13 + $0x348] sm:$0xff]
          %v3920 = vld [vmem:[#allocation13 + $0x350] sm:$0xff]
          %v3921 = vld [vmem:[#allocation13 + $0x358] sm:$0xff]
          %v3922 = vld [vmem:[#allocation13 + $0x360] sm:$0xff]
          %v3923 = vld [vmem:[#allocation13 + $0x368] sm:$0xff]
          %v3924 = vld [vmem:[#allocation13 + $0x370] sm:$0xff]
          %v3925 = vld [vmem:[#allocation13 + $0x378] sm:$0xff]
          %v3926 = vld [vmem:[#allocation13 + $0x380] sm:$0xff]
          %v3927 = vld [vmem:[#allocation13 + $0x388] sm:$0xff]
          %v3928 = vld [vmem:[#allocation13 + $0x390] sm:$0xff]
          %v3929 = vld [vmem:[#allocation13 + $0x398] sm:$0xff]
          %v3930 = vld [vmem:[#allocation13 + $0x3a0] sm:$0xff]
          %v3931 = vld [vmem:[#allocation13 + $0x3a8] sm:$0xff]
          %v3932 = vld [vmem:[#allocation13 + $0x3b0] sm:$0xff]
          %v3933 = vld [vmem:[#allocation13 + $0x3b8] sm:$0xff]
          %v3934 = vld [vmem:[#allocation13 + $0x3c0] sm:$0xff]
          %v3935 = vld [vmem:[#allocation13 + $0x3c8] sm:$0xff]
          %v3936 = vld [vmem:[#allocation13 + $0x3d0] sm:$0xff]
          %v3937 = vld [vmem:[#allocation13 + $0x3d8] sm:$0xff]
          %v3938 = vld [vmem:[#allocation13 + $0x3e0] sm:$0xff]
          %v3939 = vld [vmem:[#allocation13 + $0x3e8] sm:$0xff]
          %v3940 = vld [vmem:[#allocation13 + $0x3f0] sm:$0xff]
          %v3941 = vld [vmem:[#allocation13 + $0x3f8] sm:$0xff]
          %v3942 = vld [vmem:[#allocation13 + $0x400] sm:$0xff]
          %v3943 = vld [vmem:[#allocation13 + $0x408] sm:$0xff]
          %v3944 = vld [vmem:[#allocation13 + $0x410] sm:$0xff]
          %v3945 = vld [vmem:[#allocation13 + $0x418] sm:$0xff]
          %v3946 = vld [vmem:[#allocation13 + $0x420] sm:$0xff]
          %v3947 = vld [vmem:[#allocation13 + $0x428] sm:$0xff]
          %v3948 = vld [vmem:[#allocation13 + $0x430] sm:$0xff]
          %v3949 = vld [vmem:[#allocation13 + $0x438] sm:$0xff]
          %v3950 = vld [vmem:[#allocation13 + $0x440] sm:$0xff]
          %v3951 = vld [vmem:[#allocation13 + $0x448] sm:$0xff]
          %v3952 = vld [vmem:[#allocation13 + $0x450] sm:$0xff]
          %v3953 = vld [vmem:[#allocation13 + $0x458] sm:$0xff]
          %v3954 = vld [vmem:[#allocation13 + $0x460] sm:$0xff]
          %v3955 = vld [vmem:[#allocation13 + $0x468] sm:$0xff]
          %v3956 = vld [vmem:[#allocation13 + $0x470] sm:$0xff]
          %v3957 = vld [vmem:[#allocation13 + $0x478] sm:$0xff]
          %v3958 = vld [vmem:[#allocation13 + $0x480] sm:$0xff]
          %v3959 = vld [vmem:[#allocation13 + $0x488] sm:$0xff]
          %v3960 = vld [vmem:[#allocation13 + $0x490] sm:$0xff]
          %v3961 = vld [vmem:[#allocation13 + $0x498] sm:$0xff]
          %v3962 = vld [vmem:[#allocation13 + $0x4a0] sm:$0xff]
          %v3963 = vld [vmem:[#allocation13 + $0x4a8] sm:$0xff]
          %v3964 = vld [vmem:[#allocation13 + $0x4b0] sm:$0xff]
          %v3965 = vld [vmem:[#allocation13 + $0x4b8] sm:$0xff]
          %v3966 = vld [vmem:[#allocation13 + $0x4c0] sm:$0xff]
          %v3967 = vld [vmem:[#allocation13 + $0x4c8] sm:$0xff]
          %v3968 = vld [vmem:[#allocation13 + $0x4d0] sm:$0xff]
          %v3969 = vld [vmem:[#allocation13 + $0x4d8] sm:$0xff]
          %v3970 = vld [vmem:[#allocation13 + $0x4e0] sm:$0xff]
          %v3971 = vld [vmem:[#allocation13 + $0x4e8] sm:$0xff]
          %v3972 = vld [vmem:[#allocation13 + $0x4f0] sm:$0xff]
          %v3973 = vld [vmem:[#allocation13 + $0x4f8] sm:$0xff]
          %v3974 = vld [vmem:[#allocation13 + $0x500] sm:$0xff]
          %v3975 = vld [vmem:[#allocation13 + $0x508] sm:$0xff]
          %v3976 = vld [vmem:[#allocation13 + $0x510] sm:$0xff]
          %v3977 = vld [vmem:[#allocation13 + $0x518] sm:$0xff]
          %v3978 = vld [vmem:[#allocation13 + $0x520] sm:$0xff]
          %v3979 = vld [vmem:[#allocation13 + $0x528] sm:$0xff]
          %v3980 = vld [vmem:[#allocation13 + $0x530] sm:$0xff]
          %v3981 = vld [vmem:[#allocation13 + $0x538] sm:$0xff]
          %v3982 = vld [vmem:[#allocation13 + $0x540] sm:$0xff]
          %v3983 = vld [vmem:[#allocation13 + $0x548] sm:$0xff]
          %v3984 = vld [vmem:[#allocation13 + $0x550] sm:$0xff]
          %v3985 = vld [vmem:[#allocation13 + $0x558] sm:$0xff]
          %v3986 = vld [vmem:[#allocation13 + $0x560] sm:$0xff]
          %v3987 = vld [vmem:[#allocation13 + $0x568] sm:$0xff]
          %v3988 = vld [vmem:[#allocation13 + $0x570] sm:$0xff]
          %v3989 = vld [vmem:[#allocation13 + $0x578] sm:$0xff]
          %v3990 = vld [vmem:[#allocation13 + $0x580] sm:$0xff]
          %v3991 = vld [vmem:[#allocation13 + $0x588] sm:$0xff]
          %v3992 = vld [vmem:[#allocation13 + $0x590] sm:$0xff]
          %v3993 = vld [vmem:[#allocation13 + $0x598] sm:$0xff]
          %v3994 = vld [vmem:[#allocation13 + $0x5a0] sm:$0xff]
          %v3995 = vld [vmem:[#allocation13 + $0x5a8] sm:$0xff]
          %v3996 = vld [vmem:[#allocation13 + $0x5b0] sm:$0xff]
          %v3997 = vld [vmem:[#allocation13 + $0x5b8] sm:$0xff]
          %v3998 = vld [vmem:[#allocation13 + $0x5c0] sm:$0xff]
          %v3999 = vld [vmem:[#allocation13 + $0x5c8] sm:$0xff]
          %v4000 = vld [vmem:[#allocation13 + $0x5d0] sm:$0xff]
          %v4001 = vld [vmem:[#allocation13 + $0x5d8] sm:$0xff]
          %v4002 = vld [vmem:[#allocation13 + $0x5e0] sm:$0xff]
          %v4003 = vld [vmem:[#allocation13 + $0x5e8] sm:$0xff]
          %v4004 = vld [vmem:[#allocation13 + $0x5f0] sm:$0xff]
          %v4005 = vld [vmem:[#allocation13 + $0x5f8] sm:$0xff]
          %v4006 = vld [vmem:[#allocation13 + $0x600] sm:$0xff]
          %v4007 = vld [vmem:[#allocation13 + $0x608] sm:$0xff]
          %v4008 = vld [vmem:[#allocation13 + $0x610] sm:$0xff]
          %v4009 = vld [vmem:[#allocation13 + $0x618] sm:$0xff]
          %v4010 = vld [vmem:[#allocation13 + $0x620] sm:$0xff]
          %v4011 = vld [vmem:[#allocation13 + $0x628] sm:$0xff]
          %v4012 = vld [vmem:[#allocation13 + $0x630] sm:$0xff]
          %v4013 = vld [vmem:[#allocation13 + $0x638] sm:$0xff]
          %v4014 = vld [vmem:[#allocation13 + $0x640] sm:$0xff]
          %v4015 = vld [vmem:[#allocation13 + $0x648] sm:$0xff]
          %v4016 = vld [vmem:[#allocation13 + $0x650] sm:$0xff]
          %v4017 = vld [vmem:[#allocation13 + $0x658] sm:$0xff]
          %v4018 = vld [vmem:[#allocation13 + $0x660] sm:$0xff]
          %v4019 = vld [vmem:[#allocation13 + $0x668] sm:$0xff]
          %v4020 = vld [vmem:[#allocation13 + $0x670] sm:$0xff]
          %v4021 = vld [vmem:[#allocation13 + $0x678] sm:$0xff]
          %v4022 = vld [vmem:[#allocation13 + $0x680] sm:$0xff]
          %v4023 = vld [vmem:[#allocation13 + $0x688] sm:$0xff]
          %v4024 = vld [vmem:[#allocation13 + $0x690] sm:$0xff]
          %v4025 = vld [vmem:[#allocation13 + $0x698] sm:$0xff]
          %v4026 = vld [vmem:[#allocation13 + $0x6a0] sm:$0xff]
          %v4027 = vld [vmem:[#allocation13 + $0x6a8] sm:$0xff]
          %v4028 = vld [vmem:[#allocation13 + $0x6b0] sm:$0xff]
          %v4029 = vld [vmem:[#allocation13 + $0x6b8] sm:$0xff]
          %v4030 = vld [vmem:[#allocation13 + $0x6c0] sm:$0xff]
          %v4031 = vld [vmem:[#allocation13 + $0x6c8] sm:$0xff]
          %v4032 = vld [vmem:[#allocation13 + $0x6d0] sm:$0xff]
          %v4033 = vld [vmem:[#allocation13 + $0x6d8] sm:$0xff]
          %v4034 = vld [vmem:[#allocation13 + $0x6e0] sm:$0xff]
          %v4035 = vld [vmem:[#allocation13 + $0x6e8] sm:$0xff]
          %v4036 = vld [vmem:[#allocation13 + $0x6f0] sm:$0xff]
          %v4037 = vld [vmem:[#allocation13 + $0x6f8] sm:$0xff]
          %v4038 = vld [vmem:[#allocation13 + $0x700] sm:$0xff]
          %v4039 = vld [vmem:[#allocation13 + $0x708] sm:$0xff]
          %v4040 = vld [vmem:[#allocation13 + $0x710] sm:$0xff]
          %v4041 = vld [vmem:[#allocation13 + $0x718] sm:$0xff]
          %v4042 = vld [vmem:[#allocation13 + $0x720] sm:$0xff]
          %v4043 = vld [vmem:[#allocation13 + $0x728] sm:$0xff]
          %v4044 = vld [vmem:[#allocation13 + $0x730] sm:$0xff]
          %v4045 = vld [vmem:[#allocation13 + $0x738] sm:$0xff]
          %v4046 = vld [vmem:[#allocation13 + $0x740] sm:$0xff]
          %v4047 = vld [vmem:[#allocation13 + $0x748] sm:$0xff]
          %v4048 = vld [vmem:[#allocation13 + $0x750] sm:$0xff]
          %v4049 = vld [vmem:[#allocation13 + $0x758] sm:$0xff]
          %v4050 = vld [vmem:[#allocation13 + $0x760] sm:$0xff]
          %v4051 = vld [vmem:[#allocation13 + $0x768] sm:$0xff]
          %v4052 = vld [vmem:[#allocation13 + $0x770] sm:$0xff]
          %v4053 = vld [vmem:[#allocation13 + $0x778] sm:$0xff]
          %v4054 = vld [vmem:[#allocation13 + $0x780] sm:$0xff]
          %v4055 = vld [vmem:[#allocation13 + $0x788] sm:$0xff]
          %v4056 = vld [vmem:[#allocation13 + $0x790] sm:$0xff]
          %v4057 = vld [vmem:[#allocation13 + $0x798] sm:$0xff]
          %v4058 = vld [vmem:[#allocation13 + $0x7a0] sm:$0xff]
          %v4059 = vld [vmem:[#allocation13 + $0x7a8] sm:$0xff]
          %v4060 = vld [vmem:[#allocation13 + $0x7b0] sm:$0xff]
          %v4061 = vld [vmem:[#allocation13 + $0x7b8] sm:$0xff]
          %v4062 = vld [vmem:[#allocation13 + $0x7c0] sm:$0xff]
          %v4063 = vld [vmem:[#allocation13 + $0x7c8] sm:$0xff]
          %v4064 = vld [vmem:[#allocation13 + $0x7d0] sm:$0xff]
          %v4065 = vld [vmem:[#allocation13 + $0x7d8] sm:$0xff]
          %v4066 = vld [vmem:[#allocation13 + $0x7e0] sm:$0xff]
          %v4067 = vld [vmem:[#allocation13 + $0x7e8] sm:$0xff]
          %v4068 = vld [vmem:[#allocation13 + $0x7f0] sm:$0xff]
          %v4069 = vld [vmem:[#allocation13 + $0x7f8] sm:$0xff]
          %v4070 = vld [vmem:[#allocation13 + $0x800] sm:$0xff]
          %v4071 = vld [vmem:[#allocation13 + $0x808] sm:$0xff]
          %v4072 = vld [vmem:[#allocation13 + $0x810] sm:$0xff]
          %v4073 = vld [vmem:[#allocation13 + $0x818] sm:$0xff]
          %v4074 = vld [vmem:[#allocation13 + $0x820] sm:$0xff]
          %v4075 = vld [vmem:[#allocation13 + $0x828] sm:$0xff]
          %v4076 = vld [vmem:[#allocation13 + $0x830] sm:$0xff]
          %v4077 = vld [vmem:[#allocation13 + $0x838] sm:$0xff]
          %v4078 = vld [vmem:[#allocation13 + $0x840] sm:$0xff]
          %v4079 = vld [vmem:[#allocation13 + $0x848] sm:$0xff]
          %v4080 = vld [vmem:[#allocation13 + $0x850] sm:$0xff]
          %v4081 = vld [vmem:[#allocation13 + $0x858] sm:$0xff]
          %v4082 = vld [vmem:[#allocation13 + $0x860] sm:$0xff]
          %v4083 = vld [vmem:[#allocation13 + $0x868] sm:$0xff]
          %v4084 = vld [vmem:[#allocation13 + $0x870] sm:$0xff]
          %v4085 = vld [vmem:[#allocation13 + $0x878] sm:$0xff]
          %v4086 = vld [vmem:[#allocation13 + $0x880] sm:$0xff]
          %v4087 = vld [vmem:[#allocation13 + $0x888] sm:$0xff]
          %v4088 = vld [vmem:[#allocation13 + $0x890] sm:$0xff]
          %v4089 = vld [vmem:[#allocation13 + $0x898] sm:$0xff]
          %v4090 = vld [vmem:[#allocation13 + $0x8a0] sm:$0xff]
          %v4091 = vld [vmem:[#allocation13 + $0x8a8] sm:$0xff]
          %v4092 = vld [vmem:[#allocation13 + $0x8b0] sm:$0xff]
          %v4093 = vld [vmem:[#allocation13 + $0x8b8] sm:$0xff]
          %v4094 = vld [vmem:[#allocation13 + $0x8c0] sm:$0xff]
          %v4095 = vld [vmem:[#allocation13 + $0x8c8] sm:$0xff]
          %v4096 = vld [vmem:[#allocation13 + $0x8d0] sm:$0xff]
          %v4097 = vld [vmem:[#allocation13 + $0x8d8] sm:$0xff]
          %v4098 = vld [vmem:[#allocation13 + $0x8e0] sm:$0xff]
          %v4099 = vld [vmem:[#allocation13 + $0x8e8] sm:$0xff]
          %v4100 = vld [vmem:[#allocation13 + $0x8f0] sm:$0xff]
          %v4101 = vld [vmem:[#allocation13 + $0x8f8] sm:$0xff]
          %v4102 = vld [vmem:[#allocation13 + $0x900] sm:$0xff]
          %v4103 = vld [vmem:[#allocation13 + $0x908] sm:$0xff]
          %v4104 = vld [vmem:[#allocation13 + $0x910] sm:$0xff]
          %v4105 = vld [vmem:[#allocation13 + $0x918] sm:$0xff]
          %v4106 = vld [vmem:[#allocation13 + $0x920] sm:$0xff]
          %v4107 = vld [vmem:[#allocation13 + $0x928] sm:$0xff]
          %v4108 = vld [vmem:[#allocation13 + $0x930] sm:$0xff]
          %v4109 = vld [vmem:[#allocation13 + $0x938] sm:$0xff]
          %v4110 = vld [vmem:[#allocation13 + $0x940] sm:$0xff]
          %v4111 = vld [vmem:[#allocation13 + $0x948] sm:$0xff]
          %v4112 = vld [vmem:[#allocation13 + $0x950] sm:$0xff]
          %v4113 = vld [vmem:[#allocation13 + $0x958] sm:$0xff]
          %v4114 = vld [vmem:[#allocation13 + $0x960] sm:$0xff]
          %v4115 = vld [vmem:[#allocation13 + $0x968] sm:$0xff]
          %v4116 = vld [vmem:[#allocation13 + $0x970] sm:$0xff]
          %v4117 = vld [vmem:[#allocation13 + $0x978] sm:$0xff]
          %v4118 = vld [vmem:[#allocation13 + $0x980] sm:$0xff]
          %v4119 = vld [vmem:[#allocation13 + $0x988] sm:$0xff]
          %v4120 = vld [vmem:[#allocation13 + $0x990] sm:$0xff]
          %v4121 = vld [vmem:[#allocation13 + $0x998] sm:$0xff]
          %v4122 = vld [vmem:[#allocation13 + $0x9a0] sm:$0xff]
          %v4123 = vld [vmem:[#allocation13 + $0x9a8] sm:$0xff]
          %v4124 = vld [vmem:[#allocation13 + $0x9b0] sm:$0xff]
          %v4125 = vld [vmem:[#allocation13 + $0x9b8] sm:$0xff]
          %v4126 = vld [vmem:[#allocation13 + $0x9c0] sm:$0xff]
          %v4127 = vld [vmem:[#allocation13 + $0x9c8] sm:$0xff]
          %v4128 = vld [vmem:[#allocation13 + $0x9d0] sm:$0xff]
          %v4129 = vld [vmem:[#allocation13 + $0x9d8] sm:$0xff]
          %v4130 = vld [vmem:[#allocation13 + $0x9e0] sm:$0xff]
          %v4131 = vld [vmem:[#allocation13 + $0x9e8] sm:$0xff]
          %v4132 = vld [vmem:[#allocation13 + $0x9f0] sm:$0xff]
          %v4133 = vld [vmem:[#allocation13 + $0x9f8] sm:$0xff]
          %v4134 = vld [vmem:[#allocation13 + $0xa00] sm:$0xff]
          %v4135 = vld [vmem:[#allocation13 + $0xa08] sm:$0xff]
          %v4136 = vld [vmem:[#allocation13 + $0xa10] sm:$0xff]
          %v4137 = vld [vmem:[#allocation13 + $0xa18] sm:$0xff]
          %v4138 = vld [vmem:[#allocation13 + $0xa20] sm:$0xff]
          %v4139 = vld [vmem:[#allocation13 + $0xa28] sm:$0xff]
          %v4140 = vld [vmem:[#allocation13 + $0xa30] sm:$0xff]
          %v4141 = vld [vmem:[#allocation13 + $0xa38] sm:$0xff]
          %v4142 = vld [vmem:[#allocation13 + $0xa40] sm:$0xff]
          %v4143 = vld [vmem:[#allocation13 + $0xa48] sm:$0xff]
          %v4144 = vld [vmem:[#allocation13 + $0xa50] sm:$0xff]
          %v4145 = vld [vmem:[#allocation13 + $0xa58] sm:$0xff]
          %v4146 = vld [vmem:[#allocation13 + $0xa60] sm:$0xff]
          %v4147 = vld [vmem:[#allocation13 + $0xa68] sm:$0xff]
          %v4148 = vld [vmem:[#allocation13 + $0xa70] sm:$0xff]
          %v4149 = vld [vmem:[#allocation13 + $0xa78] sm:$0xff]
          %v4150 = vld [vmem:[#allocation13 + $0xa80] sm:$0xff]
          %v4151 = vld [vmem:[#allocation13 + $0xa88] sm:$0xff]
          %v4152 = vld [vmem:[#allocation13 + $0xa90] sm:$0xff]
          %v4153 = vld [vmem:[#allocation13 + $0xa98] sm:$0xff]
          %v4154 = vld [vmem:[#allocation13 + $0xaa0] sm:$0xff]
          %v4155 = vld [vmem:[#allocation13 + $0xaa8] sm:$0xff]
          %v4156 = vld [vmem:[#allocation13 + $0xab0] sm:$0xff]
          %v4157 = vld [vmem:[#allocation13 + $0xab8] sm:$0xff]
          %v4158 = vld [vmem:[#allocation13 + $0xac0] sm:$0xff]
          %v4159 = vld [vmem:[#allocation13 + $0xac8] sm:$0xff]
          %v4160 = vld [vmem:[#allocation13 + $0xad0] sm:$0xff]
          %v4161 = vld [vmem:[#allocation13 + $0xad8] sm:$0xff]
          %v4162 = vld [vmem:[#allocation13 + $0xae0] sm:$0xff]
          %v4163 = vld [vmem:[#allocation13 + $0xae8] sm:$0xff]
          %v4164 = vld [vmem:[#allocation13 + $0xaf0] sm:$0xff]
          %v4165 = vld [vmem:[#allocation13 + $0xaf8] sm:$0xff]
          %v4166 = vld [vmem:[#allocation13 + $0xb00] sm:$0xff]
          %v4167 = vld [vmem:[#allocation13 + $0xb08] sm:$0xff]
          %v4168 = vld [vmem:[#allocation13 + $0xb10] sm:$0xff]
          %v4169 = vld [vmem:[#allocation13 + $0xb18] sm:$0xff]
          %v4170 = vld [vmem:[#allocation13 + $0xb20] sm:$0xff]
          %v4171 = vld [vmem:[#allocation13 + $0xb28] sm:$0xff]
          %v4172 = vld [vmem:[#allocation13 + $0xb30] sm:$0xff]
          %v4173 = vld [vmem:[#allocation13 + $0xb38] sm:$0xff]
          %v4174 = vld [vmem:[#allocation13 + $0xb40] sm:$0xff]
          %v4175 = vld [vmem:[#allocation13 + $0xb48] sm:$0xff]
          %v4176 = vld [vmem:[#allocation13 + $0xb50] sm:$0xff]
          %v4177 = vld [vmem:[#allocation13 + $0xb58] sm:$0xff]
          %v4178 = vld [vmem:[#allocation13 + $0xb60] sm:$0xff]
          %v4179 = vld [vmem:[#allocation13 + $0xb68] sm:$0xff]
          %v4180 = vld [vmem:[#allocation13 + $0xb70] sm:$0xff]
          %v4181 = vld [vmem:[#allocation13 + $0xb78] sm:$0xff]
          %v4182 = vld [vmem:[#allocation13 + $0xb80] sm:$0xff]
          %v4183 = vld [vmem:[#allocation13 + $0xb88] sm:$0xff]
          %v4184 = vld [vmem:[#allocation13 + $0xb90] sm:$0xff]
          %v4185 = vld [vmem:[#allocation13 + $0xb98] sm:$0xff]
          %v4186 = vld [vmem:[#allocation13 + $0xba0] sm:$0xff]
          %v4187 = vld [vmem:[#allocation13 + $0xba8] sm:$0xff]
          %v4188 = vld [vmem:[#allocation13 + $0xbb0] sm:$0xff]
          %v4189 = vld [vmem:[#allocation13 + $0xbb8] sm:$0xff]
          %v4190 = vld [vmem:[#allocation13 + $0xbc0] sm:$0xff]
          %v4191 = vld [vmem:[#allocation13 + $0xbc8] sm:$0xff]
          %v4192 = vld [vmem:[#allocation13 + $0xbd0] sm:$0xff]
          %v4193 = vld [vmem:[#allocation13 + $0xbd8] sm:$0xff]
          %v4194 = vld [vmem:[#allocation13 + $0xbe0] sm:$0xff]
          %v4195 = vld [vmem:[#allocation13 + $0xbe8] sm:$0xff]
          %v4196 = vld [vmem:[#allocation13 + $0xbf0] sm:$0xff]
          %v4197 = vld [vmem:[#allocation13 + $0xbf8] sm:$0xff]
          %v4198 = vld [vmem:[#allocation13 + $0xc00] sm:$0xff]
          %v4199 = vld [vmem:[#allocation13 + $0xc08] sm:$0xff]
          %v4200 = vld [vmem:[#allocation13 + $0xc10] sm:$0xff]
          %v4201 = vld [vmem:[#allocation13 + $0xc18] sm:$0xff]
          %v4202 = vld [vmem:[#allocation13 + $0xc20] sm:$0xff]
          %v4203 = vld [vmem:[#allocation13 + $0xc28] sm:$0xff]
          %v4204 = vld [vmem:[#allocation13 + $0xc30] sm:$0xff]
          %v4205 = vld [vmem:[#allocation13 + $0xc38] sm:$0xff]
          %v4206 = vld [vmem:[#allocation13 + $0xc40] sm:$0xff]
          %v4207 = vld [vmem:[#allocation13 + $0xc48] sm:$0xff]
          %v4208 = vld [vmem:[#allocation13 + $0xc50] sm:$0xff]
          %v4209 = vld [vmem:[#allocation13 + $0xc58] sm:$0xff]
          %v4210 = vld [vmem:[#allocation13 + $0xc60] sm:$0xff]
          %v4211 = vld [vmem:[#allocation13 + $0xc68] sm:$0xff]
          %v4212 = vld [vmem:[#allocation13 + $0xc70] sm:$0xff]
          %v4213 = vld [vmem:[#allocation13 + $0xc78] sm:$0xff]
          %v4214 = vld [vmem:[#allocation13 + $0xc80] sm:$0xff]
          %v4215 = vld [vmem:[#allocation13 + $0xc88] sm:$0xff]
          %v4216 = vld [vmem:[#allocation13 + $0xc90] sm:$0xff]
          %v4217 = vld [vmem:[#allocation13 + $0xc98] sm:$0xff]
          %v4218 = vld [vmem:[#allocation13 + $0xca0] sm:$0xff]
          %v4219 = vld [vmem:[#allocation13 + $0xca8] sm:$0xff]
          %v4220 = vld [vmem:[#allocation13 + $0xcb0] sm:$0xff]
          %v4221 = vld [vmem:[#allocation13 + $0xcb8] sm:$0xff]
          %v4222 = vld [vmem:[#allocation13 + $0xcc0] sm:$0xff]
          %v4223 = vld [vmem:[#allocation13 + $0xcc8] sm:$0xff]
          %v4224 = vld [vmem:[#allocation13 + $0xcd0] sm:$0xff]
          %v4225 = vld [vmem:[#allocation13 + $0xcd8] sm:$0xff]
          %v4226 = vld [vmem:[#allocation13 + $0xce0] sm:$0xff]
          %v4227 = vld [vmem:[#allocation13 + $0xce8] sm:$0xff]
          %v4228 = vld [vmem:[#allocation13 + $0xcf0] sm:$0xff]
          %v4229 = vld [vmem:[#allocation13 + $0xcf8] sm:$0xff]
          %v4230 = vld [vmem:[#allocation13 + $0xd00] sm:$0xff]
          %v4231 = vld [vmem:[#allocation13 + $0xd08] sm:$0xff]
          %v4232 = vld [vmem:[#allocation13 + $0xd10] sm:$0xff]
          %v4233 = vld [vmem:[#allocation13 + $0xd18] sm:$0xff]
          %v4234 = vld [vmem:[#allocation13 + $0xd20] sm:$0xff]
          %v4235 = vld [vmem:[#allocation13 + $0xd28] sm:$0xff]
          %v4236 = vld [vmem:[#allocation13 + $0xd30] sm:$0xff]
          %v4237 = vld [vmem:[#allocation13 + $0xd38] sm:$0xff]
          %v4238 = vld [vmem:[#allocation13 + $0xd40] sm:$0xff]
          %v4239 = vld [vmem:[#allocation13 + $0xd48] sm:$0xff]
          %v4240 = vld [vmem:[#allocation13 + $0xd50] sm:$0xff]
          %v4241 = vld [vmem:[#allocation13 + $0xd58] sm:$0xff]
          %v4242 = vld [vmem:[#allocation13 + $0xd60] sm:$0xff]
          %v4243 = vld [vmem:[#allocation13 + $0xd68] sm:$0xff]
          %v4244 = vld [vmem:[#allocation13 + $0xd70] sm:$0xff]
          %v4245 = vld [vmem:[#allocation13 + $0xd78] sm:$0xff]
          %v4246 = vld [vmem:[#allocation13 + $0xd80] sm:$0xff]
          %v4247 = vld [vmem:[#allocation13 + $0xd88] sm:$0xff]
          %v4248 = vld [vmem:[#allocation13 + $0xd90] sm:$0xff]
          %v4249 = vld [vmem:[#allocation13 + $0xd98] sm:$0xff]
          %v4250 = vld [vmem:[#allocation13 + $0xda0] sm:$0xff]
          %v4251 = vld [vmem:[#allocation13 + $0xda8] sm:$0xff]
          %v4252 = vld [vmem:[#allocation13 + $0xdb0] sm:$0xff]
          %v4253 = vld [vmem:[#allocation13 + $0xdb8] sm:$0xff]
          %v4254 = vld [vmem:[#allocation13 + $0xdc0] sm:$0xff]
          %v4255 = vld [vmem:[#allocation13 + $0xdc8] sm:$0xff]
          %v4256 = vld [vmem:[#allocation13 + $0xdd0] sm:$0xff]
          %v4257 = vld [vmem:[#allocation13 + $0xdd8] sm:$0xff]
          %v4258 = vld [vmem:[#allocation13 + $0xde0] sm:$0xff]
          %v4259 = vld [vmem:[#allocation13 + $0xde8] sm:$0xff]
          %v4260 = vld [vmem:[#allocation13 + $0xdf0] sm:$0xff]
          %v4261 = vld [vmem:[#allocation13 + $0xdf8] sm:$0xff]
          %v4262 = vld [vmem:[#allocation13 + $0xe00] sm:$0xff]
          %v4263 = vld [vmem:[#allocation13 + $0xe08] sm:$0xff]
          %v4264 = vld [vmem:[#allocation13 + $0xe10] sm:$0xff]
          %v4265 = vld [vmem:[#allocation13 + $0xe18] sm:$0xff]
          %v4266 = vld [vmem:[#allocation13 + $0xe20] sm:$0xff]
          %v4267 = vld [vmem:[#allocation13 + $0xe28] sm:$0xff]
          %v4268 = vld [vmem:[#allocation13 + $0xe30] sm:$0xff]
          %v4269 = vld [vmem:[#allocation13 + $0xe38] sm:$0xff]
          %v4270 = vld [vmem:[#allocation13 + $0xe40] sm:$0xff]
          %v4271 = vld [vmem:[#allocation13 + $0xe48] sm:$0xff]
          %v4272 = vld [vmem:[#allocation13 + $0xe50] sm:$0xff]
          %v4273 = vld [vmem:[#allocation13 + $0xe58] sm:$0xff]
          %v4274 = vld [vmem:[#allocation13 + $0xe60] sm:$0xff]
          %v4275 = vld [vmem:[#allocation13 + $0xe68] sm:$0xff]
          %v4276 = vld [vmem:[#allocation13 + $0xe70] sm:$0xff]
          %v4277 = vld [vmem:[#allocation13 + $0xe78] sm:$0xff]
          %v4278 = vld [vmem:[#allocation13 + $0xe80] sm:$0xff]
          %v4279 = vld [vmem:[#allocation13 + $0xe88] sm:$0xff]
          %v4280 = vld [vmem:[#allocation13 + $0xe90] sm:$0xff]
          %v4281 = vld [vmem:[#allocation13 + $0xe98] sm:$0xff]
          %v4282 = vld [vmem:[#allocation13 + $0xea0] sm:$0xff]
          %v4283 = vld [vmem:[#allocation13 + $0xea8] sm:$0xff]
          %v4284 = vld [vmem:[#allocation13 + $0xeb0] sm:$0xff]
          %v4285 = vld [vmem:[#allocation13 + $0xeb8] sm:$0xff]
          %v4286 = vld [vmem:[#allocation13 + $0xec0] sm:$0xff]
          %v4287 = vld [vmem:[#allocation13 + $0xec8] sm:$0xff]
          %v4288 = vld [vmem:[#allocation13 + $0xed0] sm:$0xff]
          %v4289 = vld [vmem:[#allocation13 + $0xed8] sm:$0xff]
          %v4290 = vld [vmem:[#allocation13 + $0xee0] sm:$0xff]
          %v4291 = vld [vmem:[#allocation13 + $0xee8] sm:$0xff]
          %v4292 = vld [vmem:[#allocation13 + $0xef0] sm:$0xff]
          %v4293 = vld [vmem:[#allocation13 + $0xef8] sm:$0xff]
          %v4294 = vld [vmem:[#allocation13 + $0xf00] sm:$0xff]
          %v4295 = vld [vmem:[#allocation13 + $0xf08] sm:$0xff]
          %v4296 = vld [vmem:[#allocation13 + $0xf10] sm:$0xff]
          %v4297 = vld [vmem:[#allocation13 + $0xf18] sm:$0xff]
          %v4298 = vld [vmem:[#allocation13 + $0xf20] sm:$0xff]
          %v4299 = vld [vmem:[#allocation13 + $0xf28] sm:$0xff]
          %v4300 = vld [vmem:[#allocation13 + $0xf30] sm:$0xff]
          %v4301 = vld [vmem:[#allocation13 + $0xf38] sm:$0xff]
          %v4302 = vld [vmem:[#allocation13 + $0xf40] sm:$0xff]
          %v4303 = vld [vmem:[#allocation13 + $0xf48] sm:$0xff]
          %v4304 = vld [vmem:[#allocation13 + $0xf50] sm:$0xff]
          %v4305 = vld [vmem:[#allocation13 + $0xf58] sm:$0xff]
          %v4306 = vld [vmem:[#allocation13 + $0xf60] sm:$0xff]
          %v4307 = vld [vmem:[#allocation13 + $0xf68] sm:$0xff]
          %v4308 = vld [vmem:[#allocation13 + $0xf70] sm:$0xff]
          %v4309 = vld [vmem:[#allocation13 + $0xf78] sm:$0xff]
          %v4310 = vld [vmem:[#allocation13 + $0xf80] sm:$0xff]
          %v4311 = vld [vmem:[#allocation13 + $0xf88] sm:$0xff]
          %v4312 = vld [vmem:[#allocation13 + $0xf90] sm:$0xff]
          %v4313 = vld [vmem:[#allocation13 + $0xf98] sm:$0xff]
          %v4314 = vld [vmem:[#allocation13 + $0xfa0] sm:$0xff]
          %v4315 = vld [vmem:[#allocation13 + $0xfa8] sm:$0xff]
          %v4316 = vld [vmem:[#allocation13 + $0xfb0] sm:$0xff]
          %v4317 = vld [vmem:[#allocation13 + $0xfb8] sm:$0xff]
          %v4318 = vld [vmem:[#allocation13 + $0xfc0] sm:$0xff]
          %v4319 = vld [vmem:[#allocation13 + $0xfc8] sm:$0xff]
          %v4320 = vld [vmem:[#allocation13 + $0xfd0] sm:$0xff]
          %v4321 = vld [vmem:[#allocation13 + $0xfd8] sm:$0xff]
          %v4322 = vld [vmem:[#allocation13 + $0xfe0] sm:$0xff]
          %v4323 = vld [vmem:[#allocation13 + $0xfe8] sm:$0xff]
          %v4324 = vld [vmem:[#allocation13 + $0xff0] sm:$0xff]
          %v4325 = vld [vmem:[#allocation13 + $0xff8] sm:$0xff]
          %v4326 = vld [vmem:[#allocation15] sm:$0xf]
          %v4328 = vlaneseq
          %v4329 = vshrl.u32 %v4328, 7
          %v4330 = vsub.s32 0, %v4329
          %v4331 = vrot.slane %v4326, %v4330
          %v4332 = vlaneseq
          %v4333 = vshrl.u32 %v4332, 7
          %v4334 = vsub.s32 1, %v4333
          %v4335 = vrot.slane %v4326, %v4334
          %v4336 = vlaneseq
          %v4337 = vshrl.u32 %v4336, 7
          %v4338 = vsub.s32 2, %v4337
          %v4339 = vrot.slane %v4326, %v4338
          %v4340 = vlaneseq
          %v4341 = vshrl.u32 %v4340, 7
          %v4342 = vsub.s32 3, %v4341
          %v4343 = vrot.slane %v4326, %v4342
          %v4860 = vunpack.c.l.b16 %v3814
          %v4861 = vunpack.c.h.b16 %v3814
          %v4862 = vunpack.c.l.b16 %v3815
          %v4863 = vunpack.c.h.b16 %v3815
          %v4864 = vunpack.c.l.b16 %v3816
          %v4865 = vunpack.c.h.b16 %v3816
          %v4866 = vunpack.c.l.b16 %v3817
          %v4867 = vunpack.c.h.b16 %v3817
          %v4868 = vunpack.c.l.b16 %v3818
          %v4869 = vunpack.c.h.b16 %v3818
          %v4870 = vunpack.c.l.b16 %v3819
          %v4871 = vunpack.c.h.b16 %v3819
          %v4872 = vunpack.c.l.b16 %v3820
          %v4873 = vunpack.c.h.b16 %v3820
          %v4874 = vunpack.c.l.b16 %v3821
          %v4875 = vunpack.c.h.b16 %v3821
          %v4876 = vunpack.c.l.b16 %v3822
          %v4877 = vunpack.c.h.b16 %v3822
          %v4878 = vunpack.c.l.b16 %v3823
          %v4879 = vunpack.c.h.b16 %v3823
          %v4880 = vunpack.c.l.b16 %v3824
          %v4881 = vunpack.c.h.b16 %v3824
          %v4882 = vunpack.c.l.b16 %v3825
          %v4883 = vunpack.c.h.b16 %v3825
          %v4884 = vunpack.c.l.b16 %v3826
          %v4885 = vunpack.c.h.b16 %v3826
          %v4886 = vunpack.c.l.b16 %v3827
          %v4887 = vunpack.c.h.b16 %v3827
          %v4888 = vunpack.c.l.b16 %v3828
          %v4889 = vunpack.c.h.b16 %v3828
          %v4890 = vunpack.c.l.b16 %v3829
          %v4891 = vunpack.c.h.b16 %v3829
          %v4892 = vunpack.c.l.b16 %v3830
          %v4893 = vunpack.c.h.b16 %v3830
          %v4894 = vunpack.c.l.b16 %v3831
          %v4895 = vunpack.c.h.b16 %v3831
          %v4896 = vunpack.c.l.b16 %v3832
          %v4897 = vunpack.c.h.b16 %v3832
          %v4898 = vunpack.c.l.b16 %v3833
          %v4899 = vunpack.c.h.b16 %v3833
          %v4900 = vunpack.c.l.b16 %v3834
          %v4901 = vunpack.c.h.b16 %v3834
          %v4902 = vunpack.c.l.b16 %v3835
          %v4903 = vunpack.c.h.b16 %v3835
          %v4904 = vunpack.c.l.b16 %v3836
          %v4905 = vunpack.c.h.b16 %v3836
          %v4906 = vunpack.c.l.b16 %v3837
          %v4907 = vunpack.c.h.b16 %v3837
          %v4908 = vunpack.c.l.b16 %v3838
          %v4909 = vunpack.c.h.b16 %v3838
          %v4910 = vunpack.c.l.b16 %v3839
          %v4911 = vunpack.c.h.b16 %v3839
          %v4912 = vunpack.c.l.b16 %v3840
          %v4913 = vunpack.c.h.b16 %v3840
          %v4914 = vunpack.c.l.b16 %v3841
          %v4915 = vunpack.c.h.b16 %v3841
          %v4916 = vunpack.c.l.b16 %v3842
          %v4917 = vunpack.c.h.b16 %v3842
          %v4918 = vunpack.c.l.b16 %v3843
          %v4919 = vunpack.c.h.b16 %v3843
          %v4920 = vunpack.c.l.b16 %v3844
          %v4921 = vunpack.c.h.b16 %v3844
          %v4922 = vunpack.c.l.b16 %v3845
          %v4923 = vunpack.c.h.b16 %v3845
          %v4924 = vunpack.c.l.b16 %v3846
          %v4925 = vunpack.c.h.b16 %v3846
          %v4926 = vunpack.c.l.b16 %v3847
          %v4927 = vunpack.c.h.b16 %v3847
          %v4928 = vunpack.c.l.b16 %v3848
          %v4929 = vunpack.c.h.b16 %v3848
          %v4930 = vunpack.c.l.b16 %v3849
          %v4931 = vunpack.c.h.b16 %v3849
          %v4932 = vunpack.c.l.b16 %v3850
          %v4933 = vunpack.c.h.b16 %v3850
          %v4934 = vunpack.c.l.b16 %v3851
          %v4935 = vunpack.c.h.b16 %v3851
          %v4936 = vunpack.c.l.b16 %v3852
          %v4937 = vunpack.c.h.b16 %v3852
          %v4938 = vunpack.c.l.b16 %v3853
          %v4939 = vunpack.c.h.b16 %v3853
          %v4940 = vunpack.c.l.b16 %v3854
          %v4941 = vunpack.c.h.b16 %v3854
          %v4942 = vunpack.c.l.b16 %v3855
          %v4943 = vunpack.c.h.b16 %v3855
          %v4944 = vunpack.c.l.b16 %v3856
          %v4945 = vunpack.c.h.b16 %v3856
          %v4946 = vunpack.c.l.b16 %v3857
          %v4947 = vunpack.c.h.b16 %v3857
          %v4948 = vunpack.c.l.b16 %v3858
          %v4949 = vunpack.c.h.b16 %v3858
          %v4950 = vunpack.c.l.b16 %v3859
          %v4951 = vunpack.c.h.b16 %v3859
          %v4952 = vunpack.c.l.b16 %v3860
          %v4953 = vunpack.c.h.b16 %v3860
          %v4954 = vunpack.c.l.b16 %v3861
          %v4955 = vunpack.c.h.b16 %v3861
          %v4956 = vunpack.c.l.b16 %v3862
          %v4957 = vunpack.c.h.b16 %v3862
          %v4958 = vunpack.c.l.b16 %v3863
          %v4959 = vunpack.c.h.b16 %v3863
          %v4960 = vunpack.c.l.b16 %v3864
          %v4961 = vunpack.c.h.b16 %v3864
          %v4962 = vunpack.c.l.b16 %v3865
          %v4963 = vunpack.c.h.b16 %v3865
          %v4964 = vunpack.c.l.b16 %v3866
          %v4965 = vunpack.c.h.b16 %v3866
          %v4966 = vunpack.c.l.b16 %v3867
          %v4967 = vunpack.c.h.b16 %v3867
          %v4968 = vunpack.c.l.b16 %v3868
          %v4969 = vunpack.c.h.b16 %v3868
          %v4970 = vunpack.c.l.b16 %v3869
          %v4971 = vunpack.c.h.b16 %v3869
          %v4972 = vunpack.c.l.b16 %v3870
          %v4973 = vunpack.c.h.b16 %v3870
          %v4974 = vunpack.c.l.b16 %v3871
          %v4975 = vunpack.c.h.b16 %v3871
          %v4976 = vunpack.c.l.b16 %v3872
          %v4977 = vunpack.c.h.b16 %v3872
          %v4978 = vunpack.c.l.b16 %v3873
          %v4979 = vunpack.c.h.b16 %v3873
          %v4980 = vunpack.c.l.b16 %v3874
          %v4981 = vunpack.c.h.b16 %v3874
          %v4982 = vunpack.c.l.b16 %v3875
          %v4983 = vunpack.c.h.b16 %v3875
          %v4984 = vunpack.c.l.b16 %v3876
          %v4985 = vunpack.c.h.b16 %v3876
          %v4986 = vunpack.c.l.b16 %v3877
          %v4987 = vunpack.c.h.b16 %v3877
          %v4988 = vunpack.c.l.b16 %v3878
          %v4989 = vunpack.c.h.b16 %v3878
          %v4990 = vunpack.c.l.b16 %v3879
          %v4991 = vunpack.c.h.b16 %v3879
          %v4992 = vunpack.c.l.b16 %v3880
          %v4993 = vunpack.c.h.b16 %v3880
          %v4994 = vunpack.c.l.b16 %v3881
          %v4995 = vunpack.c.h.b16 %v3881
          %v4996 = vunpack.c.l.b16 %v3882
          %v4997 = vunpack.c.h.b16 %v3882
          %v4998 = vunpack.c.l.b16 %v3883
          %v4999 = vunpack.c.h.b16 %v3883
          %v5000 = vunpack.c.l.b16 %v3884
          %v5001 = vunpack.c.h.b16 %v3884
          %v5002 = vunpack.c.l.b16 %v3885
          %v5003 = vunpack.c.h.b16 %v3885
          %v5004 = vunpack.c.l.b16 %v3886
          %v5005 = vunpack.c.h.b16 %v3886
          %v5006 = vunpack.c.l.b16 %v3887
          %v5007 = vunpack.c.h.b16 %v3887
          %v5008 = vunpack.c.l.b16 %v3888
          %v5009 = vunpack.c.h.b16 %v3888
          %v5010 = vunpack.c.l.b16 %v3889
          %v5011 = vunpack.c.h.b16 %v3889
          %v5012 = vunpack.c.l.b16 %v3890
          %v5013 = vunpack.c.h.b16 %v3890
          %v5014 = vunpack.c.l.b16 %v3891
          %v5015 = vunpack.c.h.b16 %v3891
          %v5016 = vunpack.c.l.b16 %v3892
          %v5017 = vunpack.c.h.b16 %v3892
          %v5018 = vunpack.c.l.b16 %v3893
          %v5019 = vunpack.c.h.b16 %v3893
          %v5020 = vunpack.c.l.b16 %v3894
          %v5021 = vunpack.c.h.b16 %v3894
          %v5022 = vunpack.c.l.b16 %v3895
          %v5023 = vunpack.c.h.b16 %v3895
          %v5024 = vunpack.c.l.b16 %v3896
          %v5025 = vunpack.c.h.b16 %v3896
          %v5026 = vunpack.c.l.b16 %v3897
          %v5027 = vunpack.c.h.b16 %v3897
          %v5028 = vunpack.c.l.b16 %v3898
          %v5029 = vunpack.c.h.b16 %v3898
          %v5030 = vunpack.c.l.b16 %v3899
          %v5031 = vunpack.c.h.b16 %v3899
          %v5032 = vunpack.c.l.b16 %v3900
          %v5033 = vunpack.c.h.b16 %v3900
          %v5034 = vunpack.c.l.b16 %v3901
          %v5035 = vunpack.c.h.b16 %v3901
          %v5036 = vunpack.c.l.b16 %v3902
          %v5037 = vunpack.c.h.b16 %v3902
          %v5038 = vunpack.c.l.b16 %v3903
          %v5039 = vunpack.c.h.b16 %v3903
          %v5040 = vunpack.c.l.b16 %v3904
          %v5041 = vunpack.c.h.b16 %v3904
          %v5042 = vunpack.c.l.b16 %v3905
          %v5043 = vunpack.c.h.b16 %v3905
          %v5044 = vunpack.c.l.b16 %v3906
          %v5045 = vunpack.c.h.b16 %v3906
          %v5046 = vunpack.c.l.b16 %v3907
          %v5047 = vunpack.c.h.b16 %v3907
          %v5048 = vunpack.c.l.b16 %v3908
          %v5049 = vunpack.c.h.b16 %v3908
          %v5050 = vunpack.c.l.b16 %v3909
          %v5051 = vunpack.c.h.b16 %v3909
          %v5052 = vunpack.c.l.b16 %v3910
          %v5053 = vunpack.c.h.b16 %v3910
          %v5054 = vunpack.c.l.b16 %v3911
          %v5055 = vunpack.c.h.b16 %v3911
          %v5056 = vunpack.c.l.b16 %v3912
          %v5057 = vunpack.c.h.b16 %v3912
          %v5058 = vunpack.c.l.b16 %v3913
          %v5059 = vunpack.c.h.b16 %v3913
          %v5060 = vunpack.c.l.b16 %v3914
          %v5061 = vunpack.c.h.b16 %v3914
          %v5062 = vunpack.c.l.b16 %v3915
          %v5063 = vunpack.c.h.b16 %v3915
          %v5064 = vunpack.c.l.b16 %v3916
          %v5065 = vunpack.c.h.b16 %v3916
          %v5066 = vunpack.c.l.b16 %v3917
          %v5067 = vunpack.c.h.b16 %v3917
          %v5068 = vunpack.c.l.b16 %v3918
          %v5069 = vunpack.c.h.b16 %v3918
          %v5070 = vunpack.c.l.b16 %v3919
          %v5071 = vunpack.c.h.b16 %v3919
          %v5072 = vunpack.c.l.b16 %v3920
          %v5073 = vunpack.c.h.b16 %v3920
          %v5074 = vunpack.c.l.b16 %v3921
          %v5075 = vunpack.c.h.b16 %v3921
          %v5076 = vunpack.c.l.b16 %v3922
          %v5077 = vunpack.c.h.b16 %v3922
          %v5078 = vunpack.c.l.b16 %v3923
          %v5079 = vunpack.c.h.b16 %v3923
          %v5080 = vunpack.c.l.b16 %v3924
          %v5081 = vunpack.c.h.b16 %v3924
          %v5082 = vunpack.c.l.b16 %v3925
          %v5083 = vunpack.c.h.b16 %v3925
          %v5084 = vunpack.c.l.b16 %v3926
          %v5085 = vunpack.c.h.b16 %v3926
          %v5086 = vunpack.c.l.b16 %v3927
          %v5087 = vunpack.c.h.b16 %v3927
          %v5088 = vunpack.c.l.b16 %v3928
          %v5089 = vunpack.c.h.b16 %v3928
          %v5090 = vunpack.c.l.b16 %v3929
          %v5091 = vunpack.c.h.b16 %v3929
          %v5092 = vunpack.c.l.b16 %v3930
          %v5093 = vunpack.c.h.b16 %v3930
          %v5094 = vunpack.c.l.b16 %v3931
          %v5095 = vunpack.c.h.b16 %v3931
          %v5096 = vunpack.c.l.b16 %v3932
          %v5097 = vunpack.c.h.b16 %v3932
          %v5098 = vunpack.c.l.b16 %v3933
          %v5099 = vunpack.c.h.b16 %v3933
          %v5100 = vunpack.c.l.b16 %v3934
          %v5101 = vunpack.c.h.b16 %v3934
          %v5102 = vunpack.c.l.b16 %v3935
          %v5103 = vunpack.c.h.b16 %v3935
          %v5104 = vunpack.c.l.b16 %v3936
          %v5105 = vunpack.c.h.b16 %v3936
          %v5106 = vunpack.c.l.b16 %v3937
          %v5107 = vunpack.c.h.b16 %v3937
          %v5108 = vunpack.c.l.b16 %v3938
          %v5109 = vunpack.c.h.b16 %v3938
          %v5110 = vunpack.c.l.b16 %v3939
          %v5111 = vunpack.c.h.b16 %v3939
          %v5112 = vunpack.c.l.b16 %v3940
          %v5113 = vunpack.c.h.b16 %v3940
          %v5114 = vunpack.c.l.b16 %v3941
          %v5115 = vunpack.c.h.b16 %v3941
          %v5116 = vunpack.c.l.b16 %v3942
          %v5117 = vunpack.c.h.b16 %v3942
          %v5118 = vunpack.c.l.b16 %v3943
          %v5119 = vunpack.c.h.b16 %v3943
          %v5120 = vunpack.c.l.b16 %v3944
          %v5121 = vunpack.c.h.b16 %v3944
          %v5122 = vunpack.c.l.b16 %v3945
          %v5123 = vunpack.c.h.b16 %v3945
          %v5124 = vunpack.c.l.b16 %v3946
          %v5125 = vunpack.c.h.b16 %v3946
          %v5126 = vunpack.c.l.b16 %v3947
          %v5127 = vunpack.c.h.b16 %v3947
          %v5128 = vunpack.c.l.b16 %v3948
          %v5129 = vunpack.c.h.b16 %v3948
          %v5130 = vunpack.c.l.b16 %v3949
          %v5131 = vunpack.c.h.b16 %v3949
          %v5132 = vunpack.c.l.b16 %v3950
          %v5133 = vunpack.c.h.b16 %v3950
          %v5134 = vunpack.c.l.b16 %v3951
          %v5135 = vunpack.c.h.b16 %v3951
          %v5136 = vunpack.c.l.b16 %v3952
          %v5137 = vunpack.c.h.b16 %v3952
          %v5138 = vunpack.c.l.b16 %v3953
          %v5139 = vunpack.c.h.b16 %v3953
          %v5140 = vunpack.c.l.b16 %v3954
          %v5141 = vunpack.c.h.b16 %v3954
          %v5142 = vunpack.c.l.b16 %v3955
          %v5143 = vunpack.c.h.b16 %v3955
          %v5144 = vunpack.c.l.b16 %v3956
          %v5145 = vunpack.c.h.b16 %v3956
          %v5146 = vunpack.c.l.b16 %v3957
          %v5147 = vunpack.c.h.b16 %v3957
          %v5148 = vunpack.c.l.b16 %v3958
          %v5149 = vunpack.c.h.b16 %v3958
          %v5150 = vunpack.c.l.b16 %v3959
          %v5151 = vunpack.c.h.b16 %v3959
          %v5152 = vunpack.c.l.b16 %v3960
          %v5153 = vunpack.c.h.b16 %v3960
          %v5154 = vunpack.c.l.b16 %v3961
          %v5155 = vunpack.c.h.b16 %v3961
          %v5156 = vunpack.c.l.b16 %v3962
          %v5157 = vunpack.c.h.b16 %v3962
          %v5158 = vunpack.c.l.b16 %v3963
          %v5159 = vunpack.c.h.b16 %v3963
          %v5160 = vunpack.c.l.b16 %v3964
          %v5161 = vunpack.c.h.b16 %v3964
          %v5162 = vunpack.c.l.b16 %v3965
          %v5163 = vunpack.c.h.b16 %v3965
          %v5164 = vunpack.c.l.b16 %v3966
          %v5165 = vunpack.c.h.b16 %v3966
          %v5166 = vunpack.c.l.b16 %v3967
          %v5167 = vunpack.c.h.b16 %v3967
          %v5168 = vunpack.c.l.b16 %v3968
          %v5169 = vunpack.c.h.b16 %v3968
          %v5170 = vunpack.c.l.b16 %v3969
          %v5171 = vunpack.c.h.b16 %v3969
          %v5172 = vunpack.c.l.b16 %v3970
          %v5173 = vunpack.c.h.b16 %v3970
          %v5174 = vunpack.c.l.b16 %v3971
          %v5175 = vunpack.c.h.b16 %v3971
          %v5176 = vunpack.c.l.b16 %v3972
          %v5177 = vunpack.c.h.b16 %v3972
          %v5178 = vunpack.c.l.b16 %v3973
          %v5179 = vunpack.c.h.b16 %v3973
          %v5180 = vunpack.c.l.b16 %v3974
          %v5181 = vunpack.c.h.b16 %v3974
          %v5182 = vunpack.c.l.b16 %v3975
          %v5183 = vunpack.c.h.b16 %v3975
          %v5184 = vunpack.c.l.b16 %v3976
          %v5185 = vunpack.c.h.b16 %v3976
          %v5186 = vunpack.c.l.b16 %v3977
          %v5187 = vunpack.c.h.b16 %v3977
          %v5188 = vunpack.c.l.b16 %v3978
          %v5189 = vunpack.c.h.b16 %v3978
          %v5190 = vunpack.c.l.b16 %v3979
          %v5191 = vunpack.c.h.b16 %v3979
          %v5192 = vunpack.c.l.b16 %v3980
          %v5193 = vunpack.c.h.b16 %v3980
          %v5194 = vunpack.c.l.b16 %v3981
          %v5195 = vunpack.c.h.b16 %v3981
          %v5196 = vunpack.c.l.b16 %v3982
          %v5197 = vunpack.c.h.b16 %v3982
          %v5198 = vunpack.c.l.b16 %v3983
          %v5199 = vunpack.c.h.b16 %v3983
          %v5200 = vunpack.c.l.b16 %v3984
          %v5201 = vunpack.c.h.b16 %v3984
          %v5202 = vunpack.c.l.b16 %v3985
          %v5203 = vunpack.c.h.b16 %v3985
          %v5204 = vunpack.c.l.b16 %v3986
          %v5205 = vunpack.c.h.b16 %v3986
          %v5206 = vunpack.c.l.b16 %v3987
          %v5207 = vunpack.c.h.b16 %v3987
          %v5208 = vunpack.c.l.b16 %v3988
          %v5209 = vunpack.c.h.b16 %v3988
          %v5210 = vunpack.c.l.b16 %v3989
          %v5211 = vunpack.c.h.b16 %v3989
          %v5212 = vunpack.c.l.b16 %v3990
          %v5213 = vunpack.c.h.b16 %v3990
          %v5214 = vunpack.c.l.b16 %v3991
          %v5215 = vunpack.c.h.b16 %v3991
          %v5216 = vunpack.c.l.b16 %v3992
          %v5217 = vunpack.c.h.b16 %v3992
          %v5218 = vunpack.c.l.b16 %v3993
          %v5219 = vunpack.c.h.b16 %v3993
          %v5220 = vunpack.c.l.b16 %v3994
          %v5221 = vunpack.c.h.b16 %v3994
          %v5222 = vunpack.c.l.b16 %v3995
          %v5223 = vunpack.c.h.b16 %v3995
          %v5224 = vunpack.c.l.b16 %v3996
          %v5225 = vunpack.c.h.b16 %v3996
          %v5226 = vunpack.c.l.b16 %v3997
          %v5227 = vunpack.c.h.b16 %v3997
          %v5228 = vunpack.c.l.b16 %v3998
          %v5229 = vunpack.c.h.b16 %v3998
          %v5230 = vunpack.c.l.b16 %v3999
          %v5231 = vunpack.c.h.b16 %v3999
          %v5232 = vunpack.c.l.b16 %v4000
          %v5233 = vunpack.c.h.b16 %v4000
          %v5234 = vunpack.c.l.b16 %v4001
          %v5235 = vunpack.c.h.b16 %v4001
          %v5236 = vunpack.c.l.b16 %v4002
          %v5237 = vunpack.c.h.b16 %v4002
          %v5238 = vunpack.c.l.b16 %v4003
          %v5239 = vunpack.c.h.b16 %v4003
          %v5240 = vunpack.c.l.b16 %v4004
          %v5241 = vunpack.c.h.b16 %v4004
          %v5242 = vunpack.c.l.b16 %v4005
          %v5243 = vunpack.c.h.b16 %v4005
          %v5244 = vunpack.c.l.b16 %v4006
          %v5245 = vunpack.c.h.b16 %v4006
          %v5246 = vunpack.c.l.b16 %v4007
          %v5247 = vunpack.c.h.b16 %v4007
          %v5248 = vunpack.c.l.b16 %v4008
          %v5249 = vunpack.c.h.b16 %v4008
          %v5250 = vunpack.c.l.b16 %v4009
          %v5251 = vunpack.c.h.b16 %v4009
          %v5252 = vunpack.c.l.b16 %v4010
          %v5253 = vunpack.c.h.b16 %v4010
          %v5254 = vunpack.c.l.b16 %v4011
          %v5255 = vunpack.c.h.b16 %v4011
          %v5256 = vunpack.c.l.b16 %v4012
          %v5257 = vunpack.c.h.b16 %v4012
          %v5258 = vunpack.c.l.b16 %v4013
          %v5259 = vunpack.c.h.b16 %v4013
          %v5260 = vunpack.c.l.b16 %v4014
          %v5261 = vunpack.c.h.b16 %v4014
          %v5262 = vunpack.c.l.b16 %v4015
          %v5263 = vunpack.c.h.b16 %v4015
          %v5264 = vunpack.c.l.b16 %v4016
          %v5265 = vunpack.c.h.b16 %v4016
          %v5266 = vunpack.c.l.b16 %v4017
          %v5267 = vunpack.c.h.b16 %v4017
          %v5268 = vunpack.c.l.b16 %v4018
          %v5269 = vunpack.c.h.b16 %v4018
          %v5270 = vunpack.c.l.b16 %v4019
          %v5271 = vunpack.c.h.b16 %v4019
          %v5272 = vunpack.c.l.b16 %v4020
          %v5273 = vunpack.c.h.b16 %v4020
          %v5274 = vunpack.c.l.b16 %v4021
          %v5275 = vunpack.c.h.b16 %v4021
          %v5276 = vunpack.c.l.b16 %v4022
          %v5277 = vunpack.c.h.b16 %v4022
          %v5278 = vunpack.c.l.b16 %v4023
          %v5279 = vunpack.c.h.b16 %v4023
          %v5280 = vunpack.c.l.b16 %v4024
          %v5281 = vunpack.c.h.b16 %v4024
          %v5282 = vunpack.c.l.b16 %v4025
          %v5283 = vunpack.c.h.b16 %v4025
          %v5284 = vunpack.c.l.b16 %v4026
          %v5285 = vunpack.c.h.b16 %v4026
          %v5286 = vunpack.c.l.b16 %v4027
          %v5287 = vunpack.c.h.b16 %v4027
          %v5288 = vunpack.c.l.b16 %v4028
          %v5289 = vunpack.c.h.b16 %v4028
          %v5290 = vunpack.c.l.b16 %v4029
          %v5291 = vunpack.c.h.b16 %v4029
          %v5292 = vunpack.c.l.b16 %v4030
          %v5293 = vunpack.c.h.b16 %v4030
          %v5294 = vunpack.c.l.b16 %v4031
          %v5295 = vunpack.c.h.b16 %v4031
          %v5296 = vunpack.c.l.b16 %v4032
          %v5297 = vunpack.c.h.b16 %v4032
          %v5298 = vunpack.c.l.b16 %v4033
          %v5299 = vunpack.c.h.b16 %v4033
          %v5300 = vunpack.c.l.b16 %v4034
          %v5301 = vunpack.c.h.b16 %v4034
          %v5302 = vunpack.c.l.b16 %v4035
          %v5303 = vunpack.c.h.b16 %v4035
          %v5304 = vunpack.c.l.b16 %v4036
          %v5305 = vunpack.c.h.b16 %v4036
          %v5306 = vunpack.c.l.b16 %v4037
          %v5307 = vunpack.c.h.b16 %v4037
          %v5308 = vunpack.c.l.b16 %v4038
          %v5309 = vunpack.c.h.b16 %v4038
          %v5310 = vunpack.c.l.b16 %v4039
          %v5311 = vunpack.c.h.b16 %v4039
          %v5312 = vunpack.c.l.b16 %v4040
          %v5313 = vunpack.c.h.b16 %v4040
          %v5314 = vunpack.c.l.b16 %v4041
          %v5315 = vunpack.c.h.b16 %v4041
          %v5316 = vunpack.c.l.b16 %v4042
          %v5317 = vunpack.c.h.b16 %v4042
          %v5318 = vunpack.c.l.b16 %v4043
          %v5319 = vunpack.c.h.b16 %v4043
          %v5320 = vunpack.c.l.b16 %v4044
          %v5321 = vunpack.c.h.b16 %v4044
          %v5322 = vunpack.c.l.b16 %v4045
          %v5323 = vunpack.c.h.b16 %v4045
          %v5324 = vunpack.c.l.b16 %v4046
          %v5325 = vunpack.c.h.b16 %v4046
          %v5326 = vunpack.c.l.b16 %v4047
          %v5327 = vunpack.c.h.b16 %v4047
          %v5328 = vunpack.c.l.b16 %v4048
          %v5329 = vunpack.c.h.b16 %v4048
          %v5330 = vunpack.c.l.b16 %v4049
          %v5331 = vunpack.c.h.b16 %v4049
          %v5332 = vunpack.c.l.b16 %v4050
          %v5333 = vunpack.c.h.b16 %v4050
          %v5334 = vunpack.c.l.b16 %v4051
          %v5335 = vunpack.c.h.b16 %v4051
          %v5336 = vunpack.c.l.b16 %v4052
          %v5337 = vunpack.c.h.b16 %v4052
          %v5338 = vunpack.c.l.b16 %v4053
          %v5339 = vunpack.c.h.b16 %v4053
          %v5340 = vunpack.c.l.b16 %v4054
          %v5341 = vunpack.c.h.b16 %v4054
          %v5342 = vunpack.c.l.b16 %v4055
          %v5343 = vunpack.c.h.b16 %v4055
          %v5344 = vunpack.c.l.b16 %v4056
          %v5345 = vunpack.c.h.b16 %v4056
          %v5346 = vunpack.c.l.b16 %v4057
          %v5347 = vunpack.c.h.b16 %v4057
          %v5348 = vunpack.c.l.b16 %v4058
          %v5349 = vunpack.c.h.b16 %v4058
          %v5350 = vunpack.c.l.b16 %v4059
          %v5351 = vunpack.c.h.b16 %v4059
          %v5352 = vunpack.c.l.b16 %v4060
          %v5353 = vunpack.c.h.b16 %v4060
          %v5354 = vunpack.c.l.b16 %v4061
          %v5355 = vunpack.c.h.b16 %v4061
          %v5356 = vunpack.c.l.b16 %v4062
          %v5357 = vunpack.c.h.b16 %v4062
          %v5358 = vunpack.c.l.b16 %v4063
          %v5359 = vunpack.c.h.b16 %v4063
          %v5360 = vunpack.c.l.b16 %v4064
          %v5361 = vunpack.c.h.b16 %v4064
          %v5362 = vunpack.c.l.b16 %v4065
          %v5363 = vunpack.c.h.b16 %v4065
          %v5364 = vunpack.c.l.b16 %v4066
          %v5365 = vunpack.c.h.b16 %v4066
          %v5366 = vunpack.c.l.b16 %v4067
          %v5367 = vunpack.c.h.b16 %v4067
          %v5368 = vunpack.c.l.b16 %v4068
          %v5369 = vunpack.c.h.b16 %v4068
          %v5370 = vunpack.c.l.b16 %v4069
          %v5371 = vunpack.c.h.b16 %v4069
          %v5372 = vunpack.c.l.b16 %v4070
          %v5373 = vunpack.c.h.b16 %v4070
          %v5374 = vunpack.c.l.b16 %v4071
          %v5375 = vunpack.c.h.b16 %v4071
          %v5376 = vunpack.c.l.b16 %v4072
          %v5377 = vunpack.c.h.b16 %v4072
          %v5378 = vunpack.c.l.b16 %v4073
          %v5379 = vunpack.c.h.b16 %v4073
          %v5380 = vunpack.c.l.b16 %v4074
          %v5381 = vunpack.c.h.b16 %v4074
          %v5382 = vunpack.c.l.b16 %v4075
          %v5383 = vunpack.c.h.b16 %v4075
          %v5384 = vunpack.c.l.b16 %v4076
          %v5385 = vunpack.c.h.b16 %v4076
          %v5386 = vunpack.c.l.b16 %v4077
          %v5387 = vunpack.c.h.b16 %v4077
          %v5388 = vunpack.c.l.b16 %v4078
          %v5389 = vunpack.c.h.b16 %v4078
          %v5390 = vunpack.c.l.b16 %v4079
          %v5391 = vunpack.c.h.b16 %v4079
          %v5392 = vunpack.c.l.b16 %v4080
          %v5393 = vunpack.c.h.b16 %v4080
          %v5394 = vunpack.c.l.b16 %v4081
          %v5395 = vunpack.c.h.b16 %v4081
          %v5396 = vunpack.c.l.b16 %v4082
          %v5397 = vunpack.c.h.b16 %v4082
          %v5398 = vunpack.c.l.b16 %v4083
          %v5399 = vunpack.c.h.b16 %v4083
          %v5400 = vunpack.c.l.b16 %v4084
          %v5401 = vunpack.c.h.b16 %v4084
          %v5402 = vunpack.c.l.b16 %v4085
          %v5403 = vunpack.c.h.b16 %v4085
          %v5404 = vunpack.c.l.b16 %v4086
          %v5405 = vunpack.c.h.b16 %v4086
          %v5406 = vunpack.c.l.b16 %v4087
          %v5407 = vunpack.c.h.b16 %v4087
          %v5408 = vunpack.c.l.b16 %v4088
          %v5409 = vunpack.c.h.b16 %v4088
          %v5410 = vunpack.c.l.b16 %v4089
          %v5411 = vunpack.c.h.b16 %v4089
          %v5412 = vunpack.c.l.b16 %v4090
          %v5413 = vunpack.c.h.b16 %v4090
          %v5414 = vunpack.c.l.b16 %v4091
          %v5415 = vunpack.c.h.b16 %v4091
          %v5416 = vunpack.c.l.b16 %v4092
          %v5417 = vunpack.c.h.b16 %v4092
          %v5418 = vunpack.c.l.b16 %v4093
          %v5419 = vunpack.c.h.b16 %v4093
          %v5420 = vunpack.c.l.b16 %v4094
          %v5421 = vunpack.c.h.b16 %v4094
          %v5422 = vunpack.c.l.b16 %v4095
          %v5423 = vunpack.c.h.b16 %v4095
          %v5424 = vunpack.c.l.b16 %v4096
          %v5425 = vunpack.c.h.b16 %v4096
          %v5426 = vunpack.c.l.b16 %v4097
          %v5427 = vunpack.c.h.b16 %v4097
          %v5428 = vunpack.c.l.b16 %v4098
          %v5429 = vunpack.c.h.b16 %v4098
          %v5430 = vunpack.c.l.b16 %v4099
          %v5431 = vunpack.c.h.b16 %v4099
          %v5432 = vunpack.c.l.b16 %v4100
          %v5433 = vunpack.c.h.b16 %v4100
          %v5434 = vunpack.c.l.b16 %v4101
          %v5435 = vunpack.c.h.b16 %v4101
          %v5436 = vunpack.c.l.b16 %v4102
          %v5437 = vunpack.c.h.b16 %v4102
          %v5438 = vunpack.c.l.b16 %v4103
          %v5439 = vunpack.c.h.b16 %v4103
          %v5440 = vunpack.c.l.b16 %v4104
          %v5441 = vunpack.c.h.b16 %v4104
          %v5442 = vunpack.c.l.b16 %v4105
          %v5443 = vunpack.c.h.b16 %v4105
          %v5444 = vunpack.c.l.b16 %v4106
          %v5445 = vunpack.c.h.b16 %v4106
          %v5446 = vunpack.c.l.b16 %v4107
          %v5447 = vunpack.c.h.b16 %v4107
          %v5448 = vunpack.c.l.b16 %v4108
          %v5449 = vunpack.c.h.b16 %v4108
          %v5450 = vunpack.c.l.b16 %v4109
          %v5451 = vunpack.c.h.b16 %v4109
          %v5452 = vunpack.c.l.b16 %v4110
          %v5453 = vunpack.c.h.b16 %v4110
          %v5454 = vunpack.c.l.b16 %v4111
          %v5455 = vunpack.c.h.b16 %v4111
          %v5456 = vunpack.c.l.b16 %v4112
          %v5457 = vunpack.c.h.b16 %v4112
          %v5458 = vunpack.c.l.b16 %v4113
          %v5459 = vunpack.c.h.b16 %v4113
          %v5460 = vunpack.c.l.b16 %v4114
          %v5461 = vunpack.c.h.b16 %v4114
          %v5462 = vunpack.c.l.b16 %v4115
          %v5463 = vunpack.c.h.b16 %v4115
          %v5464 = vunpack.c.l.b16 %v4116
          %v5465 = vunpack.c.h.b16 %v4116
          %v5466 = vunpack.c.l.b16 %v4117
          %v5467 = vunpack.c.h.b16 %v4117
          %v5468 = vunpack.c.l.b16 %v4118
          %v5469 = vunpack.c.h.b16 %v4118
          %v5470 = vunpack.c.l.b16 %v4119
          %v5471 = vunpack.c.h.b16 %v4119
          %v5472 = vunpack.c.l.b16 %v4120
          %v5473 = vunpack.c.h.b16 %v4120
          %v5474 = vunpack.c.l.b16 %v4121
          %v5475 = vunpack.c.h.b16 %v4121
          %v5476 = vunpack.c.l.b16 %v4122
          %v5477 = vunpack.c.h.b16 %v4122
          %v5478 = vunpack.c.l.b16 %v4123
          %v5479 = vunpack.c.h.b16 %v4123
          %v5480 = vunpack.c.l.b16 %v4124
          %v5481 = vunpack.c.h.b16 %v4124
          %v5482 = vunpack.c.l.b16 %v4125
          %v5483 = vunpack.c.h.b16 %v4125
          %v5484 = vunpack.c.l.b16 %v4126
          %v5485 = vunpack.c.h.b16 %v4126
          %v5486 = vunpack.c.l.b16 %v4127
          %v5487 = vunpack.c.h.b16 %v4127
          %v5488 = vunpack.c.l.b16 %v4128
          %v5489 = vunpack.c.h.b16 %v4128
          %v5490 = vunpack.c.l.b16 %v4129
          %v5491 = vunpack.c.h.b16 %v4129
          %v5492 = vunpack.c.l.b16 %v4130
          %v5493 = vunpack.c.h.b16 %v4130
          %v5494 = vunpack.c.l.b16 %v4131
          %v5495 = vunpack.c.h.b16 %v4131
          %v5496 = vunpack.c.l.b16 %v4132
          %v5497 = vunpack.c.h.b16 %v4132
          %v5498 = vunpack.c.l.b16 %v4133
          %v5499 = vunpack.c.h.b16 %v4133
          %v5500 = vunpack.c.l.b16 %v4134
          %v5501 = vunpack.c.h.b16 %v4134
          %v5502 = vunpack.c.l.b16 %v4135
          %v5503 = vunpack.c.h.b16 %v4135
          %v5504 = vunpack.c.l.b16 %v4136
          %v5505 = vunpack.c.h.b16 %v4136
          %v5506 = vunpack.c.l.b16 %v4137
          %v5507 = vunpack.c.h.b16 %v4137
          %v5508 = vunpack.c.l.b16 %v4138
          %v5509 = vunpack.c.h.b16 %v4138
          %v5510 = vunpack.c.l.b16 %v4139
          %v5511 = vunpack.c.h.b16 %v4139
          %v5512 = vunpack.c.l.b16 %v4140
          %v5513 = vunpack.c.h.b16 %v4140
          %v5514 = vunpack.c.l.b16 %v4141
          %v5515 = vunpack.c.h.b16 %v4141
          %v5516 = vunpack.c.l.b16 %v4142
          %v5517 = vunpack.c.h.b16 %v4142
          %v5518 = vunpack.c.l.b16 %v4143
          %v5519 = vunpack.c.h.b16 %v4143
          %v5520 = vunpack.c.l.b16 %v4144
          %v5521 = vunpack.c.h.b16 %v4144
          %v5522 = vunpack.c.l.b16 %v4145
          %v5523 = vunpack.c.h.b16 %v4145
          %v5524 = vunpack.c.l.b16 %v4146
          %v5525 = vunpack.c.h.b16 %v4146
          %v5526 = vunpack.c.l.b16 %v4147
          %v5527 = vunpack.c.h.b16 %v4147
          %v5528 = vunpack.c.l.b16 %v4148
          %v5529 = vunpack.c.h.b16 %v4148
          %v5530 = vunpack.c.l.b16 %v4149
          %v5531 = vunpack.c.h.b16 %v4149
          %v5532 = vunpack.c.l.b16 %v4150
          %v5533 = vunpack.c.h.b16 %v4150
          %v5534 = vunpack.c.l.b16 %v4151
          %v5535 = vunpack.c.h.b16 %v4151
          %v5536 = vunpack.c.l.b16 %v4152
          %v5537 = vunpack.c.h.b16 %v4152
          %v5538 = vunpack.c.l.b16 %v4153
          %v5539 = vunpack.c.h.b16 %v4153
          %v5540 = vunpack.c.l.b16 %v4154
          %v5541 = vunpack.c.h.b16 %v4154
          %v5542 = vunpack.c.l.b16 %v4155
          %v5543 = vunpack.c.h.b16 %v4155
          %v5544 = vunpack.c.l.b16 %v4156
          %v5545 = vunpack.c.h.b16 %v4156
          %v5546 = vunpack.c.l.b16 %v4157
          %v5547 = vunpack.c.h.b16 %v4157
          %v5548 = vunpack.c.l.b16 %v4158
          %v5549 = vunpack.c.h.b16 %v4158
          %v5550 = vunpack.c.l.b16 %v4159
          %v5551 = vunpack.c.h.b16 %v4159
          %v5552 = vunpack.c.l.b16 %v4160
          %v5553 = vunpack.c.h.b16 %v4160
          %v5554 = vunpack.c.l.b16 %v4161
          %v5555 = vunpack.c.h.b16 %v4161
          %v5556 = vunpack.c.l.b16 %v4162
          %v5557 = vunpack.c.h.b16 %v4162
          %v5558 = vunpack.c.l.b16 %v4163
          %v5559 = vunpack.c.h.b16 %v4163
          %v5560 = vunpack.c.l.b16 %v4164
          %v5561 = vunpack.c.h.b16 %v4164
          %v5562 = vunpack.c.l.b16 %v4165
          %v5563 = vunpack.c.h.b16 %v4165
          %v5564 = vunpack.c.l.b16 %v4166
          %v5565 = vunpack.c.h.b16 %v4166
          %v5566 = vunpack.c.l.b16 %v4167
          %v5567 = vunpack.c.h.b16 %v4167
          %v5568 = vunpack.c.l.b16 %v4168
          %v5569 = vunpack.c.h.b16 %v4168
          %v5570 = vunpack.c.l.b16 %v4169
          %v5571 = vunpack.c.h.b16 %v4169
          %v5572 = vunpack.c.l.b16 %v4170
          %v5573 = vunpack.c.h.b16 %v4170
          %v5574 = vunpack.c.l.b16 %v4171
          %v5575 = vunpack.c.h.b16 %v4171
          %v5576 = vunpack.c.l.b16 %v4172
          %v5577 = vunpack.c.h.b16 %v4172
          %v5578 = vunpack.c.l.b16 %v4173
          %v5579 = vunpack.c.h.b16 %v4173
          %v5580 = vunpack.c.l.b16 %v4174
          %v5581 = vunpack.c.h.b16 %v4174
          %v5582 = vunpack.c.l.b16 %v4175
          %v5583 = vunpack.c.h.b16 %v4175
          %v5584 = vunpack.c.l.b16 %v4176
          %v5585 = vunpack.c.h.b16 %v4176
          %v5586 = vunpack.c.l.b16 %v4177
          %v5587 = vunpack.c.h.b16 %v4177
          %v5588 = vunpack.c.l.b16 %v4178
          %v5589 = vunpack.c.h.b16 %v4178
          %v5590 = vunpack.c.l.b16 %v4179
          %v5591 = vunpack.c.h.b16 %v4179
          %v5592 = vunpack.c.l.b16 %v4180
          %v5593 = vunpack.c.h.b16 %v4180
          %v5594 = vunpack.c.l.b16 %v4181
          %v5595 = vunpack.c.h.b16 %v4181
          %v5596 = vunpack.c.l.b16 %v4182
          %v5597 = vunpack.c.h.b16 %v4182
          %v5598 = vunpack.c.l.b16 %v4183
          %v5599 = vunpack.c.h.b16 %v4183
          %v5600 = vunpack.c.l.b16 %v4184
          %v5601 = vunpack.c.h.b16 %v4184
          %v5602 = vunpack.c.l.b16 %v4185
          %v5603 = vunpack.c.h.b16 %v4185
          %v5604 = vunpack.c.l.b16 %v4186
          %v5605 = vunpack.c.h.b16 %v4186
          %v5606 = vunpack.c.l.b16 %v4187
          %v5607 = vunpack.c.h.b16 %v4187
          %v5608 = vunpack.c.l.b16 %v4188
          %v5609 = vunpack.c.h.b16 %v4188
          %v5610 = vunpack.c.l.b16 %v4189
          %v5611 = vunpack.c.h.b16 %v4189
          %v5612 = vunpack.c.l.b16 %v4190
          %v5613 = vunpack.c.h.b16 %v4190
          %v5614 = vunpack.c.l.b16 %v4191
          %v5615 = vunpack.c.h.b16 %v4191
          %v5616 = vunpack.c.l.b16 %v4192
          %v5617 = vunpack.c.h.b16 %v4192
          %v5618 = vunpack.c.l.b16 %v4193
          %v5619 = vunpack.c.h.b16 %v4193
          %v5620 = vunpack.c.l.b16 %v4194
          %v5621 = vunpack.c.h.b16 %v4194
          %v5622 = vunpack.c.l.b16 %v4195
          %v5623 = vunpack.c.h.b16 %v4195
          %v5624 = vunpack.c.l.b16 %v4196
          %v5625 = vunpack.c.h.b16 %v4196
          %v5626 = vunpack.c.l.b16 %v4197
          %v5627 = vunpack.c.h.b16 %v4197
          %v5628 = vunpack.c.l.b16 %v4198
          %v5629 = vunpack.c.h.b16 %v4198
          %v5630 = vunpack.c.l.b16 %v4199
          %v5631 = vunpack.c.h.b16 %v4199
          %v5632 = vunpack.c.l.b16 %v4200
          %v5633 = vunpack.c.h.b16 %v4200
          %v5634 = vunpack.c.l.b16 %v4201
          %v5635 = vunpack.c.h.b16 %v4201
          %v5636 = vunpack.c.l.b16 %v4202
          %v5637 = vunpack.c.h.b16 %v4202
          %v5638 = vunpack.c.l.b16 %v4203
          %v5639 = vunpack.c.h.b16 %v4203
          %v5640 = vunpack.c.l.b16 %v4204
          %v5641 = vunpack.c.h.b16 %v4204
          %v5642 = vunpack.c.l.b16 %v4205
          %v5643 = vunpack.c.h.b16 %v4205
          %v5644 = vunpack.c.l.b16 %v4206
          %v5645 = vunpack.c.h.b16 %v4206
          %v5646 = vunpack.c.l.b16 %v4207
          %v5647 = vunpack.c.h.b16 %v4207
          %v5648 = vunpack.c.l.b16 %v4208
          %v5649 = vunpack.c.h.b16 %v4208
          %v5650 = vunpack.c.l.b16 %v4209
          %v5651 = vunpack.c.h.b16 %v4209
          %v5652 = vunpack.c.l.b16 %v4210
          %v5653 = vunpack.c.h.b16 %v4210
          %v5654 = vunpack.c.l.b16 %v4211
          %v5655 = vunpack.c.h.b16 %v4211
          %v5656 = vunpack.c.l.b16 %v4212
          %v5657 = vunpack.c.h.b16 %v4212
          %v5658 = vunpack.c.l.b16 %v4213
          %v5659 = vunpack.c.h.b16 %v4213
          %v5660 = vunpack.c.l.b16 %v4214
          %v5661 = vunpack.c.h.b16 %v4214
          %v5662 = vunpack.c.l.b16 %v4215
          %v5663 = vunpack.c.h.b16 %v4215
          %v5664 = vunpack.c.l.b16 %v4216
          %v5665 = vunpack.c.h.b16 %v4216
          %v5666 = vunpack.c.l.b16 %v4217
          %v5667 = vunpack.c.h.b16 %v4217
          %v5668 = vunpack.c.l.b16 %v4218
          %v5669 = vunpack.c.h.b16 %v4218
          %v5670 = vunpack.c.l.b16 %v4219
          %v5671 = vunpack.c.h.b16 %v4219
          %v5672 = vunpack.c.l.b16 %v4220
          %v5673 = vunpack.c.h.b16 %v4220
          %v5674 = vunpack.c.l.b16 %v4221
          %v5675 = vunpack.c.h.b16 %v4221
          %v5676 = vunpack.c.l.b16 %v4222
          %v5677 = vunpack.c.h.b16 %v4222
          %v5678 = vunpack.c.l.b16 %v4223
          %v5679 = vunpack.c.h.b16 %v4223
          %v5680 = vunpack.c.l.b16 %v4224
          %v5681 = vunpack.c.h.b16 %v4224
          %v5682 = vunpack.c.l.b16 %v4225
          %v5683 = vunpack.c.h.b16 %v4225
          %v5684 = vunpack.c.l.b16 %v4226
          %v5685 = vunpack.c.h.b16 %v4226
          %v5686 = vunpack.c.l.b16 %v4227
          %v5687 = vunpack.c.h.b16 %v4227
          %v5688 = vunpack.c.l.b16 %v4228
          %v5689 = vunpack.c.h.b16 %v4228
          %v5690 = vunpack.c.l.b16 %v4229
          %v5691 = vunpack.c.h.b16 %v4229
          %v5692 = vunpack.c.l.b16 %v4230
          %v5693 = vunpack.c.h.b16 %v4230
          %v5694 = vunpack.c.l.b16 %v4231
          %v5695 = vunpack.c.h.b16 %v4231
          %v5696 = vunpack.c.l.b16 %v4232
          %v5697 = vunpack.c.h.b16 %v4232
          %v5698 = vunpack.c.l.b16 %v4233
          %v5699 = vunpack.c.h.b16 %v4233
          %v5700 = vunpack.c.l.b16 %v4234
          %v5701 = vunpack.c.h.b16 %v4234
          %v5702 = vunpack.c.l.b16 %v4235
          %v5703 = vunpack.c.h.b16 %v4235
          %v5704 = vunpack.c.l.b16 %v4236
          %v5705 = vunpack.c.h.b16 %v4236
          %v5706 = vunpack.c.l.b16 %v4237
          %v5707 = vunpack.c.h.b16 %v4237
          %v5708 = vunpack.c.l.b16 %v4238
          %v5709 = vunpack.c.h.b16 %v4238
          %v5710 = vunpack.c.l.b16 %v4239
          %v5711 = vunpack.c.h.b16 %v4239
          %v5712 = vunpack.c.l.b16 %v4240
          %v5713 = vunpack.c.h.b16 %v4240
          %v5714 = vunpack.c.l.b16 %v4241
          %v5715 = vunpack.c.h.b16 %v4241
          %v5716 = vunpack.c.l.b16 %v4242
          %v5717 = vunpack.c.h.b16 %v4242
          %v5718 = vunpack.c.l.b16 %v4243
          %v5719 = vunpack.c.h.b16 %v4243
          %v5720 = vunpack.c.l.b16 %v4244
          %v5721 = vunpack.c.h.b16 %v4244
          %v5722 = vunpack.c.l.b16 %v4245
          %v5723 = vunpack.c.h.b16 %v4245
          %v5724 = vunpack.c.l.b16 %v4246
          %v5725 = vunpack.c.h.b16 %v4246
          %v5726 = vunpack.c.l.b16 %v4247
          %v5727 = vunpack.c.h.b16 %v4247
          %v5728 = vunpack.c.l.b16 %v4248
          %v5729 = vunpack.c.h.b16 %v4248
          %v5730 = vunpack.c.l.b16 %v4249
          %v5731 = vunpack.c.h.b16 %v4249
          %v5732 = vunpack.c.l.b16 %v4250
          %v5733 = vunpack.c.h.b16 %v4250
          %v5734 = vunpack.c.l.b16 %v4251
          %v5735 = vunpack.c.h.b16 %v4251
          %v5736 = vunpack.c.l.b16 %v4252
          %v5737 = vunpack.c.h.b16 %v4252
          %v5738 = vunpack.c.l.b16 %v4253
          %v5739 = vunpack.c.h.b16 %v4253
          %v5740 = vunpack.c.l.b16 %v4254
          %v5741 = vunpack.c.h.b16 %v4254
          %v5742 = vunpack.c.l.b16 %v4255
          %v5743 = vunpack.c.h.b16 %v4255
          %v5744 = vunpack.c.l.b16 %v4256
          %v5745 = vunpack.c.h.b16 %v4256
          %v5746 = vunpack.c.l.b16 %v4257
          %v5747 = vunpack.c.h.b16 %v4257
          %v5748 = vunpack.c.l.b16 %v4258
          %v5749 = vunpack.c.h.b16 %v4258
          %v5750 = vunpack.c.l.b16 %v4259
          %v5751 = vunpack.c.h.b16 %v4259
          %v5752 = vunpack.c.l.b16 %v4260
          %v5753 = vunpack.c.h.b16 %v4260
          %v5754 = vunpack.c.l.b16 %v4261
          %v5755 = vunpack.c.h.b16 %v4261
          %v5756 = vunpack.c.l.b16 %v4262
          %v5757 = vunpack.c.h.b16 %v4262
          %v5758 = vunpack.c.l.b16 %v4263
          %v5759 = vunpack.c.h.b16 %v4263
          %v5760 = vunpack.c.l.b16 %v4264
          %v5761 = vunpack.c.h.b16 %v4264
          %v5762 = vunpack.c.l.b16 %v4265
          %v5763 = vunpack.c.h.b16 %v4265
          %v5764 = vunpack.c.l.b16 %v4266
          %v5765 = vunpack.c.h.b16 %v4266
          %v5766 = vunpack.c.l.b16 %v4267
          %v5767 = vunpack.c.h.b16 %v4267
          %v5768 = vunpack.c.l.b16 %v4268
          %v5769 = vunpack.c.h.b16 %v4268
          %v5770 = vunpack.c.l.b16 %v4269
          %v5771 = vunpack.c.h.b16 %v4269
          %v5772 = vunpack.c.l.b16 %v4270
          %v5773 = vunpack.c.h.b16 %v4270
          %v5774 = vunpack.c.l.b16 %v4271
          %v5775 = vunpack.c.h.b16 %v4271
          %v5776 = vunpack.c.l.b16 %v4272
          %v5777 = vunpack.c.h.b16 %v4272
          %v5778 = vunpack.c.l.b16 %v4273
          %v5779 = vunpack.c.h.b16 %v4273
          %v5780 = vunpack.c.l.b16 %v4274
          %v5781 = vunpack.c.h.b16 %v4274
          %v5782 = vunpack.c.l.b16 %v4275
          %v5783 = vunpack.c.h.b16 %v4275
          %v5784 = vunpack.c.l.b16 %v4276
          %v5785 = vunpack.c.h.b16 %v4276
          %v5786 = vunpack.c.l.b16 %v4277
          %v5787 = vunpack.c.h.b16 %v4277
          %v5788 = vunpack.c.l.b16 %v4278
          %v5789 = vunpack.c.h.b16 %v4278
          %v5790 = vunpack.c.l.b16 %v4279
          %v5791 = vunpack.c.h.b16 %v4279
          %v5792 = vunpack.c.l.b16 %v4280
          %v5793 = vunpack.c.h.b16 %v4280
          %v5794 = vunpack.c.l.b16 %v4281
          %v5795 = vunpack.c.h.b16 %v4281
          %v5796 = vunpack.c.l.b16 %v4282
          %v5797 = vunpack.c.h.b16 %v4282
          %v5798 = vunpack.c.l.b16 %v4283
          %v5799 = vunpack.c.h.b16 %v4283
          %v5800 = vunpack.c.l.b16 %v4284
          %v5801 = vunpack.c.h.b16 %v4284
          %v5802 = vunpack.c.l.b16 %v4285
          %v5803 = vunpack.c.h.b16 %v4285
          %v5804 = vunpack.c.l.b16 %v4286
          %v5805 = vunpack.c.h.b16 %v4286
          %v5806 = vunpack.c.l.b16 %v4287
          %v5807 = vunpack.c.h.b16 %v4287
          %v5808 = vunpack.c.l.b16 %v4288
          %v5809 = vunpack.c.h.b16 %v4288
          %v5810 = vunpack.c.l.b16 %v4289
          %v5811 = vunpack.c.h.b16 %v4289
          %v5812 = vunpack.c.l.b16 %v4290
          %v5813 = vunpack.c.h.b16 %v4290
          %v5814 = vunpack.c.l.b16 %v4291
          %v5815 = vunpack.c.h.b16 %v4291
          %v5816 = vunpack.c.l.b16 %v4292
          %v5817 = vunpack.c.h.b16 %v4292
          %v5818 = vunpack.c.l.b16 %v4293
          %v5819 = vunpack.c.h.b16 %v4293
          %v5820 = vunpack.c.l.b16 %v4294
          %v5821 = vunpack.c.h.b16 %v4294
          %v5822 = vunpack.c.l.b16 %v4295
          %v5823 = vunpack.c.h.b16 %v4295
          %v5824 = vunpack.c.l.b16 %v4296
          %v5825 = vunpack.c.h.b16 %v4296
          %v5826 = vunpack.c.l.b16 %v4297
          %v5827 = vunpack.c.h.b16 %v4297
          %v5828 = vunpack.c.l.b16 %v4298
          %v5829 = vunpack.c.h.b16 %v4298
          %v5830 = vunpack.c.l.b16 %v4299
          %v5831 = vunpack.c.h.b16 %v4299
          %v5832 = vunpack.c.l.b16 %v4300
          %v5833 = vunpack.c.h.b16 %v4300
          %v5834 = vunpack.c.l.b16 %v4301
          %v5835 = vunpack.c.h.b16 %v4301
          %v5836 = vunpack.c.l.b16 %v4302
          %v5837 = vunpack.c.h.b16 %v4302
          %v5838 = vunpack.c.l.b16 %v4303
          %v5839 = vunpack.c.h.b16 %v4303
          %v5840 = vunpack.c.l.b16 %v4304
          %v5841 = vunpack.c.h.b16 %v4304
          %v5842 = vunpack.c.l.b16 %v4305
          %v5843 = vunpack.c.h.b16 %v4305
          %v5844 = vunpack.c.l.b16 %v4306
          %v5845 = vunpack.c.h.b16 %v4306
          %v5846 = vunpack.c.l.b16 %v4307
          %v5847 = vunpack.c.h.b16 %v4307
          %v5848 = vunpack.c.l.b16 %v4308
          %v5849 = vunpack.c.h.b16 %v4308
          %v5850 = vunpack.c.l.b16 %v4309
          %v5851 = vunpack.c.h.b16 %v4309
          %v5852 = vunpack.c.l.b16 %v4310
          %v5853 = vunpack.c.h.b16 %v4310
          %v5854 = vunpack.c.l.b16 %v4311
          %v5855 = vunpack.c.h.b16 %v4311
          %v5856 = vunpack.c.l.b16 %v4312
          %v5857 = vunpack.c.h.b16 %v4312
          %v5858 = vunpack.c.l.b16 %v4313
          %v5859 = vunpack.c.h.b16 %v4313
          %v5860 = vunpack.c.l.b16 %v4314
          %v5861 = vunpack.c.h.b16 %v4314
          %v5862 = vunpack.c.l.b16 %v4315
          %v5863 = vunpack.c.h.b16 %v4315
          %v5864 = vunpack.c.l.b16 %v4316
          %v5865 = vunpack.c.h.b16 %v4316
          %v5866 = vunpack.c.l.b16 %v4317
          %v5867 = vunpack.c.h.b16 %v4317
          %v5868 = vunpack.c.l.b16 %v4318
          %v5869 = vunpack.c.h.b16 %v4318
          %v5870 = vunpack.c.l.b16 %v4319
          %v5871 = vunpack.c.h.b16 %v4319
          %v5872 = vunpack.c.l.b16 %v4320
          %v5873 = vunpack.c.h.b16 %v4320
          %v5874 = vunpack.c.l.b16 %v4321
          %v5875 = vunpack.c.h.b16 %v4321
          %v5876 = vunpack.c.l.b16 %v4322
          %v5877 = vunpack.c.h.b16 %v4322
          %v5878 = vunpack.c.l.b16 %v4323
          %v5879 = vunpack.c.h.b16 %v4323
          %v5880 = vunpack.c.l.b16 %v4324
          %v5881 = vunpack.c.h.b16 %v4324
          %v5882 = vunpack.c.l.b16 %v4325
          %v5883 = vunpack.c.h.b16 %v4325
          %v5884 = vpack.c.b16 %v4864, %v4860
          %v5885 = vpack.c.b16 %v4865, %v4861
          %v5886 = vpack.c.b16 %v4866, %v4862
          %v5887 = vpack.c.b16 %v4867, %v4863
          %v5888 = vpack.c.b16 %v4872, %v4868
          %v5889 = vpack.c.b16 %v4873, %v4869
          %v5890 = vpack.c.b16 %v4874, %v4870
          %v5891 = vpack.c.b16 %v4875, %v4871
          %v5892 = vpack.c.b16 %v4880, %v4876
          %v5893 = vpack.c.b16 %v4881, %v4877
          %v5894 = vpack.c.b16 %v4882, %v4878
          %v5895 = vpack.c.b16 %v4883, %v4879
          %v5896 = vpack.c.b16 %v4888, %v4884
          %v5897 = vpack.c.b16 %v4889, %v4885
          %v5898 = vpack.c.b16 %v4890, %v4886
          %v5899 = vpack.c.b16 %v4891, %v4887
          %v5900 = vpack.c.b16 %v4896, %v4892
          %v5901 = vpack.c.b16 %v4897, %v4893
          %v5902 = vpack.c.b16 %v4898, %v4894
          %v5903 = vpack.c.b16 %v4899, %v4895
          %v5904 = vpack.c.b16 %v4904, %v4900
          %v5905 = vpack.c.b16 %v4905, %v4901
          %v5906 = vpack.c.b16 %v4906, %v4902
          %v5907 = vpack.c.b16 %v4907, %v4903
          %v5908 = vpack.c.b16 %v4912, %v4908
          %v5909 = vpack.c.b16 %v4913, %v4909
          %v5910 = vpack.c.b16 %v4914, %v4910
          %v5911 = vpack.c.b16 %v4915, %v4911
          %v5912 = vpack.c.b16 %v4920, %v4916
          %v5913 = vpack.c.b16 %v4921, %v4917
          %v5914 = vpack.c.b16 %v4922, %v4918
          %v5915 = vpack.c.b16 %v4923, %v4919
          %v5916 = vpack.c.b16 %v4928, %v4924
          %v5917 = vpack.c.b16 %v4929, %v4925
          %v5918 = vpack.c.b16 %v4930, %v4926
          %v5919 = vpack.c.b16 %v4931, %v4927
          %v5920 = vpack.c.b16 %v4936, %v4932
          %v5921 = vpack.c.b16 %v4937, %v4933
          %v5922 = vpack.c.b16 %v4938, %v4934
          %v5923 = vpack.c.b16 %v4939, %v4935
          %v5924 = vpack.c.b16 %v4944, %v4940
          %v5925 = vpack.c.b16 %v4945, %v4941
          %v5926 = vpack.c.b16 %v4946, %v4942
          %v5927 = vpack.c.b16 %v4947, %v4943
          %v5928 = vpack.c.b16 %v4952, %v4948
          %v5929 = vpack.c.b16 %v4953, %v4949
          %v5930 = vpack.c.b16 %v4954, %v4950
          %v5931 = vpack.c.b16 %v4955, %v4951
          %v5932 = vpack.c.b16 %v4960, %v4956
          %v5933 = vpack.c.b16 %v4961, %v4957
          %v5934 = vpack.c.b16 %v4962, %v4958
          %v5935 = vpack.c.b16 %v4963, %v4959
          %v5936 = vpack.c.b16 %v4968, %v4964
          %v5937 = vpack.c.b16 %v4969, %v4965
          %v5938 = vpack.c.b16 %v4970, %v4966
          %v5939 = vpack.c.b16 %v4971, %v4967
          %v5940 = vpack.c.b16 %v4976, %v4972
          %v5941 = vpack.c.b16 %v4977, %v4973
          %v5942 = vpack.c.b16 %v4978, %v4974
          %v5943 = vpack.c.b16 %v4979, %v4975
          %v5944 = vpack.c.b16 %v4984, %v4980
          %v5945 = vpack.c.b16 %v4985, %v4981
          %v5946 = vpack.c.b16 %v4986, %v4982
          %v5947 = vpack.c.b16 %v4987, %v4983
          %v5948 = vpack.c.b16 %v4992, %v4988
          %v5949 = vpack.c.b16 %v4993, %v4989
          %v5950 = vpack.c.b16 %v4994, %v4990
          %v5951 = vpack.c.b16 %v4995, %v4991
          %v5952 = vpack.c.b16 %v5000, %v4996
          %v5953 = vpack.c.b16 %v5001, %v4997
          %v5954 = vpack.c.b16 %v5002, %v4998
          %v5955 = vpack.c.b16 %v5003, %v4999
          %v5956 = vpack.c.b16 %v5008, %v5004
          %v5957 = vpack.c.b16 %v5009, %v5005
          %v5958 = vpack.c.b16 %v5010, %v5006
          %v5959 = vpack.c.b16 %v5011, %v5007
          %v5960 = vpack.c.b16 %v5016, %v5012
          %v5961 = vpack.c.b16 %v5017, %v5013
          %v5962 = vpack.c.b16 %v5018, %v5014
          %v5963 = vpack.c.b16 %v5019, %v5015
          %v5964 = vpack.c.b16 %v5024, %v5020
          %v5965 = vpack.c.b16 %v5025, %v5021
          %v5966 = vpack.c.b16 %v5026, %v5022
          %v5967 = vpack.c.b16 %v5027, %v5023
          %v5968 = vpack.c.b16 %v5032, %v5028
          %v5969 = vpack.c.b16 %v5033, %v5029
          %v5970 = vpack.c.b16 %v5034, %v5030
          %v5971 = vpack.c.b16 %v5035, %v5031
          %v5972 = vpack.c.b16 %v5040, %v5036
          %v5973 = vpack.c.b16 %v5041, %v5037
          %v5974 = vpack.c.b16 %v5042, %v5038
          %v5975 = vpack.c.b16 %v5043, %v5039
          %v5976 = vpack.c.b16 %v5048, %v5044
          %v5977 = vpack.c.b16 %v5049, %v5045
          %v5978 = vpack.c.b16 %v5050, %v5046
          %v5979 = vpack.c.b16 %v5051, %v5047
          %v5980 = vpack.c.b16 %v5056, %v5052
          %v5981 = vpack.c.b16 %v5057, %v5053
          %v5982 = vpack.c.b16 %v5058, %v5054
          %v5983 = vpack.c.b16 %v5059, %v5055
          %v5984 = vpack.c.b16 %v5064, %v5060
          %v5985 = vpack.c.b16 %v5065, %v5061
          %v5986 = vpack.c.b16 %v5066, %v5062
          %v5987 = vpack.c.b16 %v5067, %v5063
          %v5988 = vpack.c.b16 %v5072, %v5068
          %v5989 = vpack.c.b16 %v5073, %v5069
          %v5990 = vpack.c.b16 %v5074, %v5070
          %v5991 = vpack.c.b16 %v5075, %v5071
          %v5992 = vpack.c.b16 %v5080, %v5076
          %v5993 = vpack.c.b16 %v5081, %v5077
          %v5994 = vpack.c.b16 %v5082, %v5078
          %v5995 = vpack.c.b16 %v5083, %v5079
          %v5996 = vpack.c.b16 %v5088, %v5084
          %v5997 = vpack.c.b16 %v5089, %v5085
          %v5998 = vpack.c.b16 %v5090, %v5086
          %v5999 = vpack.c.b16 %v5091, %v5087
          %v6000 = vpack.c.b16 %v5096, %v5092
          %v6001 = vpack.c.b16 %v5097, %v5093
          %v6002 = vpack.c.b16 %v5098, %v5094
          %v6003 = vpack.c.b16 %v5099, %v5095
          %v6004 = vpack.c.b16 %v5104, %v5100
          %v6005 = vpack.c.b16 %v5105, %v5101
          %v6006 = vpack.c.b16 %v5106, %v5102
          %v6007 = vpack.c.b16 %v5107, %v5103
          %v6008 = vpack.c.b16 %v5112, %v5108
          %v6009 = vpack.c.b16 %v5113, %v5109
          %v6010 = vpack.c.b16 %v5114, %v5110
          %v6011 = vpack.c.b16 %v5115, %v5111
          %v6012 = vpack.c.b16 %v5120, %v5116
          %v6013 = vpack.c.b16 %v5121, %v5117
          %v6014 = vpack.c.b16 %v5122, %v5118
          %v6015 = vpack.c.b16 %v5123, %v5119
          %v6016 = vpack.c.b16 %v5128, %v5124
          %v6017 = vpack.c.b16 %v5129, %v5125
          %v6018 = vpack.c.b16 %v5130, %v5126
          %v6019 = vpack.c.b16 %v5131, %v5127
          %v6020 = vpack.c.b16 %v5136, %v5132
          %v6021 = vpack.c.b16 %v5137, %v5133
          %v6022 = vpack.c.b16 %v5138, %v5134
          %v6023 = vpack.c.b16 %v5139, %v5135
          %v6024 = vpack.c.b16 %v5144, %v5140
          %v6025 = vpack.c.b16 %v5145, %v5141
          %v6026 = vpack.c.b16 %v5146, %v5142
          %v6027 = vpack.c.b16 %v5147, %v5143
          %v6028 = vpack.c.b16 %v5152, %v5148
          %v6029 = vpack.c.b16 %v5153, %v5149
          %v6030 = vpack.c.b16 %v5154, %v5150
          %v6031 = vpack.c.b16 %v5155, %v5151
          %v6032 = vpack.c.b16 %v5160, %v5156
          %v6033 = vpack.c.b16 %v5161, %v5157
          %v6034 = vpack.c.b16 %v5162, %v5158
          %v6035 = vpack.c.b16 %v5163, %v5159
          %v6036 = vpack.c.b16 %v5168, %v5164
          %v6037 = vpack.c.b16 %v5169, %v5165
          %v6038 = vpack.c.b16 %v5170, %v5166
          %v6039 = vpack.c.b16 %v5171, %v5167
          %v6040 = vpack.c.b16 %v5176, %v5172
          %v6041 = vpack.c.b16 %v5177, %v5173
          %v6042 = vpack.c.b16 %v5178, %v5174
          %v6043 = vpack.c.b16 %v5179, %v5175
          %v6044 = vpack.c.b16 %v5184, %v5180
          %v6045 = vpack.c.b16 %v5185, %v5181
          %v6046 = vpack.c.b16 %v5186, %v5182
          %v6047 = vpack.c.b16 %v5187, %v5183
          %v6048 = vpack.c.b16 %v5192, %v5188
          %v6049 = vpack.c.b16 %v5193, %v5189
          %v6050 = vpack.c.b16 %v5194, %v5190
          %v6051 = vpack.c.b16 %v5195, %v5191
          %v6052 = vpack.c.b16 %v5200, %v5196
          %v6053 = vpack.c.b16 %v5201, %v5197
          %v6054 = vpack.c.b16 %v5202, %v5198
          %v6055 = vpack.c.b16 %v5203, %v5199
          %v6056 = vpack.c.b16 %v5208, %v5204
          %v6057 = vpack.c.b16 %v5209, %v5205
          %v6058 = vpack.c.b16 %v5210, %v5206
          %v6059 = vpack.c.b16 %v5211, %v5207
          %v6060 = vpack.c.b16 %v5216, %v5212
          %v6061 = vpack.c.b16 %v5217, %v5213
          %v6062 = vpack.c.b16 %v5218, %v5214
          %v6063 = vpack.c.b16 %v5219, %v5215
          %v6064 = vpack.c.b16 %v5224, %v5220
          %v6065 = vpack.c.b16 %v5225, %v5221
          %v6066 = vpack.c.b16 %v5226, %v5222
          %v6067 = vpack.c.b16 %v5227, %v5223
          %v6068 = vpack.c.b16 %v5232, %v5228
          %v6069 = vpack.c.b16 %v5233, %v5229
          %v6070 = vpack.c.b16 %v5234, %v5230
          %v6071 = vpack.c.b16 %v5235, %v5231
          %v6072 = vpack.c.b16 %v5240, %v5236
          %v6073 = vpack.c.b16 %v5241, %v5237
          %v6074 = vpack.c.b16 %v5242, %v5238
          %v6075 = vpack.c.b16 %v5243, %v5239
          %v6076 = vpack.c.b16 %v5248, %v5244
          %v6077 = vpack.c.b16 %v5249, %v5245
          %v6078 = vpack.c.b16 %v5250, %v5246
          %v6079 = vpack.c.b16 %v5251, %v5247
          %v6080 = vpack.c.b16 %v5256, %v5252
          %v6081 = vpack.c.b16 %v5257, %v5253
          %v6082 = vpack.c.b16 %v5258, %v5254
          %v6083 = vpack.c.b16 %v5259, %v5255
          %v6084 = vpack.c.b16 %v5264, %v5260
          %v6085 = vpack.c.b16 %v5265, %v5261
          %v6086 = vpack.c.b16 %v5266, %v5262
          %v6087 = vpack.c.b16 %v5267, %v5263
          %v6088 = vpack.c.b16 %v5272, %v5268
          %v6089 = vpack.c.b16 %v5273, %v5269
          %v6090 = vpack.c.b16 %v5274, %v5270
          %v6091 = vpack.c.b16 %v5275, %v5271
          %v6092 = vpack.c.b16 %v5280, %v5276
          %v6093 = vpack.c.b16 %v5281, %v5277
          %v6094 = vpack.c.b16 %v5282, %v5278
          %v6095 = vpack.c.b16 %v5283, %v5279
          %v6096 = vpack.c.b16 %v5288, %v5284
          %v6097 = vpack.c.b16 %v5289, %v5285
          %v6098 = vpack.c.b16 %v5290, %v5286
          %v6099 = vpack.c.b16 %v5291, %v5287
          %v6100 = vpack.c.b16 %v5296, %v5292
          %v6101 = vpack.c.b16 %v5297, %v5293
          %v6102 = vpack.c.b16 %v5298, %v5294
          %v6103 = vpack.c.b16 %v5299, %v5295
          %v6104 = vpack.c.b16 %v5304, %v5300
          %v6105 = vpack.c.b16 %v5305, %v5301
          %v6106 = vpack.c.b16 %v5306, %v5302
          %v6107 = vpack.c.b16 %v5307, %v5303
          %v6108 = vpack.c.b16 %v5312, %v5308
          %v6109 = vpack.c.b16 %v5313, %v5309
          %v6110 = vpack.c.b16 %v5314, %v5310
          %v6111 = vpack.c.b16 %v5315, %v5311
          %v6112 = vpack.c.b16 %v5320, %v5316
          %v6113 = vpack.c.b16 %v5321, %v5317
          %v6114 = vpack.c.b16 %v5322, %v5318
          %v6115 = vpack.c.b16 %v5323, %v5319
          %v6116 = vpack.c.b16 %v5328, %v5324
          %v6117 = vpack.c.b16 %v5329, %v5325
          %v6118 = vpack.c.b16 %v5330, %v5326
          %v6119 = vpack.c.b16 %v5331, %v5327
          %v6120 = vpack.c.b16 %v5336, %v5332
          %v6121 = vpack.c.b16 %v5337, %v5333
          %v6122 = vpack.c.b16 %v5338, %v5334
          %v6123 = vpack.c.b16 %v5339, %v5335
          %v6124 = vpack.c.b16 %v5344, %v5340
          %v6125 = vpack.c.b16 %v5345, %v5341
          %v6126 = vpack.c.b16 %v5346, %v5342
          %v6127 = vpack.c.b16 %v5347, %v5343
          %v6128 = vpack.c.b16 %v5352, %v5348
          %v6129 = vpack.c.b16 %v5353, %v5349
          %v6130 = vpack.c.b16 %v5354, %v5350
          %v6131 = vpack.c.b16 %v5355, %v5351
          %v6132 = vpack.c.b16 %v5360, %v5356
          %v6133 = vpack.c.b16 %v5361, %v5357
          %v6134 = vpack.c.b16 %v5362, %v5358
          %v6135 = vpack.c.b16 %v5363, %v5359
          %v6136 = vpack.c.b16 %v5368, %v5364
          %v6137 = vpack.c.b16 %v5369, %v5365
          %v6138 = vpack.c.b16 %v5370, %v5366
          %v6139 = vpack.c.b16 %v5371, %v5367
          %v6140 = vpack.c.b16 %v5376, %v5372
          %v6141 = vpack.c.b16 %v5377, %v5373
          %v6142 = vpack.c.b16 %v5378, %v5374
          %v6143 = vpack.c.b16 %v5379, %v5375
          %v6144 = vpack.c.b16 %v5384, %v5380
          %v6145 = vpack.c.b16 %v5385, %v5381
          %v6146 = vpack.c.b16 %v5386, %v5382
          %v6147 = vpack.c.b16 %v5387, %v5383
          %v6148 = vpack.c.b16 %v5392, %v5388
          %v6149 = vpack.c.b16 %v5393, %v5389
          %v6150 = vpack.c.b16 %v5394, %v5390
          %v6151 = vpack.c.b16 %v5395, %v5391
          %v6152 = vpack.c.b16 %v5400, %v5396
          %v6153 = vpack.c.b16 %v5401, %v5397
          %v6154 = vpack.c.b16 %v5402, %v5398
          %v6155 = vpack.c.b16 %v5403, %v5399
          %v6156 = vpack.c.b16 %v5408, %v5404
          %v6157 = vpack.c.b16 %v5409, %v5405
          %v6158 = vpack.c.b16 %v5410, %v5406
          %v6159 = vpack.c.b16 %v5411, %v5407
          %v6160 = vpack.c.b16 %v5416, %v5412
          %v6161 = vpack.c.b16 %v5417, %v5413
          %v6162 = vpack.c.b16 %v5418, %v5414
          %v6163 = vpack.c.b16 %v5419, %v5415
          %v6164 = vpack.c.b16 %v5424, %v5420
          %v6165 = vpack.c.b16 %v5425, %v5421
          %v6166 = vpack.c.b16 %v5426, %v5422
          %v6167 = vpack.c.b16 %v5427, %v5423
          %v6168 = vpack.c.b16 %v5432, %v5428
          %v6169 = vpack.c.b16 %v5433, %v5429
          %v6170 = vpack.c.b16 %v5434, %v5430
          %v6171 = vpack.c.b16 %v5435, %v5431
          %v6172 = vpack.c.b16 %v5440, %v5436
          %v6173 = vpack.c.b16 %v5441, %v5437
          %v6174 = vpack.c.b16 %v5442, %v5438
          %v6175 = vpack.c.b16 %v5443, %v5439
          %v6176 = vpack.c.b16 %v5448, %v5444
          %v6177 = vpack.c.b16 %v5449, %v5445
          %v6178 = vpack.c.b16 %v5450, %v5446
          %v6179 = vpack.c.b16 %v5451, %v5447
          %v6180 = vpack.c.b16 %v5456, %v5452
          %v6181 = vpack.c.b16 %v5457, %v5453
          %v6182 = vpack.c.b16 %v5458, %v5454
          %v6183 = vpack.c.b16 %v5459, %v5455
          %v6184 = vpack.c.b16 %v5464, %v5460
          %v6185 = vpack.c.b16 %v5465, %v5461
          %v6186 = vpack.c.b16 %v5466, %v5462
          %v6187 = vpack.c.b16 %v5467, %v5463
          %v6188 = vpack.c.b16 %v5472, %v5468
          %v6189 = vpack.c.b16 %v5473, %v5469
          %v6190 = vpack.c.b16 %v5474, %v5470
          %v6191 = vpack.c.b16 %v5475, %v5471
          %v6192 = vpack.c.b16 %v5480, %v5476
          %v6193 = vpack.c.b16 %v5481, %v5477
          %v6194 = vpack.c.b16 %v5482, %v5478
          %v6195 = vpack.c.b16 %v5483, %v5479
          %v6196 = vpack.c.b16 %v5488, %v5484
          %v6197 = vpack.c.b16 %v5489, %v5485
          %v6198 = vpack.c.b16 %v5490, %v5486
          %v6199 = vpack.c.b16 %v5491, %v5487
          %v6200 = vpack.c.b16 %v5496, %v5492
          %v6201 = vpack.c.b16 %v5497, %v5493
          %v6202 = vpack.c.b16 %v5498, %v5494
          %v6203 = vpack.c.b16 %v5499, %v5495
          %v6204 = vpack.c.b16 %v5504, %v5500
          %v6205 = vpack.c.b16 %v5505, %v5501
          %v6206 = vpack.c.b16 %v5506, %v5502
          %v6207 = vpack.c.b16 %v5507, %v5503
          %v6208 = vpack.c.b16 %v5512, %v5508
          %v6209 = vpack.c.b16 %v5513, %v5509
          %v6210 = vpack.c.b16 %v5514, %v5510
          %v6211 = vpack.c.b16 %v5515, %v5511
          %v6212 = vpack.c.b16 %v5520, %v5516
          %v6213 = vpack.c.b16 %v5521, %v5517
          %v6214 = vpack.c.b16 %v5522, %v5518
          %v6215 = vpack.c.b16 %v5523, %v5519
          %v6216 = vpack.c.b16 %v5528, %v5524
          %v6217 = vpack.c.b16 %v5529, %v5525
          %v6218 = vpack.c.b16 %v5530, %v5526
          %v6219 = vpack.c.b16 %v5531, %v5527
          %v6220 = vpack.c.b16 %v5536, %v5532
          %v6221 = vpack.c.b16 %v5537, %v5533
          %v6222 = vpack.c.b16 %v5538, %v5534
          %v6223 = vpack.c.b16 %v5539, %v5535
          %v6224 = vpack.c.b16 %v5544, %v5540
          %v6225 = vpack.c.b16 %v5545, %v5541
          %v6226 = vpack.c.b16 %v5546, %v5542
          %v6227 = vpack.c.b16 %v5547, %v5543
          %v6228 = vpack.c.b16 %v5552, %v5548
          %v6229 = vpack.c.b16 %v5553, %v5549
          %v6230 = vpack.c.b16 %v5554, %v5550
          %v6231 = vpack.c.b16 %v5555, %v5551
          %v6232 = vpack.c.b16 %v5560, %v5556
          %v6233 = vpack.c.b16 %v5561, %v5557
          %v6234 = vpack.c.b16 %v5562, %v5558
          %v6235 = vpack.c.b16 %v5563, %v5559
          %v6236 = vpack.c.b16 %v5568, %v5564
          %v6237 = vpack.c.b16 %v5569, %v5565
          %v6238 = vpack.c.b16 %v5570, %v5566
          %v6239 = vpack.c.b16 %v5571, %v5567
          %v6240 = vpack.c.b16 %v5576, %v5572
          %v6241 = vpack.c.b16 %v5577, %v5573
          %v6242 = vpack.c.b16 %v5578, %v5574
          %v6243 = vpack.c.b16 %v5579, %v5575
          %v6244 = vpack.c.b16 %v5584, %v5580
          %v6245 = vpack.c.b16 %v5585, %v5581
          %v6246 = vpack.c.b16 %v5586, %v5582
          %v6247 = vpack.c.b16 %v5587, %v5583
          %v6248 = vpack.c.b16 %v5592, %v5588
          %v6249 = vpack.c.b16 %v5593, %v5589
          %v6250 = vpack.c.b16 %v5594, %v5590
          %v6251 = vpack.c.b16 %v5595, %v5591
          %v6252 = vpack.c.b16 %v5600, %v5596
          %v6253 = vpack.c.b16 %v5601, %v5597
          %v6254 = vpack.c.b16 %v5602, %v5598
          %v6255 = vpack.c.b16 %v5603, %v5599
          %v6256 = vpack.c.b16 %v5608, %v5604
          %v6257 = vpack.c.b16 %v5609, %v5605
          %v6258 = vpack.c.b16 %v5610, %v5606
          %v6259 = vpack.c.b16 %v5611, %v5607
          %v6260 = vpack.c.b16 %v5616, %v5612
          %v6261 = vpack.c.b16 %v5617, %v5613
          %v6262 = vpack.c.b16 %v5618, %v5614
          %v6263 = vpack.c.b16 %v5619, %v5615
          %v6264 = vpack.c.b16 %v5624, %v5620
          %v6265 = vpack.c.b16 %v5625, %v5621
          %v6266 = vpack.c.b16 %v5626, %v5622
          %v6267 = vpack.c.b16 %v5627, %v5623
          %v6268 = vpack.c.b16 %v5632, %v5628
          %v6269 = vpack.c.b16 %v5633, %v5629
          %v6270 = vpack.c.b16 %v5634, %v5630
          %v6271 = vpack.c.b16 %v5635, %v5631
          %v6272 = vpack.c.b16 %v5640, %v5636
          %v6273 = vpack.c.b16 %v5641, %v5637
          %v6274 = vpack.c.b16 %v5642, %v5638
          %v6275 = vpack.c.b16 %v5643, %v5639
          %v6276 = vpack.c.b16 %v5648, %v5644
          %v6277 = vpack.c.b16 %v5649, %v5645
          %v6278 = vpack.c.b16 %v5650, %v5646
          %v6279 = vpack.c.b16 %v5651, %v5647
          %v6280 = vpack.c.b16 %v5656, %v5652
          %v6281 = vpack.c.b16 %v5657, %v5653
          %v6282 = vpack.c.b16 %v5658, %v5654
          %v6283 = vpack.c.b16 %v5659, %v5655
          %v6284 = vpack.c.b16 %v5664, %v5660
          %v6285 = vpack.c.b16 %v5665, %v5661
          %v6286 = vpack.c.b16 %v5666, %v5662
          %v6287 = vpack.c.b16 %v5667, %v5663
          %v6288 = vpack.c.b16 %v5672, %v5668
          %v6289 = vpack.c.b16 %v5673, %v5669
          %v6290 = vpack.c.b16 %v5674, %v5670
          %v6291 = vpack.c.b16 %v5675, %v5671
          %v6292 = vpack.c.b16 %v5680, %v5676
          %v6293 = vpack.c.b16 %v5681, %v5677
          %v6294 = vpack.c.b16 %v5682, %v5678
          %v6295 = vpack.c.b16 %v5683, %v5679
          %v6296 = vpack.c.b16 %v5688, %v5684
          %v6297 = vpack.c.b16 %v5689, %v5685
          %v6298 = vpack.c.b16 %v5690, %v5686
          %v6299 = vpack.c.b16 %v5691, %v5687
          %v6300 = vpack.c.b16 %v5696, %v5692
          %v6301 = vpack.c.b16 %v5697, %v5693
          %v6302 = vpack.c.b16 %v5698, %v5694
          %v6303 = vpack.c.b16 %v5699, %v5695
          %v6304 = vpack.c.b16 %v5704, %v5700
          %v6305 = vpack.c.b16 %v5705, %v5701
          %v6306 = vpack.c.b16 %v5706, %v5702
          %v6307 = vpack.c.b16 %v5707, %v5703
          %v6308 = vpack.c.b16 %v5712, %v5708
          %v6309 = vpack.c.b16 %v5713, %v5709
          %v6310 = vpack.c.b16 %v5714, %v5710
          %v6311 = vpack.c.b16 %v5715, %v5711
          %v6312 = vpack.c.b16 %v5720, %v5716
          %v6313 = vpack.c.b16 %v5721, %v5717
          %v6314 = vpack.c.b16 %v5722, %v5718
          %v6315 = vpack.c.b16 %v5723, %v5719
          %v6316 = vpack.c.b16 %v5728, %v5724
          %v6317 = vpack.c.b16 %v5729, %v5725
          %v6318 = vpack.c.b16 %v5730, %v5726
          %v6319 = vpack.c.b16 %v5731, %v5727
          %v6320 = vpack.c.b16 %v5736, %v5732
          %v6321 = vpack.c.b16 %v5737, %v5733
          %v6322 = vpack.c.b16 %v5738, %v5734
          %v6323 = vpack.c.b16 %v5739, %v5735
          %v6324 = vpack.c.b16 %v5744, %v5740
          %v6325 = vpack.c.b16 %v5745, %v5741
          %v6326 = vpack.c.b16 %v5746, %v5742
          %v6327 = vpack.c.b16 %v5747, %v5743
          %v6328 = vpack.c.b16 %v5752, %v5748
          %v6329 = vpack.c.b16 %v5753, %v5749
          %v6330 = vpack.c.b16 %v5754, %v5750
          %v6331 = vpack.c.b16 %v5755, %v5751
          %v6332 = vpack.c.b16 %v5760, %v5756
          %v6333 = vpack.c.b16 %v5761, %v5757
          %v6334 = vpack.c.b16 %v5762, %v5758
          %v6335 = vpack.c.b16 %v5763, %v5759
          %v6336 = vpack.c.b16 %v5768, %v5764
          %v6337 = vpack.c.b16 %v5769, %v5765
          %v6338 = vpack.c.b16 %v5770, %v5766
          %v6339 = vpack.c.b16 %v5771, %v5767
          %v6340 = vpack.c.b16 %v5776, %v5772
          %v6341 = vpack.c.b16 %v5777, %v5773
          %v6342 = vpack.c.b16 %v5778, %v5774
          %v6343 = vpack.c.b16 %v5779, %v5775
          %v6344 = vpack.c.b16 %v5784, %v5780
          %v6345 = vpack.c.b16 %v5785, %v5781
          %v6346 = vpack.c.b16 %v5786, %v5782
          %v6347 = vpack.c.b16 %v5787, %v5783
          %v6348 = vpack.c.b16 %v5792, %v5788
          %v6349 = vpack.c.b16 %v5793, %v5789
          %v6350 = vpack.c.b16 %v5794, %v5790
          %v6351 = vpack.c.b16 %v5795, %v5791
          %v6352 = vpack.c.b16 %v5800, %v5796
          %v6353 = vpack.c.b16 %v5801, %v5797
          %v6354 = vpack.c.b16 %v5802, %v5798
          %v6355 = vpack.c.b16 %v5803, %v5799
          %v6356 = vpack.c.b16 %v5808, %v5804
          %v6357 = vpack.c.b16 %v5809, %v5805
          %v6358 = vpack.c.b16 %v5810, %v5806
          %v6359 = vpack.c.b16 %v5811, %v5807
          %v6360 = vpack.c.b16 %v5816, %v5812
          %v6361 = vpack.c.b16 %v5817, %v5813
          %v6362 = vpack.c.b16 %v5818, %v5814
          %v6363 = vpack.c.b16 %v5819, %v5815
          %v6364 = vpack.c.b16 %v5824, %v5820
          %v6365 = vpack.c.b16 %v5825, %v5821
          %v6366 = vpack.c.b16 %v5826, %v5822
          %v6367 = vpack.c.b16 %v5827, %v5823
          %v6368 = vpack.c.b16 %v5832, %v5828
          %v6369 = vpack.c.b16 %v5833, %v5829
          %v6370 = vpack.c.b16 %v5834, %v5830
          %v6371 = vpack.c.b16 %v5835, %v5831
          %v6372 = vpack.c.b16 %v5840, %v5836
          %v6373 = vpack.c.b16 %v5841, %v5837
          %v6374 = vpack.c.b16 %v5842, %v5838
          %v6375 = vpack.c.b16 %v5843, %v5839
          %v6376 = vpack.c.b16 %v5848, %v5844
          %v6377 = vpack.c.b16 %v5849, %v5845
          %v6378 = vpack.c.b16 %v5850, %v5846
          %v6379 = vpack.c.b16 %v5851, %v5847
          %v6380 = vpack.c.b16 %v5856, %v5852
          %v6381 = vpack.c.b16 %v5857, %v5853
          %v6382 = vpack.c.b16 %v5858, %v5854
          %v6383 = vpack.c.b16 %v5859, %v5855
          %v6384 = vpack.c.b16 %v5864, %v5860
          %v6385 = vpack.c.b16 %v5865, %v5861
          %v6386 = vpack.c.b16 %v5866, %v5862
          %v6387 = vpack.c.b16 %v5867, %v5863
          %v6388 = vpack.c.b16 %v5872, %v5868
          %v6389 = vpack.c.b16 %v5873, %v5869
          %v6390 = vpack.c.b16 %v5874, %v5870
          %v6391 = vpack.c.b16 %v5875, %v5871
          %v6392 = vpack.c.b16 %v5880, %v5876
          %v6393 = vpack.c.b16 %v5881, %v5877
          %v6394 = vpack.c.b16 %v5882, %v5878
          %v6395 = vpack.c.b16 %v5883, %v5879
          %6908 = vmatprep.subr.bf16.mxu0 %v5885
          %6909 = vmatpush1.bf16.msra.mxu0 %v5884
          %6910 = vmatprep.subr.bf16.mxu0 %v5889
          %6911 = vmatpush1.bf16.msra.mxu0 %v5888
          %6912 = vmatprep.subr.bf16.mxu0 %v5893
          %6913 = vmatpush1.bf16.msra.mxu0 %v5892
          %6914 = vmatprep.subr.bf16.mxu0 %v5897
          %6915 = vmatpush1.bf16.msra.mxu0 %v5896
          %6916 = vmatprep.subr.bf16.mxu0 %v5901
          %6917 = vmatpush1.bf16.msra.mxu0 %v5900
          %6918 = vmatprep.subr.bf16.mxu0 %v5905
          %6919 = vmatpush1.bf16.msra.mxu0 %v5904
          %6920 = vmatprep.subr.bf16.mxu0 %v5909
          %6921 = vmatpush1.bf16.msra.mxu0 %v5908
          %6922 = vmatprep.subr.bf16.mxu0 %v5913
          %6923 = vmatpush1.bf16.msra.mxu0 %v5912
          %6924 = vmatprep.subr.bf16.mxu0 %v5917
          %6925 = vmatpush1.bf16.msra.mxu0 %v5916
          %6926 = vmatprep.subr.bf16.mxu0 %v5921
          %6927 = vmatpush1.bf16.msra.mxu0 %v5920
          %6928 = vmatprep.subr.bf16.mxu0 %v5925
          %6929 = vmatpush1.bf16.msra.mxu0 %v5924
          %6930 = vmatprep.subr.bf16.mxu0 %v5929
          %6931 = vmatpush1.bf16.msra.mxu0 %v5928
          %6932 = vmatprep.subr.bf16.mxu0 %v5933
          %6933 = vmatpush1.bf16.msra.mxu0 %v5932
          %6934 = vmatprep.subr.bf16.mxu0 %v5937
          %6935 = vmatpush1.bf16.msra.mxu0 %v5936
          %6936 = vmatprep.subr.bf16.mxu0 %v5941
          %6937 = vmatpush1.bf16.msra.mxu0 %v5940
          %6938 = vmatprep.subr.bf16.mxu0 %v5945
          %6939 = vmatpush1.bf16.msra.mxu0 %v5944
          %6940 = vmatprep.mubr.bf16.mxu0 %v3799
          %6941 = vmatmul.mubr.bf16.gmra.mrb[0].mxu0 %v3798
          %v6942 = vpop.f32.mrb[0].mxu0
          %v6943 = vadd.f32 %v4331, %v6942
          %v6944 = vpop.f32.mrb[0].mxu0
          %v6945 = vadd.f32 %v4335, %v6944
          %v6946 = vpop.f32.mrb[0].mxu0
          %v6947 = vpop.f32.mrb[0].mxu0
          %6948 = vdwg.mxu0
          %6949 = vmatprep.subr.bf16.mxu0 %v5949
          %6950 = vmatpush1.bf16.msra.mxu0 %v5948
          %6951 = vmatprep.subr.bf16.mxu0 %v5953
          %6952 = vmatpush1.bf16.msra.mxu0 %v5952
          %6953 = vmatprep.subr.bf16.mxu0 %v5957
          %6954 = vmatpush1.bf16.msra.mxu0 %v5956
          %6955 = vmatprep.subr.bf16.mxu0 %v5961
          %6956 = vmatpush1.bf16.msra.mxu0 %v5960
          %6957 = vmatprep.subr.bf16.mxu0 %v5965
          %6958 = vmatpush1.bf16.msra.mxu0 %v5964
          %6959 = vmatprep.subr.bf16.mxu0 %v5969
          %6960 = vmatpush1.bf16.msra.mxu0 %v5968
          %6961 = vmatprep.subr.bf16.mxu0 %v5973
          %6962 = vmatpush1.bf16.msra.mxu0 %v5972
          %6963 = vmatprep.subr.bf16.mxu0 %v5977
          %6964 = vmatpush1.bf16.msra.mxu0 %v5976
          %6965 = vmatprep.subr.bf16.mxu0 %v5981
          %6966 = vmatpush1.bf16.msra.mxu0 %v5980
          %6967 = vmatprep.subr.bf16.mxu0 %v5985
          %6968 = vmatpush1.bf16.msra.mxu0 %v5984
          %6969 = vmatprep.subr.bf16.mxu0 %v5989
          %6970 = vmatpush1.bf16.msra.mxu0 %v5988
          %6971 = vmatprep.subr.bf16.mxu0 %v5993
          %6972 = vmatpush1.bf16.msra.mxu0 %v5992
          %6973 = vmatprep.subr.bf16.mxu0 %v5997
          %6974 = vmatpush1.bf16.msra.mxu0 %v5996
          %6975 = vmatprep.subr.bf16.mxu0 %v6001
          %6976 = vmatpush1.bf16.msra.mxu0 %v6000
          %6977 = vmatprep.subr.bf16.mxu0 %v6005
          %6978 = vmatpush1.bf16.msra.mxu0 %v6004
          %6979 = vmatprep.subr.bf16.mxu0 %v6009
          %6980 = vmatpush1.bf16.msra.mxu0 %v6008
          %6981 = vmatprep.mubr.bf16.mxu0 %v3801
          %6982 = vmatmul.mubr.bf16.gmra.mrb[0].mxu0 %v3800
          %v6983 = vpop.f32.mrb[0].mxu0
          %v6984 = vadd.f32 %v6943, %v6983
          %v6985 = vpop.f32.mrb[0].mxu0
          %v6986 = vadd.f32 %v6945, %v6985
          %v6987 = vpop.f32.mrb[0].mxu0
          %v6988 = vpop.f32.mrb[0].mxu0
          %6989 = vdwg.mxu0
          %6990 = vmatprep.subr.bf16.mxu0 %v6013
          %6991 = vmatpush1.bf16.msra.mxu0 %v6012
          %6992 = vmatprep.subr.bf16.mxu0 %v6017
          %6993 = vmatpush1.bf16.msra.mxu0 %v6016
          %6994 = vmatprep.subr.bf16.mxu0 %v6021
          %6995 = vmatpush1.bf16.msra.mxu0 %v6020
          %6996 = vmatprep.subr.bf16.mxu0 %v6025
          %6997 = vmatpush1.bf16.msra.mxu0 %v6024
          %6998 = vmatprep.subr.bf16.mxu0 %v6029
          %6999 = vmatpush1.bf16.msra.mxu0 %v6028
          %7000 = vmatprep.subr.bf16.mxu0 %v6033
          %7001 = vmatpush1.bf16.msra.mxu0 %v6032
          %7002 = vmatprep.subr.bf16.mxu0 %v6037
          %7003 = vmatpush1.bf16.msra.mxu0 %v6036
          %7004 = vmatprep.subr.bf16.mxu0 %v6041
          %7005 = vmatpush1.bf16.msra.mxu0 %v6040
          %7006 = vmatprep.subr.bf16.mxu0 %v6045
          %7007 = vmatpush1.bf16.msra.mxu0 %v6044
          %7008 = vmatprep.subr.bf16.mxu0 %v6049
          %7009 = vmatpush1.bf16.msra.mxu0 %v6048
          %7010 = vmatprep.subr.bf16.mxu0 %v6053
          %7011 = vmatpush1.bf16.msra.mxu0 %v6052
          %7012 = vmatprep.subr.bf16.mxu0 %v6057
          %7013 = vmatpush1.bf16.msra.mxu0 %v6056
          %7014 = vmatprep.subr.bf16.mxu0 %v6061
          %7015 = vmatpush1.bf16.msra.mxu0 %v6060
          %7016 = vmatprep.subr.bf16.mxu0 %v6065
          %7017 = vmatpush1.bf16.msra.mxu0 %v6064
          %7018 = vmatprep.subr.bf16.mxu0 %v6069
          %7019 = vmatpush1.bf16.msra.mxu0 %v6068
          %7020 = vmatprep.subr.bf16.mxu0 %v6073
          %7021 = vmatpush1.bf16.msra.mxu0 %v6072
          %7022 = vmatprep.mubr.bf16.mxu0 %v3803
          %7023 = vmatmul.mubr.bf16.gmra.mrb[0].mxu0 %v3802
          %v7024 = vpop.f32.mrb[0].mxu0
          %v7025 = vadd.f32 %v6984, %v7024
          %v7026 = vpop.f32.mrb[0].mxu0
          %v7027 = vadd.f32 %v6986, %v7026
          %v7028 = vpop.f32.mrb[0].mxu0
          %v7029 = vpop.f32.mrb[0].mxu0
          %7030 = vdwg.mxu0
          %7031 = vmatprep.subr.bf16.mxu0 %v6077
          %7032 = vmatpush1.bf16.msra.mxu0 %v6076
          %7033 = vmatprep.subr.bf16.mxu0 %v6081
          %7034 = vmatpush1.bf16.msra.mxu0 %v6080
          %7035 = vmatprep.subr.bf16.mxu0 %v6085
          %7036 = vmatpush1.bf16.msra.mxu0 %v6084
          %7037 = vmatprep.subr.bf16.mxu0 %v6089
          %7038 = vmatpush1.bf16.msra.mxu0 %v6088
          %7039 = vmatprep.subr.bf16.mxu0 %v6093
          %7040 = vmatpush1.bf16.msra.mxu0 %v6092
          %7041 = vmatprep.subr.bf16.mxu0 %v6097
          %7042 = vmatpush1.bf16.msra.mxu0 %v6096
          %7043 = vmatprep.subr.bf16.mxu0 %v6101
          %7044 = vmatpush1.bf16.msra.mxu0 %v6100
          %7045 = vmatprep.subr.bf16.mxu0 %v6105
          %7046 = vmatpush1.bf16.msra.mxu0 %v6104
          %7047 = vmatprep.subr.bf16.mxu0 %v6109
          %7048 = vmatpush1.bf16.msra.mxu0 %v6108
          %7049 = vmatprep.subr.bf16.mxu0 %v6113
          %7050 = vmatpush1.bf16.msra.mxu0 %v6112
          %7051 = vmatprep.subr.bf16.mxu0 %v6117
          %7052 = vmatpush1.bf16.msra.mxu0 %v6116
          %7053 = vmatprep.subr.bf16.mxu0 %v6121
          %7054 = vmatpush1.bf16.msra.mxu0 %v6120
          %7055 = vmatprep.subr.bf16.mxu0 %v6125
          %7056 = vmatpush1.bf16.msra.mxu0 %v6124
          %7057 = vmatprep.subr.bf16.mxu0 %v6129
          %7058 = vmatpush1.bf16.msra.mxu0 %v6128
          %7059 = vmatprep.subr.bf16.mxu0 %v6133
          %7060 = vmatpush1.bf16.msra.mxu0 %v6132
          %7061 = vmatprep.subr.bf16.mxu0 %v6137
          %7062 = vmatpush1.bf16.msra.mxu0 %v6136
          %7063 = vmatprep.mubr.bf16.mxu0 %v3805
          %7064 = vmatmul.mubr.bf16.gmra.mrb[0].mxu0 %v3804
          %v7065 = vpop.f32.mrb[0].mxu0
          %v7066 = vadd.f32 %v7025, %v7065
          %v7067 = vpop.f32.mrb[0].mxu0
          %v7068 = vadd.f32 %v7027, %v7067
          %v7069 = vpop.f32.mrb[0].mxu0
          %v7070 = vpop.f32.mrb[0].mxu0
          %7071 = vdwg.mxu0
          %7072 = vmatprep.subr.bf16.mxu0 %v6141
          %7073 = vmatpush1.bf16.msra.mxu0 %v6140
          %7074 = vmatprep.subr.bf16.mxu0 %v6145
          %7075 = vmatpush1.bf16.msra.mxu0 %v6144
          %7076 = vmatprep.subr.bf16.mxu0 %v6149
          %7077 = vmatpush1.bf16.msra.mxu0 %v6148
          %7078 = vmatprep.subr.bf16.mxu0 %v6153
          %7079 = vmatpush1.bf16.msra.mxu0 %v6152
          %7080 = vmatprep.subr.bf16.mxu0 %v6157
          %7081 = vmatpush1.bf16.msra.mxu0 %v6156
          %7082 = vmatprep.subr.bf16.mxu0 %v6161
          %7083 = vmatpush1.bf16.msra.mxu0 %v6160
          %7084 = vmatprep.subr.bf16.mxu0 %v6165
          %7085 = vmatpush1.bf16.msra.mxu0 %v6164
          %7086 = vmatprep.subr.bf16.mxu0 %v6169
          %7087 = vmatpush1.bf16.msra.mxu0 %v6168
          %7088 = vmatprep.subr.bf16.mxu0 %v6173
          %7089 = vmatpush1.bf16.msra.mxu0 %v6172
          %7090 = vmatprep.subr.bf16.mxu0 %v6177
          %7091 = vmatpush1.bf16.msra.mxu0 %v6176
          %7092 = vmatprep.subr.bf16.mxu0 %v6181
          %7093 = vmatpush1.bf16.msra.mxu0 %v6180
          %7094 = vmatprep.subr.bf16.mxu0 %v6185
          %7095 = vmatpush1.bf16.msra.mxu0 %v6184
          %7096 = vmatprep.subr.bf16.mxu0 %v6189
          %7097 = vmatpush1.bf16.msra.mxu0 %v6188
          %7098 = vmatprep.subr.bf16.mxu0 %v6193
          %7099 = vmatpush1.bf16.msra.mxu0 %v6192
          %7100 = vmatprep.subr.bf16.mxu0 %v6197
          %7101 = vmatpush1.bf16.msra.mxu0 %v6196
          %7102 = vmatprep.subr.bf16.mxu0 %v6201
          %7103 = vmatpush1.bf16.msra.mxu0 %v6200
          %7104 = vmatprep.mubr.bf16.mxu0 %v3807
          %7105 = vmatmul.mubr.bf16.gmra.mrb[0].mxu0 %v3806
          %v7106 = vpop.f32.mrb[0].mxu0
          %v7107 = vadd.f32 %v7066, %v7106
          %v7108 = vpop.f32.mrb[0].mxu0
          %v7109 = vadd.f32 %v7068, %v7108
          %v7110 = vpop.f32.mrb[0].mxu0
          %v7111 = vpop.f32.mrb[0].mxu0
          %7112 = vdwg.mxu0
          %7113 = vmatprep.subr.bf16.mxu0 %v6205
          %7114 = vmatpush1.bf16.msra.mxu0 %v6204
          %7115 = vmatprep.subr.bf16.mxu0 %v6209
          %7116 = vmatpush1.bf16.msra.mxu0 %v6208
          %7117 = vmatprep.subr.bf16.mxu0 %v6213
          %7118 = vmatpush1.bf16.msra.mxu0 %v6212
          %7119 = vmatprep.subr.bf16.mxu0 %v6217
          %7120 = vmatpush1.bf16.msra.mxu0 %v6216
          %7121 = vmatprep.subr.bf16.mxu0 %v6221
          %7122 = vmatpush1.bf16.msra.mxu0 %v6220
          %7123 = vmatprep.subr.bf16.mxu0 %v6225
          %7124 = vmatpush1.bf16.msra.mxu0 %v6224
          %7125 = vmatprep.subr.bf16.mxu0 %v6229
          %7126 = vmatpush1.bf16.msra.mxu0 %v6228
          %7127 = vmatprep.subr.bf16.mxu0 %v6233
          %7128 = vmatpush1.bf16.msra.mxu0 %v6232
          %7129 = vmatprep.subr.bf16.mxu0 %v6237
          %7130 = vmatpush1.bf16.msra.mxu0 %v6236
          %7131 = vmatprep.subr.bf16.mxu0 %v6241
          %7132 = vmatpush1.bf16.msra.mxu0 %v6240
          %7133 = vmatprep.subr.bf16.mxu0 %v6245
          %7134 = vmatpush1.bf16.msra.mxu0 %v6244
          %7135 = vmatprep.subr.bf16.mxu0 %v6249
          %7136 = vmatpush1.bf16.msra.mxu0 %v6248
          %7137 = vmatprep.subr.bf16.mxu0 %v6253
          %7138 = vmatpush1.bf16.msra.mxu0 %v6252
          %7139 = vmatprep.subr.bf16.mxu0 %v6257
          %7140 = vmatpush1.bf16.msra.mxu0 %v6256
          %7141 = vmatprep.subr.bf16.mxu0 %v6261
          %7142 = vmatpush1.bf16.msra.mxu0 %v6260
          %7143 = vmatprep.subr.bf16.mxu0 %v6265
          %7144 = vmatpush1.bf16.msra.mxu0 %v6264
          %7145 = vmatprep.mubr.bf16.mxu0 %v3809
          %7146 = vmatmul.mubr.bf16.gmra.mrb[0].mxu0 %v3808
          %v7147 = vpop.f32.mrb[0].mxu0
          %v7148 = vadd.f32 %v7107, %v7147
          %v7149 = vpop.f32.mrb[0].mxu0
          %v7150 = vadd.f32 %v7109, %v7149
          %v7151 = vpop.f32.mrb[0].mxu0
          %v7152 = vpop.f32.mrb[0].mxu0
          %7153 = vdwg.mxu0
          %7154 = vmatprep.subr.bf16.mxu0 %v6269
          %7155 = vmatpush1.bf16.msra.mxu0 %v6268
          %7156 = vmatprep.subr.bf16.mxu0 %v6273
          %7157 = vmatpush1.bf16.msra.mxu0 %v6272
          %7158 = vmatprep.subr.bf16.mxu0 %v6277
          %7159 = vmatpush1.bf16.msra.mxu0 %v6276
          %7160 = vmatprep.subr.bf16.mxu0 %v6281
          %7161 = vmatpush1.bf16.msra.mxu0 %v6280
          %7162 = vmatprep.subr.bf16.mxu0 %v6285
          %7163 = vmatpush1.bf16.msra.mxu0 %v6284
          %7164 = vmatprep.subr.bf16.mxu0 %v6289
          %7165 = vmatpush1.bf16.msra.mxu0 %v6288
          %7166 = vmatprep.subr.bf16.mxu0 %v6293
          %7167 = vmatpush1.bf16.msra.mxu0 %v6292
          %7168 = vmatprep.subr.bf16.mxu0 %v6297
          %7169 = vmatpush1.bf16.msra.mxu0 %v6296
          %7170 = vmatprep.subr.bf16.mxu0 %v6301
          %7171 = vmatpush1.bf16.msra.mxu0 %v6300
          %7172 = vmatprep.subr.bf16.mxu0 %v6305
          %7173 = vmatpush1.bf16.msra.mxu0 %v6304
          %7174 = vmatprep.subr.bf16.mxu0 %v6309
          %7175 = vmatpush1.bf16.msra.mxu0 %v6308
          %7176 = vmatprep.subr.bf16.mxu0 %v6313
          %7177 = vmatpush1.bf16.msra.mxu0 %v6312
          %7178 = vmatprep.subr.bf16.mxu0 %v6317
          %7179 = vmatpush1.bf16.msra.mxu0 %v6316
          %7180 = vmatprep.subr.bf16.mxu0 %v6321
          %7181 = vmatpush1.bf16.msra.mxu0 %v6320
          %7182 = vmatprep.subr.bf16.mxu0 %v6325
          %7183 = vmatpush1.bf16.msra.mxu0 %v6324
          %7184 = vmatprep.subr.bf16.mxu0 %v6329
          %7185 = vmatpush1.bf16.msra.mxu0 %v6328
          %7186 = vmatprep.mubr.bf16.mxu0 %v3811
          %7187 = vmatmul.mubr.bf16.gmra.mrb[0].mxu0 %v3810
          %v7188 = vpop.f32.mrb[0].mxu0
          %v7189 = vadd.f32 %v7148, %v7188
          %v7190 = vpop.f32.mrb[0].mxu0
          %v7191 = vadd.f32 %v7150, %v7190
          %v7192 = vpop.f32.mrb[0].mxu0
          %v7193 = vpop.f32.mrb[0].mxu0
          %7194 = vdwg.mxu0
          %7195 = vmatprep.subr.bf16.mxu0 %v6333
          %7196 = vmatpush1.bf16.msra.mxu0 %v6332
          %7197 = vmatprep.subr.bf16.mxu0 %v6337
          %7198 = vmatpush1.bf16.msra.mxu0 %v6336
          %7199 = vmatprep.subr.bf16.mxu0 %v6341
          %7200 = vmatpush1.bf16.msra.mxu0 %v6340
          %7201 = vmatprep.subr.bf16.mxu0 %v6345
          %7202 = vmatpush1.bf16.msra.mxu0 %v6344
          %7203 = vmatprep.subr.bf16.mxu0 %v6349
          %7204 = vmatpush1.bf16.msra.mxu0 %v6348
          %7205 = vmatprep.subr.bf16.mxu0 %v6353
          %7206 = vmatpush1.bf16.msra.mxu0 %v6352
          %7207 = vmatprep.subr.bf16.mxu0 %v6357
          %7208 = vmatpush1.bf16.msra.mxu0 %v6356
          %7209 = vmatprep.subr.bf16.mxu0 %v6361
          %7210 = vmatpush1.bf16.msra.mxu0 %v6360
          %7211 = vmatprep.subr.bf16.mxu0 %v6365
          %7212 = vmatpush1.bf16.msra.mxu0 %v6364
          %7213 = vmatprep.subr.bf16.mxu0 %v6369
          %7214 = vmatpush1.bf16.msra.mxu0 %v6368
          %7215 = vmatprep.subr.bf16.mxu0 %v6373
          %7216 = vmatpush1.bf16.msra.mxu0 %v6372
          %7217 = vmatprep.subr.bf16.mxu0 %v6377
          %7218 = vmatpush1.bf16.msra.mxu0 %v6376
          %7219 = vmatprep.subr.bf16.mxu0 %v6381
          %7220 = vmatpush1.bf16.msra.mxu0 %v6380
          %7221 = vmatprep.subr.bf16.mxu0 %v6385
          %7222 = vmatpush1.bf16.msra.mxu0 %v6384
          %7223 = vmatprep.subr.bf16.mxu0 %v6389
          %7224 = vmatpush1.bf16.msra.mxu0 %v6388
          %7225 = vmatprep.subr.bf16.mxu0 %v6393
          %7226 = vmatpush1.bf16.msra.mxu0 %v6392
          %7227 = vmatprep.mubr.bf16.mxu0 %v3813
          %7228 = vmatmul.mubr.bf16.gmra.mrb[0].mxu0 %v3812
          %v7229 = vpop.f32.mrb[0].mxu0
          %v7230 = vadd.f32 %v7189, %v7229
          %v7231 = vpop.f32.mrb[0].mxu0
          %v7232 = vadd.f32 %v7191, %v7231
          %v7233 = vpop.f32.mrb[0].mxu0
          %v7234 = vpop.f32.mrb[0].mxu0
          %7235 = vdwg.mxu0
          %7236 = vmatprep.subr.bf16.mxu0 %v5887
          %7237 = vmatpush1.bf16.msra.mxu0 %v5886
          %7238 = vmatprep.subr.bf16.mxu0 %v5891
          %7239 = vmatpush1.bf16.msra.mxu0 %v5890
          %7240 = vmatprep.subr.bf16.mxu0 %v5895
          %7241 = vmatpush1.bf16.msra.mxu0 %v5894
          %7242 = vmatprep.subr.bf16.mxu0 %v5899
          %7243 = vmatpush1.bf16.msra.mxu0 %v5898
          %7244 = vmatprep.subr.bf16.mxu0 %v5903
          %7245 = vmatpush1.bf16.msra.mxu0 %v5902
          %7246 = vmatprep.subr.bf16.mxu0 %v5907
          %7247 = vmatpush1.bf16.msra.mxu0 %v5906
          %7248 = vmatprep.subr.bf16.mxu0 %v5911
          %7249 = vmatpush1.bf16.msra.mxu0 %v5910
          %7250 = vmatprep.subr.bf16.mxu0 %v5915
          %7251 = vmatpush1.bf16.msra.mxu0 %v5914
          %7252 = vmatprep.subr.bf16.mxu0 %v5919
          %7253 = vmatpush1.bf16.msra.mxu0 %v5918
          %7254 = vmatprep.subr.bf16.mxu0 %v5923
          %7255 = vmatpush1.bf16.msra.mxu0 %v5922
          %7256 = vmatprep.subr.bf16.mxu0 %v5927
          %7257 = vmatpush1.bf16.msra.mxu0 %v5926
          %7258 = vmatprep.subr.bf16.mxu0 %v5931
          %7259 = vmatpush1.bf16.msra.mxu0 %v5930
          %7260 = vmatprep.subr.bf16.mxu0 %v5935
          %7261 = vmatpush1.bf16.msra.mxu0 %v5934
          %7262 = vmatprep.subr.bf16.mxu0 %v5939
          %7263 = vmatpush1.bf16.msra.mxu0 %v5938
          %7264 = vmatprep.subr.bf16.mxu0 %v5943
          %7265 = vmatpush1.bf16.msra.mxu0 %v5942
          %7266 = vmatprep.subr.bf16.mxu0 %v5947
          %7267 = vmatpush1.bf16.msra.mxu0 %v5946
          %7268 = vmatprep.mubr.bf16.mxu0 %v3799
          %7269 = vmatmul.mubr.bf16.gmra.mrb[0].mxu0 %v3798
          %v7270 = vpop.f32.mrb[0].mxu0
          %v7271 = vadd.f32 %v4339, %v7270
          %v7272 = vpop.f32.mrb[0].mxu0
          %v7273 = vadd.f32 %v4343, %v7272
          %v7274 = vpop.f32.mrb[0].mxu0
          %v7275 = vpop.f32.mrb[0].mxu0
          %7276 = vdwg.mxu0
          %7277 = vmatprep.subr.bf16.mxu0 %v5951
          %7278 = vmatpush1.bf16.msra.mxu0 %v5950
          %7279 = vmatprep.subr.bf16.mxu0 %v5955
          %7280 = vmatpush1.bf16.msra.mxu0 %v5954
          %7281 = vmatprep.subr.bf16.mxu0 %v5959
          %7282 = vmatpush1.bf16.msra.mxu0 %v5958
          %7283 = vmatprep.subr.bf16.mxu0 %v5963
          %7284 = vmatpush1.bf16.msra.mxu0 %v5962
          %7285 = vmatprep.subr.bf16.mxu0 %v5967
          %7286 = vmatpush1.bf16.msra.mxu0 %v5966
          %7287 = vmatprep.subr.bf16.mxu0 %v5971
          %7288 = vmatpush1.bf16.msra.mxu0 %v5970
          %7289 = vmatprep.subr.bf16.mxu0 %v5975
          %7290 = vmatpush1.bf16.msra.mxu0 %v5974
          %7291 = vmatprep.subr.bf16.mxu0 %v5979
          %7292 = vmatpush1.bf16.msra.mxu0 %v5978
          %7293 = vmatprep.subr.bf16.mxu0 %v5983
          %7294 = vmatpush1.bf16.msra.mxu0 %v5982
          %7295 = vmatprep.subr.bf16.mxu0 %v5987
          %7296 = vmatpush1.bf16.msra.mxu0 %v5986
          %7297 = vmatprep.subr.bf16.mxu0 %v5991
          %7298 = vmatpush1.bf16.msra.mxu0 %v5990
          %7299 = vmatprep.subr.bf16.mxu0 %v5995
          %7300 = vmatpush1.bf16.msra.mxu0 %v5994
          %7301 = vmatprep.subr.bf16.mxu0 %v5999
          %7302 = vmatpush1.bf16.msra.mxu0 %v5998
          %7303 = vmatprep.subr.bf16.mxu0 %v6003
          %7304 = vmatpush1.bf16.msra.mxu0 %v6002
          %7305 = vmatprep.subr.bf16.mxu0 %v6007
          %7306 = vmatpush1.bf16.msra.mxu0 %v6006
          %7307 = vmatprep.subr.bf16.mxu0 %v6011
          %7308 = vmatpush1.bf16.msra.mxu0 %v6010
          %7309 = vmatprep.mubr.bf16.mxu0 %v3801
          %7310 = vmatmul.mubr.bf16.gmra.mrb[0].mxu0 %v3800
          %v7311 = vpop.f32.mrb[0].mxu0
          %v7312 = vadd.f32 %v7271, %v7311
          %v7313 = vpop.f32.mrb[0].mxu0
          %v7314 = vadd.f32 %v7273, %v7313
          %v7315 = vpop.f32.mrb[0].mxu0
          %v7316 = vpop.f32.mrb[0].mxu0
          %7317 = vdwg.mxu0
          %7318 = vmatprep.subr.bf16.mxu0 %v6015
          %7319 = vmatpush1.bf16.msra.mxu0 %v6014
          %7320 = vmatprep.subr.bf16.mxu0 %v6019
          %7321 = vmatpush1.bf16.msra.mxu0 %v6018
          %7322 = vmatprep.subr.bf16.mxu0 %v6023
          %7323 = vmatpush1.bf16.msra.mxu0 %v6022
          %7324 = vmatprep.subr.bf16.mxu0 %v6027
          %7325 = vmatpush1.bf16.msra.mxu0 %v6026
          %7326 = vmatprep.subr.bf16.mxu0 %v6031
          %7327 = vmatpush1.bf16.msra.mxu0 %v6030
          %7328 = vmatprep.subr.bf16.mxu0 %v6035
          %7329 = vmatpush1.bf16.msra.mxu0 %v6034
          %7330 = vmatprep.subr.bf16.mxu0 %v6039
          %7331 = vmatpush1.bf16.msra.mxu0 %v6038
          %7332 = vmatprep.subr.bf16.mxu0 %v6043
          %7333 = vmatpush1.bf16.msra.mxu0 %v6042
          %7334 = vmatprep.subr.bf16.mxu0 %v6047
          %7335 = vmatpush1.bf16.msra.mxu0 %v6046
          %7336 = vmatprep.subr.bf16.mxu0 %v6051
          %7337 = vmatpush1.bf16.msra.mxu0 %v6050
          %7338 = vmatprep.subr.bf16.mxu0 %v6055
          %7339 = vmatpush1.bf16.msra.mxu0 %v6054
          %7340 = vmatprep.subr.bf16.mxu0 %v6059
          %7341 = vmatpush1.bf16.msra.mxu0 %v6058
          %7342 = vmatprep.subr.bf16.mxu0 %v6063
          %7343 = vmatpush1.bf16.msra.mxu0 %v6062
          %7344 = vmatprep.subr.bf16.mxu0 %v6067
          %7345 = vmatpush1.bf16.msra.mxu0 %v6066
          %7346 = vmatprep.subr.bf16.mxu0 %v6071
          %7347 = vmatpush1.bf16.msra.mxu0 %v6070
          %7348 = vmatprep.subr.bf16.mxu0 %v6075
          %7349 = vmatpush1.bf16.msra.mxu0 %v6074
          %7350 = vmatprep.mubr.bf16.mxu0 %v3803
          %7351 = vmatmul.mubr.bf16.gmra.mrb[0].mxu0 %v3802
          %v7352 = vpop.f32.mrb[0].mxu0
          %v7353 = vadd.f32 %v7312, %v7352
          %v7354 = vpop.f32.mrb[0].mxu0
          %v7355 = vadd.f32 %v7314, %v7354
          %v7356 = vpop.f32.mrb[0].mxu0
          %v7357 = vpop.f32.mrb[0].mxu0
          %7358 = vdwg.mxu0
          %7359 = vmatprep.subr.bf16.mxu0 %v6079
          %7360 = vmatpush1.bf16.msra.mxu0 %v6078
          %7361 = vmatprep.subr.bf16.mxu0 %v6083
          %7362 = vmatpush1.bf16.msra.mxu0 %v6082
          %7363 = vmatprep.subr.bf16.mxu0 %v6087
          %7364 = vmatpush1.bf16.msra.mxu0 %v6086
          %7365 = vmatprep.subr.bf16.mxu0 %v6091
          %7366 = vmatpush1.bf16.msra.mxu0 %v6090
          %7367 = vmatprep.subr.bf16.mxu0 %v6095
          %7368 = vmatpush1.bf16.msra.mxu0 %v6094
          %7369 = vmatprep.subr.bf16.mxu0 %v6099
          %7370 = vmatpush1.bf16.msra.mxu0 %v6098
          %7371 = vmatprep.subr.bf16.mxu0 %v6103
          %7372 = vmatpush1.bf16.msra.mxu0 %v6102
          %7373 = vmatprep.subr.bf16.mxu0 %v6107
          %7374 = vmatpush1.bf16.msra.mxu0 %v6106
          %7375 = vmatprep.subr.bf16.mxu0 %v6111
          %7376 = vmatpush1.bf16.msra.mxu0 %v6110
          %7377 = vmatprep.subr.bf16.mxu0 %v6115
          %7378 = vmatpush1.bf16.msra.mxu0 %v6114
          %7379 = vmatprep.subr.bf16.mxu0 %v6119
          %7380 = vmatpush1.bf16.msra.mxu0 %v6118
          %7381 = vmatprep.subr.bf16.mxu0 %v6123
          %7382 = vmatpush1.bf16.msra.mxu0 %v6122
          %7383 = vmatprep.subr.bf16.mxu0 %v6127
          %7384 = vmatpush1.bf16.msra.mxu0 %v6126
          %7385 = vmatprep.subr.bf16.mxu0 %v6131
          %7386 = vmatpush1.bf16.msra.mxu0 %v6130
          %7387 = vmatprep.subr.bf16.mxu0 %v6135
          %7388 = vmatpush1.bf16.msra.mxu0 %v6134
          %7389 = vmatprep.subr.bf16.mxu0 %v6139
          %7390 = vmatpush1.bf16.msra.mxu0 %v6138
          %7391 = vmatprep.mubr.bf16.mxu0 %v3805
          %7392 = vmatmul.mubr.bf16.gmra.mrb[0].mxu0 %v3804
          %v7393 = vpop.f32.mrb[0].mxu0
          %v7394 = vadd.f32 %v7353, %v7393
          %v7395 = vpop.f32.mrb[0].mxu0
          %v7396 = vadd.f32 %v7355, %v7395
          %v7397 = vpop.f32.mrb[0].mxu0
          %v7398 = vpop.f32.mrb[0].mxu0
          %7399 = vdwg.mxu0
          %7400 = vmatprep.subr.bf16.mxu0 %v6143
          %7401 = vmatpush1.bf16.msra.mxu0 %v6142
          %7402 = vmatprep.subr.bf16.mxu0 %v6147
          %7403 = vmatpush1.bf16.msra.mxu0 %v6146
          %7404 = vmatprep.subr.bf16.mxu0 %v6151
          %7405 = vmatpush1.bf16.msra.mxu0 %v6150
          %7406 = vmatprep.subr.bf16.mxu0 %v6155
          %7407 = vmatpush1.bf16.msra.mxu0 %v6154
          %7408 = vmatprep.subr.bf16.mxu0 %v6159
          %7409 = vmatpush1.bf16.msra.mxu0 %v6158
          %7410 = vmatprep.subr.bf16.mxu0 %v6163
          %7411 = vmatpush1.bf16.msra.mxu0 %v6162
          %7412 = vmatprep.subr.bf16.mxu0 %v6167
          %7413 = vmatpush1.bf16.msra.mxu0 %v6166
          %7414 = vmatprep.subr.bf16.mxu0 %v6171
          %7415 = vmatpush1.bf16.msra.mxu0 %v6170
          %7416 = vmatprep.subr.bf16.mxu0 %v6175
          %7417 = vmatpush1.bf16.msra.mxu0 %v6174
          %7418 = vmatprep.subr.bf16.mxu0 %v6179
          %7419 = vmatpush1.bf16.msra.mxu0 %v6178
          %7420 = vmatprep.subr.bf16.mxu0 %v6183
          %7421 = vmatpush1.bf16.msra.mxu0 %v6182
          %7422 = vmatprep.subr.bf16.mxu0 %v6187
          %7423 = vmatpush1.bf16.msra.mxu0 %v6186
          %7424 = vmatprep.subr.bf16.mxu0 %v6191
          %7425 = vmatpush1.bf16.msra.mxu0 %v6190
          %7426 = vmatprep.subr.bf16.mxu0 %v6195
          %7427 = vmatpush1.bf16.msra.mxu0 %v6194
          %7428 = vmatprep.subr.bf16.mxu0 %v6199
          %7429 = vmatpush1.bf16.msra.mxu0 %v6198
          %7430 = vmatprep.subr.bf16.mxu0 %v6203
          %7431 = vmatpush1.bf16.msra.mxu0 %v6202
          %7432 = vmatprep.mubr.bf16.mxu0 %v3807
          %7433 = vmatmul.mubr.bf16.gmra.mrb[0].mxu0 %v3806
          %v7434 = vpop.f32.mrb[0].mxu0
          %v7435 = vadd.f32 %v7394, %v7434
          %v7436 = vpop.f32.mrb[0].mxu0
          %v7437 = vadd.f32 %v7396, %v7436
          %v7438 = vpop.f32.mrb[0].mxu0
          %v7439 = vpop.f32.mrb[0].mxu0
          %7440 = vdwg.mxu0
          %7441 = vmatprep.subr.bf16.mxu0 %v6207
          %7442 = vmatpush1.bf16.msra.mxu0 %v6206
          %7443 = vmatprep.subr.bf16.mxu0 %v6211
          %7444 = vmatpush1.bf16.msra.mxu0 %v6210
          %7445 = vmatprep.subr.bf16.mxu0 %v6215
          %7446 = vmatpush1.bf16.msra.mxu0 %v6214
          %7447 = vmatprep.subr.bf16.mxu0 %v6219
          %7448 = vmatpush1.bf16.msra.mxu0 %v6218
          %7449 = vmatprep.subr.bf16.mxu0 %v6223
          %7450 = vmatpush1.bf16.msra.mxu0 %v6222
          %7451 = vmatprep.subr.bf16.mxu0 %v6227
          %7452 = vmatpush1.bf16.msra.mxu0 %v6226
          %7453 = vmatprep.subr.bf16.mxu0 %v6231
          %7454 = vmatpush1.bf16.msra.mxu0 %v6230
          %7455 = vmatprep.subr.bf16.mxu0 %v6235
          %7456 = vmatpush1.bf16.msra.mxu0 %v6234
          %7457 = vmatprep.subr.bf16.mxu0 %v6239
          %7458 = vmatpush1.bf16.msra.mxu0 %v6238
          %7459 = vmatprep.subr.bf16.mxu0 %v6243
          %7460 = vmatpush1.bf16.msra.mxu0 %v6242
          %7461 = vmatprep.subr.bf16.mxu0 %v6247
          %7462 = vmatpush1.bf16.msra.mxu0 %v6246
          %7463 = vmatprep.subr.bf16.mxu0 %v6251
          %7464 = vmatpush1.bf16.msra.mxu0 %v6250
          %7465 = vmatprep.subr.bf16.mxu0 %v6255
          %7466 = vmatpush1.bf16.msra.mxu0 %v6254
          %7467 = vmatprep.subr.bf16.mxu0 %v6259
          %7468 = vmatpush1.bf16.msra.mxu0 %v6258
          %7469 = vmatprep.subr.bf16.mxu0 %v6263
          %7470 = vmatpush1.bf16.msra.mxu0 %v6262
          %7471 = vmatprep.subr.bf16.mxu0 %v6267
          %7472 = vmatpush1.bf16.msra.mxu0 %v6266
          %7473 = vmatprep.mubr.bf16.mxu0 %v3809
          %7474 = vmatmul.mubr.bf16.gmra.mrb[0].mxu0 %v3808
          %v7475 = vpop.f32.mrb[0].mxu0
          %v7476 = vadd.f32 %v7435, %v7475
          %v7477 = vpop.f32.mrb[0].mxu0
          %v7478 = vadd.f32 %v7437, %v7477
          %v7479 = vpop.f32.mrb[0].mxu0
          %v7480 = vpop.f32.mrb[0].mxu0
          %7481 = vdwg.mxu0
          %7482 = vmatprep.subr.bf16.mxu0 %v6271
          %7483 = vmatpush1.bf16.msra.mxu0 %v6270
          %7484 = vmatprep.subr.bf16.mxu0 %v6275
          %7485 = vmatpush1.bf16.msra.mxu0 %v6274
          %7486 = vmatprep.subr.bf16.mxu0 %v6279
          %7487 = vmatpush1.bf16.msra.mxu0 %v6278
          %7488 = vmatprep.subr.bf16.mxu0 %v6283
          %7489 = vmatpush1.bf16.msra.mxu0 %v6282
          %7490 = vmatprep.subr.bf16.mxu0 %v6287
          %7491 = vmatpush1.bf16.msra.mxu0 %v6286
          %7492 = vmatprep.subr.bf16.mxu0 %v6291
          %7493 = vmatpush1.bf16.msra.mxu0 %v6290
          %7494 = vmatprep.subr.bf16.mxu0 %v6295
          %7495 = vmatpush1.bf16.msra.mxu0 %v6294
          %7496 = vmatprep.subr.bf16.mxu0 %v6299
          %7497 = vmatpush1.bf16.msra.mxu0 %v6298
          %7498 = vmatprep.subr.bf16.mxu0 %v6303
          %7499 = vmatpush1.bf16.msra.mxu0 %v6302
          %7500 = vmatprep.subr.bf16.mxu0 %v6307
          %7501 = vmatpush1.bf16.msra.mxu0 %v6306
          %7502 = vmatprep.subr.bf16.mxu0 %v6311
          %7503 = vmatpush1.bf16.msra.mxu0 %v6310
          %7504 = vmatprep.subr.bf16.mxu0 %v6315
          %7505 = vmatpush1.bf16.msra.mxu0 %v6314
          %7506 = vmatprep.subr.bf16.mxu0 %v6319
          %7507 = vmatpush1.bf16.msra.mxu0 %v6318
          %7508 = vmatprep.subr.bf16.mxu0 %v6323
          %7509 = vmatpush1.bf16.msra.mxu0 %v6322
          %7510 = vmatprep.subr.bf16.mxu0 %v6327
          %7511 = vmatpush1.bf16.msra.mxu0 %v6326
          %7512 = vmatprep.subr.bf16.mxu0 %v6331
          %7513 = vmatpush1.bf16.msra.mxu0 %v6330
          %7514 = vmatprep.mubr.bf16.mxu0 %v3811
          %7515 = vmatmul.mubr.bf16.gmra.mrb[0].mxu0 %v3810
          %v7516 = vpop.f32.mrb[0].mxu0
          %v7517 = vadd.f32 %v7476, %v7516
          %v7518 = vpop.f32.mrb[0].mxu0
          %v7519 = vadd.f32 %v7478, %v7518
          %v7520 = vpop.f32.mrb[0].mxu0
          %v7521 = vpop.f32.mrb[0].mxu0
          %7522 = vdwg.mxu0
          %7523 = vmatprep.subr.bf16.mxu0 %v6335
          %7524 = vmatpush1.bf16.msra.mxu0 %v6334
          %7525 = vmatprep.subr.bf16.mxu0 %v6339
          %7526 = vmatpush1.bf16.msra.mxu0 %v6338
          %7527 = vmatprep.subr.bf16.mxu0 %v6343
          %7528 = vmatpush1.bf16.msra.mxu0 %v6342
          %7529 = vmatprep.subr.bf16.mxu0 %v6347
          %7530 = vmatpush1.bf16.msra.mxu0 %v6346
          %7531 = vmatprep.subr.bf16.mxu0 %v6351
          %7532 = vmatpush1.bf16.msra.mxu0 %v6350
          %7533 = vmatprep.subr.bf16.mxu0 %v6355
          %7534 = vmatpush1.bf16.msra.mxu0 %v6354
          %7535 = vmatprep.subr.bf16.mxu0 %v6359
          %7536 = vmatpush1.bf16.msra.mxu0 %v6358
          %7537 = vmatprep.subr.bf16.mxu0 %v6363
          %7538 = vmatpush1.bf16.msra.mxu0 %v6362
          %7539 = vmatprep.subr.bf16.mxu0 %v6367
          %7540 = vmatpush1.bf16.msra.mxu0 %v6366
          %7541 = vmatprep.subr.bf16.mxu0 %v6371
          %7542 = vmatpush1.bf16.msra.mxu0 %v6370
          %7543 = vmatprep.subr.bf16.mxu0 %v6375
          %7544 = vmatpush1.bf16.msra.mxu0 %v6374
          %7545 = vmatprep.subr.bf16.mxu0 %v6379
          %7546 = vmatpush1.bf16.msra.mxu0 %v6378
          %7547 = vmatprep.subr.bf16.mxu0 %v6383
          %7548 = vmatpush1.bf16.msra.mxu0 %v6382
          %7549 = vmatprep.subr.bf16.mxu0 %v6387
          %7550 = vmatpush1.bf16.msra.mxu0 %v6386
          %7551 = vmatprep.subr.bf16.mxu0 %v6391
          %7552 = vmatpush1.bf16.msra.mxu0 %v6390
          %7553 = vmatprep.subr.bf16.mxu0 %v6395
          %7554 = vmatpush1.bf16.msra.mxu0 %v6394
          %7555 = vmatprep.mubr.bf16.mxu0 %v3813
          %7556 = vmatmul.mubr.bf16.gmra.mrb[0].mxu0 %v3812
          %v7557 = vpop.f32.mrb[0].mxu0
          %v7558 = vadd.f32 %v7517, %v7557
          %v7559 = vpop.f32.mrb[0].mxu0
          %v7560 = vadd.f32 %v7519, %v7559
          %v7561 = vpop.f32.mrb[0].mxu0
          %v7562 = vpop.f32.mrb[0].mxu0
          %7563 = vdwg.mxu0
          %v7564 = vrot.slane %v7230, 4
          %v7565 = vadd.f32 %v7230, %v7564
          %v7566 = vrot.slane %v7565, 2
          %v7567 = vadd.f32 %v7565, %v7566
          %v7568 = vrot.slane %v7567, 1
          %v7569 = vadd.f32 %v7567, %v7568
          %v7570 = vrot.slane %v7232, 4
          %v7571 = vadd.f32 %v7232, %v7570
          %v7572 = vrot.slane %v7571, 2
          %v7573 = vadd.f32 %v7571, %v7572
          %v7574 = vrot.slane %v7573, 1
          %v7575 = vadd.f32 %v7573, %v7574
          %v7576 = vrot.slane %v7558, 4
          %v7577 = vadd.f32 %v7558, %v7576
          %v7578 = vrot.slane %v7577, 2
          %v7579 = vadd.f32 %v7577, %v7578
          %v7580 = vrot.slane %v7579, 1
          %v7581 = vadd.f32 %v7579, %v7580
          %v7582 = vrot.slane %v7560, 4
          %v7583 = vadd.f32 %v7560, %v7582
          %v7584 = vrot.slane %v7583, 2
          %v7585 = vadd.f32 %v7583, %v7584
          %v7586 = vrot.slane %v7585, 1
          %v7587 = vadd.f32 %v7585, %v7586
          %v7588 = vrcp.pop 8.0
          %v7589 = vmul.f32 %v7569, %v7588
          %v7590 = vmul.f32 %v7575, %v7588
          %v7591 = vmul.f32 %v7581, %v7588
          %v7592 = vmul.f32 %v7587, %v7588
          %v7593 = vsub.f32 %v7230, %v7589
          %v7594 = vsub.f32 %v7232, %v7590
          %v7595 = vsub.f32 %v7558, %v7591
          %v7596 = vsub.f32 %v7560, %v7592
          %v7597 = vmul.f32 %v7593, %v7593
          %v7598 = vmul.f32 %v7594, %v7594
          %v7599 = vmul.f32 %v7595, %v7595
          %v7600 = vmul.f32 %v7596, %v7596
          %v7601 = vrot.slane %v7597, 4
          %v7602 = vadd.f32 %v7597, %v7601
          %v7603 = vrot.slane %v7602, 2
          %v7604 = vadd.f32 %v7602, %v7603
          %v7605 = vrot.slane %v7604, 1
          %v7606 = vadd.f32 %v7604, %v7605
          %v7607 = vrot.slane %v7598, 4
          %v7608 = vadd.f32 %v7598, %v7607
          %v7609 = vrot.slane %v7608, 2
          %v7610 = vadd.f32 %v7608, %v7609
          %v7611 = vrot.slane %v7610, 1
          %v7612 = vadd.f32 %v7610, %v7611
          %v7613 = vrot.slane %v7599, 4
          %v7614 = vadd.f32 %v7599, %v7613
          %v7615 = vrot.slane %v7614, 2
          %v7616 = vadd.f32 %v7614, %v7615
          %v7617 = vrot.slane %v7616, 1
          %v7618 = vadd.f32 %v7616, %v7617
          %v7619 = vrot.slane %v7600, 4
          %v7620 = vadd.f32 %v7600, %v7619
          %v7621 = vrot.slane %v7620, 2
          %v7622 = vadd.f32 %v7620, %v7621
          %v7623 = vrot.slane %v7622, 1
          %v7624 = vadd.f32 %v7622, %v7623
          %v7625 = vmul.f32 %v7606, %v7588
          %v7626 = vmul.f32 %v7612, %v7588
          %v7627 = vmul.f32 %v7618, %v7588
          %v7628 = vmul.f32 %v7624, %v7588
          %v7629 = vadd.f32 %v7625, 1e-05
          %v7630 = vadd.f32 %v7626, 1e-05
          %v7631 = vadd.f32 %v7627, 1e-05
          %v7632 = vadd.f32 %v7628, 1e-05
          %v7633 = vrsqrt.pop %v7629
          %v7634 = vrsqrt.pop %v7630
          %v7635 = vrsqrt.pop %v7631
          %v7636 = vrsqrt.pop %v7632
          %v7637 = vmul.f32 %v7593, %v7633
          %v7638 = vmul.f32 %v7594, %v7634
          %v7639 = vmul.f32 %v7595, %v7635
          %v7640 = vmul.f32 %v7596, %v7636
          %v7641 = vld [vmem:[#allocation16] sm:$0xf]
          %v7643 = vlaneseq
          %v7644 = vshrl.u32 %v7643, 7
          %v7645 = vsub.s32 0, %v7644
          %v7646 = vrot.slane %v7641, %v7645
          %v7647 = vlaneseq
          %v7648 = vshrl.u32 %v7647, 7
          %v7649 = vsub.s32 1, %v7648
          %v7650 = vrot.slane %v7641, %v7649
          %v7651 = vlaneseq
          %v7652 = vshrl.u32 %v7651, 7
          %v7653 = vsub.s32 2, %v7652
          %v7654 = vrot.slane %v7641, %v7653
          %v7655 = vlaneseq
          %v7656 = vshrl.u32 %v7655, 7
          %v7657 = vsub.s32 3, %v7656
          %v7658 = vrot.slane %v7641, %v7657
          %v7663 = vmul.f32 %v7637, %v7646
          %v7664 = vmul.f32 %v7638, %v7650
          %v7665 = vmul.f32 %v7639, %v7654
          %v7666 = vmul.f32 %v7640, %v7658
          %v7667 = vld [vmem:[#allocation18] sm:$0xf]
          %v7669 = vlaneseq
          %v7670 = vshrl.u32 %v7669, 7
          %v7671 = vsub.s32 0, %v7670
          %v7672 = vrot.slane %v7667, %v7671
          %v7673 = vlaneseq
          %v7674 = vshrl.u32 %v7673, 7
          %v7675 = vsub.s32 1, %v7674
          %v7676 = vrot.slane %v7667, %v7675
          %v7677 = vlaneseq
          %v7678 = vshrl.u32 %v7677, 7
          %v7679 = vsub.s32 2, %v7678
          %v7680 = vrot.slane %v7667, %v7679
          %v7681 = vlaneseq
          %v7682 = vshrl.u32 %v7681, 7
          %v7683 = vsub.s32 3, %v7682
          %v7684 = vrot.slane %v7667, %v7683
          %v7689 = vadd.f32 %v7663, %v7672
          %v7690 = vadd.f32 %v7664, %v7676
          %v7691 = vadd.f32 %v7665, %v7680
          %v7692 = vadd.f32 %v7666, %v7684
          %v7693 = vld [vmem:[#allocation21] sm:$0xff]
          %v7694 = vld [vmem:[#allocation21 + $0x8] sm:$0xff]
          %v7695 = vld [vmem:[#allocation21 + $0x10] sm:$0xff]
          %v7696 = vld [vmem:[#allocation21 + $0x18] sm:$0xff]
          %v7697 = vld [vmem:[#allocation21 + $0x20] sm:$0xff]
          %v7698 = vld [vmem:[#allocation21 + $0x28] sm:$0xff]
          %v7699 = vld [vmem:[#allocation21 + $0x30] sm:$0xff]
          %v7700 = vld [vmem:[#allocation21 + $0x38] sm:$0xff]
          %v7701 = vld [vmem:[#allocation21 + $0x40] sm:$0xff]
          %v7702 = vld [vmem:[#allocation21 + $0x48] sm:$0xff]
          %v7703 = vld [vmem:[#allocation21 + $0x50] sm:$0xff]
          %v7704 = vld [vmem:[#allocation21 + $0x58] sm:$0xff]
          %v7705 = vld [vmem:[#allocation21 + $0x60] sm:$0xff]
          %v7706 = vld [vmem:[#allocation21 + $0x68] sm:$0xff]
          %v7707 = vld [vmem:[#allocation21 + $0x70] sm:$0xff]
          %v7708 = vld [vmem:[#allocation21 + $0x78] sm:$0xff]
          %v7709 = vld [vmem:[#allocation21 + $0x80] sm:$0xff]
          %v7710 = vld [vmem:[#allocation21 + $0x88] sm:$0xff]
          %v7711 = vld [vmem:[#allocation21 + $0x90] sm:$0xff]
          %v7712 = vld [vmem:[#allocation21 + $0x98] sm:$0xff]
          %v7713 = vld [vmem:[#allocation21 + $0xa0] sm:$0xff]
          %v7714 = vld [vmem:[#allocation21 + $0xa8] sm:$0xff]
          %v7715 = vld [vmem:[#allocation21 + $0xb0] sm:$0xff]
          %v7716 = vld [vmem:[#allocation21 + $0xb8] sm:$0xff]
          %v7717 = vld [vmem:[#allocation21 + $0xc0] sm:$0xff]
          %v7718 = vld [vmem:[#allocation21 + $0xc8] sm:$0xff]
          %v7719 = vld [vmem:[#allocation21 + $0xd0] sm:$0xff]
          %v7720 = vld [vmem:[#allocation21 + $0xd8] sm:$0xff]
          %v7721 = vld [vmem:[#allocation21 + $0xe0] sm:$0xff]
          %v7722 = vld [vmem:[#allocation21 + $0xe8] sm:$0xff]
          %v7723 = vld [vmem:[#allocation21 + $0xf0] sm:$0xff]
          %v7724 = vld [vmem:[#allocation21 + $0xf8] sm:$0xff]
          %v7725 = vld [vmem:[#allocation21 + $0x100] sm:$0xff]
          %v7726 = vld [vmem:[#allocation21 + $0x108] sm:$0xff]
          %v7727 = vld [vmem:[#allocation21 + $0x110] sm:$0xff]
          %v7728 = vld [vmem:[#allocation21 + $0x118] sm:$0xff]
          %v7729 = vld [vmem:[#allocation21 + $0x120] sm:$0xff]
          %v7730 = vld [vmem:[#allocation21 + $0x128] sm:$0xff]
          %v7731 = vld [vmem:[#allocation21 + $0x130] sm:$0xff]
          %v7732 = vld [vmem:[#allocation21 + $0x138] sm:$0xff]
          %v7733 = vld [vmem:[#allocation21 + $0x140] sm:$0xff]
          %v7734 = vld [vmem:[#allocation21 + $0x148] sm:$0xff]
          %v7735 = vld [vmem:[#allocation21 + $0x150] sm:$0xff]
          %v7736 = vld [vmem:[#allocation21 + $0x158] sm:$0xff]
          %v7737 = vld [vmem:[#allocation21 + $0x160] sm:$0xff]
          %v7738 = vld [vmem:[#allocation21 + $0x168] sm:$0xff]
          %v7739 = vld [vmem:[#allocation21 + $0x170] sm:$0xff]
          %v7740 = vld [vmem:[#allocation21 + $0x178] sm:$0xff]
          %v7741 = vld [vmem:[#allocation21 + $0x180] sm:$0xff]
          %v7742 = vld [vmem:[#allocation21 + $0x188] sm:$0xff]
          %v7743 = vld [vmem:[#allocation21 + $0x190] sm:$0xff]
          %v7744 = vld [vmem:[#allocation21 + $0x198] sm:$0xff]
          %v7745 = vld [vmem:[#allocation21 + $0x1a0] sm:$0xff]
          %v7746 = vld [vmem:[#allocation21 + $0x1a8] sm:$0xff]
          %v7747 = vld [vmem:[#allocation21 + $0x1b0] sm:$0xff]
          %v7748 = vld [vmem:[#allocation21 + $0x1b8] sm:$0xff]
          %v7749 = vld [vmem:[#allocation21 + $0x1c0] sm:$0xff]
          %v7750 = vld [vmem:[#allocation21 + $0x1c8] sm:$0xff]
          %v7751 = vld [vmem:[#allocation21 + $0x1d0] sm:$0xff]
          %v7752 = vld [vmem:[#allocation21 + $0x1d8] sm:$0xff]
          %v7753 = vld [vmem:[#allocation21 + $0x1e0] sm:$0xff]
          %v7754 = vld [vmem:[#allocation21 + $0x1e8] sm:$0xff]
          %v7755 = vld [vmem:[#allocation21 + $0x1f0] sm:$0xff]
          %v7756 = vld [vmem:[#allocation21 + $0x1f8] sm:$0xff]
          %7757 = vmatprep.subr.mxu0 0.0
          %7758 = vmatpush1.msra.mxu0 %v7693
          %7759 = vmatprep.subr.mxu0 0.0
          %7760 = vmatpush1.msra.mxu0 %v7694
          %7761 = vmatprep.subr.mxu0 0.0
          %7762 = vmatpush1.msra.mxu0 %v7695
          %7763 = vmatprep.subr.mxu0 0.0
          %7764 = vmatpush1.msra.mxu0 %v7696
          %7765 = vmatprep.subr.mxu0 0.0
          %7766 = vmatpush1.msra.mxu0 %v7697
          %7767 = vmatprep.subr.mxu0 0.0
          %7768 = vmatpush1.msra.mxu0 %v7698
          %7769 = vmatprep.subr.mxu0 0.0
          %7770 = vmatpush1.msra.mxu0 %v7699
          %7771 = vmatprep.subr.mxu0 0.0
          %7772 = vmatpush1.msra.mxu0 %v7700
          %7773 = vmatprep.subr.mxu0 0.0
          %7774 = vmatpush1.msra.mxu0 %v7701
          %7775 = vmatprep.subr.mxu0 0.0
          %7776 = vmatpush1.msra.mxu0 %v7702
          %7777 = vmatprep.subr.mxu0 0.0
          %7778 = vmatpush1.msra.mxu0 %v7703
          %7779 = vmatprep.subr.mxu0 0.0
          %7780 = vmatpush1.msra.mxu0 %v7704
          %7781 = vmatprep.subr.mxu0 0.0
          %7782 = vmatpush1.msra.mxu0 %v7705
          %7783 = vmatprep.subr.mxu0 0.0
          %7784 = vmatpush1.msra.mxu0 %v7706
          %7785 = vmatprep.subr.mxu0 0.0
          %7786 = vmatpush1.msra.mxu0 %v7707
          %7787 = vmatprep.subr.mxu0 0.0
          %7788 = vmatpush1.msra.mxu0 %v7708
          %7789 = vmatprep.subr.mxu0 0.0
          %7790 = vmatpush1.msra.mxu0 %v7709
          %7791 = vmatprep.subr.mxu0 0.0
          %7792 = vmatpush1.msra.mxu0 %v7710
          %7793 = vmatprep.subr.mxu0 0.0
          %7794 = vmatpush1.msra.mxu0 %v7711
          %7795 = vmatprep.subr.mxu0 0.0
          %7796 = vmatpush1.msra.mxu0 %v7712
          %7797 = vmatprep.subr.mxu0 0.0
          %7798 = vmatpush1.msra.mxu0 %v7713
          %7799 = vmatprep.subr.mxu0 0.0
          %7800 = vmatpush1.msra.mxu0 %v7714
          %7801 = vmatprep.subr.mxu0 0.0
          %7802 = vmatpush1.msra.mxu0 %v7715
          %7803 = vmatprep.subr.mxu0 0.0
          %7804 = vmatpush1.msra.mxu0 %v7716
          %7805 = vmatprep.subr.mxu0 0.0
          %7806 = vmatpush1.msra.mxu0 %v7717
          %7807 = vmatprep.subr.mxu0 0.0
          %7808 = vmatpush1.msra.mxu0 %v7718
          %7809 = vmatprep.subr.mxu0 0.0
          %7810 = vmatpush1.msra.mxu0 %v7719
          %7811 = vmatprep.subr.mxu0 0.0
          %7812 = vmatpush1.msra.mxu0 %v7720
          %7813 = vmatprep.subr.mxu0 0.0
          %7814 = vmatpush1.msra.mxu0 %v7721
          %7815 = vmatprep.subr.mxu0 0.0
          %7816 = vmatpush1.msra.mxu0 %v7722
          %7817 = vmatprep.subr.mxu0 0.0
          %7818 = vmatpush1.msra.mxu0 %v7723
          %7819 = vmatprep.subr.mxu0 0.0
          %7820 = vmatpush1.msra.mxu0 %v7724
          %7821 = vmatprep.mubr.f32.mxu0 %v7690
          %7822 = vmatmul.mubr.f32.gmra.mrb[0].mxu0 %v7689
          %v7823 = vpop.f32.mrb[0].mxu0
          %v7824 = vadd.f32 0.0, %v7823
          %v7825 = vpop.f32.mrb[0].mxu0
          %7826 = vdwg.mxu0
          %7827 = vmatprep.subr.mxu0 0.0
          %7828 = vmatpush1.msra.mxu0 %v7725
          %7829 = vmatprep.subr.mxu0 0.0
          %7830 = vmatpush1.msra.mxu0 %v7726
          %7831 = vmatprep.subr.mxu0 0.0
          %7832 = vmatpush1.msra.mxu0 %v7727
          %7833 = vmatprep.subr.mxu0 0.0
          %7834 = vmatpush1.msra.mxu0 %v7728
          %7835 = vmatprep.subr.mxu0 0.0
          %7836 = vmatpush1.msra.mxu0 %v7729
          %7837 = vmatprep.subr.mxu0 0.0
          %7838 = vmatpush1.msra.mxu0 %v7730
          %7839 = vmatprep.subr.mxu0 0.0
          %7840 = vmatpush1.msra.mxu0 %v7731
          %7841 = vmatprep.subr.mxu0 0.0
          %7842 = vmatpush1.msra.mxu0 %v7732
          %7843 = vmatprep.subr.mxu0 0.0
          %7844 = vmatpush1.msra.mxu0 %v7733
          %7845 = vmatprep.subr.mxu0 0.0
          %7846 = vmatpush1.msra.mxu0 %v7734
          %7847 = vmatprep.subr.mxu0 0.0
          %7848 = vmatpush1.msra.mxu0 %v7735
          %7849 = vmatprep.subr.mxu0 0.0
          %7850 = vmatpush1.msra.mxu0 %v7736
          %7851 = vmatprep.subr.mxu0 0.0
          %7852 = vmatpush1.msra.mxu0 %v7737
          %7853 = vmatprep.subr.mxu0 0.0
          %7854 = vmatpush1.msra.mxu0 %v7738
          %7855 = vmatprep.subr.mxu0 0.0
          %7856 = vmatpush1.msra.mxu0 %v7739
          %7857 = vmatprep.subr.mxu0 0.0
          %7858 = vmatpush1.msra.mxu0 %v7740
          %7859 = vmatprep.subr.mxu0 0.0
          %7860 = vmatpush1.msra.mxu0 %v7741
          %7861 = vmatprep.subr.mxu0 0.0
          %7862 = vmatpush1.msra.mxu0 %v7742
          %7863 = vmatprep.subr.mxu0 0.0
          %7864 = vmatpush1.msra.mxu0 %v7743
          %7865 = vmatprep.subr.mxu0 0.0
          %7866 = vmatpush1.msra.mxu0 %v7744
          %7867 = vmatprep.subr.mxu0 0.0
          %7868 = vmatpush1.msra.mxu0 %v7745
          %7869 = vmatprep.subr.mxu0 0.0
          %7870 = vmatpush1.msra.mxu0 %v7746
          %7871 = vmatprep.subr.mxu0 0.0
          %7872 = vmatpush1.msra.mxu0 %v7747
          %7873 = vmatprep.subr.mxu0 0.0
          %7874 = vmatpush1.msra.mxu0 %v7748
          %7875 = vmatprep.subr.mxu0 0.0
          %7876 = vmatpush1.msra.mxu0 %v7749
          %7877 = vmatprep.subr.mxu0 0.0
          %7878 = vmatpush1.msra.mxu0 %v7750
          %7879 = vmatprep.subr.mxu0 0.0
          %7880 = vmatpush1.msra.mxu0 %v7751
          %7881 = vmatprep.subr.mxu0 0.0
          %7882 = vmatpush1.msra.mxu0 %v7752
          %7883 = vmatprep.subr.mxu0 0.0
          %7884 = vmatpush1.msra.mxu0 %v7753
          %7885 = vmatprep.subr.mxu0 0.0
          %7886 = vmatpush1.msra.mxu0 %v7754
          %7887 = vmatprep.subr.mxu0 0.0
          %7888 = vmatpush1.msra.mxu0 %v7755
          %7889 = vmatprep.subr.mxu0 0.0
          %7890 = vmatpush1.msra.mxu0 %v7756
          %7891 = vmatprep.mubr.f32.mxu0 %v7692
          %7892 = vmatmul.mubr.f32.gmra.mrb[0].mxu0 %v7691
          %v7893 = vpop.f32.mrb[0].mxu0
          %v7894 = vadd.f32 %v7824, %v7893
          %v7895 = vpop.f32.mrb[0].mxu0
          %7896 = vdwg.mxu0
          %v7897 = vld [vmem:[#allocation22] sm:$0x1]
          %v7898 = vmul.f32 %v7894, 2.0
          %v7900 = vlaneseq
          %v7901 = vshrl.u32 %v7900, 7
          %v7902 = vsub.s32 0, %v7901
          %v7903 = vrot.slane %v7897, %v7902
          %v7905 = vsub.f32 %v7903, %v7898
          %7906 = vmin.xlane.f32.xlu0 %v7905
          %v7907 = vpop.xlane.xlu0 %7906
          %v7908 = vlaneseq
          %v7909 = vand.u32 %v7908, 127
          %vm7910 = vcmp.eq.f32.partialorder %v7905, %v7907
          %v7911 = vsel %vm7910, %v7909, 128
          %v7912 = vand.u32 %v7911, 65535
          %v7913 = vshra.s32 %v7911, 16
          %v7914 = vcvt.s32.f32 %v7912
          %v7915 = vcvt.s32.f32 %v7913
          %7916 = vmin.xlane.f32.xlu0 %v7915
          %v7917 = vpop.xlane.xlu0 %7916
          %vm7918 = vcmp.eq.f32.partialorder %v7915, %v7917
          %v7919 = vsel %vm7918, %v7914, inf
          %7920 = vmin.xlane.f32.xlu0 %v7919
          %v7921 = vpop.xlane.xlu0 %7920
          %v7922 = vcvt.f32.s32 %v7921
          %v7923 = vcvt.f32.s32 %v7917
          %v7924 = vshll.u32 %v7923, 16
          %v7925 = vadd.s32 %v7924, %v7922
          %vm7926 = vcmp.eq.s32.totalorder %v7909, %v7925
          %v7927 = vsel %vm7926, 1, 0
          %v7928 = vcvt.s32.f32 %v7927
          %v7929 = vld [vmem:[#allocation19] sm:$0xff]
          %v7930 = vld [vmem:[#allocation19 + $0x8] sm:$0xff]
          %v7931 = vld [vmem:[#allocation19 + $0x10] sm:$0xff]
          %v7932 = vld [vmem:[#allocation19 + $0x18] sm:$0xff]
          %v7933 = vld [vmem:[#allocation19 + $0x20] sm:$0xff]
          %v7934 = vld [vmem:[#allocation19 + $0x28] sm:$0xff]
          %v7935 = vld [vmem:[#allocation19 + $0x30] sm:$0xff]
          %v7936 = vld [vmem:[#allocation19 + $0x38] sm:$0xff]
          %v7937 = vld [vmem:[#allocation19 + $0x40] sm:$0xff]
          %v7938 = vld [vmem:[#allocation19 + $0x48] sm:$0xff]
          %v7939 = vld [vmem:[#allocation19 + $0x50] sm:$0xff]
          %v7940 = vld [vmem:[#allocation19 + $0x58] sm:$0xff]
          %v7941 = vld [vmem:[#allocation19 + $0x60] sm:$0xff]
          %v7942 = vld [vmem:[#allocation19 + $0x68] sm:$0xff]
          %v7943 = vld [vmem:[#allocation19 + $0x70] sm:$0xff]
          %v7944 = vld [vmem:[#allocation19 + $0x78] sm:$0xff]
          %v7945 = vld [vmem:[#allocation19 + $0x80] sm:$0xff]
          %v7946 = vld [vmem:[#allocation19 + $0x88] sm:$0xff]
          %v7947 = vld [vmem:[#allocation19 + $0x90] sm:$0xff]
          %v7948 = vld [vmem:[#allocation19 + $0x98] sm:$0xff]
          %v7949 = vld [vmem:[#allocation19 + $0xa0] sm:$0xff]
          %v7950 = vld [vmem:[#allocation19 + $0xa8] sm:$0xff]
          %v7951 = vld [vmem:[#allocation19 + $0xb0] sm:$0xff]
          %v7952 = vld [vmem:[#allocation19 + $0xb8] sm:$0xff]
          %v7953 = vld [vmem:[#allocation19 + $0xc0] sm:$0xff]
          %v7954 = vld [vmem:[#allocation19 + $0xc8] sm:$0xff]
          %v7955 = vld [vmem:[#allocation19 + $0xd0] sm:$0xff]
          %v7956 = vld [vmem:[#allocation19 + $0xd8] sm:$0xff]
          %v7957 = vld [vmem:[#allocation19 + $0xe0] sm:$0xff]
          %v7958 = vld [vmem:[#allocation19 + $0xe8] sm:$0xff]
          %v7959 = vld [vmem:[#allocation19 + $0xf0] sm:$0xff]
          %v7960 = vld [vmem:[#allocation19 + $0xf8] sm:$0xff]
          %v7961 = vld [vmem:[#allocation19 + $0x100] sm:$0xff]
          %v7962 = vld [vmem:[#allocation19 + $0x108] sm:$0xff]
          %v7963 = vld [vmem:[#allocation19 + $0x110] sm:$0xff]
          %v7964 = vld [vmem:[#allocation19 + $0x118] sm:$0xff]
          %v7965 = vld [vmem:[#allocation19 + $0x120] sm:$0xff]
          %v7966 = vld [vmem:[#allocation19 + $0x128] sm:$0xff]
          %v7967 = vld [vmem:[#allocation19 + $0x130] sm:$0xff]
          %v7968 = vld [vmem:[#allocation19 + $0x138] sm:$0xff]
          %v7969 = vld [vmem:[#allocation19 + $0x140] sm:$0xff]
          %v7970 = vld [vmem:[#allocation19 + $0x148] sm:$0xff]
          %v7971 = vld [vmem:[#allocation19 + $0x150] sm:$0xff]
          %v7972 = vld [vmem:[#allocation19 + $0x158] sm:$0xff]
          %v7973 = vld [vmem:[#allocation19 + $0x160] sm:$0xff]
          %v7974 = vld [vmem:[#allocation19 + $0x168] sm:$0xff]
          %v7975 = vld [vmem:[#allocation19 + $0x170] sm:$0xff]
          %v7976 = vld [vmem:[#allocation19 + $0x178] sm:$0xff]
          %v7977 = vld [vmem:[#allocation19 + $0x180] sm:$0xff]
          %v7978 = vld [vmem:[#allocation19 + $0x188] sm:$0xff]
          %v7979 = vld [vmem:[#allocation19 + $0x190] sm:$0xff]
          %v7980 = vld [vmem:[#allocation19 + $0x198] sm:$0xff]
          %v7981 = vld [vmem:[#allocation19 + $0x1a0] sm:$0xff]
          %v7982 = vld [vmem:[#allocation19 + $0x1a8] sm:$0xff]
          %v7983 = vld [vmem:[#allocation19 + $0x1b0] sm:$0xff]
          %v7984 = vld [vmem:[#allocation19 + $0x1b8] sm:$0xff]
          %v7985 = vld [vmem:[#allocation19 + $0x1c0] sm:$0xff]
          %v7986 = vld [vmem:[#allocation19 + $0x1c8] sm:$0xff]
          %v7987 = vld [vmem:[#allocation19 + $0x1d0] sm:$0xff]
          %v7988 = vld [vmem:[#allocation19 + $0x1d8] sm:$0xff]
          %v7989 = vld [vmem:[#allocation19 + $0x1e0] sm:$0xff]
          %v7990 = vld [vmem:[#allocation19 + $0x1e8] sm:$0xff]
          %v7991 = vld [vmem:[#allocation19 + $0x1f0] sm:$0xff]
          %v7992 = vld [vmem:[#allocation19 + $0x1f8] sm:$0xff]
          %7993 = vmatprep.subr.mxu0 %v7930
          %7994 = vmatpush1.msra.mxu0 %v7929
          %7995 = vmatprep.subr.mxu0 %v7934
          %7996 = vmatpush1.msra.mxu0 %v7933
          %7997 = vmatprep.subr.mxu0 %v7938
          %7998 = vmatpush1.msra.mxu0 %v7937
          %7999 = vmatprep.subr.mxu0 %v7942
          %8000 = vmatpush1.msra.mxu0 %v7941
          %8001 = vmatprep.subr.mxu0 %v7946
          %8002 = vmatpush1.msra.mxu0 %v7945
          %8003 = vmatprep.subr.mxu0 %v7950
          %8004 = vmatpush1.msra.mxu0 %v7949
          %8005 = vmatprep.subr.mxu0 %v7954
          %8006 = vmatpush1.msra.mxu0 %v7953
          %8007 = vmatprep.subr.mxu0 %v7958
          %8008 = vmatpush1.msra.mxu0 %v7957
          %8009 = vmatprep.subr.mxu0 %v7962
          %8010 = vmatpush1.msra.mxu0 %v7961
          %8011 = vmatprep.subr.mxu0 %v7966
          %8012 = vmatpush1.msra.mxu0 %v7965
          %8013 = vmatprep.subr.mxu0 %v7970
          %8014 = vmatpush1.msra.mxu0 %v7969
          %8015 = vmatprep.subr.mxu0 %v7974
          %8016 = vmatpush1.msra.mxu0 %v7973
          %8017 = vmatprep.subr.mxu0 %v7978
          %8018 = vmatpush1.msra.mxu0 %v7977
          %8019 = vmatprep.subr.mxu0 %v7982
          %8020 = vmatpush1.msra.mxu0 %v7981
          %8021 = vmatprep.subr.mxu0 %v7986
          %8022 = vmatpush1.msra.mxu0 %v7985
          %8023 = vmatprep.subr.mxu0 %v7990
          %8024 = vmatpush1.msra.mxu0 %v7989
          %8025 = vmatprep.subr.mxu0 0.0
          %8026 = vmatpush1.msra.mxu0 0.0
          %8027 = vmatprep.subr.mxu0 0.0
          %8028 = vmatpush1.msra.mxu0 0.0
          %8029 = vmatprep.subr.mxu0 0.0
          %8030 = vmatpush1.msra.mxu0 0.0
          %8031 = vmatprep.subr.mxu0 0.0
          %8032 = vmatpush1.msra.mxu0 0.0
          %8033 = vmatprep.subr.mxu0 0.0
          %8034 = vmatpush1.msra.mxu0 0.0
          %8035 = vmatprep.subr.mxu0 0.0
          %8036 = vmatpush1.msra.mxu0 0.0
          %8037 = vmatprep.subr.mxu0 0.0
          %8038 = vmatpush1.msra.mxu0 0.0
          %8039 = vmatprep.subr.mxu0 0.0
          %8040 = vmatpush1.msra.mxu0 0.0
          %8041 = vmatprep.subr.mxu0 0.0
          %8042 = vmatpush1.msra.mxu0 0.0
          %8043 = vmatprep.subr.mxu0 0.0
          %8044 = vmatpush1.msra.mxu0 0.0
          %8045 = vmatprep.subr.mxu0 0.0
          %8046 = vmatpush1.msra.mxu0 0.0
          %8047 = vmatprep.subr.mxu0 0.0
          %8048 = vmatpush1.msra.mxu0 0.0
          %8049 = vmatprep.subr.mxu0 0.0
          %8050 = vmatpush1.msra.mxu0 0.0
          %8051 = vmatprep.subr.mxu0 0.0
          %8052 = vmatpush1.msra.mxu0 0.0
          %8053 = vmatprep.subr.mxu0 0.0
          %8054 = vmatpush1.msra.mxu0 0.0
          %8055 = vmatprep.subr.mxu0 0.0
          %8056 = vmatpush1.msra.mxu0 0.0
          %8057 = vmatprep.mubr.f32.mxu0 0.0
          %8058 = vmatmul.mubr.f32.gmra.mrb[0].mxu0 %v7928
          %v8059 = vpop.f32.mrb[0].mxu0
          %v8060 = vadd.f32 0.0, %v8059
          %v8061 = vpop.f32.mrb[0].mxu0
          %v8062 = vadd.f32 0.0, %v8061
          %8063 = vdwg.mxu0
          %8064 = vmatprep.subr.mxu0 %v7932
          %8065 = vmatpush1.msra.mxu0 %v7931
          %8066 = vmatprep.subr.mxu0 %v7936
          %8067 = vmatpush1.msra.mxu0 %v7935
          %8068 = vmatprep.subr.mxu0 %v7940
          %8069 = vmatpush1.msra.mxu0 %v7939
          %8070 = vmatprep.subr.mxu0 %v7944
          %8071 = vmatpush1.msra.mxu0 %v7943
          %8072 = vmatprep.subr.mxu0 %v7948
          %8073 = vmatpush1.msra.mxu0 %v7947
          %8074 = vmatprep.subr.mxu0 %v7952
          %8075 = vmatpush1.msra.mxu0 %v7951
          %8076 = vmatprep.subr.mxu0 %v7956
          %8077 = vmatpush1.msra.mxu0 %v7955
          %8078 = vmatprep.subr.mxu0 %v7960
          %8079 = vmatpush1.msra.mxu0 %v7959
          %8080 = vmatprep.subr.mxu0 %v7964
          %8081 = vmatpush1.msra.mxu0 %v7963
          %8082 = vmatprep.subr.mxu0 %v7968
          %8083 = vmatpush1.msra.mxu0 %v7967
          %8084 = vmatprep.subr.mxu0 %v7972
          %8085 = vmatpush1.msra.mxu0 %v7971
          %8086 = vmatprep.subr.mxu0 %v7976
          %8087 = vmatpush1.msra.mxu0 %v7975
          %8088 = vmatprep.subr.mxu0 %v7980
          %8089 = vmatpush1.msra.mxu0 %v7979
          %8090 = vmatprep.subr.mxu0 %v7984
          %8091 = vmatpush1.msra.mxu0 %v7983
          %8092 = vmatprep.subr.mxu0 %v7988
          %8093 = vmatpush1.msra.mxu0 %v7987
          %8094 = vmatprep.subr.mxu0 %v7992
          %8095 = vmatpush1.msra.mxu0 %v7991
          %8096 = vmatprep.subr.mxu0 0.0
          %8097 = vmatpush1.msra.mxu0 0.0
          %8098 = vmatprep.subr.mxu0 0.0
          %8099 = vmatpush1.msra.mxu0 0.0
          %8100 = vmatprep.subr.mxu0 0.0
          %8101 = vmatpush1.msra.mxu0 0.0
          %8102 = vmatprep.subr.mxu0 0.0
          %8103 = vmatpush1.msra.mxu0 0.0
          %8104 = vmatprep.subr.mxu0 0.0
          %8105 = vmatpush1.msra.mxu0 0.0
          %8106 = vmatprep.subr.mxu0 0.0
          %8107 = vmatpush1.msra.mxu0 0.0
          %8108 = vmatprep.subr.mxu0 0.0
          %8109 = vmatpush1.msra.mxu0 0.0
          %8110 = vmatprep.subr.mxu0 0.0
          %8111 = vmatpush1.msra.mxu0 0.0
          %8112 = vmatprep.subr.mxu0 0.0
          %8113 = vmatpush1.msra.mxu0 0.0
          %8114 = vmatprep.subr.mxu0 0.0
          %8115 = vmatpush1.msra.mxu0 0.0
          %8116 = vmatprep.subr.mxu0 0.0
          %8117 = vmatpush1.msra.mxu0 0.0
          %8118 = vmatprep.subr.mxu0 0.0
          %8119 = vmatpush1.msra.mxu0 0.0
          %8120 = vmatprep.subr.mxu0 0.0
          %8121 = vmatpush1.msra.mxu0 0.0
          %8122 = vmatprep.subr.mxu0 0.0
          %8123 = vmatpush1.msra.mxu0 0.0
          %8124 = vmatprep.subr.mxu0 0.0
          %8125 = vmatpush1.msra.mxu0 0.0
          %8126 = vmatprep.subr.mxu0 0.0
          %8127 = vmatpush1.msra.mxu0 0.0
          %8128 = vmatprep.mubr.f32.mxu0 0.0
          %8129 = vmatmul.mubr.f32.gmra.mrb[0].mxu0 %v7928
          %v8130 = vpop.f32.mrb[0].mxu0
          %v8131 = vadd.f32 0.0, %v8130
          %v8132 = vpop.f32.mrb[0].mxu0
          %v8133 = vadd.f32 0.0, %v8132
          %8134 = vdwg.mxu0
          %v8135 = vsub.f32 %v8060, %v7689
          %v8136 = vsub.f32 %v8062, %v7690
          %v8137 = vsub.f32 %v8131, %v7691
          %v8138 = vsub.f32 %v8133, %v7692
          %v8139 = vmul.f32 %v8135, %v8135
          %v8140 = vmul.f32 %v8136, %v8136
          %v8141 = vmul.f32 %v8137, %v8137
          %v8142 = vmul.f32 %v8138, %v8138
          %v8143 = vadd.f32 %v8139, %v8140
          %v8144 = vadd.f32 %v8143, %v8141
          %v8145 = vadd.f32 %v8144, %v8142
          %8146 = vadd.xlane.f32.xlu0 %v8145
          %v8147 = vpop.xlane.xlu0 %8146
          %v8148 = vrot.slane %v8147, 4
          %v8149 = vadd.f32 %v8147, %v8148
          %v8150 = vrot.slane %v8149, 2
          %v8151 = vadd.f32 %v8149, %v8150
          %v8152 = vrot.slane %v8151, 1
          %v8153 = vadd.f32 %v8151, %v8152
          %s8154 = vtos %v8153
          %v8155 = vrcp.pop 4096.0
          %s8156 = vtos %v8155
          %s8157 = smul.f32 %s8154, %s8156
          %s8158 = scalar_lea.smem [#allocation28], 0
          %8159 = sst [smem:[%s8158]] %s8157
          %s8160 = scalar_lea.smem [#allocation29], 0
          %8161 = sst [smem:[%s8160]] %s8157
          %v8162 = vpack.c.bf16 %v8060, %v8060
          %v8163 = vpack.c.bf16 %v8062, %v8062
          %v8164 = vpack.c.bf16 %v8131, %v8131
          %v8165 = vpack.c.bf16 %v8133, %v8133
          %v8166 = vld [vmem:[#allocation24] sm:$0xff]
          %v8167 = vld [vmem:[#allocation24 + $0x8] sm:$0xff]
          %v8168 = vld [vmem:[#allocation24 + $0x10] sm:$0xff]
          %v8169 = vld [vmem:[#allocation24 + $0x18] sm:$0xff]
          %v8170 = vld [vmem:[#allocation24 + $0x20] sm:$0xff]
          %v8171 = vld [vmem:[#allocation24 + $0x28] sm:$0xff]
          %v8172 = vld [vmem:[#allocation24 + $0x30] sm:$0xff]
          %v8173 = vld [vmem:[#allocation24 + $0x38] sm:$0xff]
          %v8174 = vld [vmem:[#allocation24 + $0x40] sm:$0xff]
          %v8175 = vld [vmem:[#allocation24 + $0x48] sm:$0xff]
          %v8176 = vld [vmem:[#allocation24 + $0x50] sm:$0xff]
          %v8177 = vld [vmem:[#allocation24 + $0x58] sm:$0xff]
          %v8178 = vld [vmem:[#allocation24 + $0x60] sm:$0xff]
          %v8179 = vld [vmem:[#allocation24 + $0x68] sm:$0xff]
          %v8180 = vld [vmem:[#allocation24 + $0x70] sm:$0xff]
          %v8181 = vld [vmem:[#allocation24 + $0x78] sm:$0xff]
          %v8182 = vld [vmem:[#allocation24 + $0x80] sm:$0xff]
          %v8183 = vld [vmem:[#allocation24 + $0x88] sm:$0xff]
          %v8184 = vld [vmem:[#allocation24 + $0x90] sm:$0xff]
          %v8185 = vld [vmem:[#allocation24 + $0x98] sm:$0xff]
          %v8186 = vld [vmem:[#allocation24 + $0xa0] sm:$0xff]
          %v8187 = vld [vmem:[#allocation24 + $0xa8] sm:$0xff]
          %v8188 = vld [vmem:[#allocation24 + $0xb0] sm:$0xff]
          %v8189 = vld [vmem:[#allocation24 + $0xb8] sm:$0xff]
          %v8190 = vld [vmem:[#allocation24 + $0xc0] sm:$0xff]
          %v8191 = vld [vmem:[#allocation24 + $0xc8] sm:$0xff]
          %v8192 = vld [vmem:[#allocation24 + $0xd0] sm:$0xff]
          %v8193 = vld [vmem:[#allocation24 + $0xd8] sm:$0xff]
          %v8194 = vld [vmem:[#allocation24 + $0xe0] sm:$0xff]
          %v8195 = vld [vmem:[#allocation24 + $0xe8] sm:$0xff]
          %v8196 = vld [vmem:[#allocation24 + $0xf0] sm:$0xff]
          %v8197 = vld [vmem:[#allocation24 + $0xf8] sm:$0xff]
          %v8198 = vld [vmem:[#allocation24 + $0x100] sm:$0xff]
          %v8199 = vld [vmem:[#allocation24 + $0x108] sm:$0xff]
          %v8200 = vld [vmem:[#allocation24 + $0x110] sm:$0xff]
          %v8201 = vld [vmem:[#allocation24 + $0x118] sm:$0xff]
          %v8202 = vld [vmem:[#allocation24 + $0x120] sm:$0xff]
          %v8203 = vld [vmem:[#allocation24 + $0x128] sm:$0xff]
          %v8204 = vld [vmem:[#allocation24 + $0x130] sm:$0xff]
          %v8205 = vld [vmem:[#allocation24 + $0x138] sm:$0xff]
          %v8206 = vld [vmem:[#allocation24 + $0x140] sm:$0xff]
          %v8207 = vld [vmem:[#allocation24 + $0x148] sm:$0xff]
          %v8208 = vld [vmem:[#allocation24 + $0x150] sm:$0xff]
          %v8209 = vld [vmem:[#allocation24 + $0x158] sm:$0xff]
          %v8210 = vld [vmem:[#allocation24 + $0x160] sm:$0xff]
          %v8211 = vld [vmem:[#allocation24 + $0x168] sm:$0xff]
          %v8212 = vld [vmem:[#allocation24 + $0x170] sm:$0xff]
          %v8213 = vld [vmem:[#allocation24 + $0x178] sm:$0xff]
          %v8214 = vld [vmem:[#allocation24 + $0x180] sm:$0xff]
          %v8215 = vld [vmem:[#allocation24 + $0x188] sm:$0xff]
          %v8216 = vld [vmem:[#allocation24 + $0x190] sm:$0xff]
          %v8217 = vld [vmem:[#allocation24 + $0x198] sm:$0xff]
          %v8218 = vld [vmem:[#allocation24 + $0x1a0] sm:$0xff]
          %v8219 = vld [vmem:[#allocation24 + $0x1a8] sm:$0xff]
          %v8220 = vld [vmem:[#allocation24 + $0x1b0] sm:$0xff]
          %v8221 = vld [vmem:[#allocation24 + $0x1b8] sm:$0xff]
          %v8222 = vld [vmem:[#allocation24 + $0x1c0] sm:$0xff]
          %v8223 = vld [vmem:[#allocation24 + $0x1c8] sm:$0xff]
          %v8224 = vld [vmem:[#allocation24 + $0x1d0] sm:$0xff]
          %v8225 = vld [vmem:[#allocation24 + $0x1d8] sm:$0xff]
          %v8226 = vld [vmem:[#allocation24 + $0x1e0] sm:$0xff]
          %v8227 = vld [vmem:[#allocation24 + $0x1e8] sm:$0xff]
          %v8228 = vld [vmem:[#allocation24 + $0x1f0] sm:$0xff]
          %v8229 = vld [vmem:[#allocation24 + $0x1f8] sm:$0xff]
          %v8230 = vld [vmem:[#allocation24 + $0x200] sm:$0xff]
          %v8231 = vld [vmem:[#allocation24 + $0x208] sm:$0xff]
          %v8232 = vld [vmem:[#allocation24 + $0x210] sm:$0xff]
          %v8233 = vld [vmem:[#allocation24 + $0x218] sm:$0xff]
          %v8234 = vld [vmem:[#allocation24 + $0x220] sm:$0xff]
          %v8235 = vld [vmem:[#allocation24 + $0x228] sm:$0xff]
          %v8236 = vld [vmem:[#allocation24 + $0x230] sm:$0xff]
          %v8237 = vld [vmem:[#allocation24 + $0x238] sm:$0xff]
          %v8238 = vld [vmem:[#allocation24 + $0x240] sm:$0xff]
          %v8239 = vld [vmem:[#allocation24 + $0x248] sm:$0xff]
          %v8240 = vld [vmem:[#allocation24 + $0x250] sm:$0xff]
          %v8241 = vld [vmem:[#allocation24 + $0x258] sm:$0xff]
          %v8242 = vld [vmem:[#allocation24 + $0x260] sm:$0xff]
          %v8243 = vld [vmem:[#allocation24 + $0x268] sm:$0xff]
          %v8244 = vld [vmem:[#allocation24 + $0x270] sm:$0xff]
          %v8245 = vld [vmem:[#allocation24 + $0x278] sm:$0xff]
          %v8246 = vld [vmem:[#allocation24 + $0x280] sm:$0xff]
          %v8247 = vld [vmem:[#allocation24 + $0x288] sm:$0xff]
          %v8248 = vld [vmem:[#allocation24 + $0x290] sm:$0xff]
          %v8249 = vld [vmem:[#allocation24 + $0x298] sm:$0xff]
          %v8250 = vld [vmem:[#allocation24 + $0x2a0] sm:$0xff]
          %v8251 = vld [vmem:[#allocation24 + $0x2a8] sm:$0xff]
          %v8252 = vld [vmem:[#allocation24 + $0x2b0] sm:$0xff]
          %v8253 = vld [vmem:[#allocation24 + $0x2b8] sm:$0xff]
          %v8254 = vld [vmem:[#allocation24 + $0x2c0] sm:$0xff]
          %v8255 = vld [vmem:[#allocation24 + $0x2c8] sm:$0xff]
          %v8256 = vld [vmem:[#allocation24 + $0x2d0] sm:$0xff]
          %v8257 = vld [vmem:[#allocation24 + $0x2d8] sm:$0xff]
          %v8258 = vld [vmem:[#allocation24 + $0x2e0] sm:$0xff]
          %v8259 = vld [vmem:[#allocation24 + $0x2e8] sm:$0xff]
          %v8260 = vld [vmem:[#allocation24 + $0x2f0] sm:$0xff]
          %v8261 = vld [vmem:[#allocation24 + $0x2f8] sm:$0xff]
          %v8262 = vld [vmem:[#allocation24 + $0x300] sm:$0xff]
          %v8263 = vld [vmem:[#allocation24 + $0x308] sm:$0xff]
          %v8264 = vld [vmem:[#allocation24 + $0x310] sm:$0xff]
          %v8265 = vld [vmem:[#allocation24 + $0x318] sm:$0xff]
          %v8266 = vld [vmem:[#allocation24 + $0x320] sm:$0xff]
          %v8267 = vld [vmem:[#allocation24 + $0x328] sm:$0xff]
          %v8268 = vld [vmem:[#allocation24 + $0x330] sm:$0xff]
          %v8269 = vld [vmem:[#allocation24 + $0x338] sm:$0xff]
          %v8270 = vld [vmem:[#allocation24 + $0x340] sm:$0xff]
          %v8271 = vld [vmem:[#allocation24 + $0x348] sm:$0xff]
          %v8272 = vld [vmem:[#allocation24 + $0x350] sm:$0xff]
          %v8273 = vld [vmem:[#allocation24 + $0x358] sm:$0xff]
          %v8274 = vld [vmem:[#allocation24 + $0x360] sm:$0xff]
          %v8275 = vld [vmem:[#allocation24 + $0x368] sm:$0xff]
          %v8276 = vld [vmem:[#allocation24 + $0x370] sm:$0xff]
          %v8277 = vld [vmem:[#allocation24 + $0x378] sm:$0xff]
          %v8278 = vld [vmem:[#allocation24 + $0x380] sm:$0xff]
          %v8279 = vld [vmem:[#allocation24 + $0x388] sm:$0xff]
          %v8280 = vld [vmem:[#allocation24 + $0x390] sm:$0xff]
          %v8281 = vld [vmem:[#allocation24 + $0x398] sm:$0xff]
          %v8282 = vld [vmem:[#allocation24 + $0x3a0] sm:$0xff]
          %v8283 = vld [vmem:[#allocation24 + $0x3a8] sm:$0xff]
          %v8284 = vld [vmem:[#allocation24 + $0x3b0] sm:$0xff]
          %v8285 = vld [vmem:[#allocation24 + $0x3b8] sm:$0xff]
          %v8286 = vld [vmem:[#allocation24 + $0x3c0] sm:$0xff]
          %v8287 = vld [vmem:[#allocation24 + $0x3c8] sm:$0xff]
          %v8288 = vld [vmem:[#allocation24 + $0x3d0] sm:$0xff]
          %v8289 = vld [vmem:[#allocation24 + $0x3d8] sm:$0xff]
          %v8290 = vld [vmem:[#allocation24 + $0x3e0] sm:$0xff]
          %v8291 = vld [vmem:[#allocation24 + $0x3e8] sm:$0xff]
          %v8292 = vld [vmem:[#allocation24 + $0x3f0] sm:$0xff]
          %v8293 = vld [vmem:[#allocation24 + $0x3f8] sm:$0xff]
          %v8294 = vld [vmem:[#allocation24 + $0x400] sm:$0xff]
          %v8295 = vld [vmem:[#allocation24 + $0x408] sm:$0xff]
          %v8296 = vld [vmem:[#allocation24 + $0x410] sm:$0xff]
          %v8297 = vld [vmem:[#allocation24 + $0x418] sm:$0xff]
          %v8298 = vld [vmem:[#allocation24 + $0x420] sm:$0xff]
          %v8299 = vld [vmem:[#allocation24 + $0x428] sm:$0xff]
          %v8300 = vld [vmem:[#allocation24 + $0x430] sm:$0xff]
          %v8301 = vld [vmem:[#allocation24 + $0x438] sm:$0xff]
          %v8302 = vld [vmem:[#allocation24 + $0x440] sm:$0xff]
          %v8303 = vld [vmem:[#allocation24 + $0x448] sm:$0xff]
          %v8304 = vld [vmem:[#allocation24 + $0x450] sm:$0xff]
          %v8305 = vld [vmem:[#allocation24 + $0x458] sm:$0xff]
          %v8306 = vld [vmem:[#allocation24 + $0x460] sm:$0xff]
          %v8307 = vld [vmem:[#allocation24 + $0x468] sm:$0xff]
          %v8308 = vld [vmem:[#allocation24 + $0x470] sm:$0xff]
          %v8309 = vld [vmem:[#allocation24 + $0x478] sm:$0xff]
          %v8310 = vld [vmem:[#allocation24 + $0x480] sm:$0xff]
          %v8311 = vld [vmem:[#allocation24 + $0x488] sm:$0xff]
          %v8312 = vld [vmem:[#allocation24 + $0x490] sm:$0xff]
          %v8313 = vld [vmem:[#allocation24 + $0x498] sm:$0xff]
          %v8314 = vld [vmem:[#allocation24 + $0x4a0] sm:$0xff]
          %v8315 = vld [vmem:[#allocation24 + $0x4a8] sm:$0xff]
          %v8316 = vld [vmem:[#allocation24 + $0x4b0] sm:$0xff]
          %v8317 = vld [vmem:[#allocation24 + $0x4b8] sm:$0xff]
          %v8318 = vld [vmem:[#allocation24 + $0x4c0] sm:$0xff]
          %v8319 = vld [vmem:[#allocation24 + $0x4c8] sm:$0xff]
          %v8320 = vld [vmem:[#allocation24 + $0x4d0] sm:$0xff]
          %v8321 = vld [vmem:[#allocation24 + $0x4d8] sm:$0xff]
          %v8322 = vld [vmem:[#allocation24 + $0x4e0] sm:$0xff]
          %v8323 = vld [vmem:[#allocation24 + $0x4e8] sm:$0xff]
          %v8324 = vld [vmem:[#allocation24 + $0x4f0] sm:$0xff]
          %v8325 = vld [vmem:[#allocation24 + $0x4f8] sm:$0xff]
          %v8326 = vld [vmem:[#allocation24 + $0x500] sm:$0xff]
          %v8327 = vld [vmem:[#allocation24 + $0x508] sm:$0xff]
          %v8328 = vld [vmem:[#allocation24 + $0x510] sm:$0xff]
          %v8329 = vld [vmem:[#allocation24 + $0x518] sm:$0xff]
          %v8330 = vld [vmem:[#allocation24 + $0x520] sm:$0xff]
          %v8331 = vld [vmem:[#allocation24 + $0x528] sm:$0xff]
          %v8332 = vld [vmem:[#allocation24 + $0x530] sm:$0xff]
          %v8333 = vld [vmem:[#allocation24 + $0x538] sm:$0xff]
          %v8334 = vld [vmem:[#allocation24 + $0x540] sm:$0xff]
          %v8335 = vld [vmem:[#allocation24 + $0x548] sm:$0xff]
          %v8336 = vld [vmem:[#allocation24 + $0x550] sm:$0xff]
          %v8337 = vld [vmem:[#allocation24 + $0x558] sm:$0xff]
          %v8338 = vld [vmem:[#allocation24 + $0x560] sm:$0xff]
          %v8339 = vld [vmem:[#allocation24 + $0x568] sm:$0xff]
          %v8340 = vld [vmem:[#allocation24 + $0x570] sm:$0xff]
          %v8341 = vld [vmem:[#allocation24 + $0x578] sm:$0xff]
          %v8342 = vld [vmem:[#allocation24 + $0x580] sm:$0xff]
          %v8343 = vld [vmem:[#allocation24 + $0x588] sm:$0xff]
          %v8344 = vld [vmem:[#allocation24 + $0x590] sm:$0xff]
          %v8345 = vld [vmem:[#allocation24 + $0x598] sm:$0xff]
          %v8346 = vld [vmem:[#allocation24 + $0x5a0] sm:$0xff]
          %v8347 = vld [vmem:[#allocation24 + $0x5a8] sm:$0xff]
          %v8348 = vld [vmem:[#allocation24 + $0x5b0] sm:$0xff]
          %v8349 = vld [vmem:[#allocation24 + $0x5b8] sm:$0xff]
          %v8350 = vld [vmem:[#allocation24 + $0x5c0] sm:$0xff]
          %v8351 = vld [vmem:[#allocation24 + $0x5c8] sm:$0xff]
          %v8352 = vld [vmem:[#allocation24 + $0x5d0] sm:$0xff]
          %v8353 = vld [vmem:[#allocation24 + $0x5d8] sm:$0xff]
          %v8354 = vld [vmem:[#allocation24 + $0x5e0] sm:$0xff]
          %v8355 = vld [vmem:[#allocation24 + $0x5e8] sm:$0xff]
          %v8356 = vld [vmem:[#allocation24 + $0x5f0] sm:$0xff]
          %v8357 = vld [vmem:[#allocation24 + $0x5f8] sm:$0xff]
          %v8358 = vld [vmem:[#allocation24 + $0x600] sm:$0xff]
          %v8359 = vld [vmem:[#allocation24 + $0x608] sm:$0xff]
          %v8360 = vld [vmem:[#allocation24 + $0x610] sm:$0xff]
          %v8361 = vld [vmem:[#allocation24 + $0x618] sm:$0xff]
          %v8362 = vld [vmem:[#allocation24 + $0x620] sm:$0xff]
          %v8363 = vld [vmem:[#allocation24 + $0x628] sm:$0xff]
          %v8364 = vld [vmem:[#allocation24 + $0x630] sm:$0xff]
          %v8365 = vld [vmem:[#allocation24 + $0x638] sm:$0xff]
          %v8366 = vld [vmem:[#allocation24 + $0x640] sm:$0xff]
          %v8367 = vld [vmem:[#allocation24 + $0x648] sm:$0xff]
          %v8368 = vld [vmem:[#allocation24 + $0x650] sm:$0xff]
          %v8369 = vld [vmem:[#allocation24 + $0x658] sm:$0xff]
          %v8370 = vld [vmem:[#allocation24 + $0x660] sm:$0xff]
          %v8371 = vld [vmem:[#allocation24 + $0x668] sm:$0xff]
          %v8372 = vld [vmem:[#allocation24 + $0x670] sm:$0xff]
          %v8373 = vld [vmem:[#allocation24 + $0x678] sm:$0xff]
          %v8374 = vld [vmem:[#allocation24 + $0x680] sm:$0xff]
          %v8375 = vld [vmem:[#allocation24 + $0x688] sm:$0xff]
          %v8376 = vld [vmem:[#allocation24 + $0x690] sm:$0xff]
          %v8377 = vld [vmem:[#allocation24 + $0x698] sm:$0xff]
          %v8378 = vld [vmem:[#allocation24 + $0x6a0] sm:$0xff]
          %v8379 = vld [vmem:[#allocation24 + $0x6a8] sm:$0xff]
          %v8380 = vld [vmem:[#allocation24 + $0x6b0] sm:$0xff]
          %v8381 = vld [vmem:[#allocation24 + $0x6b8] sm:$0xff]
          %v8382 = vld [vmem:[#allocation24 + $0x6c0] sm:$0xff]
          %v8383 = vld [vmem:[#allocation24 + $0x6c8] sm:$0xff]
          %v8384 = vld [vmem:[#allocation24 + $0x6d0] sm:$0xff]
          %v8385 = vld [vmem:[#allocation24 + $0x6d8] sm:$0xff]
          %v8386 = vld [vmem:[#allocation24 + $0x6e0] sm:$0xff]
          %v8387 = vld [vmem:[#allocation24 + $0x6e8] sm:$0xff]
          %v8388 = vld [vmem:[#allocation24 + $0x6f0] sm:$0xff]
          %v8389 = vld [vmem:[#allocation24 + $0x6f8] sm:$0xff]
          %v8390 = vld [vmem:[#allocation24 + $0x700] sm:$0xff]
          %v8391 = vld [vmem:[#allocation24 + $0x708] sm:$0xff]
          %v8392 = vld [vmem:[#allocation24 + $0x710] sm:$0xff]
          %v8393 = vld [vmem:[#allocation24 + $0x718] sm:$0xff]
          %v8394 = vld [vmem:[#allocation24 + $0x720] sm:$0xff]
          %v8395 = vld [vmem:[#allocation24 + $0x728] sm:$0xff]
          %v8396 = vld [vmem:[#allocation24 + $0x730] sm:$0xff]
          %v8397 = vld [vmem:[#allocation24 + $0x738] sm:$0xff]
          %v8398 = vld [vmem:[#allocation24 + $0x740] sm:$0xff]
          %v8399 = vld [vmem:[#allocation24 + $0x748] sm:$0xff]
          %v8400 = vld [vmem:[#allocation24 + $0x750] sm:$0xff]
          %v8401 = vld [vmem:[#allocation24 + $0x758] sm:$0xff]
          %v8402 = vld [vmem:[#allocation24 + $0x760] sm:$0xff]
          %v8403 = vld [vmem:[#allocation24 + $0x768] sm:$0xff]
          %v8404 = vld [vmem:[#allocation24 + $0x770] sm:$0xff]
          %v8405 = vld [vmem:[#allocation24 + $0x778] sm:$0xff]
          %v8406 = vld [vmem:[#allocation24 + $0x780] sm:$0xff]
          %v8407 = vld [vmem:[#allocation24 + $0x788] sm:$0xff]
          %v8408 = vld [vmem:[#allocation24 + $0x790] sm:$0xff]
          %v8409 = vld [vmem:[#allocation24 + $0x798] sm:$0xff]
          %v8410 = vld [vmem:[#allocation24 + $0x7a0] sm:$0xff]
          %v8411 = vld [vmem:[#allocation24 + $0x7a8] sm:$0xff]
          %v8412 = vld [vmem:[#allocation24 + $0x7b0] sm:$0xff]
          %v8413 = vld [vmem:[#allocation24 + $0x7b8] sm:$0xff]
          %v8414 = vld [vmem:[#allocation24 + $0x7c0] sm:$0xff]
          %v8415 = vld [vmem:[#allocation24 + $0x7c8] sm:$0xff]
          %v8416 = vld [vmem:[#allocation24 + $0x7d0] sm:$0xff]
          %v8417 = vld [vmem:[#allocation24 + $0x7d8] sm:$0xff]
          %v8418 = vld [vmem:[#allocation24 + $0x7e0] sm:$0xff]
          %v8419 = vld [vmem:[#allocation24 + $0x7e8] sm:$0xff]
          %v8420 = vld [vmem:[#allocation24 + $0x7f0] sm:$0xff]
          %v8421 = vld [vmem:[#allocation24 + $0x7f8] sm:$0xff]
          %v8422 = vld [vmem:[#allocation25] sm:$0xff]
          %v8424 = vlaneseq
          %v8425 = vshrl.u32 %v8424, 7
          %v8426 = vsub.s32 0, %v8425
          %v8427 = vrot.slane %v8422, %v8426
          %v8428 = vlaneseq
          %v8429 = vshrl.u32 %v8428, 7
          %v8430 = vsub.s32 1, %v8429
          %v8431 = vrot.slane %v8422, %v8430
          %v8432 = vlaneseq
          %v8433 = vshrl.u32 %v8432, 7
          %v8434 = vsub.s32 2, %v8433
          %v8435 = vrot.slane %v8422, %v8434
          %v8436 = vlaneseq
          %v8437 = vshrl.u32 %v8436, 7
          %v8438 = vsub.s32 3, %v8437
          %v8439 = vrot.slane %v8422, %v8438
          %v8440 = vlaneseq
          %v8441 = vshrl.u32 %v8440, 7
          %v8442 = vsub.s32 4, %v8441
          %v8443 = vrot.slane %v8422, %v8442
          %v8444 = vlaneseq
          %v8445 = vshrl.u32 %v8444, 7
          %v8446 = vsub.s32 5, %v8445
          %v8447 = vrot.slane %v8422, %v8446
          %v8448 = vlaneseq
          %v8449 = vshrl.u32 %v8448, 7
          %v8450 = vsub.s32 6, %v8449
          %v8451 = vrot.slane %v8422, %v8450
          %v8452 = vlaneseq
          %v8453 = vshrl.u32 %v8452, 7
          %v8454 = vsub.s32 7, %v8453
          %v8455 = vrot.slane %v8422, %v8454
          %v8720 = vunpack.c.l.b16 %v8166
          %v8721 = vunpack.c.h.b16 %v8166
          %v8722 = vunpack.c.l.b16 %v8167
          %v8723 = vunpack.c.h.b16 %v8167
          %v8724 = vunpack.c.l.b16 %v8168
          %v8725 = vunpack.c.h.b16 %v8168
          %v8726 = vunpack.c.l.b16 %v8169
          %v8727 = vunpack.c.h.b16 %v8169
          %v8728 = vunpack.c.l.b16 %v8170
          %v8729 = vunpack.c.h.b16 %v8170
          %v8730 = vunpack.c.l.b16 %v8171
          %v8731 = vunpack.c.h.b16 %v8171
          %v8732 = vunpack.c.l.b16 %v8172
          %v8733 = vunpack.c.h.b16 %v8172
          %v8734 = vunpack.c.l.b16 %v8173
          %v8735 = vunpack.c.h.b16 %v8173
          %v8736 = vunpack.c.l.b16 %v8174
          %v8737 = vunpack.c.h.b16 %v8174
          %v8738 = vunpack.c.l.b16 %v8175
          %v8739 = vunpack.c.h.b16 %v8175
          %v8740 = vunpack.c.l.b16 %v8176
          %v8741 = vunpack.c.h.b16 %v8176
          %v8742 = vunpack.c.l.b16 %v8177
          %v8743 = vunpack.c.h.b16 %v8177
          %v8744 = vunpack.c.l.b16 %v8178
          %v8745 = vunpack.c.h.b16 %v8178
          %v8746 = vunpack.c.l.b16 %v8179
          %v8747 = vunpack.c.h.b16 %v8179
          %v8748 = vunpack.c.l.b16 %v8180
          %v8749 = vunpack.c.h.b16 %v8180
          %v8750 = vunpack.c.l.b16 %v8181
          %v8751 = vunpack.c.h.b16 %v8181
          %v8752 = vunpack.c.l.b16 %v8182
          %v8753 = vunpack.c.h.b16 %v8182
          %v8754 = vunpack.c.l.b16 %v8183
          %v8755 = vunpack.c.h.b16 %v8183
          %v8756 = vunpack.c.l.b16 %v8184
          %v8757 = vunpack.c.h.b16 %v8184
          %v8758 = vunpack.c.l.b16 %v8185
          %v8759 = vunpack.c.h.b16 %v8185
          %v8760 = vunpack.c.l.b16 %v8186
          %v8761 = vunpack.c.h.b16 %v8186
          %v8762 = vunpack.c.l.b16 %v8187
          %v8763 = vunpack.c.h.b16 %v8187
          %v8764 = vunpack.c.l.b16 %v8188
          %v8765 = vunpack.c.h.b16 %v8188
          %v8766 = vunpack.c.l.b16 %v8189
          %v8767 = vunpack.c.h.b16 %v8189
          %v8768 = vunpack.c.l.b16 %v8190
          %v8769 = vunpack.c.h.b16 %v8190
          %v8770 = vunpack.c.l.b16 %v8191
          %v8771 = vunpack.c.h.b16 %v8191
          %v8772 = vunpack.c.l.b16 %v8192
          %v8773 = vunpack.c.h.b16 %v8192
          %v8774 = vunpack.c.l.b16 %v8193
          %v8775 = vunpack.c.h.b16 %v8193
          %v8776 = vunpack.c.l.b16 %v8194
          %v8777 = vunpack.c.h.b16 %v8194
          %v8778 = vunpack.c.l.b16 %v8195
          %v8779 = vunpack.c.h.b16 %v8195
          %v8780 = vunpack.c.l.b16 %v8196
          %v8781 = vunpack.c.h.b16 %v8196
          %v8782 = vunpack.c.l.b16 %v8197
          %v8783 = vunpack.c.h.b16 %v8197
          %v8784 = vunpack.c.l.b16 %v8198
          %v8785 = vunpack.c.h.b16 %v8198
          %v8786 = vunpack.c.l.b16 %v8199
          %v8787 = vunpack.c.h.b16 %v8199
          %v8788 = vunpack.c.l.b16 %v8200
          %v8789 = vunpack.c.h.b16 %v8200
          %v8790 = vunpack.c.l.b16 %v8201
          %v8791 = vunpack.c.h.b16 %v8201
          %v8792 = vunpack.c.l.b16 %v8202
          %v8793 = vunpack.c.h.b16 %v8202
          %v8794 = vunpack.c.l.b16 %v8203
          %v8795 = vunpack.c.h.b16 %v8203
          %v8796 = vunpack.c.l.b16 %v8204
          %v8797 = vunpack.c.h.b16 %v8204
          %v8798 = vunpack.c.l.b16 %v8205
          %v8799 = vunpack.c.h.b16 %v8205
          %v8800 = vunpack.c.l.b16 %v8206
          %v8801 = vunpack.c.h.b16 %v8206
          %v8802 = vunpack.c.l.b16 %v8207
          %v8803 = vunpack.c.h.b16 %v8207
          %v8804 = vunpack.c.l.b16 %v8208
          %v8805 = vunpack.c.h.b16 %v8208
          %v8806 = vunpack.c.l.b16 %v8209
          %v8807 = vunpack.c.h.b16 %v8209
          %v8808 = vunpack.c.l.b16 %v8210
          %v8809 = vunpack.c.h.b16 %v8210
          %v8810 = vunpack.c.l.b16 %v8211
          %v8811 = vunpack.c.h.b16 %v8211
          %v8812 = vunpack.c.l.b16 %v8212
          %v8813 = vunpack.c.h.b16 %v8212
          %v8814 = vunpack.c.l.b16 %v8213
          %v8815 = vunpack.c.h.b16 %v8213
          %v8816 = vunpack.c.l.b16 %v8214
          %v8817 = vunpack.c.h.b16 %v8214
          %v8818 = vunpack.c.l.b16 %v8215
          %v8819 = vunpack.c.h.b16 %v8215
          %v8820 = vunpack.c.l.b16 %v8216
          %v8821 = vunpack.c.h.b16 %v8216
          %v8822 = vunpack.c.l.b16 %v8217
          %v8823 = vunpack.c.h.b16 %v8217
          %v8824 = vunpack.c.l.b16 %v8218
          %v8825 = vunpack.c.h.b16 %v8218
          %v8826 = vunpack.c.l.b16 %v8219
          %v8827 = vunpack.c.h.b16 %v8219
          %v8828 = vunpack.c.l.b16 %v8220
          %v8829 = vunpack.c.h.b16 %v8220
          %v8830 = vunpack.c.l.b16 %v8221
          %v8831 = vunpack.c.h.b16 %v8221
          %v8832 = vunpack.c.l.b16 %v8222
          %v8833 = vunpack.c.h.b16 %v8222
          %v8834 = vunpack.c.l.b16 %v8223
          %v8835 = vunpack.c.h.b16 %v8223
          %v8836 = vunpack.c.l.b16 %v8224
          %v8837 = vunpack.c.h.b16 %v8224
          %v8838 = vunpack.c.l.b16 %v8225
          %v8839 = vunpack.c.h.b16 %v8225
          %v8840 = vunpack.c.l.b16 %v8226
          %v8841 = vunpack.c.h.b16 %v8226
          %v8842 = vunpack.c.l.b16 %v8227
          %v8843 = vunpack.c.h.b16 %v8227
          %v8844 = vunpack.c.l.b16 %v8228
          %v8845 = vunpack.c.h.b16 %v8228
          %v8846 = vunpack.c.l.b16 %v8229
          %v8847 = vunpack.c.h.b16 %v8229
          %v8848 = vunpack.c.l.b16 %v8230
          %v8849 = vunpack.c.h.b16 %v8230
          %v8850 = vunpack.c.l.b16 %v8231
          %v8851 = vunpack.c.h.b16 %v8231
          %v8852 = vunpack.c.l.b16 %v8232
          %v8853 = vunpack.c.h.b16 %v8232
          %v8854 = vunpack.c.l.b16 %v8233
          %v8855 = vunpack.c.h.b16 %v8233
          %v8856 = vunpack.c.l.b16 %v8234
          %v8857 = vunpack.c.h.b16 %v8234
          %v8858 = vunpack.c.l.b16 %v8235
          %v8859 = vunpack.c.h.b16 %v8235
          %v8860 = vunpack.c.l.b16 %v8236
          %v8861 = vunpack.c.h.b16 %v8236
          %v8862 = vunpack.c.l.b16 %v8237
          %v8863 = vunpack.c.h.b16 %v8237
          %v8864 = vunpack.c.l.b16 %v8238
          %v8865 = vunpack.c.h.b16 %v8238
          %v8866 = vunpack.c.l.b16 %v8239
          %v8867 = vunpack.c.h.b16 %v8239
          %v8868 = vunpack.c.l.b16 %v8240
          %v8869 = vunpack.c.h.b16 %v8240
          %v8870 = vunpack.c.l.b16 %v8241
          %v8871 = vunpack.c.h.b16 %v8241
          %v8872 = vunpack.c.l.b16 %v8242
          %v8873 = vunpack.c.h.b16 %v8242
          %v8874 = vunpack.c.l.b16 %v8243
          %v8875 = vunpack.c.h.b16 %v8243
          %v8876 = vunpack.c.l.b16 %v8244
          %v8877 = vunpack.c.h.b16 %v8244
          %v8878 = vunpack.c.l.b16 %v8245
          %v8879 = vunpack.c.h.b16 %v8245
          %v8880 = vunpack.c.l.b16 %v8246
          %v8881 = vunpack.c.h.b16 %v8246
          %v8882 = vunpack.c.l.b16 %v8247
          %v8883 = vunpack.c.h.b16 %v8247
          %v8884 = vunpack.c.l.b16 %v8248
          %v8885 = vunpack.c.h.b16 %v8248
          %v8886 = vunpack.c.l.b16 %v8249
          %v8887 = vunpack.c.h.b16 %v8249
          %v8888 = vunpack.c.l.b16 %v8250
          %v8889 = vunpack.c.h.b16 %v8250
          %v8890 = vunpack.c.l.b16 %v8251
          %v8891 = vunpack.c.h.b16 %v8251
          %v8892 = vunpack.c.l.b16 %v8252
          %v8893 = vunpack.c.h.b16 %v8252
          %v8894 = vunpack.c.l.b16 %v8253
          %v8895 = vunpack.c.h.b16 %v8253
          %v8896 = vunpack.c.l.b16 %v8254
          %v8897 = vunpack.c.h.b16 %v8254
          %v8898 = vunpack.c.l.b16 %v8255
          %v8899 = vunpack.c.h.b16 %v8255
          %v8900 = vunpack.c.l.b16 %v8256
          %v8901 = vunpack.c.h.b16 %v8256
          %v8902 = vunpack.c.l.b16 %v8257
          %v8903 = vunpack.c.h.b16 %v8257
          %v8904 = vunpack.c.l.b16 %v8258
          %v8905 = vunpack.c.h.b16 %v8258
          %v8906 = vunpack.c.l.b16 %v8259
          %v8907 = vunpack.c.h.b16 %v8259
          %v8908 = vunpack.c.l.b16 %v8260
          %v8909 = vunpack.c.h.b16 %v8260
          %v8910 = vunpack.c.l.b16 %v8261
          %v8911 = vunpack.c.h.b16 %v8261
          %v8912 = vunpack.c.l.b16 %v8262
          %v8913 = vunpack.c.h.b16 %v8262
          %v8914 = vunpack.c.l.b16 %v8263
          %v8915 = vunpack.c.h.b16 %v8263
          %v8916 = vunpack.c.l.b16 %v8264
          %v8917 = vunpack.c.h.b16 %v8264
          %v8918 = vunpack.c.l.b16 %v8265
          %v8919 = vunpack.c.h.b16 %v8265
          %v8920 = vunpack.c.l.b16 %v8266
          %v8921 = vunpack.c.h.b16 %v8266
          %v8922 = vunpack.c.l.b16 %v8267
          %v8923 = vunpack.c.h.b16 %v8267
          %v8924 = vunpack.c.l.b16 %v8268
          %v8925 = vunpack.c.h.b16 %v8268
          %v8926 = vunpack.c.l.b16 %v8269
          %v8927 = vunpack.c.h.b16 %v8269
          %v8928 = vunpack.c.l.b16 %v8270
          %v8929 = vunpack.c.h.b16 %v8270
          %v8930 = vunpack.c.l.b16 %v8271
          %v8931 = vunpack.c.h.b16 %v8271
          %v8932 = vunpack.c.l.b16 %v8272
          %v8933 = vunpack.c.h.b16 %v8272
          %v8934 = vunpack.c.l.b16 %v8273
          %v8935 = vunpack.c.h.b16 %v8273
          %v8936 = vunpack.c.l.b16 %v8274
          %v8937 = vunpack.c.h.b16 %v8274
          %v8938 = vunpack.c.l.b16 %v8275
          %v8939 = vunpack.c.h.b16 %v8275
          %v8940 = vunpack.c.l.b16 %v8276
          %v8941 = vunpack.c.h.b16 %v8276
          %v8942 = vunpack.c.l.b16 %v8277
          %v8943 = vunpack.c.h.b16 %v8277
          %v8944 = vunpack.c.l.b16 %v8278
          %v8945 = vunpack.c.h.b16 %v8278
          %v8946 = vunpack.c.l.b16 %v8279
          %v8947 = vunpack.c.h.b16 %v8279
          %v8948 = vunpack.c.l.b16 %v8280
          %v8949 = vunpack.c.h.b16 %v8280
          %v8950 = vunpack.c.l.b16 %v8281
          %v8951 = vunpack.c.h.b16 %v8281
          %v8952 = vunpack.c.l.b16 %v8282
          %v8953 = vunpack.c.h.b16 %v8282
          %v8954 = vunpack.c.l.b16 %v8283
          %v8955 = vunpack.c.h.b16 %v8283
          %v8956 = vunpack.c.l.b16 %v8284
          %v8957 = vunpack.c.h.b16 %v8284
          %v8958 = vunpack.c.l.b16 %v8285
          %v8959 = vunpack.c.h.b16 %v8285
          %v8960 = vunpack.c.l.b16 %v8286
          %v8961 = vunpack.c.h.b16 %v8286
          %v8962 = vunpack.c.l.b16 %v8287
          %v8963 = vunpack.c.h.b16 %v8287
          %v8964 = vunpack.c.l.b16 %v8288
          %v8965 = vunpack.c.h.b16 %v8288
          %v8966 = vunpack.c.l.b16 %v8289
          %v8967 = vunpack.c.h.b16 %v8289
          %v8968 = vunpack.c.l.b16 %v8290
          %v8969 = vunpack.c.h.b16 %v8290
          %v8970 = vunpack.c.l.b16 %v8291
          %v8971 = vunpack.c.h.b16 %v8291
          %v8972 = vunpack.c.l.b16 %v8292
          %v8973 = vunpack.c.h.b16 %v8292
          %v8974 = vunpack.c.l.b16 %v8293
          %v8975 = vunpack.c.h.b16 %v8293
          %v8976 = vunpack.c.l.b16 %v8294
          %v8977 = vunpack.c.h.b16 %v8294
          %v8978 = vunpack.c.l.b16 %v8295
          %v8979 = vunpack.c.h.b16 %v8295
          %v8980 = vunpack.c.l.b16 %v8296
          %v8981 = vunpack.c.h.b16 %v8296
          %v8982 = vunpack.c.l.b16 %v8297
          %v8983 = vunpack.c.h.b16 %v8297
          %v8984 = vunpack.c.l.b16 %v8298
          %v8985 = vunpack.c.h.b16 %v8298
          %v8986 = vunpack.c.l.b16 %v8299
          %v8987 = vunpack.c.h.b16 %v8299
          %v8988 = vunpack.c.l.b16 %v8300
          %v8989 = vunpack.c.h.b16 %v8300
          %v8990 = vunpack.c.l.b16 %v8301
          %v8991 = vunpack.c.h.b16 %v8301
          %v8992 = vunpack.c.l.b16 %v8302
          %v8993 = vunpack.c.h.b16 %v8302
          %v8994 = vunpack.c.l.b16 %v8303
          %v8995 = vunpack.c.h.b16 %v8303
          %v8996 = vunpack.c.l.b16 %v8304
          %v8997 = vunpack.c.h.b16 %v8304
          %v8998 = vunpack.c.l.b16 %v8305
          %v8999 = vunpack.c.h.b16 %v8305
          %v9000 = vunpack.c.l.b16 %v8306
          %v9001 = vunpack.c.h.b16 %v8306
          %v9002 = vunpack.c.l.b16 %v8307
          %v9003 = vunpack.c.h.b16 %v8307
          %v9004 = vunpack.c.l.b16 %v8308
          %v9005 = vunpack.c.h.b16 %v8308
          %v9006 = vunpack.c.l.b16 %v8309
          %v9007 = vunpack.c.h.b16 %v8309
          %v9008 = vunpack.c.l.b16 %v8310
          %v9009 = vunpack.c.h.b16 %v8310
          %v9010 = vunpack.c.l.b16 %v8311
          %v9011 = vunpack.c.h.b16 %v8311
          %v9012 = vunpack.c.l.b16 %v8312
          %v9013 = vunpack.c.h.b16 %v8312
          %v9014 = vunpack.c.l.b16 %v8313
          %v9015 = vunpack.c.h.b16 %v8313
          %v9016 = vunpack.c.l.b16 %v8314
          %v9017 = vunpack.c.h.b16 %v8314
          %v9018 = vunpack.c.l.b16 %v8315
          %v9019 = vunpack.c.h.b16 %v8315
          %v9020 = vunpack.c.l.b16 %v8316
          %v9021 = vunpack.c.h.b16 %v8316
          %v9022 = vunpack.c.l.b16 %v8317
          %v9023 = vunpack.c.h.b16 %v8317
          %v9024 = vunpack.c.l.b16 %v8318
          %v9025 = vunpack.c.h.b16 %v8318
          %v9026 = vunpack.c.l.b16 %v8319
          %v9027 = vunpack.c.h.b16 %v8319
          %v9028 = vunpack.c.l.b16 %v8320
          %v9029 = vunpack.c.h.b16 %v8320
          %v9030 = vunpack.c.l.b16 %v8321
          %v9031 = vunpack.c.h.b16 %v8321
          %v9032 = vunpack.c.l.b16 %v8322
          %v9033 = vunpack.c.h.b16 %v8322
          %v9034 = vunpack.c.l.b16 %v8323
          %v9035 = vunpack.c.h.b16 %v8323
          %v9036 = vunpack.c.l.b16 %v8324
          %v9037 = vunpack.c.h.b16 %v8324
          %v9038 = vunpack.c.l.b16 %v8325
          %v9039 = vunpack.c.h.b16 %v8325
          %v9040 = vunpack.c.l.b16 %v8326
          %v9041 = vunpack.c.h.b16 %v8326
          %v9042 = vunpack.c.l.b16 %v8327
          %v9043 = vunpack.c.h.b16 %v8327
          %v9044 = vunpack.c.l.b16 %v8328
          %v9045 = vunpack.c.h.b16 %v8328
          %v9046 = vunpack.c.l.b16 %v8329
          %v9047 = vunpack.c.h.b16 %v8329
          %v9048 = vunpack.c.l.b16 %v8330
          %v9049 = vunpack.c.h.b16 %v8330
          %v9050 = vunpack.c.l.b16 %v8331
          %v9051 = vunpack.c.h.b16 %v8331
          %v9052 = vunpack.c.l.b16 %v8332
          %v9053 = vunpack.c.h.b16 %v8332
          %v9054 = vunpack.c.l.b16 %v8333
          %v9055 = vunpack.c.h.b16 %v8333
          %v9056 = vunpack.c.l.b16 %v8334
          %v9057 = vunpack.c.h.b16 %v8334
          %v9058 = vunpack.c.l.b16 %v8335
          %v9059 = vunpack.c.h.b16 %v8335
          %v9060 = vunpack.c.l.b16 %v8336
          %v9061 = vunpack.c.h.b16 %v8336
          %v9062 = vunpack.c.l.b16 %v8337
          %v9063 = vunpack.c.h.b16 %v8337
          %v9064 = vunpack.c.l.b16 %v8338
          %v9065 = vunpack.c.h.b16 %v8338
          %v9066 = vunpack.c.l.b16 %v8339
          %v9067 = vunpack.c.h.b16 %v8339
          %v9068 = vunpack.c.l.b16 %v8340
          %v9069 = vunpack.c.h.b16 %v8340
          %v9070 = vunpack.c.l.b16 %v8341
          %v9071 = vunpack.c.h.b16 %v8341
          %v9072 = vunpack.c.l.b16 %v8342
          %v9073 = vunpack.c.h.b16 %v8342
          %v9074 = vunpack.c.l.b16 %v8343
          %v9075 = vunpack.c.h.b16 %v8343
          %v9076 = vunpack.c.l.b16 %v8344
          %v9077 = vunpack.c.h.b16 %v8344
          %v9078 = vunpack.c.l.b16 %v8345
          %v9079 = vunpack.c.h.b16 %v8345
          %v9080 = vunpack.c.l.b16 %v8346
          %v9081 = vunpack.c.h.b16 %v8346
          %v9082 = vunpack.c.l.b16 %v8347
          %v9083 = vunpack.c.h.b16 %v8347
          %v9084 = vunpack.c.l.b16 %v8348
          %v9085 = vunpack.c.h.b16 %v8348
          %v9086 = vunpack.c.l.b16 %v8349
          %v9087 = vunpack.c.h.b16 %v8349
          %v9088 = vunpack.c.l.b16 %v8350
          %v9089 = vunpack.c.h.b16 %v8350
          %v9090 = vunpack.c.l.b16 %v8351
          %v9091 = vunpack.c.h.b16 %v8351
          %v9092 = vunpack.c.l.b16 %v8352
          %v9093 = vunpack.c.h.b16 %v8352
          %v9094 = vunpack.c.l.b16 %v8353
          %v9095 = vunpack.c.h.b16 %v8353
          %v9096 = vunpack.c.l.b16 %v8354
          %v9097 = vunpack.c.h.b16 %v8354
          %v9098 = vunpack.c.l.b16 %v8355
          %v9099 = vunpack.c.h.b16 %v8355
          %v9100 = vunpack.c.l.b16 %v8356
          %v9101 = vunpack.c.h.b16 %v8356
          %v9102 = vunpack.c.l.b16 %v8357
          %v9103 = vunpack.c.h.b16 %v8357
          %v9104 = vunpack.c.l.b16 %v8358
          %v9105 = vunpack.c.h.b16 %v8358
          %v9106 = vunpack.c.l.b16 %v8359
          %v9107 = vunpack.c.h.b16 %v8359
          %v9108 = vunpack.c.l.b16 %v8360
          %v9109 = vunpack.c.h.b16 %v8360
          %v9110 = vunpack.c.l.b16 %v8361
          %v9111 = vunpack.c.h.b16 %v8361
          %v9112 = vunpack.c.l.b16 %v8362
          %v9113 = vunpack.c.h.b16 %v8362
          %v9114 = vunpack.c.l.b16 %v8363
          %v9115 = vunpack.c.h.b16 %v8363
          %v9116 = vunpack.c.l.b16 %v8364
          %v9117 = vunpack.c.h.b16 %v8364
          %v9118 = vunpack.c.l.b16 %v8365
          %v9119 = vunpack.c.h.b16 %v8365
          %v9120 = vunpack.c.l.b16 %v8366
          %v9121 = vunpack.c.h.b16 %v8366
          %v9122 = vunpack.c.l.b16 %v8367
          %v9123 = vunpack.c.h.b16 %v8367
          %v9124 = vunpack.c.l.b16 %v8368
          %v9125 = vunpack.c.h.b16 %v8368
          %v9126 = vunpack.c.l.b16 %v8369
          %v9127 = vunpack.c.h.b16 %v8369
          %v9128 = vunpack.c.l.b16 %v8370
          %v9129 = vunpack.c.h.b16 %v8370
          %v9130 = vunpack.c.l.b16 %v8371
          %v9131 = vunpack.c.h.b16 %v8371
          %v9132 = vunpack.c.l.b16 %v8372
          %v9133 = vunpack.c.h.b16 %v8372
          %v9134 = vunpack.c.l.b16 %v8373
          %v9135 = vunpack.c.h.b16 %v8373
          %v9136 = vunpack.c.l.b16 %v8374
          %v9137 = vunpack.c.h.b16 %v8374
          %v9138 = vunpack.c.l.b16 %v8375
          %v9139 = vunpack.c.h.b16 %v8375
          %v9140 = vunpack.c.l.b16 %v8376
          %v9141 = vunpack.c.h.b16 %v8376
          %v9142 = vunpack.c.l.b16 %v8377
          %v9143 = vunpack.c.h.b16 %v8377
          %v9144 = vunpack.c.l.b16 %v8378
          %v9145 = vunpack.c.h.b16 %v8378
          %v9146 = vunpack.c.l.b16 %v8379
          %v9147 = vunpack.c.h.b16 %v8379
          %v9148 = vunpack.c.l.b16 %v8380
          %v9149 = vunpack.c.h.b16 %v8380
          %v9150 = vunpack.c.l.b16 %v8381
          %v9151 = vunpack.c.h.b16 %v8381
          %v9152 = vunpack.c.l.b16 %v8382
          %v9153 = vunpack.c.h.b16 %v8382
          %v9154 = vunpack.c.l.b16 %v8383
          %v9155 = vunpack.c.h.b16 %v8383
          %v9156 = vunpack.c.l.b16 %v8384
          %v9157 = vunpack.c.h.b16 %v8384
          %v9158 = vunpack.c.l.b16 %v8385
          %v9159 = vunpack.c.h.b16 %v8385
          %v9160 = vunpack.c.l.b16 %v8386
          %v9161 = vunpack.c.h.b16 %v8386
          %v9162 = vunpack.c.l.b16 %v8387
          %v9163 = vunpack.c.h.b16 %v8387
          %v9164 = vunpack.c.l.b16 %v8388
          %v9165 = vunpack.c.h.b16 %v8388
          %v9166 = vunpack.c.l.b16 %v8389
          %v9167 = vunpack.c.h.b16 %v8389
          %v9168 = vunpack.c.l.b16 %v8390
          %v9169 = vunpack.c.h.b16 %v8390
          %v9170 = vunpack.c.l.b16 %v8391
          %v9171 = vunpack.c.h.b16 %v8391
          %v9172 = vunpack.c.l.b16 %v8392
          %v9173 = vunpack.c.h.b16 %v8392
          %v9174 = vunpack.c.l.b16 %v8393
          %v9175 = vunpack.c.h.b16 %v8393
          %v9176 = vunpack.c.l.b16 %v8394
          %v9177 = vunpack.c.h.b16 %v8394
          %v9178 = vunpack.c.l.b16 %v8395
          %v9179 = vunpack.c.h.b16 %v8395
          %v9180 = vunpack.c.l.b16 %v8396
          %v9181 = vunpack.c.h.b16 %v8396
          %v9182 = vunpack.c.l.b16 %v8397
          %v9183 = vunpack.c.h.b16 %v8397
          %v9184 = vunpack.c.l.b16 %v8398
          %v9185 = vunpack.c.h.b16 %v8398
          %v9186 = vunpack.c.l.b16 %v8399
          %v9187 = vunpack.c.h.b16 %v8399
          %v9188 = vunpack.c.l.b16 %v8400
          %v9189 = vunpack.c.h.b16 %v8400
          %v9190 = vunpack.c.l.b16 %v8401
          %v9191 = vunpack.c.h.b16 %v8401
          %v9192 = vunpack.c.l.b16 %v8402
          %v9193 = vunpack.c.h.b16 %v8402
          %v9194 = vunpack.c.l.b16 %v8403
          %v9195 = vunpack.c.h.b16 %v8403
          %v9196 = vunpack.c.l.b16 %v8404
          %v9197 = vunpack.c.h.b16 %v8404
          %v9198 = vunpack.c.l.b16 %v8405
          %v9199 = vunpack.c.h.b16 %v8405
          %v9200 = vunpack.c.l.b16 %v8406
          %v9201 = vunpack.c.h.b16 %v8406
          %v9202 = vunpack.c.l.b16 %v8407
          %v9203 = vunpack.c.h.b16 %v8407
          %v9204 = vunpack.c.l.b16 %v8408
          %v9205 = vunpack.c.h.b16 %v8408
          %v9206 = vunpack.c.l.b16 %v8409
          %v9207 = vunpack.c.h.b16 %v8409
          %v9208 = vunpack.c.l.b16 %v8410
          %v9209 = vunpack.c.h.b16 %v8410
          %v9210 = vunpack.c.l.b16 %v8411
          %v9211 = vunpack.c.h.b16 %v8411
          %v9212 = vunpack.c.l.b16 %v8412
          %v9213 = vunpack.c.h.b16 %v8412
          %v9214 = vunpack.c.l.b16 %v8413
          %v9215 = vunpack.c.h.b16 %v8413
          %v9216 = vunpack.c.l.b16 %v8414
          %v9217 = vunpack.c.h.b16 %v8414
          %v9218 = vunpack.c.l.b16 %v8415
          %v9219 = vunpack.c.h.b16 %v8415
          %v9220 = vunpack.c.l.b16 %v8416
          %v9221 = vunpack.c.h.b16 %v8416
          %v9222 = vunpack.c.l.b16 %v8417
          %v9223 = vunpack.c.h.b16 %v8417
          %v9224 = vunpack.c.l.b16 %v8418
          %v9225 = vunpack.c.h.b16 %v8418
          %v9226 = vunpack.c.l.b16 %v8419
          %v9227 = vunpack.c.h.b16 %v8419
          %v9228 = vunpack.c.l.b16 %v8420
          %v9229 = vunpack.c.h.b16 %v8420
          %v9230 = vunpack.c.l.b16 %v8421
          %v9231 = vunpack.c.h.b16 %v8421
          %v9232 = vpack.c.b16 %v8728, %v8720
          %v9233 = vpack.c.b16 %v8729, %v8721
          %v9234 = vpack.c.b16 %v8730, %v8722
          %v9235 = vpack.c.b16 %v8731, %v8723
          %v9236 = vpack.c.b16 %v8732, %v8724
          %v9237 = vpack.c.b16 %v8733, %v8725
          %v9238 = vpack.c.b16 %v8734, %v8726
          %v9239 = vpack.c.b16 %v8735, %v8727
          %v9240 = vpack.c.b16 %v8744, %v8736
          %v9241 = vpack.c.b16 %v8745, %v8737
          %v9242 = vpack.c.b16 %v8746, %v8738
          %v9243 = vpack.c.b16 %v8747, %v8739
          %v9244 = vpack.c.b16 %v8748, %v8740
          %v9245 = vpack.c.b16 %v8749, %v8741
          %v9246 = vpack.c.b16 %v8750, %v8742
          %v9247 = vpack.c.b16 %v8751, %v8743
          %v9248 = vpack.c.b16 %v8760, %v8752
          %v9249 = vpack.c.b16 %v8761, %v8753
          %v9250 = vpack.c.b16 %v8762, %v8754
          %v9251 = vpack.c.b16 %v8763, %v8755
          %v9252 = vpack.c.b16 %v8764, %v8756
          %v9253 = vpack.c.b16 %v8765, %v8757
          %v9254 = vpack.c.b16 %v8766, %v8758
          %v9255 = vpack.c.b16 %v8767, %v8759
          %v9256 = vpack.c.b16 %v8776, %v8768
          %v9257 = vpack.c.b16 %v8777, %v8769
          %v9258 = vpack.c.b16 %v8778, %v8770
          %v9259 = vpack.c.b16 %v8779, %v8771
          %v9260 = vpack.c.b16 %v8780, %v8772
          %v9261 = vpack.c.b16 %v8781, %v8773
          %v9262 = vpack.c.b16 %v8782, %v8774
          %v9263 = vpack.c.b16 %v8783, %v8775
          %v9264 = vpack.c.b16 %v8792, %v8784
          %v9265 = vpack.c.b16 %v8793, %v8785
          %v9266 = vpack.c.b16 %v8794, %v8786
          %v9267 = vpack.c.b16 %v8795, %v8787
          %v9268 = vpack.c.b16 %v8796, %v8788
          %v9269 = vpack.c.b16 %v8797, %v8789
          %v9270 = vpack.c.b16 %v8798, %v8790
          %v9271 = vpack.c.b16 %v8799, %v8791
          %v9272 = vpack.c.b16 %v8808, %v8800
          %v9273 = vpack.c.b16 %v8809, %v8801
          %v9274 = vpack.c.b16 %v8810, %v8802
          %v9275 = vpack.c.b16 %v8811, %v8803
          %v9276 = vpack.c.b16 %v8812, %v8804
          %v9277 = vpack.c.b16 %v8813, %v8805
          %v9278 = vpack.c.b16 %v8814, %v8806
          %v9279 = vpack.c.b16 %v8815, %v8807
          %v9280 = vpack.c.b16 %v8824, %v8816
          %v9281 = vpack.c.b16 %v8825, %v8817
          %v9282 = vpack.c.b16 %v8826, %v8818
          %v9283 = vpack.c.b16 %v8827, %v8819
          %v9284 = vpack.c.b16 %v8828, %v8820
          %v9285 = vpack.c.b16 %v8829, %v8821
          %v9286 = vpack.c.b16 %v8830, %v8822
          %v9287 = vpack.c.b16 %v8831, %v8823
          %v9288 = vpack.c.b16 %v8840, %v8832
          %v9289 = vpack.c.b16 %v8841, %v8833
          %v9290 = vpack.c.b16 %v8842, %v8834
          %v9291 = vpack.c.b16 %v8843, %v8835
          %v9292 = vpack.c.b16 %v8844, %v8836
          %v9293 = vpack.c.b16 %v8845, %v8837
          %v9294 = vpack.c.b16 %v8846, %v8838
          %v9295 = vpack.c.b16 %v8847, %v8839
          %v9296 = vpack.c.b16 %v8856, %v8848
          %v9297 = vpack.c.b16 %v8857, %v8849
          %v9298 = vpack.c.b16 %v8858, %v8850
          %v9299 = vpack.c.b16 %v8859, %v8851
          %v9300 = vpack.c.b16 %v8860, %v8852
          %v9301 = vpack.c.b16 %v8861, %v8853
          %v9302 = vpack.c.b16 %v8862, %v8854
          %v9303 = vpack.c.b16 %v8863, %v8855
          %v9304 = vpack.c.b16 %v8872, %v8864
          %v9305 = vpack.c.b16 %v8873, %v8865
          %v9306 = vpack.c.b16 %v8874, %v8866
          %v9307 = vpack.c.b16 %v8875, %v8867
          %v9308 = vpack.c.b16 %v8876, %v8868
          %v9309 = vpack.c.b16 %v8877, %v8869
          %v9310 = vpack.c.b16 %v8878, %v8870
          %v9311 = vpack.c.b16 %v8879, %v8871
          %v9312 = vpack.c.b16 %v8888, %v8880
          %v9313 = vpack.c.b16 %v8889, %v8881
          %v9314 = vpack.c.b16 %v8890, %v8882
          %v9315 = vpack.c.b16 %v8891, %v8883
          %v9316 = vpack.c.b16 %v8892, %v8884
          %v9317 = vpack.c.b16 %v8893, %v8885
          %v9318 = vpack.c.b16 %v8894, %v8886
          %v9319 = vpack.c.b16 %v8895, %v8887
          %v9320 = vpack.c.b16 %v8904, %v8896
          %v9321 = vpack.c.b16 %v8905, %v8897
          %v9322 = vpack.c.b16 %v8906, %v8898
          %v9323 = vpack.c.b16 %v8907, %v8899
          %v9324 = vpack.c.b16 %v8908, %v8900
          %v9325 = vpack.c.b16 %v8909, %v8901
          %v9326 = vpack.c.b16 %v8910, %v8902
          %v9327 = vpack.c.b16 %v8911, %v8903
          %v9328 = vpack.c.b16 %v8920, %v8912
          %v9329 = vpack.c.b16 %v8921, %v8913
          %v9330 = vpack.c.b16 %v8922, %v8914
          %v9331 = vpack.c.b16 %v8923, %v8915
          %v9332 = vpack.c.b16 %v8924, %v8916
          %v9333 = vpack.c.b16 %v8925, %v8917
          %v9334 = vpack.c.b16 %v8926, %v8918
          %v9335 = vpack.c.b16 %v8927, %v8919
          %v9336 = vpack.c.b16 %v8936, %v8928
          %v9337 = vpack.c.b16 %v8937, %v8929
          %v9338 = vpack.c.b16 %v8938, %v8930
          %v9339 = vpack.c.b16 %v8939, %v8931
          %v9340 = vpack.c.b16 %v8940, %v8932
          %v9341 = vpack.c.b16 %v8941, %v8933
          %v9342 = vpack.c.b16 %v8942, %v8934
          %v9343 = vpack.c.b16 %v8943, %v8935
          %v9344 = vpack.c.b16 %v8952, %v8944
          %v9345 = vpack.c.b16 %v8953, %v8945
          %v9346 = vpack.c.b16 %v8954, %v8946
          %v9347 = vpack.c.b16 %v8955, %v8947
          %v9348 = vpack.c.b16 %v8956, %v8948
          %v9349 = vpack.c.b16 %v8957, %v8949
          %v9350 = vpack.c.b16 %v8958, %v8950
          %v9351 = vpack.c.b16 %v8959, %v8951
          %v9352 = vpack.c.b16 %v8968, %v8960
          %v9353 = vpack.c.b16 %v8969, %v8961
          %v9354 = vpack.c.b16 %v8970, %v8962
          %v9355 = vpack.c.b16 %v8971, %v8963
          %v9356 = vpack.c.b16 %v8972, %v8964
          %v9357 = vpack.c.b16 %v8973, %v8965
          %v9358 = vpack.c.b16 %v8974, %v8966
          %v9359 = vpack.c.b16 %v8975, %v8967
          %v9360 = vpack.c.b16 %v8984, %v8976
          %v9361 = vpack.c.b16 %v8985, %v8977
          %v9362 = vpack.c.b16 %v8986, %v8978
          %v9363 = vpack.c.b16 %v8987, %v8979
          %v9364 = vpack.c.b16 %v8988, %v8980
          %v9365 = vpack.c.b16 %v8989, %v8981
          %v9366 = vpack.c.b16 %v8990, %v8982
          %v9367 = vpack.c.b16 %v8991, %v8983
          %v9368 = vpack.c.b16 %v9000, %v8992
          %v9369 = vpack.c.b16 %v9001, %v8993
          %v9370 = vpack.c.b16 %v9002, %v8994
          %v9371 = vpack.c.b16 %v9003, %v8995
          %v9372 = vpack.c.b16 %v9004, %v8996
          %v9373 = vpack.c.b16 %v9005, %v8997
          %v9374 = vpack.c.b16 %v9006, %v8998
          %v9375 = vpack.c.b16 %v9007, %v8999
          %v9376 = vpack.c.b16 %v9016, %v9008
          %v9377 = vpack.c.b16 %v9017, %v9009
          %v9378 = vpack.c.b16 %v9018, %v9010
          %v9379 = vpack.c.b16 %v9019, %v9011
          %v9380 = vpack.c.b16 %v9020, %v9012
          %v9381 = vpack.c.b16 %v9021, %v9013
          %v9382 = vpack.c.b16 %v9022, %v9014
          %v9383 = vpack.c.b16 %v9023, %v9015
          %v9384 = vpack.c.b16 %v9032, %v9024
          %v9385 = vpack.c.b16 %v9033, %v9025
          %v9386 = vpack.c.b16 %v9034, %v9026
          %v9387 = vpack.c.b16 %v9035, %v9027
          %v9388 = vpack.c.b16 %v9036, %v9028
          %v9389 = vpack.c.b16 %v9037, %v9029
          %v9390 = vpack.c.b16 %v9038, %v9030
          %v9391 = vpack.c.b16 %v9039, %v9031
          %v9392 = vpack.c.b16 %v9048, %v9040
          %v9393 = vpack.c.b16 %v9049, %v9041
          %v9394 = vpack.c.b16 %v9050, %v9042
          %v9395 = vpack.c.b16 %v9051, %v9043
          %v9396 = vpack.c.b16 %v9052, %v9044
          %v9397 = vpack.c.b16 %v9053, %v9045
          %v9398 = vpack.c.b16 %v9054, %v9046
          %v9399 = vpack.c.b16 %v9055, %v9047
          %v9400 = vpack.c.b16 %v9064, %v9056
          %v9401 = vpack.c.b16 %v9065, %v9057
          %v9402 = vpack.c.b16 %v9066, %v9058
          %v9403 = vpack.c.b16 %v9067, %v9059
          %v9404 = vpack.c.b16 %v9068, %v9060
          %v9405 = vpack.c.b16 %v9069, %v9061
          %v9406 = vpack.c.b16 %v9070, %v9062
          %v9407 = vpack.c.b16 %v9071, %v9063
          %v9408 = vpack.c.b16 %v9080, %v9072
          %v9409 = vpack.c.b16 %v9081, %v9073
          %v9410 = vpack.c.b16 %v9082, %v9074
          %v9411 = vpack.c.b16 %v9083, %v9075
          %v9412 = vpack.c.b16 %v9084, %v9076
          %v9413 = vpack.c.b16 %v9085, %v9077
          %v9414 = vpack.c.b16 %v9086, %v9078
          %v9415 = vpack.c.b16 %v9087, %v9079
          %v9416 = vpack.c.b16 %v9096, %v9088
          %v9417 = vpack.c.b16 %v9097, %v9089
          %v9418 = vpack.c.b16 %v9098, %v9090
          %v9419 = vpack.c.b16 %v9099, %v9091
          %v9420 = vpack.c.b16 %v9100, %v9092
          %v9421 = vpack.c.b16 %v9101, %v9093
          %v9422 = vpack.c.b16 %v9102, %v9094
          %v9423 = vpack.c.b16 %v9103, %v9095
          %v9424 = vpack.c.b16 %v9112, %v9104
          %v9425 = vpack.c.b16 %v9113, %v9105
          %v9426 = vpack.c.b16 %v9114, %v9106
          %v9427 = vpack.c.b16 %v9115, %v9107
          %v9428 = vpack.c.b16 %v9116, %v9108
          %v9429 = vpack.c.b16 %v9117, %v9109
          %v9430 = vpack.c.b16 %v9118, %v9110
          %v9431 = vpack.c.b16 %v9119, %v9111
          %v9432 = vpack.c.b16 %v9128, %v9120
          %v9433 = vpack.c.b16 %v9129, %v9121
          %v9434 = vpack.c.b16 %v9130, %v9122
          %v9435 = vpack.c.b16 %v9131, %v9123
          %v9436 = vpack.c.b16 %v9132, %v9124
          %v9437 = vpack.c.b16 %v9133, %v9125
          %v9438 = vpack.c.b16 %v9134, %v9126
          %v9439 = vpack.c.b16 %v9135, %v9127
          %v9440 = vpack.c.b16 %v9144, %v9136
          %v9441 = vpack.c.b16 %v9145, %v9137
          %v9442 = vpack.c.b16 %v9146, %v9138
          %v9443 = vpack.c.b16 %v9147, %v9139
          %v9444 = vpack.c.b16 %v9148, %v9140
          %v9445 = vpack.c.b16 %v9149, %v9141
          %v9446 = vpack.c.b16 %v9150, %v9142
          %v9447 = vpack.c.b16 %v9151, %v9143
          %v9448 = vpack.c.b16 %v9160, %v9152
          %v9449 = vpack.c.b16 %v9161, %v9153
          %v9450 = vpack.c.b16 %v9162, %v9154
          %v9451 = vpack.c.b16 %v9163, %v9155
          %v9452 = vpack.c.b16 %v9164, %v9156
          %v9453 = vpack.c.b16 %v9165, %v9157
          %v9454 = vpack.c.b16 %v9166, %v9158
          %v9455 = vpack.c.b16 %v9167, %v9159
          %v9456 = vpack.c.b16 %v9176, %v9168
          %v9457 = vpack.c.b16 %v9177, %v9169
          %v9458 = vpack.c.b16 %v9178, %v9170
          %v9459 = vpack.c.b16 %v9179, %v9171
          %v9460 = vpack.c.b16 %v9180, %v9172
          %v9461 = vpack.c.b16 %v9181, %v9173
          %v9462 = vpack.c.b16 %v9182, %v9174
          %v9463 = vpack.c.b16 %v9183, %v9175
          %v9464 = vpack.c.b16 %v9192, %v9184
          %v9465 = vpack.c.b16 %v9193, %v9185
          %v9466 = vpack.c.b16 %v9194, %v9186
          %v9467 = vpack.c.b16 %v9195, %v9187
          %v9468 = vpack.c.b16 %v9196, %v9188
          %v9469 = vpack.c.b16 %v9197, %v9189
          %v9470 = vpack.c.b16 %v9198, %v9190
          %v9471 = vpack.c.b16 %v9199, %v9191
          %v9472 = vpack.c.b16 %v9208, %v9200
          %v9473 = vpack.c.b16 %v9209, %v9201
          %v9474 = vpack.c.b16 %v9210, %v9202
          %v9475 = vpack.c.b16 %v9211, %v9203
          %v9476 = vpack.c.b16 %v9212, %v9204
          %v9477 = vpack.c.b16 %v9213, %v9205
          %v9478 = vpack.c.b16 %v9214, %v9206
          %v9479 = vpack.c.b16 %v9215, %v9207
          %v9480 = vpack.c.b16 %v9224, %v9216
          %v9481 = vpack.c.b16 %v9225, %v9217
          %v9482 = vpack.c.b16 %v9226, %v9218
          %v9483 = vpack.c.b16 %v9227, %v9219
          %v9484 = vpack.c.b16 %v9228, %v9220
          %v9485 = vpack.c.b16 %v9229, %v9221
          %v9486 = vpack.c.b16 %v9230, %v9222
          %v9487 = vpack.c.b16 %v9231, %v9223
          %9744 = vmatprep.subr.bf16.mxu0 %v9233
          %9745 = vmatpush1.bf16.msra.mxu0 %v9232
          %9746 = vmatprep.subr.bf16.mxu0 %v9241
          %9747 = vmatpush1.bf16.msra.mxu0 %v9240
          %9748 = vmatprep.subr.bf16.mxu0 %v9249
          %9749 = vmatpush1.bf16.msra.mxu0 %v9248
          %9750 = vmatprep.subr.bf16.mxu0 %v9257
          %9751 = vmatpush1.bf16.msra.mxu0 %v9256
          %9752 = vmatprep.subr.bf16.mxu0 %v9265
          %9753 = vmatpush1.bf16.msra.mxu0 %v9264
          %9754 = vmatprep.subr.bf16.mxu0 %v9273
          %9755 = vmatpush1.bf16.msra.mxu0 %v9272
          %9756 = vmatprep.subr.bf16.mxu0 %v9281
          %9757 = vmatpush1.bf16.msra.mxu0 %v9280
          %9758 = vmatprep.subr.bf16.mxu0 %v9289
          %9759 = vmatpush1.bf16.msra.mxu0 %v9288
          %9760 = vmatprep.subr.bf16.mxu0 %v9297
          %9761 = vmatpush1.bf16.msra.mxu0 %v9296
          %9762 = vmatprep.subr.bf16.mxu0 %v9305
          %9763 = vmatpush1.bf16.msra.mxu0 %v9304
          %9764 = vmatprep.subr.bf16.mxu0 %v9313
          %9765 = vmatpush1.bf16.msra.mxu0 %v9312
          %9766 = vmatprep.subr.bf16.mxu0 %v9321
          %9767 = vmatpush1.bf16.msra.mxu0 %v9320
          %9768 = vmatprep.subr.bf16.mxu0 %v9329
          %9769 = vmatpush1.bf16.msra.mxu0 %v9328
          %9770 = vmatprep.subr.bf16.mxu0 %v9337
          %9771 = vmatpush1.bf16.msra.mxu0 %v9336
          %9772 = vmatprep.subr.bf16.mxu0 %v9345
          %9773 = vmatpush1.bf16.msra.mxu0 %v9344
          %9774 = vmatprep.subr.bf16.mxu0 %v9353
          %9775 = vmatpush1.bf16.msra.mxu0 %v9352
          %9776 = vmatprep.mubr.bf16.mxu0 %v8163
          %9777 = vmatmul.mubr.bf16.gmra.mrb[0].mxu0 %v8162
          %v9778 = vpop.f32.mrb[0].mxu0
          %v9779 = vadd.f32 %v8427, %v9778
          %v9780 = vpop.f32.mrb[0].mxu0
          %v9781 = vadd.f32 %v8431, %v9780
          %v9782 = vpop.f32.mrb[0].mxu0
          %v9783 = vpop.f32.mrb[0].mxu0
          %9784 = vdwg.mxu0
          %9785 = vmatprep.subr.bf16.mxu0 %v9361
          %9786 = vmatpush1.bf16.msra.mxu0 %v9360
          %9787 = vmatprep.subr.bf16.mxu0 %v9369
          %9788 = vmatpush1.bf16.msra.mxu0 %v9368
          %9789 = vmatprep.subr.bf16.mxu0 %v9377
          %9790 = vmatpush1.bf16.msra.mxu0 %v9376
          %9791 = vmatprep.subr.bf16.mxu0 %v9385
          %9792 = vmatpush1.bf16.msra.mxu0 %v9384
          %9793 = vmatprep.subr.bf16.mxu0 %v9393
          %9794 = vmatpush1.bf16.msra.mxu0 %v9392
          %9795 = vmatprep.subr.bf16.mxu0 %v9401
          %9796 = vmatpush1.bf16.msra.mxu0 %v9400
          %9797 = vmatprep.subr.bf16.mxu0 %v9409
          %9798 = vmatpush1.bf16.msra.mxu0 %v9408
          %9799 = vmatprep.subr.bf16.mxu0 %v9417
          %9800 = vmatpush1.bf16.msra.mxu0 %v9416
          %9801 = vmatprep.subr.bf16.mxu0 %v9425
          %9802 = vmatpush1.bf16.msra.mxu0 %v9424
          %9803 = vmatprep.subr.bf16.mxu0 %v9433
          %9804 = vmatpush1.bf16.msra.mxu0 %v9432
          %9805 = vmatprep.subr.bf16.mxu0 %v9441
          %9806 = vmatpush1.bf16.msra.mxu0 %v9440
          %9807 = vmatprep.subr.bf16.mxu0 %v9449
          %9808 = vmatpush1.bf16.msra.mxu0 %v9448
          %9809 = vmatprep.subr.bf16.mxu0 %v9457
          %9810 = vmatpush1.bf16.msra.mxu0 %v9456
          %9811 = vmatprep.subr.bf16.mxu0 %v9465
          %9812 = vmatpush1.bf16.msra.mxu0 %v9464
          %9813 = vmatprep.subr.bf16.mxu0 %v9473
          %9814 = vmatpush1.bf16.msra.mxu0 %v9472
          %9815 = vmatprep.subr.bf16.mxu0 %v9481
          %9816 = vmatpush1.bf16.msra.mxu0 %v9480
          %9817 = vmatprep.mubr.bf16.mxu0 %v8165
          %9818 = vmatmul.mubr.bf16.gmra.mrb[0].mxu0 %v8164
          %v9819 = vpop.f32.mrb[0].mxu0
          %v9820 = vadd.f32 %v9779, %v9819
          %v9821 = vpop.f32.mrb[0].mxu0
          %v9822 = vadd.f32 %v9781, %v9821
          %v9823 = vpop.f32.mrb[0].mxu0
          %v9824 = vpop.f32.mrb[0].mxu0
          %9825 = vdwg.mxu0
          %9826 = vmatprep.subr.bf16.mxu0 %v9235
          %9827 = vmatpush1.bf16.msra.mxu0 %v9234
          %9828 = vmatprep.subr.bf16.mxu0 %v9243
          %9829 = vmatpush1.bf16.msra.mxu0 %v9242
          %9830 = vmatprep.subr.bf16.mxu0 %v9251
          %9831 = vmatpush1.bf16.msra.mxu0 %v9250
          %9832 = vmatprep.subr.bf16.mxu0 %v9259
          %9833 = vmatpush1.bf16.msra.mxu0 %v9258
          %9834 = vmatprep.subr.bf16.mxu0 %v9267
          %9835 = vmatpush1.bf16.msra.mxu0 %v9266
          %9836 = vmatprep.subr.bf16.mxu0 %v9275
          %9837 = vmatpush1.bf16.msra.mxu0 %v9274
          %9838 = vmatprep.subr.bf16.mxu0 %v9283
          %9839 = vmatpush1.bf16.msra.mxu0 %v9282
          %9840 = vmatprep.subr.bf16.mxu0 %v9291
          %9841 = vmatpush1.bf16.msra.mxu0 %v9290
          %9842 = vmatprep.subr.bf16.mxu0 %v9299
          %9843 = vmatpush1.bf16.msra.mxu0 %v9298
          %9844 = vmatprep.subr.bf16.mxu0 %v9307
          %9845 = vmatpush1.bf16.msra.mxu0 %v9306
          %9846 = vmatprep.subr.bf16.mxu0 %v9315
          %9847 = vmatpush1.bf16.msra.mxu0 %v9314
          %9848 = vmatprep.subr.bf16.mxu0 %v9323
          %9849 = vmatpush1.bf16.msra.mxu0 %v9322
          %9850 = vmatprep.subr.bf16.mxu0 %v9331
          %9851 = vmatpush1.bf16.msra.mxu0 %v9330
          %9852 = vmatprep.subr.bf16.mxu0 %v9339
          %9853 = vmatpush1.bf16.msra.mxu0 %v9338
          %9854 = vmatprep.subr.bf16.mxu0 %v9347
          %9855 = vmatpush1.bf16.msra.mxu0 %v9346
          %9856 = vmatprep.subr.bf16.mxu0 %v9355
          %9857 = vmatpush1.bf16.msra.mxu0 %v9354
          %9858 = vmatprep.mubr.bf16.mxu0 %v8163
          %9859 = vmatmul.mubr.bf16.gmra.mrb[0].mxu0 %v8162
          %v9860 = vpop.f32.mrb[0].mxu0
          %v9861 = vadd.f32 %v8435, %v9860
          %v9862 = vpop.f32.mrb[0].mxu0
          %v9863 = vadd.f32 %v8439, %v9862
          %v9864 = vpop.f32.mrb[0].mxu0
          %v9865 = vpop.f32.mrb[0].mxu0
          %9866 = vdwg.mxu0
          %9867 = vmatprep.subr.bf16.mxu0 %v9363
          %9868 = vmatpush1.bf16.msra.mxu0 %v9362
          %9869 = vmatprep.subr.bf16.mxu0 %v9371
          %9870 = vmatpush1.bf16.msra.mxu0 %v9370
          %9871 = vmatprep.subr.bf16.mxu0 %v9379
          %9872 = vmatpush1.bf16.msra.mxu0 %v9378
          %9873 = vmatprep.subr.bf16.mxu0 %v9387
          %9874 = vmatpush1.bf16.msra.mxu0 %v9386
          %9875 = vmatprep.subr.bf16.mxu0 %v9395
          %9876 = vmatpush1.bf16.msra.mxu0 %v9394
          %9877 = vmatprep.subr.bf16.mxu0 %v9403
          %9878 = vmatpush1.bf16.msra.mxu0 %v9402
          %9879 = vmatprep.subr.bf16.mxu0 %v9411
          %9880 = vmatpush1.bf16.msra.mxu0 %v9410
          %9881 = vmatprep.subr.bf16.mxu0 %v9419
          %9882 = vmatpush1.bf16.msra.mxu0 %v9418
          %9883 = vmatprep.subr.bf16.mxu0 %v9427
          %9884 = vmatpush1.bf16.msra.mxu0 %v9426
          %9885 = vmatprep.subr.bf16.mxu0 %v9435
          %9886 = vmatpush1.bf16.msra.mxu0 %v9434
          %9887 = vmatprep.subr.bf16.mxu0 %v9443
          %9888 = vmatpush1.bf16.msra.mxu0 %v9442
          %9889 = vmatprep.subr.bf16.mxu0 %v9451
          %9890 = vmatpush1.bf16.msra.mxu0 %v9450
          %9891 = vmatprep.subr.bf16.mxu0 %v9459
          %9892 = vmatpush1.bf16.msra.mxu0 %v9458
          %9893 = vmatprep.subr.bf16.mxu0 %v9467
          %9894 = vmatpush1.bf16.msra.mxu0 %v9466
          %9895 = vmatprep.subr.bf16.mxu0 %v9475
          %9896 = vmatpush1.bf16.msra.mxu0 %v9474
          %9897 = vmatprep.subr.bf16.mxu0 %v9483
          %9898 = vmatpush1.bf16.msra.mxu0 %v9482
          %9899 = vmatprep.mubr.bf16.mxu0 %v8165
          %9900 = vmatmul.mubr.bf16.gmra.mrb[0].mxu0 %v8164
          %v9901 = vpop.f32.mrb[0].mxu0
          %v9902 = vadd.f32 %v9861, %v9901
          %v9903 = vpop.f32.mrb[0].mxu0
          %v9904 = vadd.f32 %v9863, %v9903
          %v9905 = vpop.f32.mrb[0].mxu0
          %v9906 = vpop.f32.mrb[0].mxu0
          %9907 = vdwg.mxu0
          %9908 = vmatprep.subr.bf16.mxu0 %v9237
          %9909 = vmatpush1.bf16.msra.mxu0 %v9236
          %9910 = vmatprep.subr.bf16.mxu0 %v9245
          %9911 = vmatpush1.bf16.msra.mxu0 %v9244
          %9912 = vmatprep.subr.bf16.mxu0 %v9253
          %9913 = vmatpush1.bf16.msra.mxu0 %v9252
          %9914 = vmatprep.subr.bf16.mxu0 %v9261
          %9915 = vmatpush1.bf16.msra.mxu0 %v9260
          %9916 = vmatprep.subr.bf16.mxu0 %v9269
          %9917 = vmatpush1.bf16.msra.mxu0 %v9268
          %9918 = vmatprep.subr.bf16.mxu0 %v9277
          %9919 = vmatpush1.bf16.msra.mxu0 %v9276
          %9920 = vmatprep.subr.bf16.mxu0 %v9285
          %9921 = vmatpush1.bf16.msra.mxu0 %v9284
          %9922 = vmatprep.subr.bf16.mxu0 %v9293
          %9923 = vmatpush1.bf16.msra.mxu0 %v9292
          %9924 = vmatprep.subr.bf16.mxu0 %v9301
          %9925 = vmatpush1.bf16.msra.mxu0 %v9300
          %9926 = vmatprep.subr.bf16.mxu0 %v9309
          %9927 = vmatpush1.bf16.msra.mxu0 %v9308
          %9928 = vmatprep.subr.bf16.mxu0 %v9317
          %9929 = vmatpush1.bf16.msra.mxu0 %v9316
          %9930 = vmatprep.subr.bf16.mxu0 %v9325
          %9931 = vmatpush1.bf16.msra.mxu0 %v9324
          %9932 = vmatprep.subr.bf16.mxu0 %v9333
          %9933 = vmatpush1.bf16.msra.mxu0 %v9332
          %9934 = vmatprep.subr.bf16.mxu0 %v9341
          %9935 = vmatpush1.bf16.msra.mxu0 %v9340
          %9936 = vmatprep.subr.bf16.mxu0 %v9349
          %9937 = vmatpush1.bf16.msra.mxu0 %v9348
          %9938 = vmatprep.subr.bf16.mxu0 %v9357
          %9939 = vmatpush1.bf16.msra.mxu0 %v9356
          %9940 = vmatprep.mubr.bf16.mxu0 %v8163
          %9941 = vmatmul.mubr.bf16.gmra.mrb[0].mxu0 %v8162
          %v9942 = vpop.f32.mrb[0].mxu0
          %v9943 = vadd.f32 %v8443, %v9942
          %v9944 = vpop.f32.mrb[0].mxu0
          %v9945 = vadd.f32 %v8447, %v9944
          %v9946 = vpop.f32.mrb[0].mxu0
          %v9947 = vpop.f32.mrb[0].mxu0
          %9948 = vdwg.mxu0
          %9949 = vmatprep.subr.bf16.mxu0 %v9365
          %9950 = vmatpush1.bf16.msra.mxu0 %v9364
          %9951 = vmatprep.subr.bf16.mxu0 %v9373
          %9952 = vmatpush1.bf16.msra.mxu0 %v9372
          %9953 = vmatprep.subr.bf16.mxu0 %v9381
          %9954 = vmatpush1.bf16.msra.mxu0 %v9380
          %9955 = vmatprep.subr.bf16.mxu0 %v9389
          %9956 = vmatpush1.bf16.msra.mxu0 %v9388
          %9957 = vmatprep.subr.bf16.mxu0 %v9397
          %9958 = vmatpush1.bf16.msra.mxu0 %v9396
          %9959 = vmatprep.subr.bf16.mxu0 %v9405
          %9960 = vmatpush1.bf16.msra.mxu0 %v9404
          %9961 = vmatprep.subr.bf16.mxu0 %v9413
          %9962 = vmatpush1.bf16.msra.mxu0 %v9412
          %9963 = vmatprep.subr.bf16.mxu0 %v9421
          %9964 = vmatpush1.bf16.msra.mxu0 %v9420
          %9965 = vmatprep.subr.bf16.mxu0 %v9429
          %9966 = vmatpush1.bf16.msra.mxu0 %v9428
          %9967 = vmatprep.subr.bf16.mxu0 %v9437
          %9968 = vmatpush1.bf16.msra.mxu0 %v9436
          %9969 = vmatprep.subr.bf16.mxu0 %v9445
          %9970 = vmatpush1.bf16.msra.mxu0 %v9444
          %9971 = vmatprep.subr.bf16.mxu0 %v9453
          %9972 = vmatpush1.bf16.msra.mxu0 %v9452
          %9973 = vmatprep.subr.bf16.mxu0 %v9461
          %9974 = vmatpush1.bf16.msra.mxu0 %v9460
          %9975 = vmatprep.subr.bf16.mxu0 %v9469
          %9976 = vmatpush1.bf16.msra.mxu0 %v9468
          %9977 = vmatprep.subr.bf16.mxu0 %v9477
          %9978 = vmatpush1.bf16.msra.mxu0 %v9476
          %9979 = vmatprep.subr.bf16.mxu0 %v9485
          %9980 = vmatpush1.bf16.msra.mxu0 %v9484
          %9981 = vmatprep.mubr.bf16.mxu0 %v8165
          %9982 = vmatmul.mubr.bf16.gmra.mrb[0].mxu0 %v8164
          %v9983 = vpop.f32.mrb[0].mxu0
          %v9984 = vadd.f32 %v9943, %v9983
          %v9985 = vpop.f32.mrb[0].mxu0
          %v9986 = vadd.f32 %v9945, %v9985
          %v9987 = vpop.f32.mrb[0].mxu0
          %v9988 = vpop.f32.mrb[0].mxu0
          %9989 = vdwg.mxu0
          %9990 = vmatprep.subr.bf16.mxu0 %v9239
          %9991 = vmatpush1.bf16.msra.mxu0 %v9238
          %9992 = vmatprep.subr.bf16.mxu0 %v9247
          %9993 = vmatpush1.bf16.msra.mxu0 %v9246
          %9994 = vmatprep.subr.bf16.mxu0 %v9255
          %9995 = vmatpush1.bf16.msra.mxu0 %v9254
          %9996 = vmatprep.subr.bf16.mxu0 %v9263
          %9997 = vmatpush1.bf16.msra.mxu0 %v9262
          %9998 = vmatprep.subr.bf16.mxu0 %v9271
          %9999 = vmatpush1.bf16.msra.mxu0 %v9270
          %10000 = vmatprep.subr.bf16.mxu0 %v9279
          %10001 = vmatpush1.bf16.msra.mxu0 %v9278
          %10002 = vmatprep.subr.bf16.mxu0 %v9287
          %10003 = vmatpush1.bf16.msra.mxu0 %v9286
          %10004 = vmatprep.subr.bf16.mxu0 %v9295
          %10005 = vmatpush1.bf16.msra.mxu0 %v9294
          %10006 = vmatprep.subr.bf16.mxu0 %v9303
          %10007 = vmatpush1.bf16.msra.mxu0 %v9302
          %10008 = vmatprep.subr.bf16.mxu0 %v9311
          %10009 = vmatpush1.bf16.msra.mxu0 %v9310
          %10010 = vmatprep.subr.bf16.mxu0 %v9319
          %10011 = vmatpush1.bf16.msra.mxu0 %v9318
          %10012 = vmatprep.subr.bf16.mxu0 %v9327
          %10013 = vmatpush1.bf16.msra.mxu0 %v9326
          %10014 = vmatprep.subr.bf16.mxu0 %v9335
          %10015 = vmatpush1.bf16.msra.mxu0 %v9334
          %10016 = vmatprep.subr.bf16.mxu0 %v9343
          %10017 = vmatpush1.bf16.msra.mxu0 %v9342
          %10018 = vmatprep.subr.bf16.mxu0 %v9351
          %10019 = vmatpush1.bf16.msra.mxu0 %v9350
          %10020 = vmatprep.subr.bf16.mxu0 %v9359
          %10021 = vmatpush1.bf16.msra.mxu0 %v9358
          %10022 = vmatprep.mubr.bf16.mxu0 %v8163
          %10023 = vmatmul.mubr.bf16.gmra.mrb[0].mxu0 %v8162
          %v10024 = vpop.f32.mrb[0].mxu0
          %v10025 = vadd.f32 %v8451, %v10024
          %v10026 = vpop.f32.mrb[0].mxu0
          %v10027 = vadd.f32 %v8455, %v10026
          %v10028 = vpop.f32.mrb[0].mxu0
          %v10029 = vpop.f32.mrb[0].mxu0
          %10030 = vdwg.mxu0
          %10031 = vmatprep.subr.bf16.mxu0 %v9367
          %10032 = vmatpush1.bf16.msra.mxu0 %v9366
          %10033 = vmatprep.subr.bf16.mxu0 %v9375
          %10034 = vmatpush1.bf16.msra.mxu0 %v9374
          %10035 = vmatprep.subr.bf16.mxu0 %v9383
          %10036 = vmatpush1.bf16.msra.mxu0 %v9382
          %10037 = vmatprep.subr.bf16.mxu0 %v9391
          %10038 = vmatpush1.bf16.msra.mxu0 %v9390
          %10039 = vmatprep.subr.bf16.mxu0 %v9399
          %10040 = vmatpush1.bf16.msra.mxu0 %v9398
          %10041 = vmatprep.subr.bf16.mxu0 %v9407
          %10042 = vmatpush1.bf16.msra.mxu0 %v9406
          %10043 = vmatprep.subr.bf16.mxu0 %v9415
          %10044 = vmatpush1.bf16.msra.mxu0 %v9414
          %10045 = vmatprep.subr.bf16.mxu0 %v9423
          %10046 = vmatpush1.bf16.msra.mxu0 %v9422
          %10047 = vmatprep.subr.bf16.mxu0 %v9431
          %10048 = vmatpush1.bf16.msra.mxu0 %v9430
          %10049 = vmatprep.subr.bf16.mxu0 %v9439
          %10050 = vmatpush1.bf16.msra.mxu0 %v9438
          %10051 = vmatprep.subr.bf16.mxu0 %v9447
          %10052 = vmatpush1.bf16.msra.mxu0 %v9446
          %10053 = vmatprep.subr.bf16.mxu0 %v9455
          %10054 = vmatpush1.bf16.msra.mxu0 %v9454
          %10055 = vmatprep.subr.bf16.mxu0 %v9463
          %10056 = vmatpush1.bf16.msra.mxu0 %v9462
          %10057 = vmatprep.subr.bf16.mxu0 %v9471
          %10058 = vmatpush1.bf16.msra.mxu0 %v9470
          %10059 = vmatprep.subr.bf16.mxu0 %v9479
          %10060 = vmatpush1.bf16.msra.mxu0 %v9478
          %10061 = vmatprep.subr.bf16.mxu0 %v9487
          %10062 = vmatpush1.bf16.msra.mxu0 %v9486
          %10063 = vmatprep.mubr.bf16.mxu0 %v8165
          %10064 = vmatmul.mubr.bf16.gmra.mrb[0].mxu0 %v8164
          %v10065 = vpop.f32.mrb[0].mxu0
          %v10066 = vadd.f32 %v10025, %v10065
          %v10067 = vpop.f32.mrb[0].mxu0
          %v10068 = vadd.f32 %v10027, %v10067
          %v10069 = vpop.f32.mrb[0].mxu0
          %v10070 = vpop.f32.mrb[0].mxu0
          %10071 = vdwg.mxu0
          %10072 = vst [vmem:[#allocation27] sm:$0xff] %v9820
          %10073 = vst [vmem:[#allocation27 + $0x8] sm:$0xff] %v9822
          %10074 = vst [vmem:[#allocation27 + $0x10] sm:$0xff] %v9902
          %10075 = vst [vmem:[#allocation27 + $0x18] sm:$0xff] %v9904
          %10076 = vst [vmem:[#allocation27 + $0x20] sm:$0xff] %v9984
          %10077 = vst [vmem:[#allocation27 + $0x28] sm:$0xff] %v9986
          %10078 = vst [vmem:[#allocation27 + $0x30] sm:$0xff] %v10066
          %10079 = vst [vmem:[#allocation27 + $0x38] sm:$0xff] %v10068
        $region140: #{tpu_custom_call.1} parent=75 // pred_fallthru
          _
        // Predicated region
        $region141: #{tpu_custom_call.1} parent=75 // pred_check
          %p10080 = pneg %p365
        $region142: #{tpu_custom_call.1} parent=75 // pred_check_branch
          %10082 = sbr.rel (%p10080) target = $region144
        $region143: #{tpu_custom_call.1} parent=75 // pred_region
          %s10084 = ssub.s32 1024, 1024
          %10085 = vsyncadd [#allocation5], %s10084
          %s10087 = sshll.u32 [#allocation27], 4
          %s10088 = int_to_ptr.vmem [resolvable:$true] %s10087
          %10090 = dma.vmem_to_hbm [thread:$0]  %s10088, 1024, %s14, [#allocation5]
        $region144: #{tpu_custom_call.1} parent=75 // pred_fallthru
          _
        // Predicated region
        $region145: #{tpu_custom_call.1} parent=75 // pred_check
          %p10091 = pneg %p386
        $region146: #{tpu_custom_call.1} parent=75 // pred_check_branch
          %10093 = sbr.rel (%p10091) target = $region148
        $region147: #{tpu_custom_call.1} parent=75 // pred_region
          %s10095 = ssub.s32 16, 16
          %10096 = vsyncadd [#allocation6], %s10095
          %10099 = dma.smem_to_hbm [#allocation28], 16, %s15, [#allocation6]
        $region148: #{tpu_custom_call.1} parent=75 // pred_fallthru
          _
        // Predicated region
        $region149: #{tpu_custom_call.1} parent=75 // pred_check
          %p10100 = pneg %p407
        $region150: #{tpu_custom_call.1} parent=75 // pred_check_branch
          %10102 = sbr.rel (%p10100) target = $region152
        $region151: #{tpu_custom_call.1} parent=75 // pred_region
          %s10104 = ssub.s32 16, 16
          %10105 = vsyncadd [#allocation30], %s10104
          %10108 = dma.smem_to_hbm [#allocation29], 16, %s16, [#allocation30]
        $region152: #{tpu_custom_call.1} parent=75 // pred_fallthru
          _
        // Predicated region
        $region153: #{tpu_custom_call.1} parent=75 // pred_check
          %p10109 = pneg %p365
        $region154: #{tpu_custom_call.1} parent=75 // pred_check_branch
          %10111 = sbr.rel (%p10109) target = $region156
        $region155: #{tpu_custom_call.1} parent=75 // pred_region
          %10112 = dma.done [#allocation5], 1024
        $region156: #{tpu_custom_call.1} parent=75 // pred_fallthru
          _
        // Predicated region
        $region157: #{tpu_custom_call.1} parent=75 // pred_check
          %p10113 = pneg %p386
        $region158: #{tpu_custom_call.1} parent=75 // pred_check_branch
          %10115 = sbr.rel (%p10113) target = $region160
        $region159: #{tpu_custom_call.1} parent=75 // pred_region
          %10116 = dma.done [#allocation6], 16
        $region160: #{tpu_custom_call.1} parent=75 // pred_fallthru
          _
        // Predicated region
        $region161: #{tpu_custom_call.1} parent=75 // pred_check
          %p10117 = pneg %p407
        $region162: #{tpu_custom_call.1} parent=75 // pred_check_branch
          %10119 = sbr.rel (%p10117) target = $region164
        $region163: #{tpu_custom_call.1} parent=75 // pred_region
          %10120 = dma.done [#allocation30], 16
        $region164: #{tpu_custom_call.1} parent=75 // pred_fallthru
          _
        %10121 = sfence
      $region76: #{tpu_custom_call.1} parent=5 // pred_fallthru
        _
      %p10122 = scmp.le.s32.totalorder 2, %s38
      // Predicated region
      $region165: #{tpu_custom_call.1} parent=5 // pred_check
        %p10123 = pneg %p10122
      $region166: #{tpu_custom_call.1} parent=5 // pred_check_branch
        %10125 = sbr.rel (%p10123) target = $region168
      $region167: #{tpu_custom_call.1} parent=5 // pred_region
        %s10126 = ssub.s32 %s38, 2
      $region168: #{tpu_custom_call.1} parent=5 // pred_fallthru
        _
    $region6: #{tpu_custom_call.1} parent=1 // loop_footer
      %s42 = sadd.s32 1, %s38
    $region7: #{tpu_custom_call.1} parent=1 // loop_footer_branch
      %37 = sbr.rel target = $region3
    $region8: #{tpu_custom_call.1} parent=1 // loop_exit
      _
    %10127 = vsyncpa [#allocation4], 1
    %s10128 = scalar_lea.sflag [#allocation4], 1
    %10129 = vsyncpa %s10128, 1
    %10130 = vsyncpa [#allocation8], 1
    %s10131 = scalar_lea.sflag [#allocation8], 1
    %10132 = vsyncpa %s10131, 1
    %10133 = vsyncpa [#allocation11], 1
    %s10134 = scalar_lea.sflag [#allocation11], 1
    %10135 = vsyncpa %s10134, 1
    %10136 = vsyncpa [#allocation14], 1
    %10137 = vsyncpa [#allocation17], 1
    %10138 = vsyncpa [#allocation20], 1
    %10139 = vsyncpa [#allocation23], 1
    %10140 = vsyncpa [#allocation26], 1
    %10141 = vsyncpa [#allocation5], 1
    %s10142 = scalar_lea.sflag [#allocation5], 1
    %10143 = vsyncpa %s10142, 1
    %10144 = vsyncpa [#allocation6], 1
    %s10145 = scalar_lea.sflag [#allocation6], 1
    %10146 = vsyncpa %s10145, 1
    %10147 = vsyncpa [#allocation30], 1

</llo_original>
